<compile_context>
chip_gen: v6e
topology: v6e:2x2x1
jax: 0.10.0
libtpu: 0.0.40
codegen_flags: <defaults>
</compile_context>

<pallas_src>
import jax
import jax.numpy as jnp
from jax import lax
from jax.experimental import pallas as pl
from jax.experimental.pallas import tpu as pltpu

IN_FEATURES = 3 * 224 * 224      # 150528
HIDDEN = 500
HIDDEN_PAD = 512                 # lane-dense padding of the hidden dim


def _num_col_splits():
    """2 column halves on dual-TensorCore chips (v7x), 1 elsewhere (v5e/v6e)."""
    try:
        kind = jax.devices()[0].device_kind.lower()
    except Exception:
        return 1
    return 2 if "v7" in kind else 1


N_SPLIT = _num_col_splits()
COL = HIDDEN_PAD // N_SPLIT              # 512 (single-TC) or 256 (v7x)
TK = 10752 * N_SPLIT                     # keeps per-tile bytes (TK*COL) constant
K_STEPS = IN_FEATURES // TK              # 14 (single-TC) or 7 per column half (v7x)
assert IN_FEATURES % TK == 0 and TK % 128 == 0 and COL % 128 == 0


def _fused_mlp_kernel(x_ref, w1_ref, s1_ref, b1_ref, w2_ref, b2_ref, o_ref, h_acc):
    n = pl.program_id(0)                       # column-half index ("parallel")
    k = pl.program_id(1)                       # K reduction step ("arbitrary")

    @pl.when(k == 0)
    def _():
        h_acc[...] = jnp.zeros_like(h_acc)

    # Hot path: int8 w1 tile -> bf16 (exact; VPU convert hidden under the tile
    # DMA), then (B, TK) bf16 @ (TK, COL) bf16 on the MXU, accumulated in f32.
    h_acc[...] += jnp.dot(x_ref[...], w1_ref[...].astype(jnp.bfloat16),
                          preferred_element_type=jnp.float32)

    @pl.when(k == pl.num_programs(1) - 1)
    def _():
        # dequant (per-column scale) + bias + ReLU, then the tiny fc2 half in bf16
        h = jnp.maximum(h_acc[...] * s1_ref[...] + b1_ref[...], 0.0)
        partial = jnp.dot(h.astype(jnp.bfloat16), w2_ref[...],
                          preferred_element_type=jnp.float32)
        # add b2 exactly once (on the n == 0 half)
        partial = partial + b2_ref[...] * (n == 0).astype(jnp.float32)
        o_ref[0] = partial.astype(o_ref.dtype)


def prepare_params(w1_t, b1, w2_t, b2):
    """One-time weight prep (init-time): torch layout -> kernel layout.

    w1_t: (500, 150528) f32  torch nn.Linear weight (out x in)
    b1:   (500,)        f32
    w2_t: (C, 500)      f32
    b2:   (C,)          f32
    Returns:
      w1q (150528, 512) int8   per-column symmetric-quantized fc1 weight
      s1p (1, 512)      f32    per-column dequant scales (0 on padded columns)
      b1p (1, 512)      f32
      w2p (512, C)      bf16   (padded rows are zero)
      b2p (1, C)        f32
    """
    num_classes = w2_t.shape[0]
    pad = HIDDEN_PAD - HIDDEN
    w1 = jnp.transpose(w1_t).astype(jnp.float32)                 # (K, 500)
    s1 = jnp.maximum(jnp.max(jnp.abs(w1), axis=0) / 127.0, 1e-30)
    w1q = jnp.clip(jnp.round(w1 / s1[None, :]), -127.0, 127.0).astype(jnp.int8)
    w1q = jnp.pad(w1q, ((0, 0), (0, pad)))                       # zero int8 cols
    s1p = jnp.pad(s1, (0, pad)).reshape(1, HIDDEN_PAD).astype(jnp.float32)
    b1p = jnp.pad(b1, (0, pad)).reshape(1, HIDDEN_PAD).astype(jnp.float32)
    w2p = jnp.pad(jnp.transpose(w2_t), ((0, pad), (0, 0))).astype(jnp.bfloat16)
    b2p = b2.reshape(1, num_classes).astype(jnp.float32)
    return w1q, s1p, b1p, w2p, b2p


@jax.jit
def another_net_forward(x, w1q, s1p, b1p, w2p, b2p):
    """x: (B, 3, 224, 224) f32; returns (B, num_classes) f32."""
    B = x.shape[0]
    num_classes = w2p.shape[1]

    xf = x.reshape(B, IN_FEATURES).astype(jnp.bfloat16)          # glue: flatten + cast

    cost = pl.CostEstimate(
        flops=2 * B * IN_FEATURES * HIDDEN_PAD
              + 2 * N_SPLIT * B * HIDDEN_PAD * num_classes,
        transcendentals=0,
        bytes_accessed=(IN_FEATURES * HIDDEN_PAD                 # int8 w1 stream (~77 MB)
                        + N_SPLIT * B * IN_FEATURES * 2          # bf16 x stream(s)
                        + N_SPLIT * B * num_classes * 4),
    )

    partials = pl.pallas_call(
        _fused_mlp_kernel,
        out_shape=jax.ShapeDtypeStruct((N_SPLIT, B, num_classes), jnp.float32),
        grid_spec=pltpu.PrefetchScalarGridSpec(
            num_scalar_prefetch=0,
            grid=(N_SPLIT, K_STEPS),
            in_specs=[
                pl.BlockSpec((B, TK),   lambda n, k: (0, k)),            # x chunk (bf16)
                pl.BlockSpec((TK, COL), lambda n, k: (k, n)),            # w1 chunk (int8)
                pl.BlockSpec((1, COL),  lambda n, k: (0, n)),            # dequant scales
                pl.BlockSpec((1, COL),  lambda n, k: (0, n)),            # b1 half
                pl.BlockSpec((COL, num_classes), lambda n, k: (n, 0)),   # w2 row half (bf16)
                pl.BlockSpec((1, num_classes),   lambda n, k: (0, 0)),   # b2
            ],
            out_specs=pl.BlockSpec((1, B, num_classes), lambda n, k: (n, 0, 0)),
            scratch_shapes=[pltpu.VMEM((B, COL), jnp.float32)],
        ),
        compiler_params=pltpu.CompilerParams(
            dimension_semantics=("parallel", "arbitrary"),
            vmem_limit_bytes=48 << 20,     # actual usage ~23 MB; safe incl. v7x (64 MB)
        ),
        cost_estimate=cost,
    )(xf, w1q, s1p, b1p, w2p, b2p)

    return partials.sum(axis=0)            # combine column-half partials (trivial)


if __name__ == "__main__":
    num_classes = 10
    B = 2

    key = jax.random.PRNGKey(0)
    kx, k1, kb1, k2, kb2 = jax.random.split(key, 5)

    # deterministic synthetic parameters, torch nn.Linear layout (out x in)
    x = jax.random.normal(kx, (B, 3, 224, 224), dtype=jnp.float32)
    w1_t = jax.random.normal(k1, (HIDDEN, IN_FEATURES), dtype=jnp.float32) * 0.01
    b1 = jax.random.normal(kb1, (HIDDEN,), dtype=jnp.float32) * 0.01
    w2_t = jax.random.normal(k2, (num_classes, HIDDEN), dtype=jnp.float32) * 0.01
    b2 = jax.random.normal(kb2, (num_classes,), dtype=jnp.float32) * 0.01

    params = prepare_params(w1_t, b1, w2_t, b2)
    out = another_net_forward(x, *params)
    out = jax.block_until_ready(out)

    # Plain-JAX reference using the SAME quantized/rounded operands (int8*scale
    # w1, bf16 x, bf16 h/w2 for fc2), f32 math -- isolates kernel correctness
    # from quantization error.  Note: vs an exact torch f32 forward, the int8
    # per-column fc1 weight quantization introduces ~1% relative error on the
    # hidden activations (expected / documented tradeoff for the 2x byte win).
    w1q, s1p, b1p, w2p, b2p = params
    xr = x.reshape(B, IN_FEATURES).astype(jnp.bfloat16).astype(jnp.float32)
    w1_deq = w1q[:, :HIDDEN].astype(jnp.float32) * s1p[0, :HIDDEN][None, :]
    h_ref = jnp.maximum(
        jnp.dot(xr, w1_deq, precision=lax.Precision.HIGHEST) + b1[None, :], 0.0)
    h_bf = h_ref.astype(jnp.bfloat16).astype(jnp.float32)
    w2r = jnp.transpose(w2_t).astype(jnp.bfloat16).astype(jnp.float32)
    ref = jnp.dot(h_bf, w2r, precision=lax.Precision.HIGHEST) + b2[None, :]

    assert out.shape == (B, num_classes)
    assert jnp.allclose(out, ref, rtol=5e-3, atol=5e-3), "mismatch vs reference"

    print("KERNEL_OK")
</pallas_src>

<mosaic_0001>
module attributes {stable_mosaic.version = 11 : i64} {
  func.func @_fused_mlp_kernel(%arg0: i32, %arg1: i32, %arg2: memref<2x10752xbf16, #tpu.memory_space<vmem>>, %arg3: memref<10752x512xi8, #tpu.memory_space<vmem>>, %arg4: memref<1x512xf32, #tpu.memory_space<vmem>>, %arg5: memref<1x512xf32, #tpu.memory_space<vmem>>, %arg6: memref<512x10xbf16, #tpu.memory_space<vmem>>, %arg7: memref<1x10xf32, #tpu.memory_space<vmem>>, %arg8: memref<1x2x10xf32, #tpu.memory_space<vmem>>, %arg9: memref<2x512xf32, #tpu.memory_space<vmem>>) attributes {dimension_semantics = [#tpu.dimension_semantics<parallel>, #tpu.dimension_semantics<arbitrary>], iteration_bounds = array<i64: 1, 14>, scalar_prefetch = 0 : i64, scratch_operands = 1 : i64, tpu.core_type = #tpu.core_type<tc>, window_params = [{transform_indices = @transform_0, window_bounds = array<i64: 2, 10752>}, {transform_indices = @transform_1, window_bounds = array<i64: 10752, 512>}, {transform_indices = @transform_2, window_bounds = array<i64: 1, 512>}, {transform_indices = @transform_3, window_bounds = array<i64: 1, 512>}, {transform_indices = @transform_4, window_bounds = array<i64: 512, 10>}, {pipeline_mode = #tpu.pipeline_mode<synchronous>, transform_indices = @transform_5, window_bounds = array<i64: 1, 10>}, {transform_indices = @transform_6, window_bounds = array<i64: 1, 2, 10>}]} {
    %c0_i32 = arith.constant 0 : i32
    %0 = arith.cmpi eq, %arg1, %c0_i32 : i32
    %1 = arith.extui %0 : i1 to i32
    %c0_i32_0 = arith.constant 0 : i32
    %2 = arith.cmpi ne, %1, %c0_i32_0 : i32
    scf.if %2 {
      %cst_9 = arith.constant 0.000000e+00 : f32
      %13 = vector.broadcast %cst_9 : f32 to vector<2x512xf32>
      %c0_10 = arith.constant 0 : index
      %c0_11 = arith.constant 0 : index
      %14 = vector.load %arg9[%c0_10, %c0_11] : memref<2x512xf32, #tpu.memory_space<vmem>>, vector<2x512xf32>
      tpu.vector_store %arg9[%c0_10, %c0_11], %13 {strides = array<i32>} : memref<2x512xf32, #tpu.memory_space<vmem>>, vector<2x512xf32>,
    } else {
    }
    %c0 = arith.constant 0 : index
    %c0_1 = arith.constant 0 : index
    %3 = vector.load %arg9[%c0, %c0_1] : memref<2x512xf32, #tpu.memory_space<vmem>>, vector<2x512xf32>
    %c0_2 = arith.constant 0 : index
    %c0_3 = arith.constant 0 : index
    %4 = vector.load %arg2[%c0_2, %c0_3] : memref<2x10752xbf16, #tpu.memory_space<vmem>>, vector<2x10752xbf16>
    %c0_4 = arith.constant 0 : index
    %c0_5 = arith.constant 0 : index
    %5 = vector.load %arg3[%c0_4, %c0_5] : memref<10752x512xi8, #tpu.memory_space<vmem>>, vector<10752x512xi8>
    %6 = arith.sitofp %5 : vector<10752x512xi8> to vector<10752x512xbf16>
    %cst = arith.constant dense<0.000000e+00> : vector<2x512xf32>
    %7 = tpu.matmul %4, %6, %cst {dimension_numbers = #tpu.dot_dimension_numbers<[1], [0], [0], [1], [0, 0, 1, 1], [], []>} : vector<2x10752xbf16>, vector<10752x512xbf16>, vector<2x512xf32> -> vector<2x512xf32>
    %8 = arith.addf %3, %7 : vector<2x512xf32>
    %c0_6 = arith.constant 0 : index
    %c0_7 = arith.constant 0 : index
    %9 = vector.load %arg9[%c0_6, %c0_7] : memref<2x512xf32, #tpu.memory_space<vmem>>, vector<2x512xf32>
    tpu.vector_store %arg9[%c0_6, %c0_7], %8 {strides = array<i32>} : memref<2x512xf32, #tpu.memory_space<vmem>>, vector<2x512xf32>,
    %c13_i32 = arith.constant 13 : i32
    %10 = arith.cmpi eq, %arg1, %c13_i32 : i32
    %11 = arith.extui %10 : i1 to i32
    %c0_i32_8 = arith.constant 0 : i32
    %12 = arith.cmpi ne, %11, %c0_i32_8 : i32
    scf.if %12 {
      %c0_9 = arith.constant 0 : index
      %c0_10 = arith.constant 0 : index
      %13 = vector.load %arg9[%c0_9, %c0_10] : memref<2x512xf32, #tpu.memory_space<vmem>>, vector<2x512xf32>
      %c0_11 = arith.constant 0 : index
      %c0_12 = arith.constant 0 : index
      %14 = vector.load %arg4[%c0_11, %c0_12] : memref<1x512xf32, #tpu.memory_space<vmem>>, vector<1x512xf32>
      %15 = vector.broadcast %14 : vector<1x512xf32> to vector<2x512xf32>
      %16 = arith.mulf %13, %15 : vector<2x512xf32>
      %c0_13 = arith.constant 0 : index
      %c0_14 = arith.constant 0 : index
      %17 = vector.load %arg5[%c0_13, %c0_14] : memref<1x512xf32, #tpu.memory_space<vmem>>, vector<1x512xf32>
      %18 = vector.broadcast %17 : vector<1x512xf32> to vector<2x512xf32>
      %19 = arith.addf %16, %18 : vector<2x512xf32>
      %cst_15 = arith.constant 0.000000e+00 : f32
      %20 = vector.broadcast %cst_15 : f32 to vector<2x512xf32>
      %21 = arith.maximumf %19, %20 : vector<2x512xf32>
      %22 = arith.truncf %21 : vector<2x512xf32> to vector<2x512xbf16>
      %c0_16 = arith.constant 0 : index
      %c0_17 = arith.constant 0 : index
      %23 = vector.load %arg6[%c0_16, %c0_17] : memref<512x10xbf16, #tpu.memory_space<vmem>>, vector<512x10xbf16>
      %cst_18 = arith.constant dense<0.000000e+00> : vector<2x10xf32>
      %24 = tpu.matmul %22, %23, %cst_18 {dimension_numbers = #tpu.dot_dimension_numbers<[1], [0], [0], [1], [0, 0, 1, 1], [], []>} : vector<2x512xbf16>, vector<512x10xbf16>, vector<2x10xf32> -> vector<2x10xf32>
      %c0_19 = arith.constant 0 : index
      %c0_20 = arith.constant 0 : index
      %25 = vector.load %arg7[%c0_19, %c0_20] : memref<1x10xf32, #tpu.memory_space<vmem>>, vector<1x10xf32>
      %c0_i32_21 = arith.constant 0 : i32
      %26 = arith.cmpi eq, %arg0, %c0_i32_21 : i32
      %27 = arith.extui %26 : i1 to i32
      %28 = arith.sitofp %27 : i32 to f32
      %29 = vector.broadcast %28 : f32 to vector<1x10xf32>
      %30 = arith.mulf %25, %29 : vector<1x10xf32>
      %31 = vector.broadcast %30 : vector<1x10xf32> to vector<2x10xf32>
      %32 = arith.addf %24, %31 : vector<2x10xf32>
      %c0_22 = arith.constant 0 : index
      %c0_23 = arith.constant 0 : index
      %c0_24 = arith.constant 0 : index
      %33 = vector.load %arg8[%c0_22, %c0_23, %c0_24] : memref<1x2x10xf32, #tpu.memory_space<vmem>>, vector<1x2x10xf32>
      %34 = vector.shape_cast %33 : vector<1x2x10xf32> to vector<2x10xf32>
      %35 = vector.shape_cast %32 : vector<2x10xf32> to vector<1x2x10xf32>
      tpu.vector_store %arg8[%c0_22, %c0_23, %c0_24], %35 {strides = array<i32>} : memref<1x2x10xf32, #tpu.memory_space<vmem>>, vector<1x2x10xf32>,
    } else {
    }
    return
  }
  func.func @transform_0(%arg0: i32, %arg1: i32) -> (i32, i32) {
    %c0_i32 = arith.constant 0 : i32
    %c0_i32_0 = arith.constant 0 : i32
    return %c0_i32, %arg1 : i32, i32
  }
  func.func @transform_1(%arg0: i32, %arg1: i32) -> (i32, i32) {
    %c0_i32 = arith.constant 0 : i32
    return %arg1, %arg0 : i32, i32
  }
  func.func @transform_2(%arg0: i32, %arg1: i32) -> (i32, i32) {
    %c0_i32 = arith.constant 0 : i32
    %c0_i32_0 = arith.constant 0 : i32
    return %c0_i32, %arg0 : i32, i32
  }
  func.func @transform_3(%arg0: i32, %arg1: i32) -> (i32, i32) {
    %c0_i32 = arith.constant 0 : i32
    %c0_i32_0 = arith.constant 0 : i32
    return %c0_i32, %arg0 : i32, i32
  }
  func.func @transform_4(%arg0: i32, %arg1: i32) -> (i32, i32) {
    %c0_i32 = arith.constant 0 : i32
    %c0_i32_0 = arith.constant 0 : i32
    return %arg0, %c0_i32 : i32, i32
  }
  func.func @transform_5(%arg0: i32, %arg1: i32) -> (i32, i32) {
    %c0_i32 = arith.constant 0 : i32
    %c0_i32_0 = arith.constant 0 : i32
    %c0_i32_1 = arith.constant 0 : i32
    return %c0_i32, %c0_i32_0 : i32, i32
  }
  func.func @transform_6(%arg0: i32, %arg1: i32) -> (i32, i32, i32) {
    %c0_i32 = arith.constant 0 : i32
    %c0_i32_0 = arith.constant 0 : i32
    %c0_i32_1 = arith.constant 0 : i32
    return %arg0, %c0_i32, %c0_i32_0 : i32, i32, i32
  }
}

</mosaic_0001>

<llo_original>
// kernel: another_net_forward.1
$region0: #{another_net_forward.1}
  #allocation0 [shape = 'u32[]', space=smem, size = 0x4, offset = 0x4, fixed_abs, tag = 'smem constant byte address 0x4 - core index']
  #allocation1 [shape = 'u32[144,128]{1,0:T(1,128)}', space=vmem, size = 0x12000, scoped, tag = 'internal scratch']
  #allocation2 [shape = 'f32[2,512]{1,0:T(2,128)}', space=vmem, size = 0x1000, scoped, tag = 'scratch operand']
  %s0 = inlined_call_operand.vmem [shape: bf16[2,150528], index: 0, kind: input, shape index: {}]
  %s1 = inlined_call_operand.hbm [shape: s8[150528,512], index: 1, kind: input, shape index: {}]
  %s2 = inlined_call_operand.hbm [shape: f32[1,512], index: 2, kind: input, shape index: {}]
  %s3 = inlined_call_operand.hbm [shape: f32[1,512], index: 3, kind: input, shape index: {}]
  %s4 = inlined_call_operand.vmem [shape: bf16[512,10], index: 4, kind: input, shape index: {}]
  %s5 = inlined_call_operand.hbm [shape: f32[1,10], index: 5, kind: input, shape index: {}]
  %s6 = inlined_call_operand.hbm [shape: f32[1,2,10], index: 6, kind: output, shape index: {}]
  %s7 = sld [smem:[#allocation0]]
  $region81: #{another_net_forward.1} parent=0
    _
  %s9 = ssub.s32 1, %s7
  %s10 = scalar_select 0, %s9, %s7
  $region1: #{another_net_forward.1} parent=0
    #allocation3 [shape = 'u8[11010048]{0}', space=vmem, size = 0xa80000, scoped, tag = 'input window, operand 1']
    #allocation4 [shape = 's32[2]{0}', space=sflag, size = 0x8, scoped, tag = 'scoped memory for another_net_forward.1']
    #allocation5 [shape = 's32[2]{0}', space=sflag, size = 0x8, scoped, tag = 'scoped memory for another_net_forward.1']
    #allocation6 [shape = 'u8[2048]{0}', space=vmem, size = 0x800, scoped, tag = 'input window, operand 2, single buffered']
    #allocation7 [shape = 's32[1]{0}', space=sflag, size = 0x4, scoped, tag = 'scoped memory for another_net_forward.1']
    #allocation8 [shape = 'u8[2048]{0}', space=vmem, size = 0x800, scoped, tag = 'input window, operand 3, single buffered']
    #allocation9 [shape = 'u8[512]{0}', space=vmem, size = 0x400, scoped, tag = 'input window, operand 5, single buffered']
    #allocation10 [shape = 's32[1]{0}', space=sflag, size = 0x4, scoped, tag = 'scoped memory for another_net_forward.1']
    #allocation11 [shape = 'u8[1024]{0}', space=vmem, size = 0x400, scoped, tag = 'output window, operand 0, single buffered']
    %11 = vsyncpa [#allocation4], 0
    %s12 = scalar_lea.sflag [#allocation4], 1
    %13 = vsyncpa %s12, 0
    %14 = vsyncpa [#allocation7], 0
    %15 = vsyncpa [#allocation10], 0
    %16 = vsyncpa [#allocation5], 0
    loop: start=0, step=1, limit=16
    $region2: #{another_net_forward.1} parent=1 // loop_pre_header
      _
    $region3: #{another_net_forward.1} parent=1 // loop_header
      %s18 = sphi 0, %s22
      %p19 = scmp.ge.s32.totalorder %s18, 16
      %s25 = sphi 0, %s37
      %s26 = sphi 0, %s33
      %s27 = sphi 0, %s25
      %s28 = sphi 0, %s26
      %s29 = sphi 0, %s27
      %s30 = sphi 0, %s28
      %s40 = sphi 0, %s42
      %s43 = sphi 0, %s40
      %s44 = sphi 0, %s43
      %s60 = sphi 0, %s44
      %s68 = sphi 0, %s70
      %s71 = sphi 0, %s68
      %s72 = sphi 0, %s71
      %s88 = sphi 0, %s72
      %s94 = sphi 0, %s96
      %s97 = sphi 0, %s94
      %s98 = sphi 0, %s97
      %s114 = sphi 0, %s98
      %s120 = sphi 0, %s122
      %s123 = sphi 0, %s120
      %s124 = sphi 0, %s123
      %s140 = sphi 0, %s124
      %s146 = sphi 0, %s148
      %s149 = sphi 0, %s146
      %s150 = sphi 0, %s149
      %s166 = sphi 0, %s150
      %s170 = sphi 0, %s170
      %s172 = sphi 0, %s170
      %s173 = sphi 0, %s172
      %s187 = sphi 0, %s173
      %s193 = sphi 0, %s195
      %s196 = sphi 0, %s193
      %s197 = sphi 0, %s196
      %s213 = sphi 0, %s197
    $region4: #{another_net_forward.1} parent=1 // loop_header_branch
      %21 = sbr.rel (%p19) target = $region8
    $region5: #{another_net_forward.1} parent=1 // loop_body
      %s23 = ssub.s32 %s18, 1
      %s24 = ssub.s32 %s18, 2
      %s31 = sadd.s32 1, %s26
      %p32 = scmp.ge.s32.totalorder %s31, 14
      %s33 = scalar_select %p32, 0, %s31
      %s34 = sadd.s32 1, %s25
      %s35 = scalar_select %p32, %s34, %s25
      %p36 = scmp.ge.s32.totalorder %s35, 1
      %s37 = scalar_select %p36, 0, %s35
      %s38 = ssub.s32 %s26, %s33
      %p39 = scmp.eq.s32.totalorder %s38, 0
      %s41 = sadd.s32 %s40, 1
      %s42 = scalar_select %p39, %s40, %s41
      %p45 = pneg %p39
      %p46 = scmp.eq.s32.totalorder %s18, 13
      %p47 = por %p45, %p46
      %p48 = scmp.ne.s32.totalorder %s40, %s43
      %p49 = scmp.eq.s32.totalorder %s18, 0
      %p50 = por %p48, %p49
      %p51 = scmp.ne.s32.totalorder %s40, %s43
      %p52 = scmp.eq.s32.totalorder %s23, 13
      %p53 = por %p51, %p52
      %p54 = scmp.ne.s32.totalorder %s43, %s44
      %p55 = scmp.eq.s32.totalorder %s23, 0
      %p56 = por %p54, %p55
      %p57 = scmp.ne.s32.totalorder %s43, %s44
      %p58 = scmp.eq.s32.totalorder %s24, 13
      %p59 = por %p57, %p58
      %p61 = scmp.ne.s32.totalorder %s44, %s60
      %p62 = scmp.eq.s32.totalorder %s24, 0
      %p63 = por %p61, %p62
      %s64 = ssub.s32 %s26, %s33
      %s65 = ssub.s32 %s25, %s37
      %s66 = sor.u32 %s64, %s65
      %p67 = scmp.eq.s32.totalorder %s66, 0
      %s69 = sadd.s32 %s68, 1
      %s70 = scalar_select %p67, %s68, %s69
      %p73 = pneg %p67
      %p74 = scmp.eq.s32.totalorder %s18, 13
      %p75 = por %p73, %p74
      %p76 = scmp.ne.s32.totalorder %s68, %s71
      %p77 = scmp.eq.s32.totalorder %s18, 0
      %p78 = por %p76, %p77
      %p79 = scmp.ne.s32.totalorder %s68, %s71
      %p80 = scmp.eq.s32.totalorder %s23, 13
      %p81 = por %p79, %p80
      %p82 = scmp.ne.s32.totalorder %s71, %s72
      %p83 = scmp.eq.s32.totalorder %s23, 0
      %p84 = por %p82, %p83
      %p85 = scmp.ne.s32.totalorder %s71, %s72
      %p86 = scmp.eq.s32.totalorder %s24, 13
      %p87 = por %p85, %p86
      %p89 = scmp.ne.s32.totalorder %s72, %s88
      %p90 = scmp.eq.s32.totalorder %s24, 0
      %p91 = por %p89, %p90
      %s92 = ssub.s32 %s25, %s37
      %p93 = scmp.eq.s32.totalorder %s92, 0
      %s95 = sadd.s32 %s94, 1
      %s96 = scalar_select %p93, %s94, %s95
      %p99 = pneg %p93
      %p100 = scmp.eq.s32.totalorder %s18, 13
      %p101 = por %p99, %p100
      %p102 = scmp.ne.s32.totalorder %s94, %s97
      %p103 = scmp.eq.s32.totalorder %s18, 0
      %p104 = por %p102, %p103
      %p105 = scmp.ne.s32.totalorder %s94, %s97
      %p106 = scmp.eq.s32.totalorder %s23, 13
      %p107 = por %p105, %p106
      %p108 = scmp.ne.s32.totalorder %s97, %s98
      %p109 = scmp.eq.s32.totalorder %s23, 0
      %p110 = por %p108, %p109
      %p111 = scmp.ne.s32.totalorder %s97, %s98
      %p112 = scmp.eq.s32.totalorder %s24, 13
      %p113 = por %p111, %p112
      %p115 = scmp.ne.s32.totalorder %s98, %s114
      %p116 = scmp.eq.s32.totalorder %s24, 0
      %p117 = por %p115, %p116
      %s118 = ssub.s32 %s25, %s37
      %p119 = scmp.eq.s32.totalorder %s118, 0
      %s121 = sadd.s32 %s120, 1
      %s122 = scalar_select %p119, %s120, %s121
      %p125 = pneg %p119
      %p126 = scmp.eq.s32.totalorder %s18, 13
      %p127 = por %p125, %p126
      %p128 = scmp.ne.s32.totalorder %s120, %s123
      %p129 = scmp.eq.s32.totalorder %s18, 0
      %p130 = por %p128, %p129
      %p131 = scmp.ne.s32.totalorder %s120, %s123
      %p132 = scmp.eq.s32.totalorder %s23, 13
      %p133 = por %p131, %p132
      %p134 = scmp.ne.s32.totalorder %s123, %s124
      %p135 = scmp.eq.s32.totalorder %s23, 0
      %p136 = por %p134, %p135
      %p137 = scmp.ne.s32.totalorder %s123, %s124
      %p138 = scmp.eq.s32.totalorder %s24, 13
      %p139 = por %p137, %p138
      %p141 = scmp.ne.s32.totalorder %s124, %s140
      %p142 = scmp.eq.s32.totalorder %s24, 0
      %p143 = por %p141, %p142
      %s144 = ssub.s32 %s25, %s37
      %p145 = scmp.eq.s32.totalorder %s144, 0
      %s147 = sadd.s32 %s146, 1
      %s148 = scalar_select %p145, %s146, %s147
      %p151 = pneg %p145
      %p152 = scmp.eq.s32.totalorder %s18, 13
      %p153 = por %p151, %p152
      %p154 = scmp.ne.s32.totalorder %s146, %s149
      %p155 = scmp.eq.s32.totalorder %s18, 0
      %p156 = por %p154, %p155
      %p157 = scmp.ne.s32.totalorder %s146, %s149
      %p158 = scmp.eq.s32.totalorder %s23, 13
      %p159 = por %p157, %p158
      %p160 = scmp.ne.s32.totalorder %s149, %s150
      %p161 = scmp.eq.s32.totalorder %s23, 0
      %p162 = por %p160, %p161
      %p163 = scmp.ne.s32.totalorder %s149, %s150
      %p164 = scmp.eq.s32.totalorder %s24, 13
      %p165 = por %p163, %p164
      %p167 = scmp.ne.s32.totalorder %s150, %s166
      %p168 = scmp.eq.s32.totalorder %s24, 0
      %p169 = por %p167, %p168
      %s171 = sadd.s32 %s170, 1
      %p174 = scmp.eq.s32.totalorder %s18, 13
      %p175 = scmp.ne.s32.totalorder %s170, %s172
      %p176 = scmp.eq.s32.totalorder %s18, 0
      %p177 = por %p175, %p176
      %p178 = scmp.ne.s32.totalorder %s170, %s172
      %p179 = scmp.eq.s32.totalorder %s23, 13
      %p180 = por %p178, %p179
      %p181 = scmp.ne.s32.totalorder %s172, %s173
      %p182 = scmp.eq.s32.totalorder %s23, 0
      %p183 = por %p181, %p182
      %p184 = scmp.ne.s32.totalorder %s172, %s173
      %p185 = scmp.eq.s32.totalorder %s24, 13
      %p186 = por %p184, %p185
      %p188 = scmp.ne.s32.totalorder %s173, %s187
      %p189 = scmp.eq.s32.totalorder %s24, 0
      %p190 = por %p188, %p189
      %s191 = ssub.s32 %s25, %s37
      %p192 = scmp.eq.s32.totalorder %s191, 0
      %s194 = sadd.s32 %s193, 1
      %s195 = scalar_select %p192, %s193, %s194
      %p198 = pneg %p192
      %p199 = scmp.eq.s32.totalorder %s18, 13
      %p200 = por %p198, %p199
      %p201 = scmp.ne.s32.totalorder %s193, %s196
      %p202 = scmp.eq.s32.totalorder %s18, 0
      %p203 = por %p201, %p202
      %p204 = scmp.ne.s32.totalorder %s193, %s196
      %p205 = scmp.eq.s32.totalorder %s23, 13
      %p206 = por %p204, %p205
      %p207 = scmp.ne.s32.totalorder %s196, %s197
      %p208 = scmp.eq.s32.totalorder %s23, 0
      %p209 = por %p207, %p208
      %p210 = scmp.ne.s32.totalorder %s196, %s197
      %p211 = scmp.eq.s32.totalorder %s24, 13
      %p212 = por %p210, %p211
      %p214 = scmp.ne.s32.totalorder %s197, %s213
      %p215 = scmp.eq.s32.totalorder %s24, 0
      %p216 = por %p214, %p215
      %p217 = scmp.le.s32.totalorder 1, %s18
      %p218 = scmp.lt.s32.totalorder %s18, 15
      %p219 = pnand %p217, %p218
      %p220 = pneg %p219
      // Predicated region
      $region9: #{another_net_forward.1} parent=5 // pred_check
        _
      $region10: #{another_net_forward.1} parent=5 // pred_check_branch
        %222 = sbr.rel (%p219) target = $region12
      $region11: #{another_net_forward.1} parent=5 // pred_region
        %s223 = ssub.s32 %s18, 1
        // Predicated region
        $region13: #{another_net_forward.1} parent=11 // pred_check
          %p224 = pneg %p110
        $region14: #{another_net_forward.1} parent=11 // pred_check_branch
          %226 = sbr.rel (%p224) target = $region16
        $region15: #{another_net_forward.1} parent=11 // pred_region
          %s227 = smul.u32 4, %s27
          %s229 = ssub.s32 64, 64
          %230 = vsyncadd [#allocation7], %s229
          %s231 = smul.addr %s227, 16
          %s232 = scalar_lea.hbm %s2, %s231
          %s234 = sshll.u32 [#allocation6], 4
          %s235 = int_to_ptr.vmem [resolvable:$true] %s234
          %237 = dma.hbm_to_vmem [thread:$0]  %s232, 64, %s235, [#allocation7]
        $region16: #{another_net_forward.1} parent=11 // pred_fallthru
          _
        // Predicated region
        $region17: #{another_net_forward.1} parent=11 // pred_check
          %p238 = pneg %p136
        $region18: #{another_net_forward.1} parent=11 // pred_check_branch
          %240 = sbr.rel (%p238) target = $region20
        $region19: #{another_net_forward.1} parent=11 // pred_region
          %s241 = smul.u32 4, %s27
          %s243 = ssub.s32 64, 64
          %244 = vsyncadd [#allocation7], %s243
          %s245 = smul.addr %s241, 16
          %s246 = scalar_lea.hbm %s3, %s245
          %s248 = sshll.u32 [#allocation8], 4
          %s249 = int_to_ptr.vmem [resolvable:$true] %s248
          %251 = dma.hbm_to_vmem [thread:$0]  %s246, 64, %s249, [#allocation7]
        $region20: #{another_net_forward.1} parent=11 // pred_fallthru
          _
        // Predicated region
        $region21: #{another_net_forward.1} parent=11 // pred_check
          %p252 = pneg %p162
        $region22: #{another_net_forward.1} parent=11 // pred_check_branch
          %254 = sbr.rel (%p252) target = $region24
        $region23: #{another_net_forward.1} parent=11 // pred_region
          %s255 = smul.u32 64, %s27
          %p256 = scmp.lt.s32.totalorder %s255, 63
          %s257 = scalar_select %p256, %s255, 63
          %s258 = smul.addr %s257, 4
          %s259 = scalar_lea.vmem %s4, %s258
          %s260 = smul.u32 64, %s27
        $region24: #{another_net_forward.1} parent=11 // pred_fallthru
          _
        // Predicated region
        $region25: #{another_net_forward.1} parent=11 // pred_check
          %p261 = pneg %p183
        $region26: #{another_net_forward.1} parent=11 // pred_check_branch
          %263 = sbr.rel (%p261) target = $region28
        $region27: #{another_net_forward.1} parent=11 // pred_region
          %s265 = ssub.s32 16, 16
          %266 = vsyncadd [#allocation10], %s265
          %s268 = sshll.u32 [#allocation9], 4
          %s269 = int_to_ptr.vmem [resolvable:$true] %s268
          %271 = dma.hbm_to_vmem [thread:$0]  %s5, 16, %s269, [#allocation10]
        $region28: #{another_net_forward.1} parent=11 // pred_fallthru
          _
      $region12: #{another_net_forward.1} parent=5 // pred_fallthru
        _
      %p272 = scmp.lt.s32.totalorder %s18, 14
      // Predicated region
      $region29: #{another_net_forward.1} parent=5 // pred_check
        %p273 = pneg %p272
      $region30: #{another_net_forward.1} parent=5 // pred_check_branch
        %275 = sbr.rel (%p273) target = $region32
      $region31: #{another_net_forward.1} parent=5 // pred_region
        // Predicated region
        $region33: #{another_net_forward.1} parent=31 // pred_check
          %p276 = pneg %p50
        $region34: #{another_net_forward.1} parent=31 // pred_check_branch
          %278 = sbr.rel (%p276) target = $region36
        $region35: #{another_net_forward.1} parent=31 // pred_region
          %s279 = smul.u32 84, %s26
          %p280 = scmp.lt.s32.totalorder %s279, 1175
          %s281 = scalar_select %p280, %s279, 1175
          %s282 = scalar_lea.vmem %s0, %s281
          %s283 = smul.u32 84, %s26
        $region36: #{another_net_forward.1} parent=31 // pred_fallthru
          _
        // Predicated region
        $region37: #{another_net_forward.1} parent=31 // pred_check
          %p284 = pneg %p78
        $region38: #{another_net_forward.1} parent=31 // pred_check_branch
          %286 = sbr.rel (%p284) target = $region40
        $region39: #{another_net_forward.1} parent=31 // pred_region
          %s287 = sand.u32 %s68, 1
          %s288 = scalar_lea.sflag [#allocation4], %s287
          %s289 = sand.u32 %s68, 1
          %s290 = smul.addr %s289, 10752
          %s291 = scalar_lea.vmem [#allocation3], %s290
          %s292 = smul.u32 336, %s26
          %s293 = smul.u32 4, %s25
          %s295 = ssub.s32 172032, 172032
          %296 = vsyncadd %s288, %s295
          %s297 = smul.addr %s292, 4
          %s298 = sadd.s32 %s293, %s297
          %s299 = smul.addr %s298, 128
          %s300 = scalar_lea.hbm %s1, %s299
          %s301 = sshll.u32 %s291, 4
          %s302 = int_to_ptr.vmem [resolvable:$true] %s301
          %307 = dma.hbm_to_vmem [thread:$0]  %s300, 172032, %s302, %s288, 512, 512, 32
        $region40: #{another_net_forward.1} parent=31 // pred_fallthru
          _
      $region32: #{another_net_forward.1} parent=5 // pred_fallthru
        _
      %p308 = scmp.le.s32.totalorder 1, %s18
      %p309 = scmp.lt.s32.totalorder %s18, 15
      %p310 = pnand %p308, %p309
      %p311 = pneg %p310
      // Predicated region
      $region41: #{another_net_forward.1} parent=5 // pred_check
        _
      $region42: #{another_net_forward.1} parent=5 // pred_check_branch
        %313 = sbr.rel (%p310) target = $region44
      $region43: #{another_net_forward.1} parent=5 // pred_region
        %s314 = ssub.s32 %s18, 1
        %s315 = sand.u32 %s71, 1
        %s316 = scalar_lea.sflag [#allocation4], %s315
        %s317 = sand.u32 %s71, 1
        %s318 = smul.addr %s317, 10752
        %s319 = scalar_lea.vmem [#allocation3], %s318
        // Predicated region
        $region45: #{another_net_forward.1} parent=43 // pred_check
          %p320 = pneg %p84
        $region46: #{another_net_forward.1} parent=43 // pred_check_branch
          %322 = sbr.rel (%p320) target = $region48
        $region47: #{another_net_forward.1} parent=43 // pred_region
          %323 = dma.done %s316, 172032
        $region48: #{another_net_forward.1} parent=43 // pred_fallthru
          _
        // Predicated region
        $region49: #{another_net_forward.1} parent=43 // pred_check
          %p324 = pneg %p110
        $region50: #{another_net_forward.1} parent=43 // pred_check_branch
          %326 = sbr.rel (%p324) target = $region52
        $region51: #{another_net_forward.1} parent=43 // pred_region
          %327 = dma.done [#allocation7], 64
        $region52: #{another_net_forward.1} parent=43 // pred_fallthru
          _
        // Predicated region
        $region53: #{another_net_forward.1} parent=43 // pred_check
          %p328 = pneg %p136
        $region54: #{another_net_forward.1} parent=43 // pred_check_branch
          %330 = sbr.rel (%p328) target = $region56
        $region55: #{another_net_forward.1} parent=43 // pred_region
          %331 = dma.done [#allocation7], 64
        $region56: #{another_net_forward.1} parent=43 // pred_fallthru
          _
        // Predicated region
        $region57: #{another_net_forward.1} parent=43 // pred_check
          %p332 = pneg %p183
        $region58: #{another_net_forward.1} parent=43 // pred_check_branch
          %334 = sbr.rel (%p332) target = $region60
        $region59: #{another_net_forward.1} parent=43 // pred_region
          %335 = dma.done [#allocation10], 16
        $region60: #{another_net_forward.1} parent=43 // pred_fallthru
          _
        %s336 = smul.u32 84, %s28
        %p337 = scmp.lt.s32.totalorder %s336, 1175
        %s338 = scalar_select %p337, %s336, 1175
        %s339 = scalar_lea.vmem %s0, %s338
        %p340 = pneg %p56
        %p341 = pneg %p53
        %s342 = sand.u32 %s71, 1
        %s343 = scalar_lea.sflag [#allocation4], %s342
        %s344 = sand.u32 %s71, 1
        %s345 = smul.addr %s344, 10752
        %s346 = scalar_lea.vmem [#allocation3], %s345
        %p347 = pneg %p84
        %p348 = pneg %p81
        %p349 = pneg %p110
        %p350 = pneg %p107
        %p351 = pneg %p136
        %p352 = pneg %p133
        %s353 = smul.u32 64, %s27
        %p354 = scmp.lt.s32.totalorder %s353, 63
        %s355 = scalar_select %p354, %s353, 63
        %s356 = smul.addr %s355, 4
        %s357 = scalar_lea.vmem %s4, %s356
        %p358 = pneg %p162
        %p359 = pneg %p159
        %p360 = pneg %p183
        %p361 = pneg %p180
        %p362 = pneg %p209
        %p363 = pneg %p206
        %s364 = smul.u32 84, %s28
        %p365 = scmp.lt.s32.totalorder %s364, 1175
        %s366 = scalar_select %p365, %s364, 1175
        %s367 = scalar_lea.vmem %s0, %s366
        %s368 = smul.u32 84, %s28
        %s369 = smul.u32 336, %s28
        %s370 = smul.u32 4, %s27
        %s371 = smul.u32 4, %s27
        %s372 = smul.u32 4, %s27
        %s373 = smul.u32 64, %s27
        %p374 = scmp.lt.s32.totalorder %s373, 63
        %s375 = scalar_select %p374, %s373, 63
        %s376 = smul.addr %s375, 4
        %s377 = scalar_lea.vmem %s4, %s376
        %s378 = smul.u32 64, %s27
        %p380 = scmp.eq.s32.totalorder %s28, 0
        // Predicated region
        $region61: #{another_net_forward.1} parent=43 // pred_check
          %p381 = pneg %p380
        $region62: #{another_net_forward.1} parent=43 // pred_check_branch
          %383 = sbr.rel (%p381) target = $region64
        $region63: #{another_net_forward.1} parent=43 // pred_region
          %384 = vst [vmem:[#allocation2] sm:$0xff] 0.0
        $region64: #{another_net_forward.1} parent=43 // pred_fallthru
          _
        %v385 = vld [vmem:[#allocation2] sm:$0xff]
        %v386 = vld [vmem:[%s367] sm:$0xff]
        %v387 = vld [vmem:[%s367 + $0x8] sm:$0xff]
        %v388 = vld [vmem:[%s367 + $0x10] sm:$0xff]
        %v389 = vld [vmem:[%s367 + $0x18] sm:$0xff]
        %v390 = vld [vmem:[%s367 + $0x20] sm:$0xff]
        %v391 = vld [vmem:[%s367 + $0x28] sm:$0xff]
        %v392 = vld [vmem:[%s367 + $0x30] sm:$0xff]
        %v393 = vld [vmem:[%s367 + $0x38] sm:$0xff]
        %v394 = vld [vmem:[%s367 + $0x40] sm:$0xff]
        %v395 = vld [vmem:[%s367 + $0x48] sm:$0xff]
        %v396 = vld [vmem:[%s367 + $0x50] sm:$0xf]
        %v397 = vld [vmem:[%s319] sm:$0xff]
        %v398 = vld [vmem:[%s319 + $0x8] sm:$0xff]
        %v399 = vld [vmem:[%s319 + $0x10] sm:$0xff]
        %v400 = vld [vmem:[%s319 + $0x18] sm:$0xff]
        %v401 = vld [vmem:[%s319 + $0x20] sm:$0xff]
        %v402 = vld [vmem:[%s319 + $0x28] sm:$0xff]
        %v403 = vld [vmem:[%s319 + $0x30] sm:$0xff]
        %v404 = vld [vmem:[%s319 + $0x38] sm:$0xff]
        %v405 = vld [vmem:[%s319 + $0x40] sm:$0xff]
        %v406 = vld [vmem:[%s319 + $0x48] sm:$0xff]
        %v407 = vld [vmem:[%s319 + $0x50] sm:$0xff]
        %v408 = vld [vmem:[%s319 + $0x58] sm:$0xff]
        %v409 = vld [vmem:[%s319 + $0x60] sm:$0xff]
        %v410 = vld [vmem:[%s319 + $0x68] sm:$0xff]
        %v411 = vld [vmem:[%s319 + $0x70] sm:$0xff]
        %v412 = vld [vmem:[%s319 + $0x78] sm:$0xff]
        %v413 = vld [vmem:[%s319 + $0x80] sm:$0xff]
        %v414 = vld [vmem:[%s319 + $0x88] sm:$0xff]
        %v415 = vld [vmem:[%s319 + $0x90] sm:$0xff]
        %v416 = vld [vmem:[%s319 + $0x98] sm:$0xff]
        %v417 = vld [vmem:[%s319 + $0xa0] sm:$0xff]
        %v418 = vld [vmem:[%s319 + $0xa8] sm:$0xff]
        %v419 = vld [vmem:[%s319 + $0xb0] sm:$0xff]
        %v420 = vld [vmem:[%s319 + $0xb8] sm:$0xff]
        %v421 = vld [vmem:[%s319 + $0xc0] sm:$0xff]
        %v422 = vld [vmem:[%s319 + $0xc8] sm:$0xff]
        %v423 = vld [vmem:[%s319 + $0xd0] sm:$0xff]
        %v424 = vld [vmem:[%s319 + $0xd8] sm:$0xff]
        %v425 = vld [vmem:[%s319 + $0xe0] sm:$0xff]
        %v426 = vld [vmem:[%s319 + $0xe8] sm:$0xff]
        %v427 = vld [vmem:[%s319 + $0xf0] sm:$0xff]
        %v428 = vld [vmem:[%s319 + $0xf8] sm:$0xff]
        %v429 = vld [vmem:[%s319 + $0x100] sm:$0xff]
        %v430 = vld [vmem:[%s319 + $0x108] sm:$0xff]
        %v431 = vld [vmem:[%s319 + $0x110] sm:$0xff]
        %v432 = vld [vmem:[%s319 + $0x118] sm:$0xff]
        %v433 = vld [vmem:[%s319 + $0x120] sm:$0xff]
        %v434 = vld [vmem:[%s319 + $0x128] sm:$0xff]
        %v435 = vld [vmem:[%s319 + $0x130] sm:$0xff]
        %v436 = vld [vmem:[%s319 + $0x138] sm:$0xff]
        %v437 = vld [vmem:[%s319 + $0x140] sm:$0xff]
        %v438 = vld [vmem:[%s319 + $0x148] sm:$0xff]
        %v439 = vld [vmem:[%s319 + $0x150] sm:$0xff]
        %v440 = vld [vmem:[%s319 + $0x158] sm:$0xff]
        %v441 = vld [vmem:[%s319 + $0x160] sm:$0xff]
        %v442 = vld [vmem:[%s319 + $0x168] sm:$0xff]
        %v443 = vld [vmem:[%s319 + $0x170] sm:$0xff]
        %v444 = vld [vmem:[%s319 + $0x178] sm:$0xff]
        %v445 = vld [vmem:[%s319 + $0x180] sm:$0xff]
        %v446 = vld [vmem:[%s319 + $0x188] sm:$0xff]
        %v447 = vld [vmem:[%s319 + $0x190] sm:$0xff]
        %v448 = vld [vmem:[%s319 + $0x198] sm:$0xff]
        %v449 = vld [vmem:[%s319 + $0x1a0] sm:$0xff]
        %v450 = vld [vmem:[%s319 + $0x1a8] sm:$0xff]
        %v451 = vld [vmem:[%s319 + $0x1b0] sm:$0xff]
        %v452 = vld [vmem:[%s319 + $0x1b8] sm:$0xff]
        %v453 = vld [vmem:[%s319 + $0x1c0] sm:$0xff]
        %v454 = vld [vmem:[%s319 + $0x1c8] sm:$0xff]
        %v455 = vld [vmem:[%s319 + $0x1d0] sm:$0xff]
        %v456 = vld [vmem:[%s319 + $0x1d8] sm:$0xff]
        %v457 = vld [vmem:[%s319 + $0x1e0] sm:$0xff]
        %v458 = vld [vmem:[%s319 + $0x1e8] sm:$0xff]
        %v459 = vld [vmem:[%s319 + $0x1f0] sm:$0xff]
        %v460 = vld [vmem:[%s319 + $0x1f8] sm:$0xff]
        %v461 = vld [vmem:[%s319 + $0x200] sm:$0xff]
        %v462 = vld [vmem:[%s319 + $0x208] sm:$0xff]
        %v463 = vld [vmem:[%s319 + $0x210] sm:$0xff]
        %v464 = vld [vmem:[%s319 + $0x218] sm:$0xff]
        %v465 = vld [vmem:[%s319 + $0x220] sm:$0xff]
        %v466 = vld [vmem:[%s319 + $0x228] sm:$0xff]
        %v467 = vld [vmem:[%s319 + $0x230] sm:$0xff]
        %v468 = vld [vmem:[%s319 + $0x238] sm:$0xff]
        %v469 = vld [vmem:[%s319 + $0x240] sm:$0xff]
        %v470 = vld [vmem:[%s319 + $0x248] sm:$0xff]
        %v471 = vld [vmem:[%s319 + $0x250] sm:$0xff]
        %v472 = vld [vmem:[%s319 + $0x258] sm:$0xff]
        %v473 = vld [vmem:[%s319 + $0x260] sm:$0xff]
        %v474 = vld [vmem:[%s319 + $0x268] sm:$0xff]
        %v475 = vld [vmem:[%s319 + $0x270] sm:$0xff]
        %v476 = vld [vmem:[%s319 + $0x278] sm:$0xff]
        %v477 = vld [vmem:[%s319 + $0x280] sm:$0xff]
        %v478 = vld [vmem:[%s319 + $0x288] sm:$0xff]
        %v479 = vld [vmem:[%s319 + $0x290] sm:$0xff]
        %v480 = vld [vmem:[%s319 + $0x298] sm:$0xff]
        %v481 = vld [vmem:[%s319 + $0x2a0] sm:$0xff]
        %v482 = vld [vmem:[%s319 + $0x2a8] sm:$0xff]
        %v483 = vld [vmem:[%s319 + $0x2b0] sm:$0xff]
        %v484 = vld [vmem:[%s319 + $0x2b8] sm:$0xff]
        %v485 = vld [vmem:[%s319 + $0x2c0] sm:$0xff]
        %v486 = vld [vmem:[%s319 + $0x2c8] sm:$0xff]
        %v487 = vld [vmem:[%s319 + $0x2d0] sm:$0xff]
        %v488 = vld [vmem:[%s319 + $0x2d8] sm:$0xff]
        %v489 = vld [vmem:[%s319 + $0x2e0] sm:$0xff]
        %v490 = vld [vmem:[%s319 + $0x2e8] sm:$0xff]
        %v491 = vld [vmem:[%s319 + $0x2f0] sm:$0xff]
        %v492 = vld [vmem:[%s319 + $0x2f8] sm:$0xff]
        %v493 = vld [vmem:[%s319 + $0x300] sm:$0xff]
        %v494 = vld [vmem:[%s319 + $0x308] sm:$0xff]
        %v495 = vld [vmem:[%s319 + $0x310] sm:$0xff]
        %v496 = vld [vmem:[%s319 + $0x318] sm:$0xff]
        %v497 = vld [vmem:[%s319 + $0x320] sm:$0xff]
        %v498 = vld [vmem:[%s319 + $0x328] sm:$0xff]
        %v499 = vld [vmem:[%s319 + $0x330] sm:$0xff]
        %v500 = vld [vmem:[%s319 + $0x338] sm:$0xff]
        %v501 = vld [vmem:[%s319 + $0x340] sm:$0xff]
        %v502 = vld [vmem:[%s319 + $0x348] sm:$0xff]
        %v503 = vld [vmem:[%s319 + $0x350] sm:$0xff]
        %v504 = vld [vmem:[%s319 + $0x358] sm:$0xff]
        %v505 = vld [vmem:[%s319 + $0x360] sm:$0xff]
        %v506 = vld [vmem:[%s319 + $0x368] sm:$0xff]
        %v507 = vld [vmem:[%s319 + $0x370] sm:$0xff]
        %v508 = vld [vmem:[%s319 + $0x378] sm:$0xff]
        %v509 = vld [vmem:[%s319 + $0x380] sm:$0xff]
        %v510 = vld [vmem:[%s319 + $0x388] sm:$0xff]
        %v511 = vld [vmem:[%s319 + $0x390] sm:$0xff]
        %v512 = vld [vmem:[%s319 + $0x398] sm:$0xff]
        %v513 = vld [vmem:[%s319 + $0x3a0] sm:$0xff]
        %v514 = vld [vmem:[%s319 + $0x3a8] sm:$0xff]
        %v515 = vld [vmem:[%s319 + $0x3b0] sm:$0xff]
        %v516 = vld [vmem:[%s319 + $0x3b8] sm:$0xff]
        %v517 = vld [vmem:[%s319 + $0x3c0] sm:$0xff]
        %v518 = vld [vmem:[%s319 + $0x3c8] sm:$0xff]
        %v519 = vld [vmem:[%s319 + $0x3d0] sm:$0xff]
        %v520 = vld [vmem:[%s319 + $0x3d8] sm:$0xff]
        %v521 = vld [vmem:[%s319 + $0x3e0] sm:$0xff]
        %v522 = vld [vmem:[%s319 + $0x3e8] sm:$0xff]
        %v523 = vld [vmem:[%s319 + $0x3f0] sm:$0xff]
        %v524 = vld [vmem:[%s319 + $0x3f8] sm:$0xff]
        %v525 = vld [vmem:[%s319 + $0x400] sm:$0xff]
        %v526 = vld [vmem:[%s319 + $0x408] sm:$0xff]
        %v527 = vld [vmem:[%s319 + $0x410] sm:$0xff]
        %v528 = vld [vmem:[%s319 + $0x418] sm:$0xff]
        %v529 = vld [vmem:[%s319 + $0x420] sm:$0xff]
        %v530 = vld [vmem:[%s319 + $0x428] sm:$0xff]
        %v531 = vld [vmem:[%s319 + $0x430] sm:$0xff]
        %v532 = vld [vmem:[%s319 + $0x438] sm:$0xff]
        %v533 = vld [vmem:[%s319 + $0x440] sm:$0xff]
        %v534 = vld [vmem:[%s319 + $0x448] sm:$0xff]
        %v535 = vld [vmem:[%s319 + $0x450] sm:$0xff]
        %v536 = vld [vmem:[%s319 + $0x458] sm:$0xff]
        %v537 = vld [vmem:[%s319 + $0x460] sm:$0xff]
        %v538 = vld [vmem:[%s319 + $0x468] sm:$0xff]
        %v539 = vld [vmem:[%s319 + $0x470] sm:$0xff]
        %v540 = vld [vmem:[%s319 + $0x478] sm:$0xff]
        %v541 = vld [vmem:[%s319 + $0x480] sm:$0xff]
        %v542 = vld [vmem:[%s319 + $0x488] sm:$0xff]
        %v543 = vld [vmem:[%s319 + $0x490] sm:$0xff]
        %v544 = vld [vmem:[%s319 + $0x498] sm:$0xff]
        %v545 = vld [vmem:[%s319 + $0x4a0] sm:$0xff]
        %v546 = vld [vmem:[%s319 + $0x4a8] sm:$0xff]
        %v547 = vld [vmem:[%s319 + $0x4b0] sm:$0xff]
        %v548 = vld [vmem:[%s319 + $0x4b8] sm:$0xff]
        %v549 = vld [vmem:[%s319 + $0x4c0] sm:$0xff]
        %v550 = vld [vmem:[%s319 + $0x4c8] sm:$0xff]
        %v551 = vld [vmem:[%s319 + $0x4d0] sm:$0xff]
        %v552 = vld [vmem:[%s319 + $0x4d8] sm:$0xff]
        %v553 = vld [vmem:[%s319 + $0x4e0] sm:$0xff]
        %v554 = vld [vmem:[%s319 + $0x4e8] sm:$0xff]
        %v555 = vld [vmem:[%s319 + $0x4f0] sm:$0xff]
        %v556 = vld [vmem:[%s319 + $0x4f8] sm:$0xff]
        %v557 = vld [vmem:[%s319 + $0x500] sm:$0xff]
        %v558 = vld [vmem:[%s319 + $0x508] sm:$0xff]
        %v559 = vld [vmem:[%s319 + $0x510] sm:$0xff]
        %v560 = vld [vmem:[%s319 + $0x518] sm:$0xff]
        %v561 = vld [vmem:[%s319 + $0x520] sm:$0xff]
        %v562 = vld [vmem:[%s319 + $0x528] sm:$0xff]
        %v563 = vld [vmem:[%s319 + $0x530] sm:$0xff]
        %v564 = vld [vmem:[%s319 + $0x538] sm:$0xff]
        %v565 = vld [vmem:[%s319 + $0x540] sm:$0xff]
        %v566 = vld [vmem:[%s319 + $0x548] sm:$0xff]
        %v567 = vld [vmem:[%s319 + $0x550] sm:$0xff]
        %v568 = vld [vmem:[%s319 + $0x558] sm:$0xff]
        %v569 = vld [vmem:[%s319 + $0x560] sm:$0xff]
        %v570 = vld [vmem:[%s319 + $0x568] sm:$0xff]
        %v571 = vld [vmem:[%s319 + $0x570] sm:$0xff]
        %v572 = vld [vmem:[%s319 + $0x578] sm:$0xff]
        %v573 = vld [vmem:[%s319 + $0x580] sm:$0xff]
        %v574 = vld [vmem:[%s319 + $0x588] sm:$0xff]
        %v575 = vld [vmem:[%s319 + $0x590] sm:$0xff]
        %v576 = vld [vmem:[%s319 + $0x598] sm:$0xff]
        %v577 = vld [vmem:[%s319 + $0x5a0] sm:$0xff]
        %v578 = vld [vmem:[%s319 + $0x5a8] sm:$0xff]
        %v579 = vld [vmem:[%s319 + $0x5b0] sm:$0xff]
        %v580 = vld [vmem:[%s319 + $0x5b8] sm:$0xff]
        %v581 = vld [vmem:[%s319 + $0x5c0] sm:$0xff]
        %v582 = vld [vmem:[%s319 + $0x5c8] sm:$0xff]
        %v583 = vld [vmem:[%s319 + $0x5d0] sm:$0xff]
        %v584 = vld [vmem:[%s319 + $0x5d8] sm:$0xff]
        %v585 = vld [vmem:[%s319 + $0x5e0] sm:$0xff]
        %v586 = vld [vmem:[%s319 + $0x5e8] sm:$0xff]
        %v587 = vld [vmem:[%s319 + $0x5f0] sm:$0xff]
        %v588 = vld [vmem:[%s319 + $0x5f8] sm:$0xff]
        %v589 = vld [vmem:[%s319 + $0x600] sm:$0xff]
        %v590 = vld [vmem:[%s319 + $0x608] sm:$0xff]
        %v591 = vld [vmem:[%s319 + $0x610] sm:$0xff]
        %v592 = vld [vmem:[%s319 + $0x618] sm:$0xff]
        %v593 = vld [vmem:[%s319 + $0x620] sm:$0xff]
        %v594 = vld [vmem:[%s319 + $0x628] sm:$0xff]
        %v595 = vld [vmem:[%s319 + $0x630] sm:$0xff]
        %v596 = vld [vmem:[%s319 + $0x638] sm:$0xff]
        %v597 = vld [vmem:[%s319 + $0x640] sm:$0xff]
        %v598 = vld [vmem:[%s319 + $0x648] sm:$0xff]
        %v599 = vld [vmem:[%s319 + $0x650] sm:$0xff]
        %v600 = vld [vmem:[%s319 + $0x658] sm:$0xff]
        %v601 = vld [vmem:[%s319 + $0x660] sm:$0xff]
        %v602 = vld [vmem:[%s319 + $0x668] sm:$0xff]
        %v603 = vld [vmem:[%s319 + $0x670] sm:$0xff]
        %v604 = vld [vmem:[%s319 + $0x678] sm:$0xff]
        %v605 = vld [vmem:[%s319 + $0x680] sm:$0xff]
        %v606 = vld [vmem:[%s319 + $0x688] sm:$0xff]
        %v607 = vld [vmem:[%s319 + $0x690] sm:$0xff]
        %v608 = vld [vmem:[%s319 + $0x698] sm:$0xff]
        %v609 = vld [vmem:[%s319 + $0x6a0] sm:$0xff]
        %v610 = vld [vmem:[%s319 + $0x6a8] sm:$0xff]
        %v611 = vld [vmem:[%s319 + $0x6b0] sm:$0xff]
        %v612 = vld [vmem:[%s319 + $0x6b8] sm:$0xff]
        %v613 = vld [vmem:[%s319 + $0x6c0] sm:$0xff]
        %v614 = vld [vmem:[%s319 + $0x6c8] sm:$0xff]
        %v615 = vld [vmem:[%s319 + $0x6d0] sm:$0xff]
        %v616 = vld [vmem:[%s319 + $0x6d8] sm:$0xff]
        %v617 = vld [vmem:[%s319 + $0x6e0] sm:$0xff]
        %v618 = vld [vmem:[%s319 + $0x6e8] sm:$0xff]
        %v619 = vld [vmem:[%s319 + $0x6f0] sm:$0xff]
        %v620 = vld [vmem:[%s319 + $0x6f8] sm:$0xff]
        %v621 = vld [vmem:[%s319 + $0x700] sm:$0xff]
        %v622 = vld [vmem:[%s319 + $0x708] sm:$0xff]
        %v623 = vld [vmem:[%s319 + $0x710] sm:$0xff]
        %v624 = vld [vmem:[%s319 + $0x718] sm:$0xff]
        %v625 = vld [vmem:[%s319 + $0x720] sm:$0xff]
        %v626 = vld [vmem:[%s319 + $0x728] sm:$0xff]
        %v627 = vld [vmem:[%s319 + $0x730] sm:$0xff]
        %v628 = vld [vmem:[%s319 + $0x738] sm:$0xff]
        %v629 = vld [vmem:[%s319 + $0x740] sm:$0xff]
        %v630 = vld [vmem:[%s319 + $0x748] sm:$0xff]
        %v631 = vld [vmem:[%s319 + $0x750] sm:$0xff]
        %v632 = vld [vmem:[%s319 + $0x758] sm:$0xff]
        %v633 = vld [vmem:[%s319 + $0x760] sm:$0xff]
        %v634 = vld [vmem:[%s319 + $0x768] sm:$0xff]
        %v635 = vld [vmem:[%s319 + $0x770] sm:$0xff]
        %v636 = vld [vmem:[%s319 + $0x778] sm:$0xff]
        %v637 = vld [vmem:[%s319 + $0x780] sm:$0xff]
        %v638 = vld [vmem:[%s319 + $0x788] sm:$0xff]
        %v639 = vld [vmem:[%s319 + $0x790] sm:$0xff]
        %v640 = vld [vmem:[%s319 + $0x798] sm:$0xff]
        %v641 = vld [vmem:[%s319 + $0x7a0] sm:$0xff]
        %v642 = vld [vmem:[%s319 + $0x7a8] sm:$0xff]
        %v643 = vld [vmem:[%s319 + $0x7b0] sm:$0xff]
        %v644 = vld [vmem:[%s319 + $0x7b8] sm:$0xff]
        %v645 = vld [vmem:[%s319 + $0x7c0] sm:$0xff]
        %v646 = vld [vmem:[%s319 + $0x7c8] sm:$0xff]
        %v647 = vld [vmem:[%s319 + $0x7d0] sm:$0xff]
        %v648 = vld [vmem:[%s319 + $0x7d8] sm:$0xff]
        %v649 = vld [vmem:[%s319 + $0x7e0] sm:$0xff]
        %v650 = vld [vmem:[%s319 + $0x7e8] sm:$0xff]
        %v651 = vld [vmem:[%s319 + $0x7f0] sm:$0xff]
        %v652 = vld [vmem:[%s319 + $0x7f8] sm:$0xff]
        %v653 = vld [vmem:[%s319 + $0x800] sm:$0xff]
        %v654 = vld [vmem:[%s319 + $0x808] sm:$0xff]
        %v655 = vld [vmem:[%s319 + $0x810] sm:$0xff]
        %v656 = vld [vmem:[%s319 + $0x818] sm:$0xff]
        %v657 = vld [vmem:[%s319 + $0x820] sm:$0xff]
        %v658 = vld [vmem:[%s319 + $0x828] sm:$0xff]
        %v659 = vld [vmem:[%s319 + $0x830] sm:$0xff]
        %v660 = vld [vmem:[%s319 + $0x838] sm:$0xff]
        %v661 = vld [vmem:[%s319 + $0x840] sm:$0xff]
        %v662 = vld [vmem:[%s319 + $0x848] sm:$0xff]
        %v663 = vld [vmem:[%s319 + $0x850] sm:$0xff]
        %v664 = vld [vmem:[%s319 + $0x858] sm:$0xff]
        %v665 = vld [vmem:[%s319 + $0x860] sm:$0xff]
        %v666 = vld [vmem:[%s319 + $0x868] sm:$0xff]
        %v667 = vld [vmem:[%s319 + $0x870] sm:$0xff]
        %v668 = vld [vmem:[%s319 + $0x878] sm:$0xff]
        %v669 = vld [vmem:[%s319 + $0x880] sm:$0xff]
        %v670 = vld [vmem:[%s319 + $0x888] sm:$0xff]
        %v671 = vld [vmem:[%s319 + $0x890] sm:$0xff]
        %v672 = vld [vmem:[%s319 + $0x898] sm:$0xff]
        %v673 = vld [vmem:[%s319 + $0x8a0] sm:$0xff]
        %v674 = vld [vmem:[%s319 + $0x8a8] sm:$0xff]
        %v675 = vld [vmem:[%s319 + $0x8b0] sm:$0xff]
        %v676 = vld [vmem:[%s319 + $0x8b8] sm:$0xff]
        %v677 = vld [vmem:[%s319 + $0x8c0] sm:$0xff]
        %v678 = vld [vmem:[%s319 + $0x8c8] sm:$0xff]
        %v679 = vld [vmem:[%s319 + $0x8d0] sm:$0xff]
        %v680 = vld [vmem:[%s319 + $0x8d8] sm:$0xff]
        %v681 = vld [vmem:[%s319 + $0x8e0] sm:$0xff]
        %v682 = vld [vmem:[%s319 + $0x8e8] sm:$0xff]
        %v683 = vld [vmem:[%s319 + $0x8f0] sm:$0xff]
        %v684 = vld [vmem:[%s319 + $0x8f8] sm:$0xff]
        %v685 = vld [vmem:[%s319 + $0x900] sm:$0xff]
        %v686 = vld [vmem:[%s319 + $0x908] sm:$0xff]
        %v687 = vld [vmem:[%s319 + $0x910] sm:$0xff]
        %v688 = vld [vmem:[%s319 + $0x918] sm:$0xff]
        %v689 = vld [vmem:[%s319 + $0x920] sm:$0xff]
        %v690 = vld [vmem:[%s319 + $0x928] sm:$0xff]
        %v691 = vld [vmem:[%s319 + $0x930] sm:$0xff]
        %v692 = vld [vmem:[%s319 + $0x938] sm:$0xff]
        %v693 = vld [vmem:[%s319 + $0x940] sm:$0xff]
        %v694 = vld [vmem:[%s319 + $0x948] sm:$0xff]
        %v695 = vld [vmem:[%s319 + $0x950] sm:$0xff]
        %v696 = vld [vmem:[%s319 + $0x958] sm:$0xff]
        %v697 = vld [vmem:[%s319 + $0x960] sm:$0xff]
        %v698 = vld [vmem:[%s319 + $0x968] sm:$0xff]
        %v699 = vld [vmem:[%s319 + $0x970] sm:$0xff]
        %v700 = vld [vmem:[%s319 + $0x978] sm:$0xff]
        %v701 = vld [vmem:[%s319 + $0x980] sm:$0xff]
        %v702 = vld [vmem:[%s319 + $0x988] sm:$0xff]
        %v703 = vld [vmem:[%s319 + $0x990] sm:$0xff]
        %v704 = vld [vmem:[%s319 + $0x998] sm:$0xff]
        %v705 = vld [vmem:[%s319 + $0x9a0] sm:$0xff]
        %v706 = vld [vmem:[%s319 + $0x9a8] sm:$0xff]
        %v707 = vld [vmem:[%s319 + $0x9b0] sm:$0xff]
        %v708 = vld [vmem:[%s319 + $0x9b8] sm:$0xff]
        %v709 = vld [vmem:[%s319 + $0x9c0] sm:$0xff]
        %v710 = vld [vmem:[%s319 + $0x9c8] sm:$0xff]
        %v711 = vld [vmem:[%s319 + $0x9d0] sm:$0xff]
        %v712 = vld [vmem:[%s319 + $0x9d8] sm:$0xff]
        %v713 = vld [vmem:[%s319 + $0x9e0] sm:$0xff]
        %v714 = vld [vmem:[%s319 + $0x9e8] sm:$0xff]
        %v715 = vld [vmem:[%s319 + $0x9f0] sm:$0xff]
        %v716 = vld [vmem:[%s319 + $0x9f8] sm:$0xff]
        %v717 = vld [vmem:[%s319 + $0xa00] sm:$0xff]
        %v718 = vld [vmem:[%s319 + $0xa08] sm:$0xff]
        %v719 = vld [vmem:[%s319 + $0xa10] sm:$0xff]
        %v720 = vld [vmem:[%s319 + $0xa18] sm:$0xff]
        %v721 = vld [vmem:[%s319 + $0xa20] sm:$0xff]
        %v722 = vld [vmem:[%s319 + $0xa28] sm:$0xff]
        %v723 = vld [vmem:[%s319 + $0xa30] sm:$0xff]
        %v724 = vld [vmem:[%s319 + $0xa38] sm:$0xff]
        %v725 = vld [vmem:[%s319 + $0xa40] sm:$0xff]
        %v726 = vld [vmem:[%s319 + $0xa48] sm:$0xff]
        %v727 = vld [vmem:[%s319 + $0xa50] sm:$0xff]
        %v728 = vld [vmem:[%s319 + $0xa58] sm:$0xff]
        %v729 = vld [vmem:[%s319 + $0xa60] sm:$0xff]
        %v730 = vld [vmem:[%s319 + $0xa68] sm:$0xff]
        %v731 = vld [vmem:[%s319 + $0xa70] sm:$0xff]
        %v732 = vld [vmem:[%s319 + $0xa78] sm:$0xff]
        %v733 = vld [vmem:[%s319 + $0xa80] sm:$0xff]
        %v734 = vld [vmem:[%s319 + $0xa88] sm:$0xff]
        %v735 = vld [vmem:[%s319 + $0xa90] sm:$0xff]
        %v736 = vld [vmem:[%s319 + $0xa98] sm:$0xff]
        %v737 = vld [vmem:[%s319 + $0xaa0] sm:$0xff]
        %v738 = vld [vmem:[%s319 + $0xaa8] sm:$0xff]
        %v739 = vld [vmem:[%s319 + $0xab0] sm:$0xff]
        %v740 = vld [vmem:[%s319 + $0xab8] sm:$0xff]
        %v741 = vld [vmem:[%s319 + $0xac0] sm:$0xff]
        %v742 = vld [vmem:[%s319 + $0xac8] sm:$0xff]
        %v743 = vld [vmem:[%s319 + $0xad0] sm:$0xff]
        %v744 = vld [vmem:[%s319 + $0xad8] sm:$0xff]
        %v745 = vld [vmem:[%s319 + $0xae0] sm:$0xff]
        %v746 = vld [vmem:[%s319 + $0xae8] sm:$0xff]
        %v747 = vld [vmem:[%s319 + $0xaf0] sm:$0xff]
        %v748 = vld [vmem:[%s319 + $0xaf8] sm:$0xff]
        %v749 = vld [vmem:[%s319 + $0xb00] sm:$0xff]
        %v750 = vld [vmem:[%s319 + $0xb08] sm:$0xff]
        %v751 = vld [vmem:[%s319 + $0xb10] sm:$0xff]
        %v752 = vld [vmem:[%s319 + $0xb18] sm:$0xff]
        %v753 = vld [vmem:[%s319 + $0xb20] sm:$0xff]
        %v754 = vld [vmem:[%s319 + $0xb28] sm:$0xff]
        %v755 = vld [vmem:[%s319 + $0xb30] sm:$0xff]
        %v756 = vld [vmem:[%s319 + $0xb38] sm:$0xff]
        %v757 = vld [vmem:[%s319 + $0xb40] sm:$0xff]
        %v758 = vld [vmem:[%s319 + $0xb48] sm:$0xff]
        %v759 = vld [vmem:[%s319 + $0xb50] sm:$0xff]
        %v760 = vld [vmem:[%s319 + $0xb58] sm:$0xff]
        %v761 = vld [vmem:[%s319 + $0xb60] sm:$0xff]
        %v762 = vld [vmem:[%s319 + $0xb68] sm:$0xff]
        %v763 = vld [vmem:[%s319 + $0xb70] sm:$0xff]
        %v764 = vld [vmem:[%s319 + $0xb78] sm:$0xff]
        %v765 = vld [vmem:[%s319 + $0xb80] sm:$0xff]
        %v766 = vld [vmem:[%s319 + $0xb88] sm:$0xff]
        %v767 = vld [vmem:[%s319 + $0xb90] sm:$0xff]
        %v768 = vld [vmem:[%s319 + $0xb98] sm:$0xff]
        %v769 = vld [vmem:[%s319 + $0xba0] sm:$0xff]
        %v770 = vld [vmem:[%s319 + $0xba8] sm:$0xff]
        %v771 = vld [vmem:[%s319 + $0xbb0] sm:$0xff]
        %v772 = vld [vmem:[%s319 + $0xbb8] sm:$0xff]
        %v773 = vld [vmem:[%s319 + $0xbc0] sm:$0xff]
        %v774 = vld [vmem:[%s319 + $0xbc8] sm:$0xff]
        %v775 = vld [vmem:[%s319 + $0xbd0] sm:$0xff]
        %v776 = vld [vmem:[%s319 + $0xbd8] sm:$0xff]
        %v777 = vld [vmem:[%s319 + $0xbe0] sm:$0xff]
        %v778 = vld [vmem:[%s319 + $0xbe8] sm:$0xff]
        %v779 = vld [vmem:[%s319 + $0xbf0] sm:$0xff]
        %v780 = vld [vmem:[%s319 + $0xbf8] sm:$0xff]
        %v781 = vld [vmem:[%s319 + $0xc00] sm:$0xff]
        %v782 = vld [vmem:[%s319 + $0xc08] sm:$0xff]
        %v783 = vld [vmem:[%s319 + $0xc10] sm:$0xff]
        %v784 = vld [vmem:[%s319 + $0xc18] sm:$0xff]
        %v785 = vld [vmem:[%s319 + $0xc20] sm:$0xff]
        %v786 = vld [vmem:[%s319 + $0xc28] sm:$0xff]
        %v787 = vld [vmem:[%s319 + $0xc30] sm:$0xff]
        %v788 = vld [vmem:[%s319 + $0xc38] sm:$0xff]
        %v789 = vld [vmem:[%s319 + $0xc40] sm:$0xff]
        %v790 = vld [vmem:[%s319 + $0xc48] sm:$0xff]
        %v791 = vld [vmem:[%s319 + $0xc50] sm:$0xff]
        %v792 = vld [vmem:[%s319 + $0xc58] sm:$0xff]
        %v793 = vld [vmem:[%s319 + $0xc60] sm:$0xff]
        %v794 = vld [vmem:[%s319 + $0xc68] sm:$0xff]
        %v795 = vld [vmem:[%s319 + $0xc70] sm:$0xff]
        %v796 = vld [vmem:[%s319 + $0xc78] sm:$0xff]
        %v797 = vld [vmem:[%s319 + $0xc80] sm:$0xff]
        %v798 = vld [vmem:[%s319 + $0xc88] sm:$0xff]
        %v799 = vld [vmem:[%s319 + $0xc90] sm:$0xff]
        %v800 = vld [vmem:[%s319 + $0xc98] sm:$0xff]
        %v801 = vld [vmem:[%s319 + $0xca0] sm:$0xff]
        %v802 = vld [vmem:[%s319 + $0xca8] sm:$0xff]
        %v803 = vld [vmem:[%s319 + $0xcb0] sm:$0xff]
        %v804 = vld [vmem:[%s319 + $0xcb8] sm:$0xff]
        %v805 = vld [vmem:[%s319 + $0xcc0] sm:$0xff]
        %v806 = vld [vmem:[%s319 + $0xcc8] sm:$0xff]
        %v807 = vld [vmem:[%s319 + $0xcd0] sm:$0xff]
        %v808 = vld [vmem:[%s319 + $0xcd8] sm:$0xff]
        %v809 = vld [vmem:[%s319 + $0xce0] sm:$0xff]
        %v810 = vld [vmem:[%s319 + $0xce8] sm:$0xff]
        %v811 = vld [vmem:[%s319 + $0xcf0] sm:$0xff]
        %v812 = vld [vmem:[%s319 + $0xcf8] sm:$0xff]
        %v813 = vld [vmem:[%s319 + $0xd00] sm:$0xff]
        %v814 = vld [vmem:[%s319 + $0xd08] sm:$0xff]
        %v815 = vld [vmem:[%s319 + $0xd10] sm:$0xff]
        %v816 = vld [vmem:[%s319 + $0xd18] sm:$0xff]
        %v817 = vld [vmem:[%s319 + $0xd20] sm:$0xff]
        %v818 = vld [vmem:[%s319 + $0xd28] sm:$0xff]
        %v819 = vld [vmem:[%s319 + $0xd30] sm:$0xff]
        %v820 = vld [vmem:[%s319 + $0xd38] sm:$0xff]
        %v821 = vld [vmem:[%s319 + $0xd40] sm:$0xff]
        %v822 = vld [vmem:[%s319 + $0xd48] sm:$0xff]
        %v823 = vld [vmem:[%s319 + $0xd50] sm:$0xff]
        %v824 = vld [vmem:[%s319 + $0xd58] sm:$0xff]
        %v825 = vld [vmem:[%s319 + $0xd60] sm:$0xff]
        %v826 = vld [vmem:[%s319 + $0xd68] sm:$0xff]
        %v827 = vld [vmem:[%s319 + $0xd70] sm:$0xff]
        %v828 = vld [vmem:[%s319 + $0xd78] sm:$0xff]
        %v829 = vld [vmem:[%s319 + $0xd80] sm:$0xff]
        %v830 = vld [vmem:[%s319 + $0xd88] sm:$0xff]
        %v831 = vld [vmem:[%s319 + $0xd90] sm:$0xff]
        %v832 = vld [vmem:[%s319 + $0xd98] sm:$0xff]
        %v833 = vld [vmem:[%s319 + $0xda0] sm:$0xff]
        %v834 = vld [vmem:[%s319 + $0xda8] sm:$0xff]
        %v835 = vld [vmem:[%s319 + $0xdb0] sm:$0xff]
        %v836 = vld [vmem:[%s319 + $0xdb8] sm:$0xff]
        %v837 = vld [vmem:[%s319 + $0xdc0] sm:$0xff]
        %v838 = vld [vmem:[%s319 + $0xdc8] sm:$0xff]
        %v839 = vld [vmem:[%s319 + $0xdd0] sm:$0xff]
        %v840 = vld [vmem:[%s319 + $0xdd8] sm:$0xff]
        %v841 = vld [vmem:[%s319 + $0xde0] sm:$0xff]
        %v842 = vld [vmem:[%s319 + $0xde8] sm:$0xff]
        %v843 = vld [vmem:[%s319 + $0xdf0] sm:$0xff]
        %v844 = vld [vmem:[%s319 + $0xdf8] sm:$0xff]
        %v845 = vld [vmem:[%s319 + $0xe00] sm:$0xff]
        %v846 = vld [vmem:[%s319 + $0xe08] sm:$0xff]
        %v847 = vld [vmem:[%s319 + $0xe10] sm:$0xff]
        %v848 = vld [vmem:[%s319 + $0xe18] sm:$0xff]
        %v849 = vld [vmem:[%s319 + $0xe20] sm:$0xff]
        %v850 = vld [vmem:[%s319 + $0xe28] sm:$0xff]
        %v851 = vld [vmem:[%s319 + $0xe30] sm:$0xff]
        %v852 = vld [vmem:[%s319 + $0xe38] sm:$0xff]
        %v853 = vld [vmem:[%s319 + $0xe40] sm:$0xff]
        %v854 = vld [vmem:[%s319 + $0xe48] sm:$0xff]
        %v855 = vld [vmem:[%s319 + $0xe50] sm:$0xff]
        %v856 = vld [vmem:[%s319 + $0xe58] sm:$0xff]
        %v857 = vld [vmem:[%s319 + $0xe60] sm:$0xff]
        %v858 = vld [vmem:[%s319 + $0xe68] sm:$0xff]
        %v859 = vld [vmem:[%s319 + $0xe70] sm:$0xff]
        %v860 = vld [vmem:[%s319 + $0xe78] sm:$0xff]
        %v861 = vld [vmem:[%s319 + $0xe80] sm:$0xff]
        %v862 = vld [vmem:[%s319 + $0xe88] sm:$0xff]
        %v863 = vld [vmem:[%s319 + $0xe90] sm:$0xff]
        %v864 = vld [vmem:[%s319 + $0xe98] sm:$0xff]
        %v865 = vld [vmem:[%s319 + $0xea0] sm:$0xff]
        %v866 = vld [vmem:[%s319 + $0xea8] sm:$0xff]
        %v867 = vld [vmem:[%s319 + $0xeb0] sm:$0xff]
        %v868 = vld [vmem:[%s319 + $0xeb8] sm:$0xff]
        %v869 = vld [vmem:[%s319 + $0xec0] sm:$0xff]
        %v870 = vld [vmem:[%s319 + $0xec8] sm:$0xff]
        %v871 = vld [vmem:[%s319 + $0xed0] sm:$0xff]
        %v872 = vld [vmem:[%s319 + $0xed8] sm:$0xff]
        %v873 = vld [vmem:[%s319 + $0xee0] sm:$0xff]
        %v874 = vld [vmem:[%s319 + $0xee8] sm:$0xff]
        %v875 = vld [vmem:[%s319 + $0xef0] sm:$0xff]
        %v876 = vld [vmem:[%s319 + $0xef8] sm:$0xff]
        %v877 = vld [vmem:[%s319 + $0xf00] sm:$0xff]
        %v878 = vld [vmem:[%s319 + $0xf08] sm:$0xff]
        %v879 = vld [vmem:[%s319 + $0xf10] sm:$0xff]
        %v880 = vld [vmem:[%s319 + $0xf18] sm:$0xff]
        %v881 = vld [vmem:[%s319 + $0xf20] sm:$0xff]
        %v882 = vld [vmem:[%s319 + $0xf28] sm:$0xff]
        %v883 = vld [vmem:[%s319 + $0xf30] sm:$0xff]
        %v884 = vld [vmem:[%s319 + $0xf38] sm:$0xff]
        %v885 = vld [vmem:[%s319 + $0xf40] sm:$0xff]
        %v886 = vld [vmem:[%s319 + $0xf48] sm:$0xff]
        %v887 = vld [vmem:[%s319 + $0xf50] sm:$0xff]
        %v888 = vld [vmem:[%s319 + $0xf58] sm:$0xff]
        %v889 = vld [vmem:[%s319 + $0xf60] sm:$0xff]
        %v890 = vld [vmem:[%s319 + $0xf68] sm:$0xff]
        %v891 = vld [vmem:[%s319 + $0xf70] sm:$0xff]
        %v892 = vld [vmem:[%s319 + $0xf78] sm:$0xff]
        %v893 = vld [vmem:[%s319 + $0xf80] sm:$0xff]
        %v894 = vld [vmem:[%s319 + $0xf88] sm:$0xff]
        %v895 = vld [vmem:[%s319 + $0xf90] sm:$0xff]
        %v896 = vld [vmem:[%s319 + $0xf98] sm:$0xff]
        %v897 = vld [vmem:[%s319 + $0xfa0] sm:$0xff]
        %v898 = vld [vmem:[%s319 + $0xfa8] sm:$0xff]
        %v899 = vld [vmem:[%s319 + $0xfb0] sm:$0xff]
        %v900 = vld [vmem:[%s319 + $0xfb8] sm:$0xff]
        %v901 = vld [vmem:[%s319 + $0xfc0] sm:$0xff]
        %v902 = vld [vmem:[%s319 + $0xfc8] sm:$0xff]
        %v903 = vld [vmem:[%s319 + $0xfd0] sm:$0xff]
        %v904 = vld [vmem:[%s319 + $0xfd8] sm:$0xff]
        %v905 = vld [vmem:[%s319 + $0xfe0] sm:$0xff]
        %v906 = vld [vmem:[%s319 + $0xfe8] sm:$0xff]
        %v907 = vld [vmem:[%s319 + $0xff0] sm:$0xff]
        %v908 = vld [vmem:[%s319 + $0xff8] sm:$0xff]
        %v909 = vld [vmem:[%s319 + $0x1000] sm:$0xff]
        %v910 = vld [vmem:[%s319 + $0x1008] sm:$0xff]
        %v911 = vld [vmem:[%s319 + $0x1010] sm:$0xff]
        %v912 = vld [vmem:[%s319 + $0x1018] sm:$0xff]
        %v913 = vld [vmem:[%s319 + $0x1020] sm:$0xff]
        %v914 = vld [vmem:[%s319 + $0x1028] sm:$0xff]
        %v915 = vld [vmem:[%s319 + $0x1030] sm:$0xff]
        %v916 = vld [vmem:[%s319 + $0x1038] sm:$0xff]
        %v917 = vld [vmem:[%s319 + $0x1040] sm:$0xff]
        %v918 = vld [vmem:[%s319 + $0x1048] sm:$0xff]
        %v919 = vld [vmem:[%s319 + $0x1050] sm:$0xff]
        %v920 = vld [vmem:[%s319 + $0x1058] sm:$0xff]
        %v921 = vld [vmem:[%s319 + $0x1060] sm:$0xff]
        %v922 = vld [vmem:[%s319 + $0x1068] sm:$0xff]
        %v923 = vld [vmem:[%s319 + $0x1070] sm:$0xff]
        %v924 = vld [vmem:[%s319 + $0x1078] sm:$0xff]
        %v925 = vld [vmem:[%s319 + $0x1080] sm:$0xff]
        %v926 = vld [vmem:[%s319 + $0x1088] sm:$0xff]
        %v927 = vld [vmem:[%s319 + $0x1090] sm:$0xff]
        %v928 = vld [vmem:[%s319 + $0x1098] sm:$0xff]
        %v929 = vld [vmem:[%s319 + $0x10a0] sm:$0xff]
        %v930 = vld [vmem:[%s319 + $0x10a8] sm:$0xff]
        %v931 = vld [vmem:[%s319 + $0x10b0] sm:$0xff]
        %v932 = vld [vmem:[%s319 + $0x10b8] sm:$0xff]
        %v933 = vld [vmem:[%s319 + $0x10c0] sm:$0xff]
        %v934 = vld [vmem:[%s319 + $0x10c8] sm:$0xff]
        %v935 = vld [vmem:[%s319 + $0x10d0] sm:$0xff]
        %v936 = vld [vmem:[%s319 + $0x10d8] sm:$0xff]
        %v937 = vld [vmem:[%s319 + $0x10e0] sm:$0xff]
        %v938 = vld [vmem:[%s319 + $0x10e8] sm:$0xff]
        %v939 = vld [vmem:[%s319 + $0x10f0] sm:$0xff]
        %v940 = vld [vmem:[%s319 + $0x10f8] sm:$0xff]
        %v941 = vld [vmem:[%s319 + $0x1100] sm:$0xff]
        %v942 = vld [vmem:[%s319 + $0x1108] sm:$0xff]
        %v943 = vld [vmem:[%s319 + $0x1110] sm:$0xff]
        %v944 = vld [vmem:[%s319 + $0x1118] sm:$0xff]
        %v945 = vld [vmem:[%s319 + $0x1120] sm:$0xff]
        %v946 = vld [vmem:[%s319 + $0x1128] sm:$0xff]
        %v947 = vld [vmem:[%s319 + $0x1130] sm:$0xff]
        %v948 = vld [vmem:[%s319 + $0x1138] sm:$0xff]
        %v949 = vld [vmem:[%s319 + $0x1140] sm:$0xff]
        %v950 = vld [vmem:[%s319 + $0x1148] sm:$0xff]
        %v951 = vld [vmem:[%s319 + $0x1150] sm:$0xff]
        %v952 = vld [vmem:[%s319 + $0x1158] sm:$0xff]
        %v953 = vld [vmem:[%s319 + $0x1160] sm:$0xff]
        %v954 = vld [vmem:[%s319 + $0x1168] sm:$0xff]
        %v955 = vld [vmem:[%s319 + $0x1170] sm:$0xff]
        %v956 = vld [vmem:[%s319 + $0x1178] sm:$0xff]
        %v957 = vld [vmem:[%s319 + $0x1180] sm:$0xff]
        %v958 = vld [vmem:[%s319 + $0x1188] sm:$0xff]
        %v959 = vld [vmem:[%s319 + $0x1190] sm:$0xff]
        %v960 = vld [vmem:[%s319 + $0x1198] sm:$0xff]
        %v961 = vld [vmem:[%s319 + $0x11a0] sm:$0xff]
        %v962 = vld [vmem:[%s319 + $0x11a8] sm:$0xff]
        %v963 = vld [vmem:[%s319 + $0x11b0] sm:$0xff]
        %v964 = vld [vmem:[%s319 + $0x11b8] sm:$0xff]
        %v965 = vld [vmem:[%s319 + $0x11c0] sm:$0xff]
        %v966 = vld [vmem:[%s319 + $0x11c8] sm:$0xff]
        %v967 = vld [vmem:[%s319 + $0x11d0] sm:$0xff]
        %v968 = vld [vmem:[%s319 + $0x11d8] sm:$0xff]
        %v969 = vld [vmem:[%s319 + $0x11e0] sm:$0xff]
        %v970 = vld [vmem:[%s319 + $0x11e8] sm:$0xff]
        %v971 = vld [vmem:[%s319 + $0x11f0] sm:$0xff]
        %v972 = vld [vmem:[%s319 + $0x11f8] sm:$0xff]
        %v973 = vld [vmem:[%s319 + $0x1200] sm:$0xff]
        %v974 = vld [vmem:[%s319 + $0x1208] sm:$0xff]
        %v975 = vld [vmem:[%s319 + $0x1210] sm:$0xff]
        %v976 = vld [vmem:[%s319 + $0x1218] sm:$0xff]
        %v977 = vld [vmem:[%s319 + $0x1220] sm:$0xff]
        %v978 = vld [vmem:[%s319 + $0x1228] sm:$0xff]
        %v979 = vld [vmem:[%s319 + $0x1230] sm:$0xff]
        %v980 = vld [vmem:[%s319 + $0x1238] sm:$0xff]
        %v981 = vld [vmem:[%s319 + $0x1240] sm:$0xff]
        %v982 = vld [vmem:[%s319 + $0x1248] sm:$0xff]
        %v983 = vld [vmem:[%s319 + $0x1250] sm:$0xff]
        %v984 = vld [vmem:[%s319 + $0x1258] sm:$0xff]
        %v985 = vld [vmem:[%s319 + $0x1260] sm:$0xff]
        %v986 = vld [vmem:[%s319 + $0x1268] sm:$0xff]
        %v987 = vld [vmem:[%s319 + $0x1270] sm:$0xff]
        %v988 = vld [vmem:[%s319 + $0x1278] sm:$0xff]
        %v989 = vld [vmem:[%s319 + $0x1280] sm:$0xff]
        %v990 = vld [vmem:[%s319 + $0x1288] sm:$0xff]
        %v991 = vld [vmem:[%s319 + $0x1290] sm:$0xff]
        %v992 = vld [vmem:[%s319 + $0x1298] sm:$0xff]
        %v993 = vld [vmem:[%s319 + $0x12a0] sm:$0xff]
        %v994 = vld [vmem:[%s319 + $0x12a8] sm:$0xff]
        %v995 = vld [vmem:[%s319 + $0x12b0] sm:$0xff]
        %v996 = vld [vmem:[%s319 + $0x12b8] sm:$0xff]
        %v997 = vld [vmem:[%s319 + $0x12c0] sm:$0xff]
        %v998 = vld [vmem:[%s319 + $0x12c8] sm:$0xff]
        %v999 = vld [vmem:[%s319 + $0x12d0] sm:$0xff]
        %v1000 = vld [vmem:[%s319 + $0x12d8] sm:$0xff]
        %v1001 = vld [vmem:[%s319 + $0x12e0] sm:$0xff]
        %v1002 = vld [vmem:[%s319 + $0x12e8] sm:$0xff]
        %v1003 = vld [vmem:[%s319 + $0x12f0] sm:$0xff]
        %v1004 = vld [vmem:[%s319 + $0x12f8] sm:$0xff]
        %v1005 = vld [vmem:[%s319 + $0x1300] sm:$0xff]
        %v1006 = vld [vmem:[%s319 + $0x1308] sm:$0xff]
        %v1007 = vld [vmem:[%s319 + $0x1310] sm:$0xff]
        %v1008 = vld [vmem:[%s319 + $0x1318] sm:$0xff]
        %v1009 = vld [vmem:[%s319 + $0x1320] sm:$0xff]
        %v1010 = vld [vmem:[%s319 + $0x1328] sm:$0xff]
        %v1011 = vld [vmem:[%s319 + $0x1330] sm:$0xff]
        %v1012 = vld [vmem:[%s319 + $0x1338] sm:$0xff]
        %v1013 = vld [vmem:[%s319 + $0x1340] sm:$0xff]
        %v1014 = vld [vmem:[%s319 + $0x1348] sm:$0xff]
        %v1015 = vld [vmem:[%s319 + $0x1350] sm:$0xff]
        %v1016 = vld [vmem:[%s319 + $0x1358] sm:$0xff]
        %v1017 = vld [vmem:[%s319 + $0x1360] sm:$0xff]
        %v1018 = vld [vmem:[%s319 + $0x1368] sm:$0xff]
        %v1019 = vld [vmem:[%s319 + $0x1370] sm:$0xff]
        %v1020 = vld [vmem:[%s319 + $0x1378] sm:$0xff]
        %v1021 = vld [vmem:[%s319 + $0x1380] sm:$0xff]
        %v1022 = vld [vmem:[%s319 + $0x1388] sm:$0xff]
        %v1023 = vld [vmem:[%s319 + $0x1390] sm:$0xff]
        %v1024 = vld [vmem:[%s319 + $0x1398] sm:$0xff]
        %v1025 = vld [vmem:[%s319 + $0x13a0] sm:$0xff]
        %v1026 = vld [vmem:[%s319 + $0x13a8] sm:$0xff]
        %v1027 = vld [vmem:[%s319 + $0x13b0] sm:$0xff]
        %v1028 = vld [vmem:[%s319 + $0x13b8] sm:$0xff]
        %v1029 = vld [vmem:[%s319 + $0x13c0] sm:$0xff]
        %v1030 = vld [vmem:[%s319 + $0x13c8] sm:$0xff]
        %v1031 = vld [vmem:[%s319 + $0x13d0] sm:$0xff]
        %v1032 = vld [vmem:[%s319 + $0x13d8] sm:$0xff]
        %v1033 = vld [vmem:[%s319 + $0x13e0] sm:$0xff]
        %v1034 = vld [vmem:[%s319 + $0x13e8] sm:$0xff]
        %v1035 = vld [vmem:[%s319 + $0x13f0] sm:$0xff]
        %v1036 = vld [vmem:[%s319 + $0x13f8] sm:$0xff]
        %v1037 = vld [vmem:[%s319 + $0x1400] sm:$0xff]
        %v1038 = vld [vmem:[%s319 + $0x1408] sm:$0xff]
        %v1039 = vld [vmem:[%s319 + $0x1410] sm:$0xff]
        %v1040 = vld [vmem:[%s319 + $0x1418] sm:$0xff]
        %v1041 = vld [vmem:[%s319 + $0x1420] sm:$0xff]
        %v1042 = vld [vmem:[%s319 + $0x1428] sm:$0xff]
        %v1043 = vld [vmem:[%s319 + $0x1430] sm:$0xff]
        %v1044 = vld [vmem:[%s319 + $0x1438] sm:$0xff]
        %v1045 = vld [vmem:[%s319 + $0x1440] sm:$0xff]
        %v1046 = vld [vmem:[%s319 + $0x1448] sm:$0xff]
        %v1047 = vld [vmem:[%s319 + $0x1450] sm:$0xff]
        %v1048 = vld [vmem:[%s319 + $0x1458] sm:$0xff]
        %v1049 = vld [vmem:[%s319 + $0x1460] sm:$0xff]
        %v1050 = vld [vmem:[%s319 + $0x1468] sm:$0xff]
        %v1051 = vld [vmem:[%s319 + $0x1470] sm:$0xff]
        %v1052 = vld [vmem:[%s319 + $0x1478] sm:$0xff]
        %v1053 = vld [vmem:[%s319 + $0x1480] sm:$0xff]
        %v1054 = vld [vmem:[%s319 + $0x1488] sm:$0xff]
        %v1055 = vld [vmem:[%s319 + $0x1490] sm:$0xff]
        %v1056 = vld [vmem:[%s319 + $0x1498] sm:$0xff]
        %v1057 = vld [vmem:[%s319 + $0x14a0] sm:$0xff]
        %v1058 = vld [vmem:[%s319 + $0x14a8] sm:$0xff]
        %v1059 = vld [vmem:[%s319 + $0x14b0] sm:$0xff]
        %v1060 = vld [vmem:[%s319 + $0x14b8] sm:$0xff]
        %v1061 = vld [vmem:[%s319 + $0x14c0] sm:$0xff]
        %v1062 = vld [vmem:[%s319 + $0x14c8] sm:$0xff]
        %v1063 = vld [vmem:[%s319 + $0x14d0] sm:$0xff]
        %v1064 = vld [vmem:[%s319 + $0x14d8] sm:$0xff]
        %v1065 = vld [vmem:[%s319 + $0x14e0] sm:$0xff]
        %v1066 = vld [vmem:[%s319 + $0x14e8] sm:$0xff]
        %v1067 = vld [vmem:[%s319 + $0x14f0] sm:$0xff]
        %v1068 = vld [vmem:[%s319 + $0x14f8] sm:$0xff]
        %v1069 = vld [vmem:[%s319 + $0x1500] sm:$0xff]
        %v1070 = vld [vmem:[%s319 + $0x1508] sm:$0xff]
        %v1071 = vld [vmem:[%s319 + $0x1510] sm:$0xff]
        %v1072 = vld [vmem:[%s319 + $0x1518] sm:$0xff]
        %v1073 = vld [vmem:[%s319 + $0x1520] sm:$0xff]
        %v1074 = vld [vmem:[%s319 + $0x1528] sm:$0xff]
        %v1075 = vld [vmem:[%s319 + $0x1530] sm:$0xff]
        %v1076 = vld [vmem:[%s319 + $0x1538] sm:$0xff]
        %v1077 = vld [vmem:[%s319 + $0x1540] sm:$0xff]
        %v1078 = vld [vmem:[%s319 + $0x1548] sm:$0xff]
        %v1079 = vld [vmem:[%s319 + $0x1550] sm:$0xff]
        %v1080 = vld [vmem:[%s319 + $0x1558] sm:$0xff]
        %v1081 = vld [vmem:[%s319 + $0x1560] sm:$0xff]
        %v1082 = vld [vmem:[%s319 + $0x1568] sm:$0xff]
        %v1083 = vld [vmem:[%s319 + $0x1570] sm:$0xff]
        %v1084 = vld [vmem:[%s319 + $0x1578] sm:$0xff]
        %v1085 = vld [vmem:[%s319 + $0x1580] sm:$0xff]
        %v1086 = vld [vmem:[%s319 + $0x1588] sm:$0xff]
        %v1087 = vld [vmem:[%s319 + $0x1590] sm:$0xff]
        %v1088 = vld [vmem:[%s319 + $0x1598] sm:$0xff]
        %v1089 = vld [vmem:[%s319 + $0x15a0] sm:$0xff]
        %v1090 = vld [vmem:[%s319 + $0x15a8] sm:$0xff]
        %v1091 = vld [vmem:[%s319 + $0x15b0] sm:$0xff]
        %v1092 = vld [vmem:[%s319 + $0x15b8] sm:$0xff]
        %v1093 = vld [vmem:[%s319 + $0x15c0] sm:$0xff]
        %v1094 = vld [vmem:[%s319 + $0x15c8] sm:$0xff]
        %v1095 = vld [vmem:[%s319 + $0x15d0] sm:$0xff]
        %v1096 = vld [vmem:[%s319 + $0x15d8] sm:$0xff]
        %v1097 = vld [vmem:[%s319 + $0x15e0] sm:$0xff]
        %v1098 = vld [vmem:[%s319 + $0x15e8] sm:$0xff]
        %v1099 = vld [vmem:[%s319 + $0x15f0] sm:$0xff]
        %v1100 = vld [vmem:[%s319 + $0x15f8] sm:$0xff]
        %v1101 = vld [vmem:[%s319 + $0x1600] sm:$0xff]
        %v1102 = vld [vmem:[%s319 + $0x1608] sm:$0xff]
        %v1103 = vld [vmem:[%s319 + $0x1610] sm:$0xff]
        %v1104 = vld [vmem:[%s319 + $0x1618] sm:$0xff]
        %v1105 = vld [vmem:[%s319 + $0x1620] sm:$0xff]
        %v1106 = vld [vmem:[%s319 + $0x1628] sm:$0xff]
        %v1107 = vld [vmem:[%s319 + $0x1630] sm:$0xff]
        %v1108 = vld [vmem:[%s319 + $0x1638] sm:$0xff]
        %v1109 = vld [vmem:[%s319 + $0x1640] sm:$0xff]
        %v1110 = vld [vmem:[%s319 + $0x1648] sm:$0xff]
        %v1111 = vld [vmem:[%s319 + $0x1650] sm:$0xff]
        %v1112 = vld [vmem:[%s319 + $0x1658] sm:$0xff]
        %v1113 = vld [vmem:[%s319 + $0x1660] sm:$0xff]
        %v1114 = vld [vmem:[%s319 + $0x1668] sm:$0xff]
        %v1115 = vld [vmem:[%s319 + $0x1670] sm:$0xff]
        %v1116 = vld [vmem:[%s319 + $0x1678] sm:$0xff]
        %v1117 = vld [vmem:[%s319 + $0x1680] sm:$0xff]
        %v1118 = vld [vmem:[%s319 + $0x1688] sm:$0xff]
        %v1119 = vld [vmem:[%s319 + $0x1690] sm:$0xff]
        %v1120 = vld [vmem:[%s319 + $0x1698] sm:$0xff]
        %v1121 = vld [vmem:[%s319 + $0x16a0] sm:$0xff]
        %v1122 = vld [vmem:[%s319 + $0x16a8] sm:$0xff]
        %v1123 = vld [vmem:[%s319 + $0x16b0] sm:$0xff]
        %v1124 = vld [vmem:[%s319 + $0x16b8] sm:$0xff]
        %v1125 = vld [vmem:[%s319 + $0x16c0] sm:$0xff]
        %v1126 = vld [vmem:[%s319 + $0x16c8] sm:$0xff]
        %v1127 = vld [vmem:[%s319 + $0x16d0] sm:$0xff]
        %v1128 = vld [vmem:[%s319 + $0x16d8] sm:$0xff]
        %v1129 = vld [vmem:[%s319 + $0x16e0] sm:$0xff]
        %v1130 = vld [vmem:[%s319 + $0x16e8] sm:$0xff]
        %v1131 = vld [vmem:[%s319 + $0x16f0] sm:$0xff]
        %v1132 = vld [vmem:[%s319 + $0x16f8] sm:$0xff]
        %v1133 = vld [vmem:[%s319 + $0x1700] sm:$0xff]
        %v1134 = vld [vmem:[%s319 + $0x1708] sm:$0xff]
        %v1135 = vld [vmem:[%s319 + $0x1710] sm:$0xff]
        %v1136 = vld [vmem:[%s319 + $0x1718] sm:$0xff]
        %v1137 = vld [vmem:[%s319 + $0x1720] sm:$0xff]
        %v1138 = vld [vmem:[%s319 + $0x1728] sm:$0xff]
        %v1139 = vld [vmem:[%s319 + $0x1730] sm:$0xff]
        %v1140 = vld [vmem:[%s319 + $0x1738] sm:$0xff]
        %v1141 = vld [vmem:[%s319 + $0x1740] sm:$0xff]
        %v1142 = vld [vmem:[%s319 + $0x1748] sm:$0xff]
        %v1143 = vld [vmem:[%s319 + $0x1750] sm:$0xff]
        %v1144 = vld [vmem:[%s319 + $0x1758] sm:$0xff]
        %v1145 = vld [vmem:[%s319 + $0x1760] sm:$0xff]
        %v1146 = vld [vmem:[%s319 + $0x1768] sm:$0xff]
        %v1147 = vld [vmem:[%s319 + $0x1770] sm:$0xff]
        %v1148 = vld [vmem:[%s319 + $0x1778] sm:$0xff]
        %v1149 = vld [vmem:[%s319 + $0x1780] sm:$0xff]
        %v1150 = vld [vmem:[%s319 + $0x1788] sm:$0xff]
        %v1151 = vld [vmem:[%s319 + $0x1790] sm:$0xff]
        %v1152 = vld [vmem:[%s319 + $0x1798] sm:$0xff]
        %v1153 = vld [vmem:[%s319 + $0x17a0] sm:$0xff]
        %v1154 = vld [vmem:[%s319 + $0x17a8] sm:$0xff]
        %v1155 = vld [vmem:[%s319 + $0x17b0] sm:$0xff]
        %v1156 = vld [vmem:[%s319 + $0x17b8] sm:$0xff]
        %v1157 = vld [vmem:[%s319 + $0x17c0] sm:$0xff]
        %v1158 = vld [vmem:[%s319 + $0x17c8] sm:$0xff]
        %v1159 = vld [vmem:[%s319 + $0x17d0] sm:$0xff]
        %v1160 = vld [vmem:[%s319 + $0x17d8] sm:$0xff]
        %v1161 = vld [vmem:[%s319 + $0x17e0] sm:$0xff]
        %v1162 = vld [vmem:[%s319 + $0x17e8] sm:$0xff]
        %v1163 = vld [vmem:[%s319 + $0x17f0] sm:$0xff]
        %v1164 = vld [vmem:[%s319 + $0x17f8] sm:$0xff]
        %v1165 = vld [vmem:[%s319 + $0x1800] sm:$0xff]
        %v1166 = vld [vmem:[%s319 + $0x1808] sm:$0xff]
        %v1167 = vld [vmem:[%s319 + $0x1810] sm:$0xff]
        %v1168 = vld [vmem:[%s319 + $0x1818] sm:$0xff]
        %v1169 = vld [vmem:[%s319 + $0x1820] sm:$0xff]
        %v1170 = vld [vmem:[%s319 + $0x1828] sm:$0xff]
        %v1171 = vld [vmem:[%s319 + $0x1830] sm:$0xff]
        %v1172 = vld [vmem:[%s319 + $0x1838] sm:$0xff]
        %v1173 = vld [vmem:[%s319 + $0x1840] sm:$0xff]
        %v1174 = vld [vmem:[%s319 + $0x1848] sm:$0xff]
        %v1175 = vld [vmem:[%s319 + $0x1850] sm:$0xff]
        %v1176 = vld [vmem:[%s319 + $0x1858] sm:$0xff]
        %v1177 = vld [vmem:[%s319 + $0x1860] sm:$0xff]
        %v1178 = vld [vmem:[%s319 + $0x1868] sm:$0xff]
        %v1179 = vld [vmem:[%s319 + $0x1870] sm:$0xff]
        %v1180 = vld [vmem:[%s319 + $0x1878] sm:$0xff]
        %v1181 = vld [vmem:[%s319 + $0x1880] sm:$0xff]
        %v1182 = vld [vmem:[%s319 + $0x1888] sm:$0xff]
        %v1183 = vld [vmem:[%s319 + $0x1890] sm:$0xff]
        %v1184 = vld [vmem:[%s319 + $0x1898] sm:$0xff]
        %v1185 = vld [vmem:[%s319 + $0x18a0] sm:$0xff]
        %v1186 = vld [vmem:[%s319 + $0x18a8] sm:$0xff]
        %v1187 = vld [vmem:[%s319 + $0x18b0] sm:$0xff]
        %v1188 = vld [vmem:[%s319 + $0x18b8] sm:$0xff]
        %v1189 = vld [vmem:[%s319 + $0x18c0] sm:$0xff]
        %v1190 = vld [vmem:[%s319 + $0x18c8] sm:$0xff]
        %v1191 = vld [vmem:[%s319 + $0x18d0] sm:$0xff]
        %v1192 = vld [vmem:[%s319 + $0x18d8] sm:$0xff]
        %v1193 = vld [vmem:[%s319 + $0x18e0] sm:$0xff]
        %v1194 = vld [vmem:[%s319 + $0x18e8] sm:$0xff]
        %v1195 = vld [vmem:[%s319 + $0x18f0] sm:$0xff]
        %v1196 = vld [vmem:[%s319 + $0x18f8] sm:$0xff]
        %v1197 = vld [vmem:[%s319 + $0x1900] sm:$0xff]
        %v1198 = vld [vmem:[%s319 + $0x1908] sm:$0xff]
        %v1199 = vld [vmem:[%s319 + $0x1910] sm:$0xff]
        %v1200 = vld [vmem:[%s319 + $0x1918] sm:$0xff]
        %v1201 = vld [vmem:[%s319 + $0x1920] sm:$0xff]
        %v1202 = vld [vmem:[%s319 + $0x1928] sm:$0xff]
        %v1203 = vld [vmem:[%s319 + $0x1930] sm:$0xff]
        %v1204 = vld [vmem:[%s319 + $0x1938] sm:$0xff]
        %v1205 = vld [vmem:[%s319 + $0x1940] sm:$0xff]
        %v1206 = vld [vmem:[%s319 + $0x1948] sm:$0xff]
        %v1207 = vld [vmem:[%s319 + $0x1950] sm:$0xff]
        %v1208 = vld [vmem:[%s319 + $0x1958] sm:$0xff]
        %v1209 = vld [vmem:[%s319 + $0x1960] sm:$0xff]
        %v1210 = vld [vmem:[%s319 + $0x1968] sm:$0xff]
        %v1211 = vld [vmem:[%s319 + $0x1970] sm:$0xff]
        %v1212 = vld [vmem:[%s319 + $0x1978] sm:$0xff]
        %v1213 = vld [vmem:[%s319 + $0x1980] sm:$0xff]
        %v1214 = vld [vmem:[%s319 + $0x1988] sm:$0xff]
        %v1215 = vld [vmem:[%s319 + $0x1990] sm:$0xff]
        %v1216 = vld [vmem:[%s319 + $0x1998] sm:$0xff]
        %v1217 = vld [vmem:[%s319 + $0x19a0] sm:$0xff]
        %v1218 = vld [vmem:[%s319 + $0x19a8] sm:$0xff]
        %v1219 = vld [vmem:[%s319 + $0x19b0] sm:$0xff]
        %v1220 = vld [vmem:[%s319 + $0x19b8] sm:$0xff]
        %v1221 = vld [vmem:[%s319 + $0x19c0] sm:$0xff]
        %v1222 = vld [vmem:[%s319 + $0x19c8] sm:$0xff]
        %v1223 = vld [vmem:[%s319 + $0x19d0] sm:$0xff]
        %v1224 = vld [vmem:[%s319 + $0x19d8] sm:$0xff]
        %v1225 = vld [vmem:[%s319 + $0x19e0] sm:$0xff]
        %v1226 = vld [vmem:[%s319 + $0x19e8] sm:$0xff]
        %v1227 = vld [vmem:[%s319 + $0x19f0] sm:$0xff]
        %v1228 = vld [vmem:[%s319 + $0x19f8] sm:$0xff]
        %v1229 = vld [vmem:[%s319 + $0x1a00] sm:$0xff]
        %v1230 = vld [vmem:[%s319 + $0x1a08] sm:$0xff]
        %v1231 = vld [vmem:[%s319 + $0x1a10] sm:$0xff]
        %v1232 = vld [vmem:[%s319 + $0x1a18] sm:$0xff]
        %v1233 = vld [vmem:[%s319 + $0x1a20] sm:$0xff]
        %v1234 = vld [vmem:[%s319 + $0x1a28] sm:$0xff]
        %v1235 = vld [vmem:[%s319 + $0x1a30] sm:$0xff]
        %v1236 = vld [vmem:[%s319 + $0x1a38] sm:$0xff]
        %v1237 = vld [vmem:[%s319 + $0x1a40] sm:$0xff]
        %v1238 = vld [vmem:[%s319 + $0x1a48] sm:$0xff]
        %v1239 = vld [vmem:[%s319 + $0x1a50] sm:$0xff]
        %v1240 = vld [vmem:[%s319 + $0x1a58] sm:$0xff]
        %v1241 = vld [vmem:[%s319 + $0x1a60] sm:$0xff]
        %v1242 = vld [vmem:[%s319 + $0x1a68] sm:$0xff]
        %v1243 = vld [vmem:[%s319 + $0x1a70] sm:$0xff]
        %v1244 = vld [vmem:[%s319 + $0x1a78] sm:$0xff]
        %v1245 = vld [vmem:[%s319 + $0x1a80] sm:$0xff]
        %v1246 = vld [vmem:[%s319 + $0x1a88] sm:$0xff]
        %v1247 = vld [vmem:[%s319 + $0x1a90] sm:$0xff]
        %v1248 = vld [vmem:[%s319 + $0x1a98] sm:$0xff]
        %v1249 = vld [vmem:[%s319 + $0x1aa0] sm:$0xff]
        %v1250 = vld [vmem:[%s319 + $0x1aa8] sm:$0xff]
        %v1251 = vld [vmem:[%s319 + $0x1ab0] sm:$0xff]
        %v1252 = vld [vmem:[%s319 + $0x1ab8] sm:$0xff]
        %v1253 = vld [vmem:[%s319 + $0x1ac0] sm:$0xff]
        %v1254 = vld [vmem:[%s319 + $0x1ac8] sm:$0xff]
        %v1255 = vld [vmem:[%s319 + $0x1ad0] sm:$0xff]
        %v1256 = vld [vmem:[%s319 + $0x1ad8] sm:$0xff]
        %v1257 = vld [vmem:[%s319 + $0x1ae0] sm:$0xff]
        %v1258 = vld [vmem:[%s319 + $0x1ae8] sm:$0xff]
        %v1259 = vld [vmem:[%s319 + $0x1af0] sm:$0xff]
        %v1260 = vld [vmem:[%s319 + $0x1af8] sm:$0xff]
        %v1261 = vld [vmem:[%s319 + $0x1b00] sm:$0xff]
        %v1262 = vld [vmem:[%s319 + $0x1b08] sm:$0xff]
        %v1263 = vld [vmem:[%s319 + $0x1b10] sm:$0xff]
        %v1264 = vld [vmem:[%s319 + $0x1b18] sm:$0xff]
        %v1265 = vld [vmem:[%s319 + $0x1b20] sm:$0xff]
        %v1266 = vld [vmem:[%s319 + $0x1b28] sm:$0xff]
        %v1267 = vld [vmem:[%s319 + $0x1b30] sm:$0xff]
        %v1268 = vld [vmem:[%s319 + $0x1b38] sm:$0xff]
        %v1269 = vld [vmem:[%s319 + $0x1b40] sm:$0xff]
        %v1270 = vld [vmem:[%s319 + $0x1b48] sm:$0xff]
        %v1271 = vld [vmem:[%s319 + $0x1b50] sm:$0xff]
        %v1272 = vld [vmem:[%s319 + $0x1b58] sm:$0xff]
        %v1273 = vld [vmem:[%s319 + $0x1b60] sm:$0xff]
        %v1274 = vld [vmem:[%s319 + $0x1b68] sm:$0xff]
        %v1275 = vld [vmem:[%s319 + $0x1b70] sm:$0xff]
        %v1276 = vld [vmem:[%s319 + $0x1b78] sm:$0xff]
        %v1277 = vld [vmem:[%s319 + $0x1b80] sm:$0xff]
        %v1278 = vld [vmem:[%s319 + $0x1b88] sm:$0xff]
        %v1279 = vld [vmem:[%s319 + $0x1b90] sm:$0xff]
        %v1280 = vld [vmem:[%s319 + $0x1b98] sm:$0xff]
        %v1281 = vld [vmem:[%s319 + $0x1ba0] sm:$0xff]
        %v1282 = vld [vmem:[%s319 + $0x1ba8] sm:$0xff]
        %v1283 = vld [vmem:[%s319 + $0x1bb0] sm:$0xff]
        %v1284 = vld [vmem:[%s319 + $0x1bb8] sm:$0xff]
        %v1285 = vld [vmem:[%s319 + $0x1bc0] sm:$0xff]
        %v1286 = vld [vmem:[%s319 + $0x1bc8] sm:$0xff]
        %v1287 = vld [vmem:[%s319 + $0x1bd0] sm:$0xff]
        %v1288 = vld [vmem:[%s319 + $0x1bd8] sm:$0xff]
        %v1289 = vld [vmem:[%s319 + $0x1be0] sm:$0xff]
        %v1290 = vld [vmem:[%s319 + $0x1be8] sm:$0xff]
        %v1291 = vld [vmem:[%s319 + $0x1bf0] sm:$0xff]
        %v1292 = vld [vmem:[%s319 + $0x1bf8] sm:$0xff]
        %v1293 = vld [vmem:[%s319 + $0x1c00] sm:$0xff]
        %v1294 = vld [vmem:[%s319 + $0x1c08] sm:$0xff]
        %v1295 = vld [vmem:[%s319 + $0x1c10] sm:$0xff]
        %v1296 = vld [vmem:[%s319 + $0x1c18] sm:$0xff]
        %v1297 = vld [vmem:[%s319 + $0x1c20] sm:$0xff]
        %v1298 = vld [vmem:[%s319 + $0x1c28] sm:$0xff]
        %v1299 = vld [vmem:[%s319 + $0x1c30] sm:$0xff]
        %v1300 = vld [vmem:[%s319 + $0x1c38] sm:$0xff]
        %v1301 = vld [vmem:[%s319 + $0x1c40] sm:$0xff]
        %v1302 = vld [vmem:[%s319 + $0x1c48] sm:$0xff]
        %v1303 = vld [vmem:[%s319 + $0x1c50] sm:$0xff]
        %v1304 = vld [vmem:[%s319 + $0x1c58] sm:$0xff]
        %v1305 = vld [vmem:[%s319 + $0x1c60] sm:$0xff]
        %v1306 = vld [vmem:[%s319 + $0x1c68] sm:$0xff]
        %v1307 = vld [vmem:[%s319 + $0x1c70] sm:$0xff]
        %v1308 = vld [vmem:[%s319 + $0x1c78] sm:$0xff]
        %v1309 = vld [vmem:[%s319 + $0x1c80] sm:$0xff]
        %v1310 = vld [vmem:[%s319 + $0x1c88] sm:$0xff]
        %v1311 = vld [vmem:[%s319 + $0x1c90] sm:$0xff]
        %v1312 = vld [vmem:[%s319 + $0x1c98] sm:$0xff]
        %v1313 = vld [vmem:[%s319 + $0x1ca0] sm:$0xff]
        %v1314 = vld [vmem:[%s319 + $0x1ca8] sm:$0xff]
        %v1315 = vld [vmem:[%s319 + $0x1cb0] sm:$0xff]
        %v1316 = vld [vmem:[%s319 + $0x1cb8] sm:$0xff]
        %v1317 = vld [vmem:[%s319 + $0x1cc0] sm:$0xff]
        %v1318 = vld [vmem:[%s319 + $0x1cc8] sm:$0xff]
        %v1319 = vld [vmem:[%s319 + $0x1cd0] sm:$0xff]
        %v1320 = vld [vmem:[%s319 + $0x1cd8] sm:$0xff]
        %v1321 = vld [vmem:[%s319 + $0x1ce0] sm:$0xff]
        %v1322 = vld [vmem:[%s319 + $0x1ce8] sm:$0xff]
        %v1323 = vld [vmem:[%s319 + $0x1cf0] sm:$0xff]
        %v1324 = vld [vmem:[%s319 + $0x1cf8] sm:$0xff]
        %v1325 = vld [vmem:[%s319 + $0x1d00] sm:$0xff]
        %v1326 = vld [vmem:[%s319 + $0x1d08] sm:$0xff]
        %v1327 = vld [vmem:[%s319 + $0x1d10] sm:$0xff]
        %v1328 = vld [vmem:[%s319 + $0x1d18] sm:$0xff]
        %v1329 = vld [vmem:[%s319 + $0x1d20] sm:$0xff]
        %v1330 = vld [vmem:[%s319 + $0x1d28] sm:$0xff]
        %v1331 = vld [vmem:[%s319 + $0x1d30] sm:$0xff]
        %v1332 = vld [vmem:[%s319 + $0x1d38] sm:$0xff]
        %v1333 = vld [vmem:[%s319 + $0x1d40] sm:$0xff]
        %v1334 = vld [vmem:[%s319 + $0x1d48] sm:$0xff]
        %v1335 = vld [vmem:[%s319 + $0x1d50] sm:$0xff]
        %v1336 = vld [vmem:[%s319 + $0x1d58] sm:$0xff]
        %v1337 = vld [vmem:[%s319 + $0x1d60] sm:$0xff]
        %v1338 = vld [vmem:[%s319 + $0x1d68] sm:$0xff]
        %v1339 = vld [vmem:[%s319 + $0x1d70] sm:$0xff]
        %v1340 = vld [vmem:[%s319 + $0x1d78] sm:$0xff]
        %v1341 = vld [vmem:[%s319 + $0x1d80] sm:$0xff]
        %v1342 = vld [vmem:[%s319 + $0x1d88] sm:$0xff]
        %v1343 = vld [vmem:[%s319 + $0x1d90] sm:$0xff]
        %v1344 = vld [vmem:[%s319 + $0x1d98] sm:$0xff]
        %v1345 = vld [vmem:[%s319 + $0x1da0] sm:$0xff]
        %v1346 = vld [vmem:[%s319 + $0x1da8] sm:$0xff]
        %v1347 = vld [vmem:[%s319 + $0x1db0] sm:$0xff]
        %v1348 = vld [vmem:[%s319 + $0x1db8] sm:$0xff]
        %v1349 = vld [vmem:[%s319 + $0x1dc0] sm:$0xff]
        %v1350 = vld [vmem:[%s319 + $0x1dc8] sm:$0xff]
        %v1351 = vld [vmem:[%s319 + $0x1dd0] sm:$0xff]
        %v1352 = vld [vmem:[%s319 + $0x1dd8] sm:$0xff]
        %v1353 = vld [vmem:[%s319 + $0x1de0] sm:$0xff]
        %v1354 = vld [vmem:[%s319 + $0x1de8] sm:$0xff]
        %v1355 = vld [vmem:[%s319 + $0x1df0] sm:$0xff]
        %v1356 = vld [vmem:[%s319 + $0x1df8] sm:$0xff]
        %v1357 = vld [vmem:[%s319 + $0x1e00] sm:$0xff]
        %v1358 = vld [vmem:[%s319 + $0x1e08] sm:$0xff]
        %v1359 = vld [vmem:[%s319 + $0x1e10] sm:$0xff]
        %v1360 = vld [vmem:[%s319 + $0x1e18] sm:$0xff]
        %v1361 = vld [vmem:[%s319 + $0x1e20] sm:$0xff]
        %v1362 = vld [vmem:[%s319 + $0x1e28] sm:$0xff]
        %v1363 = vld [vmem:[%s319 + $0x1e30] sm:$0xff]
        %v1364 = vld [vmem:[%s319 + $0x1e38] sm:$0xff]
        %v1365 = vld [vmem:[%s319 + $0x1e40] sm:$0xff]
        %v1366 = vld [vmem:[%s319 + $0x1e48] sm:$0xff]
        %v1367 = vld [vmem:[%s319 + $0x1e50] sm:$0xff]
        %v1368 = vld [vmem:[%s319 + $0x1e58] sm:$0xff]
        %v1369 = vld [vmem:[%s319 + $0x1e60] sm:$0xff]
        %v1370 = vld [vmem:[%s319 + $0x1e68] sm:$0xff]
        %v1371 = vld [vmem:[%s319 + $0x1e70] sm:$0xff]
        %v1372 = vld [vmem:[%s319 + $0x1e78] sm:$0xff]
        %v1373 = vld [vmem:[%s319 + $0x1e80] sm:$0xff]
        %v1374 = vld [vmem:[%s319 + $0x1e88] sm:$0xff]
        %v1375 = vld [vmem:[%s319 + $0x1e90] sm:$0xff]
        %v1376 = vld [vmem:[%s319 + $0x1e98] sm:$0xff]
        %v1377 = vld [vmem:[%s319 + $0x1ea0] sm:$0xff]
        %v1378 = vld [vmem:[%s319 + $0x1ea8] sm:$0xff]
        %v1379 = vld [vmem:[%s319 + $0x1eb0] sm:$0xff]
        %v1380 = vld [vmem:[%s319 + $0x1eb8] sm:$0xff]
        %v1381 = vld [vmem:[%s319 + $0x1ec0] sm:$0xff]
        %v1382 = vld [vmem:[%s319 + $0x1ec8] sm:$0xff]
        %v1383 = vld [vmem:[%s319 + $0x1ed0] sm:$0xff]
        %v1384 = vld [vmem:[%s319 + $0x1ed8] sm:$0xff]
        %v1385 = vld [vmem:[%s319 + $0x1ee0] sm:$0xff]
        %v1386 = vld [vmem:[%s319 + $0x1ee8] sm:$0xff]
        %v1387 = vld [vmem:[%s319 + $0x1ef0] sm:$0xff]
        %v1388 = vld [vmem:[%s319 + $0x1ef8] sm:$0xff]
        %v1389 = vld [vmem:[%s319 + $0x1f00] sm:$0xff]
        %v1390 = vld [vmem:[%s319 + $0x1f08] sm:$0xff]
        %v1391 = vld [vmem:[%s319 + $0x1f10] sm:$0xff]
        %v1392 = vld [vmem:[%s319 + $0x1f18] sm:$0xff]
        %v1393 = vld [vmem:[%s319 + $0x1f20] sm:$0xff]
        %v1394 = vld [vmem:[%s319 + $0x1f28] sm:$0xff]
        %v1395 = vld [vmem:[%s319 + $0x1f30] sm:$0xff]
        %v1396 = vld [vmem:[%s319 + $0x1f38] sm:$0xff]
        %v1397 = vld [vmem:[%s319 + $0x1f40] sm:$0xff]
        %v1398 = vld [vmem:[%s319 + $0x1f48] sm:$0xff]
        %v1399 = vld [vmem:[%s319 + $0x1f50] sm:$0xff]
        %v1400 = vld [vmem:[%s319 + $0x1f58] sm:$0xff]
        %v1401 = vld [vmem:[%s319 + $0x1f60] sm:$0xff]
        %v1402 = vld [vmem:[%s319 + $0x1f68] sm:$0xff]
        %v1403 = vld [vmem:[%s319 + $0x1f70] sm:$0xff]
        %v1404 = vld [vmem:[%s319 + $0x1f78] sm:$0xff]
        %v1405 = vld [vmem:[%s319 + $0x1f80] sm:$0xff]
        %v1406 = vld [vmem:[%s319 + $0x1f88] sm:$0xff]
        %v1407 = vld [vmem:[%s319 + $0x1f90] sm:$0xff]
        %v1408 = vld [vmem:[%s319 + $0x1f98] sm:$0xff]
        %v1409 = vld [vmem:[%s319 + $0x1fa0] sm:$0xff]
        %v1410 = vld [vmem:[%s319 + $0x1fa8] sm:$0xff]
        %v1411 = vld [vmem:[%s319 + $0x1fb0] sm:$0xff]
        %v1412 = vld [vmem:[%s319 + $0x1fb8] sm:$0xff]
        %v1413 = vld [vmem:[%s319 + $0x1fc0] sm:$0xff]
        %v1414 = vld [vmem:[%s319 + $0x1fc8] sm:$0xff]
        %v1415 = vld [vmem:[%s319 + $0x1fd0] sm:$0xff]
        %v1416 = vld [vmem:[%s319 + $0x1fd8] sm:$0xff]
        %v1417 = vld [vmem:[%s319 + $0x1fe0] sm:$0xff]
        %v1418 = vld [vmem:[%s319 + $0x1fe8] sm:$0xff]
        %v1419 = vld [vmem:[%s319 + $0x1ff0] sm:$0xff]
        %v1420 = vld [vmem:[%s319 + $0x1ff8] sm:$0xff]
        %v1421 = vld [vmem:[%s319 + $0x2000] sm:$0xff]
        %v1422 = vld [vmem:[%s319 + $0x2008] sm:$0xff]
        %v1423 = vld [vmem:[%s319 + $0x2010] sm:$0xff]
        %v1424 = vld [vmem:[%s319 + $0x2018] sm:$0xff]
        %v1425 = vld [vmem:[%s319 + $0x2020] sm:$0xff]
        %v1426 = vld [vmem:[%s319 + $0x2028] sm:$0xff]
        %v1427 = vld [vmem:[%s319 + $0x2030] sm:$0xff]
        %v1428 = vld [vmem:[%s319 + $0x2038] sm:$0xff]
        %v1429 = vld [vmem:[%s319 + $0x2040] sm:$0xff]
        %v1430 = vld [vmem:[%s319 + $0x2048] sm:$0xff]
        %v1431 = vld [vmem:[%s319 + $0x2050] sm:$0xff]
        %v1432 = vld [vmem:[%s319 + $0x2058] sm:$0xff]
        %v1433 = vld [vmem:[%s319 + $0x2060] sm:$0xff]
        %v1434 = vld [vmem:[%s319 + $0x2068] sm:$0xff]
        %v1435 = vld [vmem:[%s319 + $0x2070] sm:$0xff]
        %v1436 = vld [vmem:[%s319 + $0x2078] sm:$0xff]
        %v1437 = vld [vmem:[%s319 + $0x2080] sm:$0xff]
        %v1438 = vld [vmem:[%s319 + $0x2088] sm:$0xff]
        %v1439 = vld [vmem:[%s319 + $0x2090] sm:$0xff]
        %v1440 = vld [vmem:[%s319 + $0x2098] sm:$0xff]
        %v1441 = vld [vmem:[%s319 + $0x20a0] sm:$0xff]
        %v1442 = vld [vmem:[%s319 + $0x20a8] sm:$0xff]
        %v1443 = vld [vmem:[%s319 + $0x20b0] sm:$0xff]
        %v1444 = vld [vmem:[%s319 + $0x20b8] sm:$0xff]
        %v1445 = vld [vmem:[%s319 + $0x20c0] sm:$0xff]
        %v1446 = vld [vmem:[%s319 + $0x20c8] sm:$0xff]
        %v1447 = vld [vmem:[%s319 + $0x20d0] sm:$0xff]
        %v1448 = vld [vmem:[%s319 + $0x20d8] sm:$0xff]
        %v1449 = vld [vmem:[%s319 + $0x20e0] sm:$0xff]
        %v1450 = vld [vmem:[%s319 + $0x20e8] sm:$0xff]
        %v1451 = vld [vmem:[%s319 + $0x20f0] sm:$0xff]
        %v1452 = vld [vmem:[%s319 + $0x20f8] sm:$0xff]
        %v1453 = vld [vmem:[%s319 + $0x2100] sm:$0xff]
        %v1454 = vld [vmem:[%s319 + $0x2108] sm:$0xff]
        %v1455 = vld [vmem:[%s319 + $0x2110] sm:$0xff]
        %v1456 = vld [vmem:[%s319 + $0x2118] sm:$0xff]
        %v1457 = vld [vmem:[%s319 + $0x2120] sm:$0xff]
        %v1458 = vld [vmem:[%s319 + $0x2128] sm:$0xff]
        %v1459 = vld [vmem:[%s319 + $0x2130] sm:$0xff]
        %v1460 = vld [vmem:[%s319 + $0x2138] sm:$0xff]
        %v1461 = vld [vmem:[%s319 + $0x2140] sm:$0xff]
        %v1462 = vld [vmem:[%s319 + $0x2148] sm:$0xff]
        %v1463 = vld [vmem:[%s319 + $0x2150] sm:$0xff]
        %v1464 = vld [vmem:[%s319 + $0x2158] sm:$0xff]
        %v1465 = vld [vmem:[%s319 + $0x2160] sm:$0xff]
        %v1466 = vld [vmem:[%s319 + $0x2168] sm:$0xff]
        %v1467 = vld [vmem:[%s319 + $0x2170] sm:$0xff]
        %v1468 = vld [vmem:[%s319 + $0x2178] sm:$0xff]
        %v1469 = vld [vmem:[%s319 + $0x2180] sm:$0xff]
        %v1470 = vld [vmem:[%s319 + $0x2188] sm:$0xff]
        %v1471 = vld [vmem:[%s319 + $0x2190] sm:$0xff]
        %v1472 = vld [vmem:[%s319 + $0x2198] sm:$0xff]
        %v1473 = vld [vmem:[%s319 + $0x21a0] sm:$0xff]
        %v1474 = vld [vmem:[%s319 + $0x21a8] sm:$0xff]
        %v1475 = vld [vmem:[%s319 + $0x21b0] sm:$0xff]
        %v1476 = vld [vmem:[%s319 + $0x21b8] sm:$0xff]
        %v1477 = vld [vmem:[%s319 + $0x21c0] sm:$0xff]
        %v1478 = vld [vmem:[%s319 + $0x21c8] sm:$0xff]
        %v1479 = vld [vmem:[%s319 + $0x21d0] sm:$0xff]
        %v1480 = vld [vmem:[%s319 + $0x21d8] sm:$0xff]
        %v1481 = vld [vmem:[%s319 + $0x21e0] sm:$0xff]
        %v1482 = vld [vmem:[%s319 + $0x21e8] sm:$0xff]
        %v1483 = vld [vmem:[%s319 + $0x21f0] sm:$0xff]
        %v1484 = vld [vmem:[%s319 + $0x21f8] sm:$0xff]
        %v1485 = vld [vmem:[%s319 + $0x2200] sm:$0xff]
        %v1486 = vld [vmem:[%s319 + $0x2208] sm:$0xff]
        %v1487 = vld [vmem:[%s319 + $0x2210] sm:$0xff]
        %v1488 = vld [vmem:[%s319 + $0x2218] sm:$0xff]
        %v1489 = vld [vmem:[%s319 + $0x2220] sm:$0xff]
        %v1490 = vld [vmem:[%s319 + $0x2228] sm:$0xff]
        %v1491 = vld [vmem:[%s319 + $0x2230] sm:$0xff]
        %v1492 = vld [vmem:[%s319 + $0x2238] sm:$0xff]
        %v1493 = vld [vmem:[%s319 + $0x2240] sm:$0xff]
        %v1494 = vld [vmem:[%s319 + $0x2248] sm:$0xff]
        %v1495 = vld [vmem:[%s319 + $0x2250] sm:$0xff]
        %v1496 = vld [vmem:[%s319 + $0x2258] sm:$0xff]
        %v1497 = vld [vmem:[%s319 + $0x2260] sm:$0xff]
        %v1498 = vld [vmem:[%s319 + $0x2268] sm:$0xff]
        %v1499 = vld [vmem:[%s319 + $0x2270] sm:$0xff]
        %v1500 = vld [vmem:[%s319 + $0x2278] sm:$0xff]
        %v1501 = vld [vmem:[%s319 + $0x2280] sm:$0xff]
        %v1502 = vld [vmem:[%s319 + $0x2288] sm:$0xff]
        %v1503 = vld [vmem:[%s319 + $0x2290] sm:$0xff]
        %v1504 = vld [vmem:[%s319 + $0x2298] sm:$0xff]
        %v1505 = vld [vmem:[%s319 + $0x22a0] sm:$0xff]
        %v1506 = vld [vmem:[%s319 + $0x22a8] sm:$0xff]
        %v1507 = vld [vmem:[%s319 + $0x22b0] sm:$0xff]
        %v1508 = vld [vmem:[%s319 + $0x22b8] sm:$0xff]
        %v1509 = vld [vmem:[%s319 + $0x22c0] sm:$0xff]
        %v1510 = vld [vmem:[%s319 + $0x22c8] sm:$0xff]
        %v1511 = vld [vmem:[%s319 + $0x22d0] sm:$0xff]
        %v1512 = vld [vmem:[%s319 + $0x22d8] sm:$0xff]
        %v1513 = vld [vmem:[%s319 + $0x22e0] sm:$0xff]
        %v1514 = vld [vmem:[%s319 + $0x22e8] sm:$0xff]
        %v1515 = vld [vmem:[%s319 + $0x22f0] sm:$0xff]
        %v1516 = vld [vmem:[%s319 + $0x22f8] sm:$0xff]
        %v1517 = vld [vmem:[%s319 + $0x2300] sm:$0xff]
        %v1518 = vld [vmem:[%s319 + $0x2308] sm:$0xff]
        %v1519 = vld [vmem:[%s319 + $0x2310] sm:$0xff]
        %v1520 = vld [vmem:[%s319 + $0x2318] sm:$0xff]
        %v1521 = vld [vmem:[%s319 + $0x2320] sm:$0xff]
        %v1522 = vld [vmem:[%s319 + $0x2328] sm:$0xff]
        %v1523 = vld [vmem:[%s319 + $0x2330] sm:$0xff]
        %v1524 = vld [vmem:[%s319 + $0x2338] sm:$0xff]
        %v1525 = vld [vmem:[%s319 + $0x2340] sm:$0xff]
        %v1526 = vld [vmem:[%s319 + $0x2348] sm:$0xff]
        %v1527 = vld [vmem:[%s319 + $0x2350] sm:$0xff]
        %v1528 = vld [vmem:[%s319 + $0x2358] sm:$0xff]
        %v1529 = vld [vmem:[%s319 + $0x2360] sm:$0xff]
        %v1530 = vld [vmem:[%s319 + $0x2368] sm:$0xff]
        %v1531 = vld [vmem:[%s319 + $0x2370] sm:$0xff]
        %v1532 = vld [vmem:[%s319 + $0x2378] sm:$0xff]
        %v1533 = vld [vmem:[%s319 + $0x2380] sm:$0xff]
        %v1534 = vld [vmem:[%s319 + $0x2388] sm:$0xff]
        %v1535 = vld [vmem:[%s319 + $0x2390] sm:$0xff]
        %v1536 = vld [vmem:[%s319 + $0x2398] sm:$0xff]
        %v1537 = vld [vmem:[%s319 + $0x23a0] sm:$0xff]
        %v1538 = vld [vmem:[%s319 + $0x23a8] sm:$0xff]
        %v1539 = vld [vmem:[%s319 + $0x23b0] sm:$0xff]
        %v1540 = vld [vmem:[%s319 + $0x23b8] sm:$0xff]
        %v1541 = vld [vmem:[%s319 + $0x23c0] sm:$0xff]
        %v1542 = vld [vmem:[%s319 + $0x23c8] sm:$0xff]
        %v1543 = vld [vmem:[%s319 + $0x23d0] sm:$0xff]
        %v1544 = vld [vmem:[%s319 + $0x23d8] sm:$0xff]
        %v1545 = vld [vmem:[%s319 + $0x23e0] sm:$0xff]
        %v1546 = vld [vmem:[%s319 + $0x23e8] sm:$0xff]
        %v1547 = vld [vmem:[%s319 + $0x23f0] sm:$0xff]
        %v1548 = vld [vmem:[%s319 + $0x23f8] sm:$0xff]
        %v1549 = vld [vmem:[%s319 + $0x2400] sm:$0xff]
        %v1550 = vld [vmem:[%s319 + $0x2408] sm:$0xff]
        %v1551 = vld [vmem:[%s319 + $0x2410] sm:$0xff]
        %v1552 = vld [vmem:[%s319 + $0x2418] sm:$0xff]
        %v1553 = vld [vmem:[%s319 + $0x2420] sm:$0xff]
        %v1554 = vld [vmem:[%s319 + $0x2428] sm:$0xff]
        %v1555 = vld [vmem:[%s319 + $0x2430] sm:$0xff]
        %v1556 = vld [vmem:[%s319 + $0x2438] sm:$0xff]
        %v1557 = vld [vmem:[%s319 + $0x2440] sm:$0xff]
        %v1558 = vld [vmem:[%s319 + $0x2448] sm:$0xff]
        %v1559 = vld [vmem:[%s319 + $0x2450] sm:$0xff]
        %v1560 = vld [vmem:[%s319 + $0x2458] sm:$0xff]
        %v1561 = vld [vmem:[%s319 + $0x2460] sm:$0xff]
        %v1562 = vld [vmem:[%s319 + $0x2468] sm:$0xff]
        %v1563 = vld [vmem:[%s319 + $0x2470] sm:$0xff]
        %v1564 = vld [vmem:[%s319 + $0x2478] sm:$0xff]
        %v1565 = vld [vmem:[%s319 + $0x2480] sm:$0xff]
        %v1566 = vld [vmem:[%s319 + $0x2488] sm:$0xff]
        %v1567 = vld [vmem:[%s319 + $0x2490] sm:$0xff]
        %v1568 = vld [vmem:[%s319 + $0x2498] sm:$0xff]
        %v1569 = vld [vmem:[%s319 + $0x24a0] sm:$0xff]
        %v1570 = vld [vmem:[%s319 + $0x24a8] sm:$0xff]
        %v1571 = vld [vmem:[%s319 + $0x24b0] sm:$0xff]
        %v1572 = vld [vmem:[%s319 + $0x24b8] sm:$0xff]
        %v1573 = vld [vmem:[%s319 + $0x24c0] sm:$0xff]
        %v1574 = vld [vmem:[%s319 + $0x24c8] sm:$0xff]
        %v1575 = vld [vmem:[%s319 + $0x24d0] sm:$0xff]
        %v1576 = vld [vmem:[%s319 + $0x24d8] sm:$0xff]
        %v1577 = vld [vmem:[%s319 + $0x24e0] sm:$0xff]
        %v1578 = vld [vmem:[%s319 + $0x24e8] sm:$0xff]
        %v1579 = vld [vmem:[%s319 + $0x24f0] sm:$0xff]
        %v1580 = vld [vmem:[%s319 + $0x24f8] sm:$0xff]
        %v1581 = vld [vmem:[%s319 + $0x2500] sm:$0xff]
        %v1582 = vld [vmem:[%s319 + $0x2508] sm:$0xff]
        %v1583 = vld [vmem:[%s319 + $0x2510] sm:$0xff]
        %v1584 = vld [vmem:[%s319 + $0x2518] sm:$0xff]
        %v1585 = vld [vmem:[%s319 + $0x2520] sm:$0xff]
        %v1586 = vld [vmem:[%s319 + $0x2528] sm:$0xff]
        %v1587 = vld [vmem:[%s319 + $0x2530] sm:$0xff]
        %v1588 = vld [vmem:[%s319 + $0x2538] sm:$0xff]
        %v1589 = vld [vmem:[%s319 + $0x2540] sm:$0xff]
        %v1590 = vld [vmem:[%s319 + $0x2548] sm:$0xff]
        %v1591 = vld [vmem:[%s319 + $0x2550] sm:$0xff]
        %v1592 = vld [vmem:[%s319 + $0x2558] sm:$0xff]
        %v1593 = vld [vmem:[%s319 + $0x2560] sm:$0xff]
        %v1594 = vld [vmem:[%s319 + $0x2568] sm:$0xff]
        %v1595 = vld [vmem:[%s319 + $0x2570] sm:$0xff]
        %v1596 = vld [vmem:[%s319 + $0x2578] sm:$0xff]
        %v1597 = vld [vmem:[%s319 + $0x2580] sm:$0xff]
        %v1598 = vld [vmem:[%s319 + $0x2588] sm:$0xff]
        %v1599 = vld [vmem:[%s319 + $0x2590] sm:$0xff]
        %v1600 = vld [vmem:[%s319 + $0x2598] sm:$0xff]
        %v1601 = vld [vmem:[%s319 + $0x25a0] sm:$0xff]
        %v1602 = vld [vmem:[%s319 + $0x25a8] sm:$0xff]
        %v1603 = vld [vmem:[%s319 + $0x25b0] sm:$0xff]
        %v1604 = vld [vmem:[%s319 + $0x25b8] sm:$0xff]
        %v1605 = vld [vmem:[%s319 + $0x25c0] sm:$0xff]
        %v1606 = vld [vmem:[%s319 + $0x25c8] sm:$0xff]
        %v1607 = vld [vmem:[%s319 + $0x25d0] sm:$0xff]
        %v1608 = vld [vmem:[%s319 + $0x25d8] sm:$0xff]
        %v1609 = vld [vmem:[%s319 + $0x25e0] sm:$0xff]
        %v1610 = vld [vmem:[%s319 + $0x25e8] sm:$0xff]
        %v1611 = vld [vmem:[%s319 + $0x25f0] sm:$0xff]
        %v1612 = vld [vmem:[%s319 + $0x25f8] sm:$0xff]
        %v1613 = vld [vmem:[%s319 + $0x2600] sm:$0xff]
        %v1614 = vld [vmem:[%s319 + $0x2608] sm:$0xff]
        %v1615 = vld [vmem:[%s319 + $0x2610] sm:$0xff]
        %v1616 = vld [vmem:[%s319 + $0x2618] sm:$0xff]
        %v1617 = vld [vmem:[%s319 + $0x2620] sm:$0xff]
        %v1618 = vld [vmem:[%s319 + $0x2628] sm:$0xff]
        %v1619 = vld [vmem:[%s319 + $0x2630] sm:$0xff]
        %v1620 = vld [vmem:[%s319 + $0x2638] sm:$0xff]
        %v1621 = vld [vmem:[%s319 + $0x2640] sm:$0xff]
        %v1622 = vld [vmem:[%s319 + $0x2648] sm:$0xff]
        %v1623 = vld [vmem:[%s319 + $0x2650] sm:$0xff]
        %v1624 = vld [vmem:[%s319 + $0x2658] sm:$0xff]
        %v1625 = vld [vmem:[%s319 + $0x2660] sm:$0xff]
        %v1626 = vld [vmem:[%s319 + $0x2668] sm:$0xff]
        %v1627 = vld [vmem:[%s319 + $0x2670] sm:$0xff]
        %v1628 = vld [vmem:[%s319 + $0x2678] sm:$0xff]
        %v1629 = vld [vmem:[%s319 + $0x2680] sm:$0xff]
        %v1630 = vld [vmem:[%s319 + $0x2688] sm:$0xff]
        %v1631 = vld [vmem:[%s319 + $0x2690] sm:$0xff]
        %v1632 = vld [vmem:[%s319 + $0x2698] sm:$0xff]
        %v1633 = vld [vmem:[%s319 + $0x26a0] sm:$0xff]
        %v1634 = vld [vmem:[%s319 + $0x26a8] sm:$0xff]
        %v1635 = vld [vmem:[%s319 + $0x26b0] sm:$0xff]
        %v1636 = vld [vmem:[%s319 + $0x26b8] sm:$0xff]
        %v1637 = vld [vmem:[%s319 + $0x26c0] sm:$0xff]
        %v1638 = vld [vmem:[%s319 + $0x26c8] sm:$0xff]
        %v1639 = vld [vmem:[%s319 + $0x26d0] sm:$0xff]
        %v1640 = vld [vmem:[%s319 + $0x26d8] sm:$0xff]
        %v1641 = vld [vmem:[%s319 + $0x26e0] sm:$0xff]
        %v1642 = vld [vmem:[%s319 + $0x26e8] sm:$0xff]
        %v1643 = vld [vmem:[%s319 + $0x26f0] sm:$0xff]
        %v1644 = vld [vmem:[%s319 + $0x26f8] sm:$0xff]
        %v1645 = vld [vmem:[%s319 + $0x2700] sm:$0xff]
        %v1646 = vld [vmem:[%s319 + $0x2708] sm:$0xff]
        %v1647 = vld [vmem:[%s319 + $0x2710] sm:$0xff]
        %v1648 = vld [vmem:[%s319 + $0x2718] sm:$0xff]
        %v1649 = vld [vmem:[%s319 + $0x2720] sm:$0xff]
        %v1650 = vld [vmem:[%s319 + $0x2728] sm:$0xff]
        %v1651 = vld [vmem:[%s319 + $0x2730] sm:$0xff]
        %v1652 = vld [vmem:[%s319 + $0x2738] sm:$0xff]
        %v1653 = vld [vmem:[%s319 + $0x2740] sm:$0xff]
        %v1654 = vld [vmem:[%s319 + $0x2748] sm:$0xff]
        %v1655 = vld [vmem:[%s319 + $0x2750] sm:$0xff]
        %v1656 = vld [vmem:[%s319 + $0x2758] sm:$0xff]
        %v1657 = vld [vmem:[%s319 + $0x2760] sm:$0xff]
        %v1658 = vld [vmem:[%s319 + $0x2768] sm:$0xff]
        %v1659 = vld [vmem:[%s319 + $0x2770] sm:$0xff]
        %v1660 = vld [vmem:[%s319 + $0x2778] sm:$0xff]
        %v1661 = vld [vmem:[%s319 + $0x2780] sm:$0xff]
        %v1662 = vld [vmem:[%s319 + $0x2788] sm:$0xff]
        %v1663 = vld [vmem:[%s319 + $0x2790] sm:$0xff]
        %v1664 = vld [vmem:[%s319 + $0x2798] sm:$0xff]
        %v1665 = vld [vmem:[%s319 + $0x27a0] sm:$0xff]
        %v1666 = vld [vmem:[%s319 + $0x27a8] sm:$0xff]
        %v1667 = vld [vmem:[%s319 + $0x27b0] sm:$0xff]
        %v1668 = vld [vmem:[%s319 + $0x27b8] sm:$0xff]
        %v1669 = vld [vmem:[%s319 + $0x27c0] sm:$0xff]
        %v1670 = vld [vmem:[%s319 + $0x27c8] sm:$0xff]
        %v1671 = vld [vmem:[%s319 + $0x27d0] sm:$0xff]
        %v1672 = vld [vmem:[%s319 + $0x27d8] sm:$0xff]
        %v1673 = vld [vmem:[%s319 + $0x27e0] sm:$0xff]
        %v1674 = vld [vmem:[%s319 + $0x27e8] sm:$0xff]
        %v1675 = vld [vmem:[%s319 + $0x27f0] sm:$0xff]
        %v1676 = vld [vmem:[%s319 + $0x27f8] sm:$0xff]
        %v1677 = vld [vmem:[%s319 + $0x2800] sm:$0xff]
        %v1678 = vld [vmem:[%s319 + $0x2808] sm:$0xff]
        %v1679 = vld [vmem:[%s319 + $0x2810] sm:$0xff]
        %v1680 = vld [vmem:[%s319 + $0x2818] sm:$0xff]
        %v1681 = vld [vmem:[%s319 + $0x2820] sm:$0xff]
        %v1682 = vld [vmem:[%s319 + $0x2828] sm:$0xff]
        %v1683 = vld [vmem:[%s319 + $0x2830] sm:$0xff]
        %v1684 = vld [vmem:[%s319 + $0x2838] sm:$0xff]
        %v1685 = vld [vmem:[%s319 + $0x2840] sm:$0xff]
        %v1686 = vld [vmem:[%s319 + $0x2848] sm:$0xff]
        %v1687 = vld [vmem:[%s319 + $0x2850] sm:$0xff]
        %v1688 = vld [vmem:[%s319 + $0x2858] sm:$0xff]
        %v1689 = vld [vmem:[%s319 + $0x2860] sm:$0xff]
        %v1690 = vld [vmem:[%s319 + $0x2868] sm:$0xff]
        %v1691 = vld [vmem:[%s319 + $0x2870] sm:$0xff]
        %v1692 = vld [vmem:[%s319 + $0x2878] sm:$0xff]
        %v1693 = vld [vmem:[%s319 + $0x2880] sm:$0xff]
        %v1694 = vld [vmem:[%s319 + $0x2888] sm:$0xff]
        %v1695 = vld [vmem:[%s319 + $0x2890] sm:$0xff]
        %v1696 = vld [vmem:[%s319 + $0x2898] sm:$0xff]
        %v1697 = vld [vmem:[%s319 + $0x28a0] sm:$0xff]
        %v1698 = vld [vmem:[%s319 + $0x28a8] sm:$0xff]
        %v1699 = vld [vmem:[%s319 + $0x28b0] sm:$0xff]
        %v1700 = vld [vmem:[%s319 + $0x28b8] sm:$0xff]
        %v1701 = vld [vmem:[%s319 + $0x28c0] sm:$0xff]
        %v1702 = vld [vmem:[%s319 + $0x28c8] sm:$0xff]
        %v1703 = vld [vmem:[%s319 + $0x28d0] sm:$0xff]
        %v1704 = vld [vmem:[%s319 + $0x28d8] sm:$0xff]
        %v1705 = vld [vmem:[%s319 + $0x28e0] sm:$0xff]
        %v1706 = vld [vmem:[%s319 + $0x28e8] sm:$0xff]
        %v1707 = vld [vmem:[%s319 + $0x28f0] sm:$0xff]
        %v1708 = vld [vmem:[%s319 + $0x28f8] sm:$0xff]
        %v1709 = vld [vmem:[%s319 + $0x2900] sm:$0xff]
        %v1710 = vld [vmem:[%s319 + $0x2908] sm:$0xff]
        %v1711 = vld [vmem:[%s319 + $0x2910] sm:$0xff]
        %v1712 = vld [vmem:[%s319 + $0x2918] sm:$0xff]
        %v1713 = vld [vmem:[%s319 + $0x2920] sm:$0xff]
        %v1714 = vld [vmem:[%s319 + $0x2928] sm:$0xff]
        %v1715 = vld [vmem:[%s319 + $0x2930] sm:$0xff]
        %v1716 = vld [vmem:[%s319 + $0x2938] sm:$0xff]
        %v1717 = vld [vmem:[%s319 + $0x2940] sm:$0xff]
        %v1718 = vld [vmem:[%s319 + $0x2948] sm:$0xff]
        %v1719 = vld [vmem:[%s319 + $0x2950] sm:$0xff]
        %v1720 = vld [vmem:[%s319 + $0x2958] sm:$0xff]
        %v1721 = vld [vmem:[%s319 + $0x2960] sm:$0xff]
        %v1722 = vld [vmem:[%s319 + $0x2968] sm:$0xff]
        %v1723 = vld [vmem:[%s319 + $0x2970] sm:$0xff]
        %v1724 = vld [vmem:[%s319 + $0x2978] sm:$0xff]
        %v1725 = vld [vmem:[%s319 + $0x2980] sm:$0xff]
        %v1726 = vld [vmem:[%s319 + $0x2988] sm:$0xff]
        %v1727 = vld [vmem:[%s319 + $0x2990] sm:$0xff]
        %v1728 = vld [vmem:[%s319 + $0x2998] sm:$0xff]
        %v1729 = vld [vmem:[%s319 + $0x29a0] sm:$0xff]
        %v1730 = vld [vmem:[%s319 + $0x29a8] sm:$0xff]
        %v1731 = vld [vmem:[%s319 + $0x29b0] sm:$0xff]
        %v1732 = vld [vmem:[%s319 + $0x29b8] sm:$0xff]
        %v1733 = vld [vmem:[%s319 + $0x29c0] sm:$0xff]
        %v1734 = vld [vmem:[%s319 + $0x29c8] sm:$0xff]
        %v1735 = vld [vmem:[%s319 + $0x29d0] sm:$0xff]
        %v1736 = vld [vmem:[%s319 + $0x29d8] sm:$0xff]
        %v1737 = vld [vmem:[%s319 + $0x29e0] sm:$0xff]
        %v1738 = vld [vmem:[%s319 + $0x29e8] sm:$0xff]
        %v1739 = vld [vmem:[%s319 + $0x29f0] sm:$0xff]
        %v1740 = vld [vmem:[%s319 + $0x29f8] sm:$0xff]
        %v1741 = vunpack.c.l.s8.bf16 %v397
        %v1742 = vunpack.c.l.s8.bf16 %v398
        %v1743 = vunpack.c.l.s8.bf16 %v399
        %v1744 = vunpack.c.l.s8.bf16 %v400
        %v1745 = vunpack.c.h.s8.bf16 %v397
        %v1746 = vunpack.c.h.s8.bf16 %v398
        %v1747 = vunpack.c.h.s8.bf16 %v399
        %v1748 = vunpack.c.h.s8.bf16 %v400
        %v1749 = vunpack.c.l.s8.bf16 %v401
        %v1750 = vunpack.c.l.s8.bf16 %v402
        %v1751 = vunpack.c.l.s8.bf16 %v403
        %v1752 = vunpack.c.l.s8.bf16 %v404
        %v1753 = vunpack.c.h.s8.bf16 %v401
        %v1754 = vunpack.c.h.s8.bf16 %v402
        %v1755 = vunpack.c.h.s8.bf16 %v403
        %v1756 = vunpack.c.h.s8.bf16 %v404
        %v1757 = vunpack.c.l.s8.bf16 %v405
        %v1758 = vunpack.c.l.s8.bf16 %v406
        %v1759 = vunpack.c.l.s8.bf16 %v407
        %v1760 = vunpack.c.l.s8.bf16 %v408
        %v1761 = vunpack.c.h.s8.bf16 %v405
        %v1762 = vunpack.c.h.s8.bf16 %v406
        %v1763 = vunpack.c.h.s8.bf16 %v407
        %v1764 = vunpack.c.h.s8.bf16 %v408
        %v1765 = vunpack.c.l.s8.bf16 %v409
        %v1766 = vunpack.c.l.s8.bf16 %v410
        %v1767 = vunpack.c.l.s8.bf16 %v411
        %v1768 = vunpack.c.l.s8.bf16 %v412
        %v1769 = vunpack.c.h.s8.bf16 %v409
        %v1770 = vunpack.c.h.s8.bf16 %v410
        %v1771 = vunpack.c.h.s8.bf16 %v411
        %v1772 = vunpack.c.h.s8.bf16 %v412
        %v1773 = vunpack.c.l.s8.bf16 %v413
        %v1774 = vunpack.c.l.s8.bf16 %v414
        %v1775 = vunpack.c.l.s8.bf16 %v415
        %v1776 = vunpack.c.l.s8.bf16 %v416
        %v1777 = vunpack.c.h.s8.bf16 %v413
        %v1778 = vunpack.c.h.s8.bf16 %v414
        %v1779 = vunpack.c.h.s8.bf16 %v415
        %v1780 = vunpack.c.h.s8.bf16 %v416
        %v1781 = vunpack.c.l.s8.bf16 %v417
        %v1782 = vunpack.c.l.s8.bf16 %v418
        %v1783 = vunpack.c.l.s8.bf16 %v419
        %v1784 = vunpack.c.l.s8.bf16 %v420
        %v1785 = vunpack.c.h.s8.bf16 %v417
        %v1786 = vunpack.c.h.s8.bf16 %v418
        %v1787 = vunpack.c.h.s8.bf16 %v419
        %v1788 = vunpack.c.h.s8.bf16 %v420
        %v1789 = vunpack.c.l.s8.bf16 %v421
        %v1790 = vunpack.c.l.s8.bf16 %v422
        %v1791 = vunpack.c.l.s8.bf16 %v423
        %v1792 = vunpack.c.l.s8.bf16 %v424
        %v1793 = vunpack.c.h.s8.bf16 %v421
        %v1794 = vunpack.c.h.s8.bf16 %v422
        %v1795 = vunpack.c.h.s8.bf16 %v423
        %v1796 = vunpack.c.h.s8.bf16 %v424
        %v1797 = vunpack.c.l.s8.bf16 %v425
        %v1798 = vunpack.c.l.s8.bf16 %v426
        %v1799 = vunpack.c.l.s8.bf16 %v427
        %v1800 = vunpack.c.l.s8.bf16 %v428
        %v1801 = vunpack.c.h.s8.bf16 %v425
        %v1802 = vunpack.c.h.s8.bf16 %v426
        %v1803 = vunpack.c.h.s8.bf16 %v427
        %v1804 = vunpack.c.h.s8.bf16 %v428
        %v1805 = vunpack.c.l.s8.bf16 %v429
        %v1806 = vunpack.c.l.s8.bf16 %v430
        %v1807 = vunpack.c.l.s8.bf16 %v431
        %v1808 = vunpack.c.l.s8.bf16 %v432
        %v1809 = vunpack.c.h.s8.bf16 %v429
        %v1810 = vunpack.c.h.s8.bf16 %v430
        %v1811 = vunpack.c.h.s8.bf16 %v431
        %v1812 = vunpack.c.h.s8.bf16 %v432
        %v1813 = vunpack.c.l.s8.bf16 %v433
        %v1814 = vunpack.c.l.s8.bf16 %v434
        %v1815 = vunpack.c.l.s8.bf16 %v435
        %v1816 = vunpack.c.l.s8.bf16 %v436
        %v1817 = vunpack.c.h.s8.bf16 %v433
        %v1818 = vunpack.c.h.s8.bf16 %v434
        %v1819 = vunpack.c.h.s8.bf16 %v435
        %v1820 = vunpack.c.h.s8.bf16 %v436
        %v1821 = vunpack.c.l.s8.bf16 %v437
        %v1822 = vunpack.c.l.s8.bf16 %v438
        %v1823 = vunpack.c.l.s8.bf16 %v439
        %v1824 = vunpack.c.l.s8.bf16 %v440
        %v1825 = vunpack.c.h.s8.bf16 %v437
        %v1826 = vunpack.c.h.s8.bf16 %v438
        %v1827 = vunpack.c.h.s8.bf16 %v439
        %v1828 = vunpack.c.h.s8.bf16 %v440
        %v1829 = vunpack.c.l.s8.bf16 %v441
        %v1830 = vunpack.c.l.s8.bf16 %v442
        %v1831 = vunpack.c.l.s8.bf16 %v443
        %v1832 = vunpack.c.l.s8.bf16 %v444
        %v1833 = vunpack.c.h.s8.bf16 %v441
        %v1834 = vunpack.c.h.s8.bf16 %v442
        %v1835 = vunpack.c.h.s8.bf16 %v443
        %v1836 = vunpack.c.h.s8.bf16 %v444
        %v1837 = vunpack.c.l.s8.bf16 %v445
        %v1838 = vunpack.c.l.s8.bf16 %v446
        %v1839 = vunpack.c.l.s8.bf16 %v447
        %v1840 = vunpack.c.l.s8.bf16 %v448
        %v1841 = vunpack.c.h.s8.bf16 %v445
        %v1842 = vunpack.c.h.s8.bf16 %v446
        %v1843 = vunpack.c.h.s8.bf16 %v447
        %v1844 = vunpack.c.h.s8.bf16 %v448
        %v1845 = vunpack.c.l.s8.bf16 %v449
        %v1846 = vunpack.c.l.s8.bf16 %v450
        %v1847 = vunpack.c.l.s8.bf16 %v451
        %v1848 = vunpack.c.l.s8.bf16 %v452
        %v1849 = vunpack.c.h.s8.bf16 %v449
        %v1850 = vunpack.c.h.s8.bf16 %v450
        %v1851 = vunpack.c.h.s8.bf16 %v451
        %v1852 = vunpack.c.h.s8.bf16 %v452
        %v1853 = vunpack.c.l.s8.bf16 %v453
        %v1854 = vunpack.c.l.s8.bf16 %v454
        %v1855 = vunpack.c.l.s8.bf16 %v455
        %v1856 = vunpack.c.l.s8.bf16 %v456
        %v1857 = vunpack.c.h.s8.bf16 %v453
        %v1858 = vunpack.c.h.s8.bf16 %v454
        %v1859 = vunpack.c.h.s8.bf16 %v455
        %v1860 = vunpack.c.h.s8.bf16 %v456
        %v1861 = vunpack.c.l.s8.bf16 %v457
        %v1862 = vunpack.c.l.s8.bf16 %v458
        %v1863 = vunpack.c.l.s8.bf16 %v459
        %v1864 = vunpack.c.l.s8.bf16 %v460
        %v1865 = vunpack.c.h.s8.bf16 %v457
        %v1866 = vunpack.c.h.s8.bf16 %v458
        %v1867 = vunpack.c.h.s8.bf16 %v459
        %v1868 = vunpack.c.h.s8.bf16 %v460
        %v1869 = vunpack.c.l.s8.bf16 %v461
        %v1870 = vunpack.c.l.s8.bf16 %v462
        %v1871 = vunpack.c.l.s8.bf16 %v463
        %v1872 = vunpack.c.l.s8.bf16 %v464
        %v1873 = vunpack.c.h.s8.bf16 %v461
        %v1874 = vunpack.c.h.s8.bf16 %v462
        %v1875 = vunpack.c.h.s8.bf16 %v463
        %v1876 = vunpack.c.h.s8.bf16 %v464
        %v1877 = vunpack.c.l.s8.bf16 %v465
        %v1878 = vunpack.c.l.s8.bf16 %v466
        %v1879 = vunpack.c.l.s8.bf16 %v467
        %v1880 = vunpack.c.l.s8.bf16 %v468
        %v1881 = vunpack.c.h.s8.bf16 %v465
        %v1882 = vunpack.c.h.s8.bf16 %v466
        %v1883 = vunpack.c.h.s8.bf16 %v467
        %v1884 = vunpack.c.h.s8.bf16 %v468
        %v1885 = vunpack.c.l.s8.bf16 %v469
        %v1886 = vunpack.c.l.s8.bf16 %v470
        %v1887 = vunpack.c.l.s8.bf16 %v471
        %v1888 = vunpack.c.l.s8.bf16 %v472
        %v1889 = vunpack.c.h.s8.bf16 %v469
        %v1890 = vunpack.c.h.s8.bf16 %v470
        %v1891 = vunpack.c.h.s8.bf16 %v471
        %v1892 = vunpack.c.h.s8.bf16 %v472
        %v1893 = vunpack.c.l.s8.bf16 %v473
        %v1894 = vunpack.c.l.s8.bf16 %v474
        %v1895 = vunpack.c.l.s8.bf16 %v475
        %v1896 = vunpack.c.l.s8.bf16 %v476
        %v1897 = vunpack.c.h.s8.bf16 %v473
        %v1898 = vunpack.c.h.s8.bf16 %v474
        %v1899 = vunpack.c.h.s8.bf16 %v475
        %v1900 = vunpack.c.h.s8.bf16 %v476
        %v1901 = vunpack.c.l.s8.bf16 %v477
        %v1902 = vunpack.c.l.s8.bf16 %v478
        %v1903 = vunpack.c.l.s8.bf16 %v479
        %v1904 = vunpack.c.l.s8.bf16 %v480
        %v1905 = vunpack.c.h.s8.bf16 %v477
        %v1906 = vunpack.c.h.s8.bf16 %v478
        %v1907 = vunpack.c.h.s8.bf16 %v479
        %v1908 = vunpack.c.h.s8.bf16 %v480
        %v1909 = vunpack.c.l.s8.bf16 %v481
        %v1910 = vunpack.c.l.s8.bf16 %v482
        %v1911 = vunpack.c.l.s8.bf16 %v483
        %v1912 = vunpack.c.l.s8.bf16 %v484
        %v1913 = vunpack.c.h.s8.bf16 %v481
        %v1914 = vunpack.c.h.s8.bf16 %v482
        %v1915 = vunpack.c.h.s8.bf16 %v483
        %v1916 = vunpack.c.h.s8.bf16 %v484
        %v1917 = vunpack.c.l.s8.bf16 %v485
        %v1918 = vunpack.c.l.s8.bf16 %v486
        %v1919 = vunpack.c.l.s8.bf16 %v487
        %v1920 = vunpack.c.l.s8.bf16 %v488
        %v1921 = vunpack.c.h.s8.bf16 %v485
        %v1922 = vunpack.c.h.s8.bf16 %v486
        %v1923 = vunpack.c.h.s8.bf16 %v487
        %v1924 = vunpack.c.h.s8.bf16 %v488
        %v1925 = vunpack.c.l.s8.bf16 %v489
        %v1926 = vunpack.c.l.s8.bf16 %v490
        %v1927 = vunpack.c.l.s8.bf16 %v491
        %v1928 = vunpack.c.l.s8.bf16 %v492
        %v1929 = vunpack.c.h.s8.bf16 %v489
        %v1930 = vunpack.c.h.s8.bf16 %v490
        %v1931 = vunpack.c.h.s8.bf16 %v491
        %v1932 = vunpack.c.h.s8.bf16 %v492
        %v1933 = vunpack.c.l.s8.bf16 %v493
        %v1934 = vunpack.c.l.s8.bf16 %v494
        %v1935 = vunpack.c.l.s8.bf16 %v495
        %v1936 = vunpack.c.l.s8.bf16 %v496
        %v1937 = vunpack.c.h.s8.bf16 %v493
        %v1938 = vunpack.c.h.s8.bf16 %v494
        %v1939 = vunpack.c.h.s8.bf16 %v495
        %v1940 = vunpack.c.h.s8.bf16 %v496
        %v1941 = vunpack.c.l.s8.bf16 %v497
        %v1942 = vunpack.c.l.s8.bf16 %v498
        %v1943 = vunpack.c.l.s8.bf16 %v499
        %v1944 = vunpack.c.l.s8.bf16 %v500
        %v1945 = vunpack.c.h.s8.bf16 %v497
        %v1946 = vunpack.c.h.s8.bf16 %v498
        %v1947 = vunpack.c.h.s8.bf16 %v499
        %v1948 = vunpack.c.h.s8.bf16 %v500
        %v1949 = vunpack.c.l.s8.bf16 %v501
        %v1950 = vunpack.c.l.s8.bf16 %v502
        %v1951 = vunpack.c.l.s8.bf16 %v503
        %v1952 = vunpack.c.l.s8.bf16 %v504
        %v1953 = vunpack.c.h.s8.bf16 %v501
        %v1954 = vunpack.c.h.s8.bf16 %v502
        %v1955 = vunpack.c.h.s8.bf16 %v503
        %v1956 = vunpack.c.h.s8.bf16 %v504
        %v1957 = vunpack.c.l.s8.bf16 %v505
        %v1958 = vunpack.c.l.s8.bf16 %v506
        %v1959 = vunpack.c.l.s8.bf16 %v507
        %v1960 = vunpack.c.l.s8.bf16 %v508
        %v1961 = vunpack.c.h.s8.bf16 %v505
        %v1962 = vunpack.c.h.s8.bf16 %v506
        %v1963 = vunpack.c.h.s8.bf16 %v507
        %v1964 = vunpack.c.h.s8.bf16 %v508
        %v1965 = vunpack.c.l.s8.bf16 %v509
        %v1966 = vunpack.c.l.s8.bf16 %v510
        %v1967 = vunpack.c.l.s8.bf16 %v511
        %v1968 = vunpack.c.l.s8.bf16 %v512
        %v1969 = vunpack.c.h.s8.bf16 %v509
        %v1970 = vunpack.c.h.s8.bf16 %v510
        %v1971 = vunpack.c.h.s8.bf16 %v511
        %v1972 = vunpack.c.h.s8.bf16 %v512
        %v1973 = vunpack.c.l.s8.bf16 %v513
        %v1974 = vunpack.c.l.s8.bf16 %v514
        %v1975 = vunpack.c.l.s8.bf16 %v515
        %v1976 = vunpack.c.l.s8.bf16 %v516
        %v1977 = vunpack.c.h.s8.bf16 %v513
        %v1978 = vunpack.c.h.s8.bf16 %v514
        %v1979 = vunpack.c.h.s8.bf16 %v515
        %v1980 = vunpack.c.h.s8.bf16 %v516
        %v1981 = vunpack.c.l.s8.bf16 %v517
        %v1982 = vunpack.c.l.s8.bf16 %v518
        %v1983 = vunpack.c.l.s8.bf16 %v519
        %v1984 = vunpack.c.l.s8.bf16 %v520
        %v1985 = vunpack.c.h.s8.bf16 %v517
        %v1986 = vunpack.c.h.s8.bf16 %v518
        %v1987 = vunpack.c.h.s8.bf16 %v519
        %v1988 = vunpack.c.h.s8.bf16 %v520
        %v1989 = vunpack.c.l.s8.bf16 %v521
        %v1990 = vunpack.c.l.s8.bf16 %v522
        %v1991 = vunpack.c.l.s8.bf16 %v523
        %v1992 = vunpack.c.l.s8.bf16 %v524
        %v1993 = vunpack.c.h.s8.bf16 %v521
        %v1994 = vunpack.c.h.s8.bf16 %v522
        %v1995 = vunpack.c.h.s8.bf16 %v523
        %v1996 = vunpack.c.h.s8.bf16 %v524
        %v1997 = vunpack.c.l.s8.bf16 %v525
        %v1998 = vunpack.c.l.s8.bf16 %v526
        %v1999 = vunpack.c.l.s8.bf16 %v527
        %v2000 = vunpack.c.l.s8.bf16 %v528
        %v2001 = vunpack.c.h.s8.bf16 %v525
        %v2002 = vunpack.c.h.s8.bf16 %v526
        %v2003 = vunpack.c.h.s8.bf16 %v527
        %v2004 = vunpack.c.h.s8.bf16 %v528
        %v2005 = vunpack.c.l.s8.bf16 %v529
        %v2006 = vunpack.c.l.s8.bf16 %v530
        %v2007 = vunpack.c.l.s8.bf16 %v531
        %v2008 = vunpack.c.l.s8.bf16 %v532
        %v2009 = vunpack.c.h.s8.bf16 %v529
        %v2010 = vunpack.c.h.s8.bf16 %v530
        %v2011 = vunpack.c.h.s8.bf16 %v531
        %v2012 = vunpack.c.h.s8.bf16 %v532
        %v2013 = vunpack.c.l.s8.bf16 %v533
        %v2014 = vunpack.c.l.s8.bf16 %v534
        %v2015 = vunpack.c.l.s8.bf16 %v535
        %v2016 = vunpack.c.l.s8.bf16 %v536
        %v2017 = vunpack.c.h.s8.bf16 %v533
        %v2018 = vunpack.c.h.s8.bf16 %v534
        %v2019 = vunpack.c.h.s8.bf16 %v535
        %v2020 = vunpack.c.h.s8.bf16 %v536
        %v2021 = vunpack.c.l.s8.bf16 %v537
        %v2022 = vunpack.c.l.s8.bf16 %v538
        %v2023 = vunpack.c.l.s8.bf16 %v539
        %v2024 = vunpack.c.l.s8.bf16 %v540
        %v2025 = vunpack.c.h.s8.bf16 %v537
        %v2026 = vunpack.c.h.s8.bf16 %v538
        %v2027 = vunpack.c.h.s8.bf16 %v539
        %v2028 = vunpack.c.h.s8.bf16 %v540
        %v2029 = vunpack.c.l.s8.bf16 %v541
        %v2030 = vunpack.c.l.s8.bf16 %v542
        %v2031 = vunpack.c.l.s8.bf16 %v543
        %v2032 = vunpack.c.l.s8.bf16 %v544
        %v2033 = vunpack.c.h.s8.bf16 %v541
        %v2034 = vunpack.c.h.s8.bf16 %v542
        %v2035 = vunpack.c.h.s8.bf16 %v543
        %v2036 = vunpack.c.h.s8.bf16 %v544
        %v2037 = vunpack.c.l.s8.bf16 %v545
        %v2038 = vunpack.c.l.s8.bf16 %v546
        %v2039 = vunpack.c.l.s8.bf16 %v547
        %v2040 = vunpack.c.l.s8.bf16 %v548
        %v2041 = vunpack.c.h.s8.bf16 %v545
        %v2042 = vunpack.c.h.s8.bf16 %v546
        %v2043 = vunpack.c.h.s8.bf16 %v547
        %v2044 = vunpack.c.h.s8.bf16 %v548
        %v2045 = vunpack.c.l.s8.bf16 %v549
        %v2046 = vunpack.c.l.s8.bf16 %v550
        %v2047 = vunpack.c.l.s8.bf16 %v551
        %v2048 = vunpack.c.l.s8.bf16 %v552
        %v2049 = vunpack.c.h.s8.bf16 %v549
        %v2050 = vunpack.c.h.s8.bf16 %v550
        %v2051 = vunpack.c.h.s8.bf16 %v551
        %v2052 = vunpack.c.h.s8.bf16 %v552
        %v2053 = vunpack.c.l.s8.bf16 %v553
        %v2054 = vunpack.c.l.s8.bf16 %v554
        %v2055 = vunpack.c.l.s8.bf16 %v555
        %v2056 = vunpack.c.l.s8.bf16 %v556
        %v2057 = vunpack.c.h.s8.bf16 %v553
        %v2058 = vunpack.c.h.s8.bf16 %v554
        %v2059 = vunpack.c.h.s8.bf16 %v555
        %v2060 = vunpack.c.h.s8.bf16 %v556
        %v2061 = vunpack.c.l.s8.bf16 %v557
        %v2062 = vunpack.c.l.s8.bf16 %v558
        %v2063 = vunpack.c.l.s8.bf16 %v559
        %v2064 = vunpack.c.l.s8.bf16 %v560
        %v2065 = vunpack.c.h.s8.bf16 %v557
        %v2066 = vunpack.c.h.s8.bf16 %v558
        %v2067 = vunpack.c.h.s8.bf16 %v559
        %v2068 = vunpack.c.h.s8.bf16 %v560
        %v2069 = vunpack.c.l.s8.bf16 %v561
        %v2070 = vunpack.c.l.s8.bf16 %v562
        %v2071 = vunpack.c.l.s8.bf16 %v563
        %v2072 = vunpack.c.l.s8.bf16 %v564
        %v2073 = vunpack.c.h.s8.bf16 %v561
        %v2074 = vunpack.c.h.s8.bf16 %v562
        %v2075 = vunpack.c.h.s8.bf16 %v563
        %v2076 = vunpack.c.h.s8.bf16 %v564
        %v2077 = vunpack.c.l.s8.bf16 %v565
        %v2078 = vunpack.c.l.s8.bf16 %v566
        %v2079 = vunpack.c.l.s8.bf16 %v567
        %v2080 = vunpack.c.l.s8.bf16 %v568
        %v2081 = vunpack.c.h.s8.bf16 %v565
        %v2082 = vunpack.c.h.s8.bf16 %v566
        %v2083 = vunpack.c.h.s8.bf16 %v567
        %v2084 = vunpack.c.h.s8.bf16 %v568
        %v2085 = vunpack.c.l.s8.bf16 %v569
        %v2086 = vunpack.c.l.s8.bf16 %v570
        %v2087 = vunpack.c.l.s8.bf16 %v571
        %v2088 = vunpack.c.l.s8.bf16 %v572
        %v2089 = vunpack.c.h.s8.bf16 %v569
        %v2090 = vunpack.c.h.s8.bf16 %v570
        %v2091 = vunpack.c.h.s8.bf16 %v571
        %v2092 = vunpack.c.h.s8.bf16 %v572
        %v2093 = vunpack.c.l.s8.bf16 %v573
        %v2094 = vunpack.c.l.s8.bf16 %v574
        %v2095 = vunpack.c.l.s8.bf16 %v575
        %v2096 = vunpack.c.l.s8.bf16 %v576
        %v2097 = vunpack.c.h.s8.bf16 %v573
        %v2098 = vunpack.c.h.s8.bf16 %v574
        %v2099 = vunpack.c.h.s8.bf16 %v575
        %v2100 = vunpack.c.h.s8.bf16 %v576
        %v2101 = vunpack.c.l.s8.bf16 %v577
        %v2102 = vunpack.c.l.s8.bf16 %v578
        %v2103 = vunpack.c.l.s8.bf16 %v579
        %v2104 = vunpack.c.l.s8.bf16 %v580
        %v2105 = vunpack.c.h.s8.bf16 %v577
        %v2106 = vunpack.c.h.s8.bf16 %v578
        %v2107 = vunpack.c.h.s8.bf16 %v579
        %v2108 = vunpack.c.h.s8.bf16 %v580
        %v2109 = vunpack.c.l.s8.bf16 %v581
        %v2110 = vunpack.c.l.s8.bf16 %v582
        %v2111 = vunpack.c.l.s8.bf16 %v583
        %v2112 = vunpack.c.l.s8.bf16 %v584
        %v2113 = vunpack.c.h.s8.bf16 %v581
        %v2114 = vunpack.c.h.s8.bf16 %v582
        %v2115 = vunpack.c.h.s8.bf16 %v583
        %v2116 = vunpack.c.h.s8.bf16 %v584
        %v2117 = vunpack.c.l.s8.bf16 %v585
        %v2118 = vunpack.c.l.s8.bf16 %v586
        %v2119 = vunpack.c.l.s8.bf16 %v587
        %v2120 = vunpack.c.l.s8.bf16 %v588
        %v2121 = vunpack.c.h.s8.bf16 %v585
        %v2122 = vunpack.c.h.s8.bf16 %v586
        %v2123 = vunpack.c.h.s8.bf16 %v587
        %v2124 = vunpack.c.h.s8.bf16 %v588
        %v2125 = vunpack.c.l.s8.bf16 %v589
        %v2126 = vunpack.c.l.s8.bf16 %v590
        %v2127 = vunpack.c.l.s8.bf16 %v591
        %v2128 = vunpack.c.l.s8.bf16 %v592
        %v2129 = vunpack.c.h.s8.bf16 %v589
        %v2130 = vunpack.c.h.s8.bf16 %v590
        %v2131 = vunpack.c.h.s8.bf16 %v591
        %v2132 = vunpack.c.h.s8.bf16 %v592
        %v2133 = vunpack.c.l.s8.bf16 %v593
        %v2134 = vunpack.c.l.s8.bf16 %v594
        %v2135 = vunpack.c.l.s8.bf16 %v595
        %v2136 = vunpack.c.l.s8.bf16 %v596
        %v2137 = vunpack.c.h.s8.bf16 %v593
        %v2138 = vunpack.c.h.s8.bf16 %v594
        %v2139 = vunpack.c.h.s8.bf16 %v595
        %v2140 = vunpack.c.h.s8.bf16 %v596
        %v2141 = vunpack.c.l.s8.bf16 %v597
        %v2142 = vunpack.c.l.s8.bf16 %v598
        %v2143 = vunpack.c.l.s8.bf16 %v599
        %v2144 = vunpack.c.l.s8.bf16 %v600
        %v2145 = vunpack.c.h.s8.bf16 %v597
        %v2146 = vunpack.c.h.s8.bf16 %v598
        %v2147 = vunpack.c.h.s8.bf16 %v599
        %v2148 = vunpack.c.h.s8.bf16 %v600
        %v2149 = vunpack.c.l.s8.bf16 %v601
        %v2150 = vunpack.c.l.s8.bf16 %v602
        %v2151 = vunpack.c.l.s8.bf16 %v603
        %v2152 = vunpack.c.l.s8.bf16 %v604
        %v2153 = vunpack.c.h.s8.bf16 %v601
        %v2154 = vunpack.c.h.s8.bf16 %v602
        %v2155 = vunpack.c.h.s8.bf16 %v603
        %v2156 = vunpack.c.h.s8.bf16 %v604
        %v2157 = vunpack.c.l.s8.bf16 %v605
        %v2158 = vunpack.c.l.s8.bf16 %v606
        %v2159 = vunpack.c.l.s8.bf16 %v607
        %v2160 = vunpack.c.l.s8.bf16 %v608
        %v2161 = vunpack.c.h.s8.bf16 %v605
        %v2162 = vunpack.c.h.s8.bf16 %v606
        %v2163 = vunpack.c.h.s8.bf16 %v607
        %v2164 = vunpack.c.h.s8.bf16 %v608
        %v2165 = vunpack.c.l.s8.bf16 %v609
        %v2166 = vunpack.c.l.s8.bf16 %v610
        %v2167 = vunpack.c.l.s8.bf16 %v611
        %v2168 = vunpack.c.l.s8.bf16 %v612
        %v2169 = vunpack.c.h.s8.bf16 %v609
        %v2170 = vunpack.c.h.s8.bf16 %v610
        %v2171 = vunpack.c.h.s8.bf16 %v611
        %v2172 = vunpack.c.h.s8.bf16 %v612
        %v2173 = vunpack.c.l.s8.bf16 %v613
        %v2174 = vunpack.c.l.s8.bf16 %v614
        %v2175 = vunpack.c.l.s8.bf16 %v615
        %v2176 = vunpack.c.l.s8.bf16 %v616
        %v2177 = vunpack.c.h.s8.bf16 %v613
        %v2178 = vunpack.c.h.s8.bf16 %v614
        %v2179 = vunpack.c.h.s8.bf16 %v615
        %v2180 = vunpack.c.h.s8.bf16 %v616
        %v2181 = vunpack.c.l.s8.bf16 %v617
        %v2182 = vunpack.c.l.s8.bf16 %v618
        %v2183 = vunpack.c.l.s8.bf16 %v619
        %v2184 = vunpack.c.l.s8.bf16 %v620
        %v2185 = vunpack.c.h.s8.bf16 %v617
        %v2186 = vunpack.c.h.s8.bf16 %v618
        %v2187 = vunpack.c.h.s8.bf16 %v619
        %v2188 = vunpack.c.h.s8.bf16 %v620
        %v2189 = vunpack.c.l.s8.bf16 %v621
        %v2190 = vunpack.c.l.s8.bf16 %v622
        %v2191 = vunpack.c.l.s8.bf16 %v623
        %v2192 = vunpack.c.l.s8.bf16 %v624
        %v2193 = vunpack.c.h.s8.bf16 %v621
        %v2194 = vunpack.c.h.s8.bf16 %v622
        %v2195 = vunpack.c.h.s8.bf16 %v623
        %v2196 = vunpack.c.h.s8.bf16 %v624
        %v2197 = vunpack.c.l.s8.bf16 %v625
        %v2198 = vunpack.c.l.s8.bf16 %v626
        %v2199 = vunpack.c.l.s8.bf16 %v627
        %v2200 = vunpack.c.l.s8.bf16 %v628
        %v2201 = vunpack.c.h.s8.bf16 %v625
        %v2202 = vunpack.c.h.s8.bf16 %v626
        %v2203 = vunpack.c.h.s8.bf16 %v627
        %v2204 = vunpack.c.h.s8.bf16 %v628
        %v2205 = vunpack.c.l.s8.bf16 %v629
        %v2206 = vunpack.c.l.s8.bf16 %v630
        %v2207 = vunpack.c.l.s8.bf16 %v631
        %v2208 = vunpack.c.l.s8.bf16 %v632
        %v2209 = vunpack.c.h.s8.bf16 %v629
        %v2210 = vunpack.c.h.s8.bf16 %v630
        %v2211 = vunpack.c.h.s8.bf16 %v631
        %v2212 = vunpack.c.h.s8.bf16 %v632
        %v2213 = vunpack.c.l.s8.bf16 %v633
        %v2214 = vunpack.c.l.s8.bf16 %v634
        %v2215 = vunpack.c.l.s8.bf16 %v635
        %v2216 = vunpack.c.l.s8.bf16 %v636
        %v2217 = vunpack.c.h.s8.bf16 %v633
        %v2218 = vunpack.c.h.s8.bf16 %v634
        %v2219 = vunpack.c.h.s8.bf16 %v635
        %v2220 = vunpack.c.h.s8.bf16 %v636
        %v2221 = vunpack.c.l.s8.bf16 %v637
        %v2222 = vunpack.c.l.s8.bf16 %v638
        %v2223 = vunpack.c.l.s8.bf16 %v639
        %v2224 = vunpack.c.l.s8.bf16 %v640
        %v2225 = vunpack.c.h.s8.bf16 %v637
        %v2226 = vunpack.c.h.s8.bf16 %v638
        %v2227 = vunpack.c.h.s8.bf16 %v639
        %v2228 = vunpack.c.h.s8.bf16 %v640
        %v2229 = vunpack.c.l.s8.bf16 %v641
        %v2230 = vunpack.c.l.s8.bf16 %v642
        %v2231 = vunpack.c.l.s8.bf16 %v643
        %v2232 = vunpack.c.l.s8.bf16 %v644
        %v2233 = vunpack.c.h.s8.bf16 %v641
        %v2234 = vunpack.c.h.s8.bf16 %v642
        %v2235 = vunpack.c.h.s8.bf16 %v643
        %v2236 = vunpack.c.h.s8.bf16 %v644
        %v2237 = vunpack.c.l.s8.bf16 %v645
        %v2238 = vunpack.c.l.s8.bf16 %v646
        %v2239 = vunpack.c.l.s8.bf16 %v647
        %v2240 = vunpack.c.l.s8.bf16 %v648
        %v2241 = vunpack.c.h.s8.bf16 %v645
        %v2242 = vunpack.c.h.s8.bf16 %v646
        %v2243 = vunpack.c.h.s8.bf16 %v647
        %v2244 = vunpack.c.h.s8.bf16 %v648
        %v2245 = vunpack.c.l.s8.bf16 %v649
        %v2246 = vunpack.c.l.s8.bf16 %v650
        %v2247 = vunpack.c.l.s8.bf16 %v651
        %v2248 = vunpack.c.l.s8.bf16 %v652
        %v2249 = vunpack.c.h.s8.bf16 %v649
        %v2250 = vunpack.c.h.s8.bf16 %v650
        %v2251 = vunpack.c.h.s8.bf16 %v651
        %v2252 = vunpack.c.h.s8.bf16 %v652
        %v2253 = vunpack.c.l.s8.bf16 %v653
        %v2254 = vunpack.c.l.s8.bf16 %v654
        %v2255 = vunpack.c.l.s8.bf16 %v655
        %v2256 = vunpack.c.l.s8.bf16 %v656
        %v2257 = vunpack.c.h.s8.bf16 %v653
        %v2258 = vunpack.c.h.s8.bf16 %v654
        %v2259 = vunpack.c.h.s8.bf16 %v655
        %v2260 = vunpack.c.h.s8.bf16 %v656
        %v2261 = vunpack.c.l.s8.bf16 %v657
        %v2262 = vunpack.c.l.s8.bf16 %v658
        %v2263 = vunpack.c.l.s8.bf16 %v659
        %v2264 = vunpack.c.l.s8.bf16 %v660
        %v2265 = vunpack.c.h.s8.bf16 %v657
        %v2266 = vunpack.c.h.s8.bf16 %v658
        %v2267 = vunpack.c.h.s8.bf16 %v659
        %v2268 = vunpack.c.h.s8.bf16 %v660
        %v2269 = vunpack.c.l.s8.bf16 %v661
        %v2270 = vunpack.c.l.s8.bf16 %v662
        %v2271 = vunpack.c.l.s8.bf16 %v663
        %v2272 = vunpack.c.l.s8.bf16 %v664
        %v2273 = vunpack.c.h.s8.bf16 %v661
        %v2274 = vunpack.c.h.s8.bf16 %v662
        %v2275 = vunpack.c.h.s8.bf16 %v663
        %v2276 = vunpack.c.h.s8.bf16 %v664
        %v2277 = vunpack.c.l.s8.bf16 %v665
        %v2278 = vunpack.c.l.s8.bf16 %v666
        %v2279 = vunpack.c.l.s8.bf16 %v667
        %v2280 = vunpack.c.l.s8.bf16 %v668
        %v2281 = vunpack.c.h.s8.bf16 %v665
        %v2282 = vunpack.c.h.s8.bf16 %v666
        %v2283 = vunpack.c.h.s8.bf16 %v667
        %v2284 = vunpack.c.h.s8.bf16 %v668
        %v2285 = vunpack.c.l.s8.bf16 %v669
        %v2286 = vunpack.c.l.s8.bf16 %v670
        %v2287 = vunpack.c.l.s8.bf16 %v671
        %v2288 = vunpack.c.l.s8.bf16 %v672
        %v2289 = vunpack.c.h.s8.bf16 %v669
        %v2290 = vunpack.c.h.s8.bf16 %v670
        %v2291 = vunpack.c.h.s8.bf16 %v671
        %v2292 = vunpack.c.h.s8.bf16 %v672
        %v2293 = vunpack.c.l.s8.bf16 %v673
        %v2294 = vunpack.c.l.s8.bf16 %v674
        %v2295 = vunpack.c.l.s8.bf16 %v675
        %v2296 = vunpack.c.l.s8.bf16 %v676
        %v2297 = vunpack.c.h.s8.bf16 %v673
        %v2298 = vunpack.c.h.s8.bf16 %v674
        %v2299 = vunpack.c.h.s8.bf16 %v675
        %v2300 = vunpack.c.h.s8.bf16 %v676
        %v2301 = vunpack.c.l.s8.bf16 %v677
        %v2302 = vunpack.c.l.s8.bf16 %v678
        %v2303 = vunpack.c.l.s8.bf16 %v679
        %v2304 = vunpack.c.l.s8.bf16 %v680
        %v2305 = vunpack.c.h.s8.bf16 %v677
        %v2306 = vunpack.c.h.s8.bf16 %v678
        %v2307 = vunpack.c.h.s8.bf16 %v679
        %v2308 = vunpack.c.h.s8.bf16 %v680
        %v2309 = vunpack.c.l.s8.bf16 %v681
        %v2310 = vunpack.c.l.s8.bf16 %v682
        %v2311 = vunpack.c.l.s8.bf16 %v683
        %v2312 = vunpack.c.l.s8.bf16 %v684
        %v2313 = vunpack.c.h.s8.bf16 %v681
        %v2314 = vunpack.c.h.s8.bf16 %v682
        %v2315 = vunpack.c.h.s8.bf16 %v683
        %v2316 = vunpack.c.h.s8.bf16 %v684
        %v2317 = vunpack.c.l.s8.bf16 %v685
        %v2318 = vunpack.c.l.s8.bf16 %v686
        %v2319 = vunpack.c.l.s8.bf16 %v687
        %v2320 = vunpack.c.l.s8.bf16 %v688
        %v2321 = vunpack.c.h.s8.bf16 %v685
        %v2322 = vunpack.c.h.s8.bf16 %v686
        %v2323 = vunpack.c.h.s8.bf16 %v687
        %v2324 = vunpack.c.h.s8.bf16 %v688
        %v2325 = vunpack.c.l.s8.bf16 %v689
        %v2326 = vunpack.c.l.s8.bf16 %v690
        %v2327 = vunpack.c.l.s8.bf16 %v691
        %v2328 = vunpack.c.l.s8.bf16 %v692
        %v2329 = vunpack.c.h.s8.bf16 %v689
        %v2330 = vunpack.c.h.s8.bf16 %v690
        %v2331 = vunpack.c.h.s8.bf16 %v691
        %v2332 = vunpack.c.h.s8.bf16 %v692
        %v2333 = vunpack.c.l.s8.bf16 %v693
        %v2334 = vunpack.c.l.s8.bf16 %v694
        %v2335 = vunpack.c.l.s8.bf16 %v695
        %v2336 = vunpack.c.l.s8.bf16 %v696
        %v2337 = vunpack.c.h.s8.bf16 %v693
        %v2338 = vunpack.c.h.s8.bf16 %v694
        %v2339 = vunpack.c.h.s8.bf16 %v695
        %v2340 = vunpack.c.h.s8.bf16 %v696
        %v2341 = vunpack.c.l.s8.bf16 %v697
        %v2342 = vunpack.c.l.s8.bf16 %v698
        %v2343 = vunpack.c.l.s8.bf16 %v699
        %v2344 = vunpack.c.l.s8.bf16 %v700
        %v2345 = vunpack.c.h.s8.bf16 %v697
        %v2346 = vunpack.c.h.s8.bf16 %v698
        %v2347 = vunpack.c.h.s8.bf16 %v699
        %v2348 = vunpack.c.h.s8.bf16 %v700
        %v2349 = vunpack.c.l.s8.bf16 %v701
        %v2350 = vunpack.c.l.s8.bf16 %v702
        %v2351 = vunpack.c.l.s8.bf16 %v703
        %v2352 = vunpack.c.l.s8.bf16 %v704
        %v2353 = vunpack.c.h.s8.bf16 %v701
        %v2354 = vunpack.c.h.s8.bf16 %v702
        %v2355 = vunpack.c.h.s8.bf16 %v703
        %v2356 = vunpack.c.h.s8.bf16 %v704
        %v2357 = vunpack.c.l.s8.bf16 %v705
        %v2358 = vunpack.c.l.s8.bf16 %v706
        %v2359 = vunpack.c.l.s8.bf16 %v707
        %v2360 = vunpack.c.l.s8.bf16 %v708
        %v2361 = vunpack.c.h.s8.bf16 %v705
        %v2362 = vunpack.c.h.s8.bf16 %v706
        %v2363 = vunpack.c.h.s8.bf16 %v707
        %v2364 = vunpack.c.h.s8.bf16 %v708
        %v2365 = vunpack.c.l.s8.bf16 %v709
        %v2366 = vunpack.c.l.s8.bf16 %v710
        %v2367 = vunpack.c.l.s8.bf16 %v711
        %v2368 = vunpack.c.l.s8.bf16 %v712
        %v2369 = vunpack.c.h.s8.bf16 %v709
        %v2370 = vunpack.c.h.s8.bf16 %v710
        %v2371 = vunpack.c.h.s8.bf16 %v711
        %v2372 = vunpack.c.h.s8.bf16 %v712
        %v2373 = vunpack.c.l.s8.bf16 %v713
        %v2374 = vunpack.c.l.s8.bf16 %v714
        %v2375 = vunpack.c.l.s8.bf16 %v715
        %v2376 = vunpack.c.l.s8.bf16 %v716
        %v2377 = vunpack.c.h.s8.bf16 %v713
        %v2378 = vunpack.c.h.s8.bf16 %v714
        %v2379 = vunpack.c.h.s8.bf16 %v715
        %v2380 = vunpack.c.h.s8.bf16 %v716
        %v2381 = vunpack.c.l.s8.bf16 %v717
        %v2382 = vunpack.c.l.s8.bf16 %v718
        %v2383 = vunpack.c.l.s8.bf16 %v719
        %v2384 = vunpack.c.l.s8.bf16 %v720
        %v2385 = vunpack.c.h.s8.bf16 %v717
        %v2386 = vunpack.c.h.s8.bf16 %v718
        %v2387 = vunpack.c.h.s8.bf16 %v719
        %v2388 = vunpack.c.h.s8.bf16 %v720
        %v2389 = vunpack.c.l.s8.bf16 %v721
        %v2390 = vunpack.c.l.s8.bf16 %v722
        %v2391 = vunpack.c.l.s8.bf16 %v723
        %v2392 = vunpack.c.l.s8.bf16 %v724
        %v2393 = vunpack.c.h.s8.bf16 %v721
        %v2394 = vunpack.c.h.s8.bf16 %v722
        %v2395 = vunpack.c.h.s8.bf16 %v723
        %v2396 = vunpack.c.h.s8.bf16 %v724
        %v2397 = vunpack.c.l.s8.bf16 %v725
        %v2398 = vunpack.c.l.s8.bf16 %v726
        %v2399 = vunpack.c.l.s8.bf16 %v727
        %v2400 = vunpack.c.l.s8.bf16 %v728
        %v2401 = vunpack.c.h.s8.bf16 %v725
        %v2402 = vunpack.c.h.s8.bf16 %v726
        %v2403 = vunpack.c.h.s8.bf16 %v727
        %v2404 = vunpack.c.h.s8.bf16 %v728
        %v2405 = vunpack.c.l.s8.bf16 %v729
        %v2406 = vunpack.c.l.s8.bf16 %v730
        %v2407 = vunpack.c.l.s8.bf16 %v731
        %v2408 = vunpack.c.l.s8.bf16 %v732
        %v2409 = vunpack.c.h.s8.bf16 %v729
        %v2410 = vunpack.c.h.s8.bf16 %v730
        %v2411 = vunpack.c.h.s8.bf16 %v731
        %v2412 = vunpack.c.h.s8.bf16 %v732
        %v2413 = vunpack.c.l.s8.bf16 %v733
        %v2414 = vunpack.c.l.s8.bf16 %v734
        %v2415 = vunpack.c.l.s8.bf16 %v735
        %v2416 = vunpack.c.l.s8.bf16 %v736
        %v2417 = vunpack.c.h.s8.bf16 %v733
        %v2418 = vunpack.c.h.s8.bf16 %v734
        %v2419 = vunpack.c.h.s8.bf16 %v735
        %v2420 = vunpack.c.h.s8.bf16 %v736
        %v2421 = vunpack.c.l.s8.bf16 %v737
        %v2422 = vunpack.c.l.s8.bf16 %v738
        %v2423 = vunpack.c.l.s8.bf16 %v739
        %v2424 = vunpack.c.l.s8.bf16 %v740
        %v2425 = vunpack.c.h.s8.bf16 %v737
        %v2426 = vunpack.c.h.s8.bf16 %v738
        %v2427 = vunpack.c.h.s8.bf16 %v739
        %v2428 = vunpack.c.h.s8.bf16 %v740
        %v2429 = vunpack.c.l.s8.bf16 %v741
        %v2430 = vunpack.c.l.s8.bf16 %v742
        %v2431 = vunpack.c.l.s8.bf16 %v743
        %v2432 = vunpack.c.l.s8.bf16 %v744
        %v2433 = vunpack.c.h.s8.bf16 %v741
        %v2434 = vunpack.c.h.s8.bf16 %v742
        %v2435 = vunpack.c.h.s8.bf16 %v743
        %v2436 = vunpack.c.h.s8.bf16 %v744
        %v2437 = vunpack.c.l.s8.bf16 %v745
        %v2438 = vunpack.c.l.s8.bf16 %v746
        %v2439 = vunpack.c.l.s8.bf16 %v747
        %v2440 = vunpack.c.l.s8.bf16 %v748
        %v2441 = vunpack.c.h.s8.bf16 %v745
        %v2442 = vunpack.c.h.s8.bf16 %v746
        %v2443 = vunpack.c.h.s8.bf16 %v747
        %v2444 = vunpack.c.h.s8.bf16 %v748
        %v2445 = vunpack.c.l.s8.bf16 %v749
        %v2446 = vunpack.c.l.s8.bf16 %v750
        %v2447 = vunpack.c.l.s8.bf16 %v751
        %v2448 = vunpack.c.l.s8.bf16 %v752
        %v2449 = vunpack.c.h.s8.bf16 %v749
        %v2450 = vunpack.c.h.s8.bf16 %v750
        %v2451 = vunpack.c.h.s8.bf16 %v751
        %v2452 = vunpack.c.h.s8.bf16 %v752
        %v2453 = vunpack.c.l.s8.bf16 %v753
        %v2454 = vunpack.c.l.s8.bf16 %v754
        %v2455 = vunpack.c.l.s8.bf16 %v755
        %v2456 = vunpack.c.l.s8.bf16 %v756
        %v2457 = vunpack.c.h.s8.bf16 %v753
        %v2458 = vunpack.c.h.s8.bf16 %v754
        %v2459 = vunpack.c.h.s8.bf16 %v755
        %v2460 = vunpack.c.h.s8.bf16 %v756
        %v2461 = vunpack.c.l.s8.bf16 %v757
        %v2462 = vunpack.c.l.s8.bf16 %v758
        %v2463 = vunpack.c.l.s8.bf16 %v759
        %v2464 = vunpack.c.l.s8.bf16 %v760
        %v2465 = vunpack.c.h.s8.bf16 %v757
        %v2466 = vunpack.c.h.s8.bf16 %v758
        %v2467 = vunpack.c.h.s8.bf16 %v759
        %v2468 = vunpack.c.h.s8.bf16 %v760
        %v2469 = vunpack.c.l.s8.bf16 %v761
        %v2470 = vunpack.c.l.s8.bf16 %v762
        %v2471 = vunpack.c.l.s8.bf16 %v763
        %v2472 = vunpack.c.l.s8.bf16 %v764
        %v2473 = vunpack.c.h.s8.bf16 %v761
        %v2474 = vunpack.c.h.s8.bf16 %v762
        %v2475 = vunpack.c.h.s8.bf16 %v763
        %v2476 = vunpack.c.h.s8.bf16 %v764
        %v2477 = vunpack.c.l.s8.bf16 %v765
        %v2478 = vunpack.c.l.s8.bf16 %v766
        %v2479 = vunpack.c.l.s8.bf16 %v767
        %v2480 = vunpack.c.l.s8.bf16 %v768
        %v2481 = vunpack.c.h.s8.bf16 %v765
        %v2482 = vunpack.c.h.s8.bf16 %v766
        %v2483 = vunpack.c.h.s8.bf16 %v767
        %v2484 = vunpack.c.h.s8.bf16 %v768
        %v2485 = vunpack.c.l.s8.bf16 %v769
        %v2486 = vunpack.c.l.s8.bf16 %v770
        %v2487 = vunpack.c.l.s8.bf16 %v771
        %v2488 = vunpack.c.l.s8.bf16 %v772
        %v2489 = vunpack.c.h.s8.bf16 %v769
        %v2490 = vunpack.c.h.s8.bf16 %v770
        %v2491 = vunpack.c.h.s8.bf16 %v771
        %v2492 = vunpack.c.h.s8.bf16 %v772
        %v2493 = vunpack.c.l.s8.bf16 %v773
        %v2494 = vunpack.c.l.s8.bf16 %v774
        %v2495 = vunpack.c.l.s8.bf16 %v775
        %v2496 = vunpack.c.l.s8.bf16 %v776
        %v2497 = vunpack.c.h.s8.bf16 %v773
        %v2498 = vunpack.c.h.s8.bf16 %v774
        %v2499 = vunpack.c.h.s8.bf16 %v775
        %v2500 = vunpack.c.h.s8.bf16 %v776
        %v2501 = vunpack.c.l.s8.bf16 %v777
        %v2502 = vunpack.c.l.s8.bf16 %v778
        %v2503 = vunpack.c.l.s8.bf16 %v779
        %v2504 = vunpack.c.l.s8.bf16 %v780
        %v2505 = vunpack.c.h.s8.bf16 %v777
        %v2506 = vunpack.c.h.s8.bf16 %v778
        %v2507 = vunpack.c.h.s8.bf16 %v779
        %v2508 = vunpack.c.h.s8.bf16 %v780
        %v2509 = vunpack.c.l.s8.bf16 %v781
        %v2510 = vunpack.c.l.s8.bf16 %v782
        %v2511 = vunpack.c.l.s8.bf16 %v783
        %v2512 = vunpack.c.l.s8.bf16 %v784
        %v2513 = vunpack.c.h.s8.bf16 %v781
        %v2514 = vunpack.c.h.s8.bf16 %v782
        %v2515 = vunpack.c.h.s8.bf16 %v783
        %v2516 = vunpack.c.h.s8.bf16 %v784
        %v2517 = vunpack.c.l.s8.bf16 %v785
        %v2518 = vunpack.c.l.s8.bf16 %v786
        %v2519 = vunpack.c.l.s8.bf16 %v787
        %v2520 = vunpack.c.l.s8.bf16 %v788
        %v2521 = vunpack.c.h.s8.bf16 %v785
        %v2522 = vunpack.c.h.s8.bf16 %v786
        %v2523 = vunpack.c.h.s8.bf16 %v787
        %v2524 = vunpack.c.h.s8.bf16 %v788
        %v2525 = vunpack.c.l.s8.bf16 %v789
        %v2526 = vunpack.c.l.s8.bf16 %v790
        %v2527 = vunpack.c.l.s8.bf16 %v791
        %v2528 = vunpack.c.l.s8.bf16 %v792
        %v2529 = vunpack.c.h.s8.bf16 %v789
        %v2530 = vunpack.c.h.s8.bf16 %v790
        %v2531 = vunpack.c.h.s8.bf16 %v791
        %v2532 = vunpack.c.h.s8.bf16 %v792
        %v2533 = vunpack.c.l.s8.bf16 %v793
        %v2534 = vunpack.c.l.s8.bf16 %v794
        %v2535 = vunpack.c.l.s8.bf16 %v795
        %v2536 = vunpack.c.l.s8.bf16 %v796
        %v2537 = vunpack.c.h.s8.bf16 %v793
        %v2538 = vunpack.c.h.s8.bf16 %v794
        %v2539 = vunpack.c.h.s8.bf16 %v795
        %v2540 = vunpack.c.h.s8.bf16 %v796
        %v2541 = vunpack.c.l.s8.bf16 %v797
        %v2542 = vunpack.c.l.s8.bf16 %v798
        %v2543 = vunpack.c.l.s8.bf16 %v799
        %v2544 = vunpack.c.l.s8.bf16 %v800
        %v2545 = vunpack.c.h.s8.bf16 %v797
        %v2546 = vunpack.c.h.s8.bf16 %v798
        %v2547 = vunpack.c.h.s8.bf16 %v799
        %v2548 = vunpack.c.h.s8.bf16 %v800
        %v2549 = vunpack.c.l.s8.bf16 %v801
        %v2550 = vunpack.c.l.s8.bf16 %v802
        %v2551 = vunpack.c.l.s8.bf16 %v803
        %v2552 = vunpack.c.l.s8.bf16 %v804
        %v2553 = vunpack.c.h.s8.bf16 %v801
        %v2554 = vunpack.c.h.s8.bf16 %v802
        %v2555 = vunpack.c.h.s8.bf16 %v803
        %v2556 = vunpack.c.h.s8.bf16 %v804
        %v2557 = vunpack.c.l.s8.bf16 %v805
        %v2558 = vunpack.c.l.s8.bf16 %v806
        %v2559 = vunpack.c.l.s8.bf16 %v807
        %v2560 = vunpack.c.l.s8.bf16 %v808
        %v2561 = vunpack.c.h.s8.bf16 %v805
        %v2562 = vunpack.c.h.s8.bf16 %v806
        %v2563 = vunpack.c.h.s8.bf16 %v807
        %v2564 = vunpack.c.h.s8.bf16 %v808
        %v2565 = vunpack.c.l.s8.bf16 %v809
        %v2566 = vunpack.c.l.s8.bf16 %v810
        %v2567 = vunpack.c.l.s8.bf16 %v811
        %v2568 = vunpack.c.l.s8.bf16 %v812
        %v2569 = vunpack.c.h.s8.bf16 %v809
        %v2570 = vunpack.c.h.s8.bf16 %v810
        %v2571 = vunpack.c.h.s8.bf16 %v811
        %v2572 = vunpack.c.h.s8.bf16 %v812
        %v2573 = vunpack.c.l.s8.bf16 %v813
        %v2574 = vunpack.c.l.s8.bf16 %v814
        %v2575 = vunpack.c.l.s8.bf16 %v815
        %v2576 = vunpack.c.l.s8.bf16 %v816
        %v2577 = vunpack.c.h.s8.bf16 %v813
        %v2578 = vunpack.c.h.s8.bf16 %v814
        %v2579 = vunpack.c.h.s8.bf16 %v815
        %v2580 = vunpack.c.h.s8.bf16 %v816
        %v2581 = vunpack.c.l.s8.bf16 %v817
        %v2582 = vunpack.c.l.s8.bf16 %v818
        %v2583 = vunpack.c.l.s8.bf16 %v819
        %v2584 = vunpack.c.l.s8.bf16 %v820
        %v2585 = vunpack.c.h.s8.bf16 %v817
        %v2586 = vunpack.c.h.s8.bf16 %v818
        %v2587 = vunpack.c.h.s8.bf16 %v819
        %v2588 = vunpack.c.h.s8.bf16 %v820
        %v2589 = vunpack.c.l.s8.bf16 %v821
        %v2590 = vunpack.c.l.s8.bf16 %v822
        %v2591 = vunpack.c.l.s8.bf16 %v823
        %v2592 = vunpack.c.l.s8.bf16 %v824
        %v2593 = vunpack.c.h.s8.bf16 %v821
        %v2594 = vunpack.c.h.s8.bf16 %v822
        %v2595 = vunpack.c.h.s8.bf16 %v823
        %v2596 = vunpack.c.h.s8.bf16 %v824
        %v2597 = vunpack.c.l.s8.bf16 %v825
        %v2598 = vunpack.c.l.s8.bf16 %v826
        %v2599 = vunpack.c.l.s8.bf16 %v827
        %v2600 = vunpack.c.l.s8.bf16 %v828
        %v2601 = vunpack.c.h.s8.bf16 %v825
        %v2602 = vunpack.c.h.s8.bf16 %v826
        %v2603 = vunpack.c.h.s8.bf16 %v827
        %v2604 = vunpack.c.h.s8.bf16 %v828
        %v2605 = vunpack.c.l.s8.bf16 %v829
        %v2606 = vunpack.c.l.s8.bf16 %v830
        %v2607 = vunpack.c.l.s8.bf16 %v831
        %v2608 = vunpack.c.l.s8.bf16 %v832
        %v2609 = vunpack.c.h.s8.bf16 %v829
        %v2610 = vunpack.c.h.s8.bf16 %v830
        %v2611 = vunpack.c.h.s8.bf16 %v831
        %v2612 = vunpack.c.h.s8.bf16 %v832
        %v2613 = vunpack.c.l.s8.bf16 %v833
        %v2614 = vunpack.c.l.s8.bf16 %v834
        %v2615 = vunpack.c.l.s8.bf16 %v835
        %v2616 = vunpack.c.l.s8.bf16 %v836
        %v2617 = vunpack.c.h.s8.bf16 %v833
        %v2618 = vunpack.c.h.s8.bf16 %v834
        %v2619 = vunpack.c.h.s8.bf16 %v835
        %v2620 = vunpack.c.h.s8.bf16 %v836
        %v2621 = vunpack.c.l.s8.bf16 %v837
        %v2622 = vunpack.c.l.s8.bf16 %v838
        %v2623 = vunpack.c.l.s8.bf16 %v839
        %v2624 = vunpack.c.l.s8.bf16 %v840
        %v2625 = vunpack.c.h.s8.bf16 %v837
        %v2626 = vunpack.c.h.s8.bf16 %v838
        %v2627 = vunpack.c.h.s8.bf16 %v839
        %v2628 = vunpack.c.h.s8.bf16 %v840
        %v2629 = vunpack.c.l.s8.bf16 %v841
        %v2630 = vunpack.c.l.s8.bf16 %v842
        %v2631 = vunpack.c.l.s8.bf16 %v843
        %v2632 = vunpack.c.l.s8.bf16 %v844
        %v2633 = vunpack.c.h.s8.bf16 %v841
        %v2634 = vunpack.c.h.s8.bf16 %v842
        %v2635 = vunpack.c.h.s8.bf16 %v843
        %v2636 = vunpack.c.h.s8.bf16 %v844
        %v2637 = vunpack.c.l.s8.bf16 %v845
        %v2638 = vunpack.c.l.s8.bf16 %v846
        %v2639 = vunpack.c.l.s8.bf16 %v847
        %v2640 = vunpack.c.l.s8.bf16 %v848
        %v2641 = vunpack.c.h.s8.bf16 %v845
        %v2642 = vunpack.c.h.s8.bf16 %v846
        %v2643 = vunpack.c.h.s8.bf16 %v847
        %v2644 = vunpack.c.h.s8.bf16 %v848
        %v2645 = vunpack.c.l.s8.bf16 %v849
        %v2646 = vunpack.c.l.s8.bf16 %v850
        %v2647 = vunpack.c.l.s8.bf16 %v851
        %v2648 = vunpack.c.l.s8.bf16 %v852
        %v2649 = vunpack.c.h.s8.bf16 %v849
        %v2650 = vunpack.c.h.s8.bf16 %v850
        %v2651 = vunpack.c.h.s8.bf16 %v851
        %v2652 = vunpack.c.h.s8.bf16 %v852
        %v2653 = vunpack.c.l.s8.bf16 %v853
        %v2654 = vunpack.c.l.s8.bf16 %v854
        %v2655 = vunpack.c.l.s8.bf16 %v855
        %v2656 = vunpack.c.l.s8.bf16 %v856
        %v2657 = vunpack.c.h.s8.bf16 %v853
        %v2658 = vunpack.c.h.s8.bf16 %v854
        %v2659 = vunpack.c.h.s8.bf16 %v855
        %v2660 = vunpack.c.h.s8.bf16 %v856
        %v2661 = vunpack.c.l.s8.bf16 %v857
        %v2662 = vunpack.c.l.s8.bf16 %v858
        %v2663 = vunpack.c.l.s8.bf16 %v859
        %v2664 = vunpack.c.l.s8.bf16 %v860
        %v2665 = vunpack.c.h.s8.bf16 %v857
        %v2666 = vunpack.c.h.s8.bf16 %v858
        %v2667 = vunpack.c.h.s8.bf16 %v859
        %v2668 = vunpack.c.h.s8.bf16 %v860
        %v2669 = vunpack.c.l.s8.bf16 %v861
        %v2670 = vunpack.c.l.s8.bf16 %v862
        %v2671 = vunpack.c.l.s8.bf16 %v863
        %v2672 = vunpack.c.l.s8.bf16 %v864
        %v2673 = vunpack.c.h.s8.bf16 %v861
        %v2674 = vunpack.c.h.s8.bf16 %v862
        %v2675 = vunpack.c.h.s8.bf16 %v863
        %v2676 = vunpack.c.h.s8.bf16 %v864
        %v2677 = vunpack.c.l.s8.bf16 %v865
        %v2678 = vunpack.c.l.s8.bf16 %v866
        %v2679 = vunpack.c.l.s8.bf16 %v867
        %v2680 = vunpack.c.l.s8.bf16 %v868
        %v2681 = vunpack.c.h.s8.bf16 %v865
        %v2682 = vunpack.c.h.s8.bf16 %v866
        %v2683 = vunpack.c.h.s8.bf16 %v867
        %v2684 = vunpack.c.h.s8.bf16 %v868
        %v2685 = vunpack.c.l.s8.bf16 %v869
        %v2686 = vunpack.c.l.s8.bf16 %v870
        %v2687 = vunpack.c.l.s8.bf16 %v871
        %v2688 = vunpack.c.l.s8.bf16 %v872
        %v2689 = vunpack.c.h.s8.bf16 %v869
        %v2690 = vunpack.c.h.s8.bf16 %v870
        %v2691 = vunpack.c.h.s8.bf16 %v871
        %v2692 = vunpack.c.h.s8.bf16 %v872
        %v2693 = vunpack.c.l.s8.bf16 %v873
        %v2694 = vunpack.c.l.s8.bf16 %v874
        %v2695 = vunpack.c.l.s8.bf16 %v875
        %v2696 = vunpack.c.l.s8.bf16 %v876
        %v2697 = vunpack.c.h.s8.bf16 %v873
        %v2698 = vunpack.c.h.s8.bf16 %v874
        %v2699 = vunpack.c.h.s8.bf16 %v875
        %v2700 = vunpack.c.h.s8.bf16 %v876
        %v2701 = vunpack.c.l.s8.bf16 %v877
        %v2702 = vunpack.c.l.s8.bf16 %v878
        %v2703 = vunpack.c.l.s8.bf16 %v879
        %v2704 = vunpack.c.l.s8.bf16 %v880
        %v2705 = vunpack.c.h.s8.bf16 %v877
        %v2706 = vunpack.c.h.s8.bf16 %v878
        %v2707 = vunpack.c.h.s8.bf16 %v879
        %v2708 = vunpack.c.h.s8.bf16 %v880
        %v2709 = vunpack.c.l.s8.bf16 %v881
        %v2710 = vunpack.c.l.s8.bf16 %v882
        %v2711 = vunpack.c.l.s8.bf16 %v883
        %v2712 = vunpack.c.l.s8.bf16 %v884
        %v2713 = vunpack.c.h.s8.bf16 %v881
        %v2714 = vunpack.c.h.s8.bf16 %v882
        %v2715 = vunpack.c.h.s8.bf16 %v883
        %v2716 = vunpack.c.h.s8.bf16 %v884
        %v2717 = vunpack.c.l.s8.bf16 %v885
        %v2718 = vunpack.c.l.s8.bf16 %v886
        %v2719 = vunpack.c.l.s8.bf16 %v887
        %v2720 = vunpack.c.l.s8.bf16 %v888
        %v2721 = vunpack.c.h.s8.bf16 %v885
        %v2722 = vunpack.c.h.s8.bf16 %v886
        %v2723 = vunpack.c.h.s8.bf16 %v887
        %v2724 = vunpack.c.h.s8.bf16 %v888
        %v2725 = vunpack.c.l.s8.bf16 %v889
        %v2726 = vunpack.c.l.s8.bf16 %v890
        %v2727 = vunpack.c.l.s8.bf16 %v891
        %v2728 = vunpack.c.l.s8.bf16 %v892
        %v2729 = vunpack.c.h.s8.bf16 %v889
        %v2730 = vunpack.c.h.s8.bf16 %v890
        %v2731 = vunpack.c.h.s8.bf16 %v891
        %v2732 = vunpack.c.h.s8.bf16 %v892
        %v2733 = vunpack.c.l.s8.bf16 %v893
        %v2734 = vunpack.c.l.s8.bf16 %v894
        %v2735 = vunpack.c.l.s8.bf16 %v895
        %v2736 = vunpack.c.l.s8.bf16 %v896
        %v2737 = vunpack.c.h.s8.bf16 %v893
        %v2738 = vunpack.c.h.s8.bf16 %v894
        %v2739 = vunpack.c.h.s8.bf16 %v895
        %v2740 = vunpack.c.h.s8.bf16 %v896
        %v2741 = vunpack.c.l.s8.bf16 %v897
        %v2742 = vunpack.c.l.s8.bf16 %v898
        %v2743 = vunpack.c.l.s8.bf16 %v899
        %v2744 = vunpack.c.l.s8.bf16 %v900
        %v2745 = vunpack.c.h.s8.bf16 %v897
        %v2746 = vunpack.c.h.s8.bf16 %v898
        %v2747 = vunpack.c.h.s8.bf16 %v899
        %v2748 = vunpack.c.h.s8.bf16 %v900
        %v2749 = vunpack.c.l.s8.bf16 %v901
        %v2750 = vunpack.c.l.s8.bf16 %v902
        %v2751 = vunpack.c.l.s8.bf16 %v903
        %v2752 = vunpack.c.l.s8.bf16 %v904
        %v2753 = vunpack.c.h.s8.bf16 %v901
        %v2754 = vunpack.c.h.s8.bf16 %v902
        %v2755 = vunpack.c.h.s8.bf16 %v903
        %v2756 = vunpack.c.h.s8.bf16 %v904
        %v2757 = vunpack.c.l.s8.bf16 %v905
        %v2758 = vunpack.c.l.s8.bf16 %v906
        %v2759 = vunpack.c.l.s8.bf16 %v907
        %v2760 = vunpack.c.l.s8.bf16 %v908
        %v2761 = vunpack.c.h.s8.bf16 %v905
        %v2762 = vunpack.c.h.s8.bf16 %v906
        %v2763 = vunpack.c.h.s8.bf16 %v907
        %v2764 = vunpack.c.h.s8.bf16 %v908
        %v2765 = vunpack.c.l.s8.bf16 %v909
        %v2766 = vunpack.c.l.s8.bf16 %v910
        %v2767 = vunpack.c.l.s8.bf16 %v911
        %v2768 = vunpack.c.l.s8.bf16 %v912
        %v2769 = vunpack.c.h.s8.bf16 %v909
        %v2770 = vunpack.c.h.s8.bf16 %v910
        %v2771 = vunpack.c.h.s8.bf16 %v911
        %v2772 = vunpack.c.h.s8.bf16 %v912
        %v2773 = vunpack.c.l.s8.bf16 %v913
        %v2774 = vunpack.c.l.s8.bf16 %v914
        %v2775 = vunpack.c.l.s8.bf16 %v915
        %v2776 = vunpack.c.l.s8.bf16 %v916
        %v2777 = vunpack.c.h.s8.bf16 %v913
        %v2778 = vunpack.c.h.s8.bf16 %v914
        %v2779 = vunpack.c.h.s8.bf16 %v915
        %v2780 = vunpack.c.h.s8.bf16 %v916
        %v2781 = vunpack.c.l.s8.bf16 %v917
        %v2782 = vunpack.c.l.s8.bf16 %v918
        %v2783 = vunpack.c.l.s8.bf16 %v919
        %v2784 = vunpack.c.l.s8.bf16 %v920
        %v2785 = vunpack.c.h.s8.bf16 %v917
        %v2786 = vunpack.c.h.s8.bf16 %v918
        %v2787 = vunpack.c.h.s8.bf16 %v919
        %v2788 = vunpack.c.h.s8.bf16 %v920
        %v2789 = vunpack.c.l.s8.bf16 %v921
        %v2790 = vunpack.c.l.s8.bf16 %v922
        %v2791 = vunpack.c.l.s8.bf16 %v923
        %v2792 = vunpack.c.l.s8.bf16 %v924
        %v2793 = vunpack.c.h.s8.bf16 %v921
        %v2794 = vunpack.c.h.s8.bf16 %v922
        %v2795 = vunpack.c.h.s8.bf16 %v923
        %v2796 = vunpack.c.h.s8.bf16 %v924
        %v2797 = vunpack.c.l.s8.bf16 %v925
        %v2798 = vunpack.c.l.s8.bf16 %v926
        %v2799 = vunpack.c.l.s8.bf16 %v927
        %v2800 = vunpack.c.l.s8.bf16 %v928
        %v2801 = vunpack.c.h.s8.bf16 %v925
        %v2802 = vunpack.c.h.s8.bf16 %v926
        %v2803 = vunpack.c.h.s8.bf16 %v927
        %v2804 = vunpack.c.h.s8.bf16 %v928
        %v2805 = vunpack.c.l.s8.bf16 %v929
        %v2806 = vunpack.c.l.s8.bf16 %v930
        %v2807 = vunpack.c.l.s8.bf16 %v931
        %v2808 = vunpack.c.l.s8.bf16 %v932
        %v2809 = vunpack.c.h.s8.bf16 %v929
        %v2810 = vunpack.c.h.s8.bf16 %v930
        %v2811 = vunpack.c.h.s8.bf16 %v931
        %v2812 = vunpack.c.h.s8.bf16 %v932
        %v2813 = vunpack.c.l.s8.bf16 %v933
        %v2814 = vunpack.c.l.s8.bf16 %v934
        %v2815 = vunpack.c.l.s8.bf16 %v935
        %v2816 = vunpack.c.l.s8.bf16 %v936
        %v2817 = vunpack.c.h.s8.bf16 %v933
        %v2818 = vunpack.c.h.s8.bf16 %v934
        %v2819 = vunpack.c.h.s8.bf16 %v935
        %v2820 = vunpack.c.h.s8.bf16 %v936
        %v2821 = vunpack.c.l.s8.bf16 %v937
        %v2822 = vunpack.c.l.s8.bf16 %v938
        %v2823 = vunpack.c.l.s8.bf16 %v939
        %v2824 = vunpack.c.l.s8.bf16 %v940
        %v2825 = vunpack.c.h.s8.bf16 %v937
        %v2826 = vunpack.c.h.s8.bf16 %v938
        %v2827 = vunpack.c.h.s8.bf16 %v939
        %v2828 = vunpack.c.h.s8.bf16 %v940
        %v2829 = vunpack.c.l.s8.bf16 %v941
        %v2830 = vunpack.c.l.s8.bf16 %v942
        %v2831 = vunpack.c.l.s8.bf16 %v943
        %v2832 = vunpack.c.l.s8.bf16 %v944
        %v2833 = vunpack.c.h.s8.bf16 %v941
        %v2834 = vunpack.c.h.s8.bf16 %v942
        %v2835 = vunpack.c.h.s8.bf16 %v943
        %v2836 = vunpack.c.h.s8.bf16 %v944
        %v2837 = vunpack.c.l.s8.bf16 %v945
        %v2838 = vunpack.c.l.s8.bf16 %v946
        %v2839 = vunpack.c.l.s8.bf16 %v947
        %v2840 = vunpack.c.l.s8.bf16 %v948
        %v2841 = vunpack.c.h.s8.bf16 %v945
        %v2842 = vunpack.c.h.s8.bf16 %v946
        %v2843 = vunpack.c.h.s8.bf16 %v947
        %v2844 = vunpack.c.h.s8.bf16 %v948
        %v2845 = vunpack.c.l.s8.bf16 %v949
        %v2846 = vunpack.c.l.s8.bf16 %v950
        %v2847 = vunpack.c.l.s8.bf16 %v951
        %v2848 = vunpack.c.l.s8.bf16 %v952
        %v2849 = vunpack.c.h.s8.bf16 %v949
        %v2850 = vunpack.c.h.s8.bf16 %v950
        %v2851 = vunpack.c.h.s8.bf16 %v951
        %v2852 = vunpack.c.h.s8.bf16 %v952
        %v2853 = vunpack.c.l.s8.bf16 %v953
        %v2854 = vunpack.c.l.s8.bf16 %v954
        %v2855 = vunpack.c.l.s8.bf16 %v955
        %v2856 = vunpack.c.l.s8.bf16 %v956
        %v2857 = vunpack.c.h.s8.bf16 %v953
        %v2858 = vunpack.c.h.s8.bf16 %v954
        %v2859 = vunpack.c.h.s8.bf16 %v955
        %v2860 = vunpack.c.h.s8.bf16 %v956
        %v2861 = vunpack.c.l.s8.bf16 %v957
        %v2862 = vunpack.c.l.s8.bf16 %v958
        %v2863 = vunpack.c.l.s8.bf16 %v959
        %v2864 = vunpack.c.l.s8.bf16 %v960
        %v2865 = vunpack.c.h.s8.bf16 %v957
        %v2866 = vunpack.c.h.s8.bf16 %v958
        %v2867 = vunpack.c.h.s8.bf16 %v959
        %v2868 = vunpack.c.h.s8.bf16 %v960
        %v2869 = vunpack.c.l.s8.bf16 %v961
        %v2870 = vunpack.c.l.s8.bf16 %v962
        %v2871 = vunpack.c.l.s8.bf16 %v963
        %v2872 = vunpack.c.l.s8.bf16 %v964
        %v2873 = vunpack.c.h.s8.bf16 %v961
        %v2874 = vunpack.c.h.s8.bf16 %v962
        %v2875 = vunpack.c.h.s8.bf16 %v963
        %v2876 = vunpack.c.h.s8.bf16 %v964
        %v2877 = vunpack.c.l.s8.bf16 %v965
        %v2878 = vunpack.c.l.s8.bf16 %v966
        %v2879 = vunpack.c.l.s8.bf16 %v967
        %v2880 = vunpack.c.l.s8.bf16 %v968
        %v2881 = vunpack.c.h.s8.bf16 %v965
        %v2882 = vunpack.c.h.s8.bf16 %v966
        %v2883 = vunpack.c.h.s8.bf16 %v967
        %v2884 = vunpack.c.h.s8.bf16 %v968
        %v2885 = vunpack.c.l.s8.bf16 %v969
        %v2886 = vunpack.c.l.s8.bf16 %v970
        %v2887 = vunpack.c.l.s8.bf16 %v971
        %v2888 = vunpack.c.l.s8.bf16 %v972
        %v2889 = vunpack.c.h.s8.bf16 %v969
        %v2890 = vunpack.c.h.s8.bf16 %v970
        %v2891 = vunpack.c.h.s8.bf16 %v971
        %v2892 = vunpack.c.h.s8.bf16 %v972
        %v2893 = vunpack.c.l.s8.bf16 %v973
        %v2894 = vunpack.c.l.s8.bf16 %v974
        %v2895 = vunpack.c.l.s8.bf16 %v975
        %v2896 = vunpack.c.l.s8.bf16 %v976
        %v2897 = vunpack.c.h.s8.bf16 %v973
        %v2898 = vunpack.c.h.s8.bf16 %v974
        %v2899 = vunpack.c.h.s8.bf16 %v975
        %v2900 = vunpack.c.h.s8.bf16 %v976
        %v2901 = vunpack.c.l.s8.bf16 %v977
        %v2902 = vunpack.c.l.s8.bf16 %v978
        %v2903 = vunpack.c.l.s8.bf16 %v979
        %v2904 = vunpack.c.l.s8.bf16 %v980
        %v2905 = vunpack.c.h.s8.bf16 %v977
        %v2906 = vunpack.c.h.s8.bf16 %v978
        %v2907 = vunpack.c.h.s8.bf16 %v979
        %v2908 = vunpack.c.h.s8.bf16 %v980
        %v2909 = vunpack.c.l.s8.bf16 %v981
        %v2910 = vunpack.c.l.s8.bf16 %v982
        %v2911 = vunpack.c.l.s8.bf16 %v983
        %v2912 = vunpack.c.l.s8.bf16 %v984
        %v2913 = vunpack.c.h.s8.bf16 %v981
        %v2914 = vunpack.c.h.s8.bf16 %v982
        %v2915 = vunpack.c.h.s8.bf16 %v983
        %v2916 = vunpack.c.h.s8.bf16 %v984
        %v2917 = vunpack.c.l.s8.bf16 %v985
        %v2918 = vunpack.c.l.s8.bf16 %v986
        %v2919 = vunpack.c.l.s8.bf16 %v987
        %v2920 = vunpack.c.l.s8.bf16 %v988
        %v2921 = vunpack.c.h.s8.bf16 %v985
        %v2922 = vunpack.c.h.s8.bf16 %v986
        %v2923 = vunpack.c.h.s8.bf16 %v987
        %v2924 = vunpack.c.h.s8.bf16 %v988
        %v2925 = vunpack.c.l.s8.bf16 %v989
        %v2926 = vunpack.c.l.s8.bf16 %v990
        %v2927 = vunpack.c.l.s8.bf16 %v991
        %v2928 = vunpack.c.l.s8.bf16 %v992
        %v2929 = vunpack.c.h.s8.bf16 %v989
        %v2930 = vunpack.c.h.s8.bf16 %v990
        %v2931 = vunpack.c.h.s8.bf16 %v991
        %v2932 = vunpack.c.h.s8.bf16 %v992
        %v2933 = vunpack.c.l.s8.bf16 %v993
        %v2934 = vunpack.c.l.s8.bf16 %v994
        %v2935 = vunpack.c.l.s8.bf16 %v995
        %v2936 = vunpack.c.l.s8.bf16 %v996
        %v2937 = vunpack.c.h.s8.bf16 %v993
        %v2938 = vunpack.c.h.s8.bf16 %v994
        %v2939 = vunpack.c.h.s8.bf16 %v995
        %v2940 = vunpack.c.h.s8.bf16 %v996
        %v2941 = vunpack.c.l.s8.bf16 %v997
        %v2942 = vunpack.c.l.s8.bf16 %v998
        %v2943 = vunpack.c.l.s8.bf16 %v999
        %v2944 = vunpack.c.l.s8.bf16 %v1000
        %v2945 = vunpack.c.h.s8.bf16 %v997
        %v2946 = vunpack.c.h.s8.bf16 %v998
        %v2947 = vunpack.c.h.s8.bf16 %v999
        %v2948 = vunpack.c.h.s8.bf16 %v1000
        %v2949 = vunpack.c.l.s8.bf16 %v1001
        %v2950 = vunpack.c.l.s8.bf16 %v1002
        %v2951 = vunpack.c.l.s8.bf16 %v1003
        %v2952 = vunpack.c.l.s8.bf16 %v1004
        %v2953 = vunpack.c.h.s8.bf16 %v1001
        %v2954 = vunpack.c.h.s8.bf16 %v1002
        %v2955 = vunpack.c.h.s8.bf16 %v1003
        %v2956 = vunpack.c.h.s8.bf16 %v1004
        %v2957 = vunpack.c.l.s8.bf16 %v1005
        %v2958 = vunpack.c.l.s8.bf16 %v1006
        %v2959 = vunpack.c.l.s8.bf16 %v1007
        %v2960 = vunpack.c.l.s8.bf16 %v1008
        %v2961 = vunpack.c.h.s8.bf16 %v1005
        %v2962 = vunpack.c.h.s8.bf16 %v1006
        %v2963 = vunpack.c.h.s8.bf16 %v1007
        %v2964 = vunpack.c.h.s8.bf16 %v1008
        %v2965 = vunpack.c.l.s8.bf16 %v1009
        %v2966 = vunpack.c.l.s8.bf16 %v1010
        %v2967 = vunpack.c.l.s8.bf16 %v1011
        %v2968 = vunpack.c.l.s8.bf16 %v1012
        %v2969 = vunpack.c.h.s8.bf16 %v1009
        %v2970 = vunpack.c.h.s8.bf16 %v1010
        %v2971 = vunpack.c.h.s8.bf16 %v1011
        %v2972 = vunpack.c.h.s8.bf16 %v1012
        %v2973 = vunpack.c.l.s8.bf16 %v1013
        %v2974 = vunpack.c.l.s8.bf16 %v1014
        %v2975 = vunpack.c.l.s8.bf16 %v1015
        %v2976 = vunpack.c.l.s8.bf16 %v1016
        %v2977 = vunpack.c.h.s8.bf16 %v1013
        %v2978 = vunpack.c.h.s8.bf16 %v1014
        %v2979 = vunpack.c.h.s8.bf16 %v1015
        %v2980 = vunpack.c.h.s8.bf16 %v1016
        %v2981 = vunpack.c.l.s8.bf16 %v1017
        %v2982 = vunpack.c.l.s8.bf16 %v1018
        %v2983 = vunpack.c.l.s8.bf16 %v1019
        %v2984 = vunpack.c.l.s8.bf16 %v1020
        %v2985 = vunpack.c.h.s8.bf16 %v1017
        %v2986 = vunpack.c.h.s8.bf16 %v1018
        %v2987 = vunpack.c.h.s8.bf16 %v1019
        %v2988 = vunpack.c.h.s8.bf16 %v1020
        %v2989 = vunpack.c.l.s8.bf16 %v1021
        %v2990 = vunpack.c.l.s8.bf16 %v1022
        %v2991 = vunpack.c.l.s8.bf16 %v1023
        %v2992 = vunpack.c.l.s8.bf16 %v1024
        %v2993 = vunpack.c.h.s8.bf16 %v1021
        %v2994 = vunpack.c.h.s8.bf16 %v1022
        %v2995 = vunpack.c.h.s8.bf16 %v1023
        %v2996 = vunpack.c.h.s8.bf16 %v1024
        %v2997 = vunpack.c.l.s8.bf16 %v1025
        %v2998 = vunpack.c.l.s8.bf16 %v1026
        %v2999 = vunpack.c.l.s8.bf16 %v1027
        %v3000 = vunpack.c.l.s8.bf16 %v1028
        %v3001 = vunpack.c.h.s8.bf16 %v1025
        %v3002 = vunpack.c.h.s8.bf16 %v1026
        %v3003 = vunpack.c.h.s8.bf16 %v1027
        %v3004 = vunpack.c.h.s8.bf16 %v1028
        %v3005 = vunpack.c.l.s8.bf16 %v1029
        %v3006 = vunpack.c.l.s8.bf16 %v1030
        %v3007 = vunpack.c.l.s8.bf16 %v1031
        %v3008 = vunpack.c.l.s8.bf16 %v1032
        %v3009 = vunpack.c.h.s8.bf16 %v1029
        %v3010 = vunpack.c.h.s8.bf16 %v1030
        %v3011 = vunpack.c.h.s8.bf16 %v1031
        %v3012 = vunpack.c.h.s8.bf16 %v1032
        %v3013 = vunpack.c.l.s8.bf16 %v1033
        %v3014 = vunpack.c.l.s8.bf16 %v1034
        %v3015 = vunpack.c.l.s8.bf16 %v1035
        %v3016 = vunpack.c.l.s8.bf16 %v1036
        %v3017 = vunpack.c.h.s8.bf16 %v1033
        %v3018 = vunpack.c.h.s8.bf16 %v1034
        %v3019 = vunpack.c.h.s8.bf16 %v1035
        %v3020 = vunpack.c.h.s8.bf16 %v1036
        %v3021 = vunpack.c.l.s8.bf16 %v1037
        %v3022 = vunpack.c.l.s8.bf16 %v1038
        %v3023 = vunpack.c.l.s8.bf16 %v1039
        %v3024 = vunpack.c.l.s8.bf16 %v1040
        %v3025 = vunpack.c.h.s8.bf16 %v1037
        %v3026 = vunpack.c.h.s8.bf16 %v1038
        %v3027 = vunpack.c.h.s8.bf16 %v1039
        %v3028 = vunpack.c.h.s8.bf16 %v1040
        %v3029 = vunpack.c.l.s8.bf16 %v1041
        %v3030 = vunpack.c.l.s8.bf16 %v1042
        %v3031 = vunpack.c.l.s8.bf16 %v1043
        %v3032 = vunpack.c.l.s8.bf16 %v1044
        %v3033 = vunpack.c.h.s8.bf16 %v1041
        %v3034 = vunpack.c.h.s8.bf16 %v1042
        %v3035 = vunpack.c.h.s8.bf16 %v1043
        %v3036 = vunpack.c.h.s8.bf16 %v1044
        %v3037 = vunpack.c.l.s8.bf16 %v1045
        %v3038 = vunpack.c.l.s8.bf16 %v1046
        %v3039 = vunpack.c.l.s8.bf16 %v1047
        %v3040 = vunpack.c.l.s8.bf16 %v1048
        %v3041 = vunpack.c.h.s8.bf16 %v1045
        %v3042 = vunpack.c.h.s8.bf16 %v1046
        %v3043 = vunpack.c.h.s8.bf16 %v1047
        %v3044 = vunpack.c.h.s8.bf16 %v1048
        %v3045 = vunpack.c.l.s8.bf16 %v1049
        %v3046 = vunpack.c.l.s8.bf16 %v1050
        %v3047 = vunpack.c.l.s8.bf16 %v1051
        %v3048 = vunpack.c.l.s8.bf16 %v1052
        %v3049 = vunpack.c.h.s8.bf16 %v1049
        %v3050 = vunpack.c.h.s8.bf16 %v1050
        %v3051 = vunpack.c.h.s8.bf16 %v1051
        %v3052 = vunpack.c.h.s8.bf16 %v1052
        %v3053 = vunpack.c.l.s8.bf16 %v1053
        %v3054 = vunpack.c.l.s8.bf16 %v1054
        %v3055 = vunpack.c.l.s8.bf16 %v1055
        %v3056 = vunpack.c.l.s8.bf16 %v1056
        %v3057 = vunpack.c.h.s8.bf16 %v1053
        %v3058 = vunpack.c.h.s8.bf16 %v1054
        %v3059 = vunpack.c.h.s8.bf16 %v1055
        %v3060 = vunpack.c.h.s8.bf16 %v1056
        %v3061 = vunpack.c.l.s8.bf16 %v1057
        %v3062 = vunpack.c.l.s8.bf16 %v1058
        %v3063 = vunpack.c.l.s8.bf16 %v1059
        %v3064 = vunpack.c.l.s8.bf16 %v1060
        %v3065 = vunpack.c.h.s8.bf16 %v1057
        %v3066 = vunpack.c.h.s8.bf16 %v1058
        %v3067 = vunpack.c.h.s8.bf16 %v1059
        %v3068 = vunpack.c.h.s8.bf16 %v1060
        %v3069 = vunpack.c.l.s8.bf16 %v1061
        %v3070 = vunpack.c.l.s8.bf16 %v1062
        %v3071 = vunpack.c.l.s8.bf16 %v1063
        %v3072 = vunpack.c.l.s8.bf16 %v1064
        %v3073 = vunpack.c.h.s8.bf16 %v1061
        %v3074 = vunpack.c.h.s8.bf16 %v1062
        %v3075 = vunpack.c.h.s8.bf16 %v1063
        %v3076 = vunpack.c.h.s8.bf16 %v1064
        %v3077 = vunpack.c.l.s8.bf16 %v1065
        %v3078 = vunpack.c.l.s8.bf16 %v1066
        %v3079 = vunpack.c.l.s8.bf16 %v1067
        %v3080 = vunpack.c.l.s8.bf16 %v1068
        %v3081 = vunpack.c.h.s8.bf16 %v1065
        %v3082 = vunpack.c.h.s8.bf16 %v1066
        %v3083 = vunpack.c.h.s8.bf16 %v1067
        %v3084 = vunpack.c.h.s8.bf16 %v1068
        %v3085 = vunpack.c.l.s8.bf16 %v1069
        %v3086 = vunpack.c.l.s8.bf16 %v1070
        %v3087 = vunpack.c.l.s8.bf16 %v1071
        %v3088 = vunpack.c.l.s8.bf16 %v1072
        %v3089 = vunpack.c.h.s8.bf16 %v1069
        %v3090 = vunpack.c.h.s8.bf16 %v1070
        %v3091 = vunpack.c.h.s8.bf16 %v1071
        %v3092 = vunpack.c.h.s8.bf16 %v1072
        %v3093 = vunpack.c.l.s8.bf16 %v1073
        %v3094 = vunpack.c.l.s8.bf16 %v1074
        %v3095 = vunpack.c.l.s8.bf16 %v1075
        %v3096 = vunpack.c.l.s8.bf16 %v1076
        %v3097 = vunpack.c.h.s8.bf16 %v1073
        %v3098 = vunpack.c.h.s8.bf16 %v1074
        %v3099 = vunpack.c.h.s8.bf16 %v1075
        %v3100 = vunpack.c.h.s8.bf16 %v1076
        %v3101 = vunpack.c.l.s8.bf16 %v1077
        %v3102 = vunpack.c.l.s8.bf16 %v1078
        %v3103 = vunpack.c.l.s8.bf16 %v1079
        %v3104 = vunpack.c.l.s8.bf16 %v1080
        %v3105 = vunpack.c.h.s8.bf16 %v1077
        %v3106 = vunpack.c.h.s8.bf16 %v1078
        %v3107 = vunpack.c.h.s8.bf16 %v1079
        %v3108 = vunpack.c.h.s8.bf16 %v1080
        %v3109 = vunpack.c.l.s8.bf16 %v1081
        %v3110 = vunpack.c.l.s8.bf16 %v1082
        %v3111 = vunpack.c.l.s8.bf16 %v1083
        %v3112 = vunpack.c.l.s8.bf16 %v1084
        %v3113 = vunpack.c.h.s8.bf16 %v1081
        %v3114 = vunpack.c.h.s8.bf16 %v1082
        %v3115 = vunpack.c.h.s8.bf16 %v1083
        %v3116 = vunpack.c.h.s8.bf16 %v1084
        %v3117 = vunpack.c.l.s8.bf16 %v1085
        %v3118 = vunpack.c.l.s8.bf16 %v1086
        %v3119 = vunpack.c.l.s8.bf16 %v1087
        %v3120 = vunpack.c.l.s8.bf16 %v1088
        %v3121 = vunpack.c.h.s8.bf16 %v1085
        %v3122 = vunpack.c.h.s8.bf16 %v1086
        %v3123 = vunpack.c.h.s8.bf16 %v1087
        %v3124 = vunpack.c.h.s8.bf16 %v1088
        %v3125 = vunpack.c.l.s8.bf16 %v1089
        %v3126 = vunpack.c.l.s8.bf16 %v1090
        %v3127 = vunpack.c.l.s8.bf16 %v1091
        %v3128 = vunpack.c.l.s8.bf16 %v1092
        %v3129 = vunpack.c.h.s8.bf16 %v1089
        %v3130 = vunpack.c.h.s8.bf16 %v1090
        %v3131 = vunpack.c.h.s8.bf16 %v1091
        %v3132 = vunpack.c.h.s8.bf16 %v1092
        %v3133 = vunpack.c.l.s8.bf16 %v1093
        %v3134 = vunpack.c.l.s8.bf16 %v1094
        %v3135 = vunpack.c.l.s8.bf16 %v1095
        %v3136 = vunpack.c.l.s8.bf16 %v1096
        %v3137 = vunpack.c.h.s8.bf16 %v1093
        %v3138 = vunpack.c.h.s8.bf16 %v1094
        %v3139 = vunpack.c.h.s8.bf16 %v1095
        %v3140 = vunpack.c.h.s8.bf16 %v1096
        %v3141 = vunpack.c.l.s8.bf16 %v1097
        %v3142 = vunpack.c.l.s8.bf16 %v1098
        %v3143 = vunpack.c.l.s8.bf16 %v1099
        %v3144 = vunpack.c.l.s8.bf16 %v1100
        %v3145 = vunpack.c.h.s8.bf16 %v1097
        %v3146 = vunpack.c.h.s8.bf16 %v1098
        %v3147 = vunpack.c.h.s8.bf16 %v1099
        %v3148 = vunpack.c.h.s8.bf16 %v1100
        %v3149 = vunpack.c.l.s8.bf16 %v1101
        %v3150 = vunpack.c.l.s8.bf16 %v1102
        %v3151 = vunpack.c.l.s8.bf16 %v1103
        %v3152 = vunpack.c.l.s8.bf16 %v1104
        %v3153 = vunpack.c.h.s8.bf16 %v1101
        %v3154 = vunpack.c.h.s8.bf16 %v1102
        %v3155 = vunpack.c.h.s8.bf16 %v1103
        %v3156 = vunpack.c.h.s8.bf16 %v1104
        %v3157 = vunpack.c.l.s8.bf16 %v1105
        %v3158 = vunpack.c.l.s8.bf16 %v1106
        %v3159 = vunpack.c.l.s8.bf16 %v1107
        %v3160 = vunpack.c.l.s8.bf16 %v1108
        %v3161 = vunpack.c.h.s8.bf16 %v1105
        %v3162 = vunpack.c.h.s8.bf16 %v1106
        %v3163 = vunpack.c.h.s8.bf16 %v1107
        %v3164 = vunpack.c.h.s8.bf16 %v1108
        %v3165 = vunpack.c.l.s8.bf16 %v1109
        %v3166 = vunpack.c.l.s8.bf16 %v1110
        %v3167 = vunpack.c.l.s8.bf16 %v1111
        %v3168 = vunpack.c.l.s8.bf16 %v1112
        %v3169 = vunpack.c.h.s8.bf16 %v1109
        %v3170 = vunpack.c.h.s8.bf16 %v1110
        %v3171 = vunpack.c.h.s8.bf16 %v1111
        %v3172 = vunpack.c.h.s8.bf16 %v1112
        %v3173 = vunpack.c.l.s8.bf16 %v1113
        %v3174 = vunpack.c.l.s8.bf16 %v1114
        %v3175 = vunpack.c.l.s8.bf16 %v1115
        %v3176 = vunpack.c.l.s8.bf16 %v1116
        %v3177 = vunpack.c.h.s8.bf16 %v1113
        %v3178 = vunpack.c.h.s8.bf16 %v1114
        %v3179 = vunpack.c.h.s8.bf16 %v1115
        %v3180 = vunpack.c.h.s8.bf16 %v1116
        %v3181 = vunpack.c.l.s8.bf16 %v1117
        %v3182 = vunpack.c.l.s8.bf16 %v1118
        %v3183 = vunpack.c.l.s8.bf16 %v1119
        %v3184 = vunpack.c.l.s8.bf16 %v1120
        %v3185 = vunpack.c.h.s8.bf16 %v1117
        %v3186 = vunpack.c.h.s8.bf16 %v1118
        %v3187 = vunpack.c.h.s8.bf16 %v1119
        %v3188 = vunpack.c.h.s8.bf16 %v1120
        %v3189 = vunpack.c.l.s8.bf16 %v1121
        %v3190 = vunpack.c.l.s8.bf16 %v1122
        %v3191 = vunpack.c.l.s8.bf16 %v1123
        %v3192 = vunpack.c.l.s8.bf16 %v1124
        %v3193 = vunpack.c.h.s8.bf16 %v1121
        %v3194 = vunpack.c.h.s8.bf16 %v1122
        %v3195 = vunpack.c.h.s8.bf16 %v1123
        %v3196 = vunpack.c.h.s8.bf16 %v1124
        %v3197 = vunpack.c.l.s8.bf16 %v1125
        %v3198 = vunpack.c.l.s8.bf16 %v1126
        %v3199 = vunpack.c.l.s8.bf16 %v1127
        %v3200 = vunpack.c.l.s8.bf16 %v1128
        %v3201 = vunpack.c.h.s8.bf16 %v1125
        %v3202 = vunpack.c.h.s8.bf16 %v1126
        %v3203 = vunpack.c.h.s8.bf16 %v1127
        %v3204 = vunpack.c.h.s8.bf16 %v1128
        %v3205 = vunpack.c.l.s8.bf16 %v1129
        %v3206 = vunpack.c.l.s8.bf16 %v1130
        %v3207 = vunpack.c.l.s8.bf16 %v1131
        %v3208 = vunpack.c.l.s8.bf16 %v1132
        %v3209 = vunpack.c.h.s8.bf16 %v1129
        %v3210 = vunpack.c.h.s8.bf16 %v1130
        %v3211 = vunpack.c.h.s8.bf16 %v1131
        %v3212 = vunpack.c.h.s8.bf16 %v1132
        %v3213 = vunpack.c.l.s8.bf16 %v1133
        %v3214 = vunpack.c.l.s8.bf16 %v1134
        %v3215 = vunpack.c.l.s8.bf16 %v1135
        %v3216 = vunpack.c.l.s8.bf16 %v1136
        %v3217 = vunpack.c.h.s8.bf16 %v1133
        %v3218 = vunpack.c.h.s8.bf16 %v1134
        %v3219 = vunpack.c.h.s8.bf16 %v1135
        %v3220 = vunpack.c.h.s8.bf16 %v1136
        %v3221 = vunpack.c.l.s8.bf16 %v1137
        %v3222 = vunpack.c.l.s8.bf16 %v1138
        %v3223 = vunpack.c.l.s8.bf16 %v1139
        %v3224 = vunpack.c.l.s8.bf16 %v1140
        %v3225 = vunpack.c.h.s8.bf16 %v1137
        %v3226 = vunpack.c.h.s8.bf16 %v1138
        %v3227 = vunpack.c.h.s8.bf16 %v1139
        %v3228 = vunpack.c.h.s8.bf16 %v1140
        %v3229 = vunpack.c.l.s8.bf16 %v1141
        %v3230 = vunpack.c.l.s8.bf16 %v1142
        %v3231 = vunpack.c.l.s8.bf16 %v1143
        %v3232 = vunpack.c.l.s8.bf16 %v1144
        %v3233 = vunpack.c.h.s8.bf16 %v1141
        %v3234 = vunpack.c.h.s8.bf16 %v1142
        %v3235 = vunpack.c.h.s8.bf16 %v1143
        %v3236 = vunpack.c.h.s8.bf16 %v1144
        %v3237 = vunpack.c.l.s8.bf16 %v1145
        %v3238 = vunpack.c.l.s8.bf16 %v1146
        %v3239 = vunpack.c.l.s8.bf16 %v1147
        %v3240 = vunpack.c.l.s8.bf16 %v1148
        %v3241 = vunpack.c.h.s8.bf16 %v1145
        %v3242 = vunpack.c.h.s8.bf16 %v1146
        %v3243 = vunpack.c.h.s8.bf16 %v1147
        %v3244 = vunpack.c.h.s8.bf16 %v1148
        %v3245 = vunpack.c.l.s8.bf16 %v1149
        %v3246 = vunpack.c.l.s8.bf16 %v1150
        %v3247 = vunpack.c.l.s8.bf16 %v1151
        %v3248 = vunpack.c.l.s8.bf16 %v1152
        %v3249 = vunpack.c.h.s8.bf16 %v1149
        %v3250 = vunpack.c.h.s8.bf16 %v1150
        %v3251 = vunpack.c.h.s8.bf16 %v1151
        %v3252 = vunpack.c.h.s8.bf16 %v1152
        %v3253 = vunpack.c.l.s8.bf16 %v1153
        %v3254 = vunpack.c.l.s8.bf16 %v1154
        %v3255 = vunpack.c.l.s8.bf16 %v1155
        %v3256 = vunpack.c.l.s8.bf16 %v1156
        %v3257 = vunpack.c.h.s8.bf16 %v1153
        %v3258 = vunpack.c.h.s8.bf16 %v1154
        %v3259 = vunpack.c.h.s8.bf16 %v1155
        %v3260 = vunpack.c.h.s8.bf16 %v1156
        %v3261 = vunpack.c.l.s8.bf16 %v1157
        %v3262 = vunpack.c.l.s8.bf16 %v1158
        %v3263 = vunpack.c.l.s8.bf16 %v1159
        %v3264 = vunpack.c.l.s8.bf16 %v1160
        %v3265 = vunpack.c.h.s8.bf16 %v1157
        %v3266 = vunpack.c.h.s8.bf16 %v1158
        %v3267 = vunpack.c.h.s8.bf16 %v1159
        %v3268 = vunpack.c.h.s8.bf16 %v1160
        %v3269 = vunpack.c.l.s8.bf16 %v1161
        %v3270 = vunpack.c.l.s8.bf16 %v1162
        %v3271 = vunpack.c.l.s8.bf16 %v1163
        %v3272 = vunpack.c.l.s8.bf16 %v1164
        %v3273 = vunpack.c.h.s8.bf16 %v1161
        %v3274 = vunpack.c.h.s8.bf16 %v1162
        %v3275 = vunpack.c.h.s8.bf16 %v1163
        %v3276 = vunpack.c.h.s8.bf16 %v1164
        %v3277 = vunpack.c.l.s8.bf16 %v1165
        %v3278 = vunpack.c.l.s8.bf16 %v1166
        %v3279 = vunpack.c.l.s8.bf16 %v1167
        %v3280 = vunpack.c.l.s8.bf16 %v1168
        %v3281 = vunpack.c.h.s8.bf16 %v1165
        %v3282 = vunpack.c.h.s8.bf16 %v1166
        %v3283 = vunpack.c.h.s8.bf16 %v1167
        %v3284 = vunpack.c.h.s8.bf16 %v1168
        %v3285 = vunpack.c.l.s8.bf16 %v1169
        %v3286 = vunpack.c.l.s8.bf16 %v1170
        %v3287 = vunpack.c.l.s8.bf16 %v1171
        %v3288 = vunpack.c.l.s8.bf16 %v1172
        %v3289 = vunpack.c.h.s8.bf16 %v1169
        %v3290 = vunpack.c.h.s8.bf16 %v1170
        %v3291 = vunpack.c.h.s8.bf16 %v1171
        %v3292 = vunpack.c.h.s8.bf16 %v1172
        %v3293 = vunpack.c.l.s8.bf16 %v1173
        %v3294 = vunpack.c.l.s8.bf16 %v1174
        %v3295 = vunpack.c.l.s8.bf16 %v1175
        %v3296 = vunpack.c.l.s8.bf16 %v1176
        %v3297 = vunpack.c.h.s8.bf16 %v1173
        %v3298 = vunpack.c.h.s8.bf16 %v1174
        %v3299 = vunpack.c.h.s8.bf16 %v1175
        %v3300 = vunpack.c.h.s8.bf16 %v1176
        %v3301 = vunpack.c.l.s8.bf16 %v1177
        %v3302 = vunpack.c.l.s8.bf16 %v1178
        %v3303 = vunpack.c.l.s8.bf16 %v1179
        %v3304 = vunpack.c.l.s8.bf16 %v1180
        %v3305 = vunpack.c.h.s8.bf16 %v1177
        %v3306 = vunpack.c.h.s8.bf16 %v1178
        %v3307 = vunpack.c.h.s8.bf16 %v1179
        %v3308 = vunpack.c.h.s8.bf16 %v1180
        %v3309 = vunpack.c.l.s8.bf16 %v1181
        %v3310 = vunpack.c.l.s8.bf16 %v1182
        %v3311 = vunpack.c.l.s8.bf16 %v1183
        %v3312 = vunpack.c.l.s8.bf16 %v1184
        %v3313 = vunpack.c.h.s8.bf16 %v1181
        %v3314 = vunpack.c.h.s8.bf16 %v1182
        %v3315 = vunpack.c.h.s8.bf16 %v1183
        %v3316 = vunpack.c.h.s8.bf16 %v1184
        %v3317 = vunpack.c.l.s8.bf16 %v1185
        %v3318 = vunpack.c.l.s8.bf16 %v1186
        %v3319 = vunpack.c.l.s8.bf16 %v1187
        %v3320 = vunpack.c.l.s8.bf16 %v1188
        %v3321 = vunpack.c.h.s8.bf16 %v1185
        %v3322 = vunpack.c.h.s8.bf16 %v1186
        %v3323 = vunpack.c.h.s8.bf16 %v1187
        %v3324 = vunpack.c.h.s8.bf16 %v1188
        %v3325 = vunpack.c.l.s8.bf16 %v1189
        %v3326 = vunpack.c.l.s8.bf16 %v1190
        %v3327 = vunpack.c.l.s8.bf16 %v1191
        %v3328 = vunpack.c.l.s8.bf16 %v1192
        %v3329 = vunpack.c.h.s8.bf16 %v1189
        %v3330 = vunpack.c.h.s8.bf16 %v1190
        %v3331 = vunpack.c.h.s8.bf16 %v1191
        %v3332 = vunpack.c.h.s8.bf16 %v1192
        %v3333 = vunpack.c.l.s8.bf16 %v1193
        %v3334 = vunpack.c.l.s8.bf16 %v1194
        %v3335 = vunpack.c.l.s8.bf16 %v1195
        %v3336 = vunpack.c.l.s8.bf16 %v1196
        %v3337 = vunpack.c.h.s8.bf16 %v1193
        %v3338 = vunpack.c.h.s8.bf16 %v1194
        %v3339 = vunpack.c.h.s8.bf16 %v1195
        %v3340 = vunpack.c.h.s8.bf16 %v1196
        %v3341 = vunpack.c.l.s8.bf16 %v1197
        %v3342 = vunpack.c.l.s8.bf16 %v1198
        %v3343 = vunpack.c.l.s8.bf16 %v1199
        %v3344 = vunpack.c.l.s8.bf16 %v1200
        %v3345 = vunpack.c.h.s8.bf16 %v1197
        %v3346 = vunpack.c.h.s8.bf16 %v1198
        %v3347 = vunpack.c.h.s8.bf16 %v1199
        %v3348 = vunpack.c.h.s8.bf16 %v1200
        %v3349 = vunpack.c.l.s8.bf16 %v1201
        %v3350 = vunpack.c.l.s8.bf16 %v1202
        %v3351 = vunpack.c.l.s8.bf16 %v1203
        %v3352 = vunpack.c.l.s8.bf16 %v1204
        %v3353 = vunpack.c.h.s8.bf16 %v1201
        %v3354 = vunpack.c.h.s8.bf16 %v1202
        %v3355 = vunpack.c.h.s8.bf16 %v1203
        %v3356 = vunpack.c.h.s8.bf16 %v1204
        %v3357 = vunpack.c.l.s8.bf16 %v1205
        %v3358 = vunpack.c.l.s8.bf16 %v1206
        %v3359 = vunpack.c.l.s8.bf16 %v1207
        %v3360 = vunpack.c.l.s8.bf16 %v1208
        %v3361 = vunpack.c.h.s8.bf16 %v1205
        %v3362 = vunpack.c.h.s8.bf16 %v1206
        %v3363 = vunpack.c.h.s8.bf16 %v1207
        %v3364 = vunpack.c.h.s8.bf16 %v1208
        %v3365 = vunpack.c.l.s8.bf16 %v1209
        %v3366 = vunpack.c.l.s8.bf16 %v1210
        %v3367 = vunpack.c.l.s8.bf16 %v1211
        %v3368 = vunpack.c.l.s8.bf16 %v1212
        %v3369 = vunpack.c.h.s8.bf16 %v1209
        %v3370 = vunpack.c.h.s8.bf16 %v1210
        %v3371 = vunpack.c.h.s8.bf16 %v1211
        %v3372 = vunpack.c.h.s8.bf16 %v1212
        %v3373 = vunpack.c.l.s8.bf16 %v1213
        %v3374 = vunpack.c.l.s8.bf16 %v1214
        %v3375 = vunpack.c.l.s8.bf16 %v1215
        %v3376 = vunpack.c.l.s8.bf16 %v1216
        %v3377 = vunpack.c.h.s8.bf16 %v1213
        %v3378 = vunpack.c.h.s8.bf16 %v1214
        %v3379 = vunpack.c.h.s8.bf16 %v1215
        %v3380 = vunpack.c.h.s8.bf16 %v1216
        %v3381 = vunpack.c.l.s8.bf16 %v1217
        %v3382 = vunpack.c.l.s8.bf16 %v1218
        %v3383 = vunpack.c.l.s8.bf16 %v1219
        %v3384 = vunpack.c.l.s8.bf16 %v1220
        %v3385 = vunpack.c.h.s8.bf16 %v1217
        %v3386 = vunpack.c.h.s8.bf16 %v1218
        %v3387 = vunpack.c.h.s8.bf16 %v1219
        %v3388 = vunpack.c.h.s8.bf16 %v1220
        %v3389 = vunpack.c.l.s8.bf16 %v1221
        %v3390 = vunpack.c.l.s8.bf16 %v1222
        %v3391 = vunpack.c.l.s8.bf16 %v1223
        %v3392 = vunpack.c.l.s8.bf16 %v1224
        %v3393 = vunpack.c.h.s8.bf16 %v1221
        %v3394 = vunpack.c.h.s8.bf16 %v1222
        %v3395 = vunpack.c.h.s8.bf16 %v1223
        %v3396 = vunpack.c.h.s8.bf16 %v1224
        %v3397 = vunpack.c.l.s8.bf16 %v1225
        %v3398 = vunpack.c.l.s8.bf16 %v1226
        %v3399 = vunpack.c.l.s8.bf16 %v1227
        %v3400 = vunpack.c.l.s8.bf16 %v1228
        %v3401 = vunpack.c.h.s8.bf16 %v1225
        %v3402 = vunpack.c.h.s8.bf16 %v1226
        %v3403 = vunpack.c.h.s8.bf16 %v1227
        %v3404 = vunpack.c.h.s8.bf16 %v1228
        %v3405 = vunpack.c.l.s8.bf16 %v1229
        %v3406 = vunpack.c.l.s8.bf16 %v1230
        %v3407 = vunpack.c.l.s8.bf16 %v1231
        %v3408 = vunpack.c.l.s8.bf16 %v1232
        %v3409 = vunpack.c.h.s8.bf16 %v1229
        %v3410 = vunpack.c.h.s8.bf16 %v1230
        %v3411 = vunpack.c.h.s8.bf16 %v1231
        %v3412 = vunpack.c.h.s8.bf16 %v1232
        %v3413 = vunpack.c.l.s8.bf16 %v1233
        %v3414 = vunpack.c.l.s8.bf16 %v1234
        %v3415 = vunpack.c.l.s8.bf16 %v1235
        %v3416 = vunpack.c.l.s8.bf16 %v1236
        %v3417 = vunpack.c.h.s8.bf16 %v1233
        %v3418 = vunpack.c.h.s8.bf16 %v1234
        %v3419 = vunpack.c.h.s8.bf16 %v1235
        %v3420 = vunpack.c.h.s8.bf16 %v1236
        %v3421 = vunpack.c.l.s8.bf16 %v1237
        %v3422 = vunpack.c.l.s8.bf16 %v1238
        %v3423 = vunpack.c.l.s8.bf16 %v1239
        %v3424 = vunpack.c.l.s8.bf16 %v1240
        %v3425 = vunpack.c.h.s8.bf16 %v1237
        %v3426 = vunpack.c.h.s8.bf16 %v1238
        %v3427 = vunpack.c.h.s8.bf16 %v1239
        %v3428 = vunpack.c.h.s8.bf16 %v1240
        %v3429 = vunpack.c.l.s8.bf16 %v1241
        %v3430 = vunpack.c.l.s8.bf16 %v1242
        %v3431 = vunpack.c.l.s8.bf16 %v1243
        %v3432 = vunpack.c.l.s8.bf16 %v1244
        %v3433 = vunpack.c.h.s8.bf16 %v1241
        %v3434 = vunpack.c.h.s8.bf16 %v1242
        %v3435 = vunpack.c.h.s8.bf16 %v1243
        %v3436 = vunpack.c.h.s8.bf16 %v1244
        %v3437 = vunpack.c.l.s8.bf16 %v1245
        %v3438 = vunpack.c.l.s8.bf16 %v1246
        %v3439 = vunpack.c.l.s8.bf16 %v1247
        %v3440 = vunpack.c.l.s8.bf16 %v1248
        %v3441 = vunpack.c.h.s8.bf16 %v1245
        %v3442 = vunpack.c.h.s8.bf16 %v1246
        %v3443 = vunpack.c.h.s8.bf16 %v1247
        %v3444 = vunpack.c.h.s8.bf16 %v1248
        %v3445 = vunpack.c.l.s8.bf16 %v1249
        %v3446 = vunpack.c.l.s8.bf16 %v1250
        %v3447 = vunpack.c.l.s8.bf16 %v1251
        %v3448 = vunpack.c.l.s8.bf16 %v1252
        %v3449 = vunpack.c.h.s8.bf16 %v1249
        %v3450 = vunpack.c.h.s8.bf16 %v1250
        %v3451 = vunpack.c.h.s8.bf16 %v1251
        %v3452 = vunpack.c.h.s8.bf16 %v1252
        %v3453 = vunpack.c.l.s8.bf16 %v1253
        %v3454 = vunpack.c.l.s8.bf16 %v1254
        %v3455 = vunpack.c.l.s8.bf16 %v1255
        %v3456 = vunpack.c.l.s8.bf16 %v1256
        %v3457 = vunpack.c.h.s8.bf16 %v1253
        %v3458 = vunpack.c.h.s8.bf16 %v1254
        %v3459 = vunpack.c.h.s8.bf16 %v1255
        %v3460 = vunpack.c.h.s8.bf16 %v1256
        %v3461 = vunpack.c.l.s8.bf16 %v1257
        %v3462 = vunpack.c.l.s8.bf16 %v1258
        %v3463 = vunpack.c.l.s8.bf16 %v1259
        %v3464 = vunpack.c.l.s8.bf16 %v1260
        %v3465 = vunpack.c.h.s8.bf16 %v1257
        %v3466 = vunpack.c.h.s8.bf16 %v1258
        %v3467 = vunpack.c.h.s8.bf16 %v1259
        %v3468 = vunpack.c.h.s8.bf16 %v1260
        %v3469 = vunpack.c.l.s8.bf16 %v1261
        %v3470 = vunpack.c.l.s8.bf16 %v1262
        %v3471 = vunpack.c.l.s8.bf16 %v1263
        %v3472 = vunpack.c.l.s8.bf16 %v1264
        %v3473 = vunpack.c.h.s8.bf16 %v1261
        %v3474 = vunpack.c.h.s8.bf16 %v1262
        %v3475 = vunpack.c.h.s8.bf16 %v1263
        %v3476 = vunpack.c.h.s8.bf16 %v1264
        %v3477 = vunpack.c.l.s8.bf16 %v1265
        %v3478 = vunpack.c.l.s8.bf16 %v1266
        %v3479 = vunpack.c.l.s8.bf16 %v1267
        %v3480 = vunpack.c.l.s8.bf16 %v1268
        %v3481 = vunpack.c.h.s8.bf16 %v1265
        %v3482 = vunpack.c.h.s8.bf16 %v1266
        %v3483 = vunpack.c.h.s8.bf16 %v1267
        %v3484 = vunpack.c.h.s8.bf16 %v1268
        %v3485 = vunpack.c.l.s8.bf16 %v1269
        %v3486 = vunpack.c.l.s8.bf16 %v1270
        %v3487 = vunpack.c.l.s8.bf16 %v1271
        %v3488 = vunpack.c.l.s8.bf16 %v1272
        %v3489 = vunpack.c.h.s8.bf16 %v1269
        %v3490 = vunpack.c.h.s8.bf16 %v1270
        %v3491 = vunpack.c.h.s8.bf16 %v1271
        %v3492 = vunpack.c.h.s8.bf16 %v1272
        %v3493 = vunpack.c.l.s8.bf16 %v1273
        %v3494 = vunpack.c.l.s8.bf16 %v1274
        %v3495 = vunpack.c.l.s8.bf16 %v1275
        %v3496 = vunpack.c.l.s8.bf16 %v1276
        %v3497 = vunpack.c.h.s8.bf16 %v1273
        %v3498 = vunpack.c.h.s8.bf16 %v1274
        %v3499 = vunpack.c.h.s8.bf16 %v1275
        %v3500 = vunpack.c.h.s8.bf16 %v1276
        %v3501 = vunpack.c.l.s8.bf16 %v1277
        %v3502 = vunpack.c.l.s8.bf16 %v1278
        %v3503 = vunpack.c.l.s8.bf16 %v1279
        %v3504 = vunpack.c.l.s8.bf16 %v1280
        %v3505 = vunpack.c.h.s8.bf16 %v1277
        %v3506 = vunpack.c.h.s8.bf16 %v1278
        %v3507 = vunpack.c.h.s8.bf16 %v1279
        %v3508 = vunpack.c.h.s8.bf16 %v1280
        %v3509 = vunpack.c.l.s8.bf16 %v1281
        %v3510 = vunpack.c.l.s8.bf16 %v1282
        %v3511 = vunpack.c.l.s8.bf16 %v1283
        %v3512 = vunpack.c.l.s8.bf16 %v1284
        %v3513 = vunpack.c.h.s8.bf16 %v1281
        %v3514 = vunpack.c.h.s8.bf16 %v1282
        %v3515 = vunpack.c.h.s8.bf16 %v1283
        %v3516 = vunpack.c.h.s8.bf16 %v1284
        %v3517 = vunpack.c.l.s8.bf16 %v1285
        %v3518 = vunpack.c.l.s8.bf16 %v1286
        %v3519 = vunpack.c.l.s8.bf16 %v1287
        %v3520 = vunpack.c.l.s8.bf16 %v1288
        %v3521 = vunpack.c.h.s8.bf16 %v1285
        %v3522 = vunpack.c.h.s8.bf16 %v1286
        %v3523 = vunpack.c.h.s8.bf16 %v1287
        %v3524 = vunpack.c.h.s8.bf16 %v1288
        %v3525 = vunpack.c.l.s8.bf16 %v1289
        %v3526 = vunpack.c.l.s8.bf16 %v1290
        %v3527 = vunpack.c.l.s8.bf16 %v1291
        %v3528 = vunpack.c.l.s8.bf16 %v1292
        %v3529 = vunpack.c.h.s8.bf16 %v1289
        %v3530 = vunpack.c.h.s8.bf16 %v1290
        %v3531 = vunpack.c.h.s8.bf16 %v1291
        %v3532 = vunpack.c.h.s8.bf16 %v1292
        %v3533 = vunpack.c.l.s8.bf16 %v1293
        %v3534 = vunpack.c.l.s8.bf16 %v1294
        %v3535 = vunpack.c.l.s8.bf16 %v1295
        %v3536 = vunpack.c.l.s8.bf16 %v1296
        %v3537 = vunpack.c.h.s8.bf16 %v1293
        %v3538 = vunpack.c.h.s8.bf16 %v1294
        %v3539 = vunpack.c.h.s8.bf16 %v1295
        %v3540 = vunpack.c.h.s8.bf16 %v1296
        %v3541 = vunpack.c.l.s8.bf16 %v1297
        %v3542 = vunpack.c.l.s8.bf16 %v1298
        %v3543 = vunpack.c.l.s8.bf16 %v1299
        %v3544 = vunpack.c.l.s8.bf16 %v1300
        %v3545 = vunpack.c.h.s8.bf16 %v1297
        %v3546 = vunpack.c.h.s8.bf16 %v1298
        %v3547 = vunpack.c.h.s8.bf16 %v1299
        %v3548 = vunpack.c.h.s8.bf16 %v1300
        %v3549 = vunpack.c.l.s8.bf16 %v1301
        %v3550 = vunpack.c.l.s8.bf16 %v1302
        %v3551 = vunpack.c.l.s8.bf16 %v1303
        %v3552 = vunpack.c.l.s8.bf16 %v1304
        %v3553 = vunpack.c.h.s8.bf16 %v1301
        %v3554 = vunpack.c.h.s8.bf16 %v1302
        %v3555 = vunpack.c.h.s8.bf16 %v1303
        %v3556 = vunpack.c.h.s8.bf16 %v1304
        %v3557 = vunpack.c.l.s8.bf16 %v1305
        %v3558 = vunpack.c.l.s8.bf16 %v1306
        %v3559 = vunpack.c.l.s8.bf16 %v1307
        %v3560 = vunpack.c.l.s8.bf16 %v1308
        %v3561 = vunpack.c.h.s8.bf16 %v1305
        %v3562 = vunpack.c.h.s8.bf16 %v1306
        %v3563 = vunpack.c.h.s8.bf16 %v1307
        %v3564 = vunpack.c.h.s8.bf16 %v1308
        %v3565 = vunpack.c.l.s8.bf16 %v1309
        %v3566 = vunpack.c.l.s8.bf16 %v1310
        %v3567 = vunpack.c.l.s8.bf16 %v1311
        %v3568 = vunpack.c.l.s8.bf16 %v1312
        %v3569 = vunpack.c.h.s8.bf16 %v1309
        %v3570 = vunpack.c.h.s8.bf16 %v1310
        %v3571 = vunpack.c.h.s8.bf16 %v1311
        %v3572 = vunpack.c.h.s8.bf16 %v1312
        %v3573 = vunpack.c.l.s8.bf16 %v1313
        %v3574 = vunpack.c.l.s8.bf16 %v1314
        %v3575 = vunpack.c.l.s8.bf16 %v1315
        %v3576 = vunpack.c.l.s8.bf16 %v1316
        %v3577 = vunpack.c.h.s8.bf16 %v1313
        %v3578 = vunpack.c.h.s8.bf16 %v1314
        %v3579 = vunpack.c.h.s8.bf16 %v1315
        %v3580 = vunpack.c.h.s8.bf16 %v1316
        %v3581 = vunpack.c.l.s8.bf16 %v1317
        %v3582 = vunpack.c.l.s8.bf16 %v1318
        %v3583 = vunpack.c.l.s8.bf16 %v1319
        %v3584 = vunpack.c.l.s8.bf16 %v1320
        %v3585 = vunpack.c.h.s8.bf16 %v1317
        %v3586 = vunpack.c.h.s8.bf16 %v1318
        %v3587 = vunpack.c.h.s8.bf16 %v1319
        %v3588 = vunpack.c.h.s8.bf16 %v1320
        %v3589 = vunpack.c.l.s8.bf16 %v1321
        %v3590 = vunpack.c.l.s8.bf16 %v1322
        %v3591 = vunpack.c.l.s8.bf16 %v1323
        %v3592 = vunpack.c.l.s8.bf16 %v1324
        %v3593 = vunpack.c.h.s8.bf16 %v1321
        %v3594 = vunpack.c.h.s8.bf16 %v1322
        %v3595 = vunpack.c.h.s8.bf16 %v1323
        %v3596 = vunpack.c.h.s8.bf16 %v1324
        %v3597 = vunpack.c.l.s8.bf16 %v1325
        %v3598 = vunpack.c.l.s8.bf16 %v1326
        %v3599 = vunpack.c.l.s8.bf16 %v1327
        %v3600 = vunpack.c.l.s8.bf16 %v1328
        %v3601 = vunpack.c.h.s8.bf16 %v1325
        %v3602 = vunpack.c.h.s8.bf16 %v1326
        %v3603 = vunpack.c.h.s8.bf16 %v1327
        %v3604 = vunpack.c.h.s8.bf16 %v1328
        %v3605 = vunpack.c.l.s8.bf16 %v1329
        %v3606 = vunpack.c.l.s8.bf16 %v1330
        %v3607 = vunpack.c.l.s8.bf16 %v1331
        %v3608 = vunpack.c.l.s8.bf16 %v1332
        %v3609 = vunpack.c.h.s8.bf16 %v1329
        %v3610 = vunpack.c.h.s8.bf16 %v1330
        %v3611 = vunpack.c.h.s8.bf16 %v1331
        %v3612 = vunpack.c.h.s8.bf16 %v1332
        %v3613 = vunpack.c.l.s8.bf16 %v1333
        %v3614 = vunpack.c.l.s8.bf16 %v1334
        %v3615 = vunpack.c.l.s8.bf16 %v1335
        %v3616 = vunpack.c.l.s8.bf16 %v1336
        %v3617 = vunpack.c.h.s8.bf16 %v1333
        %v3618 = vunpack.c.h.s8.bf16 %v1334
        %v3619 = vunpack.c.h.s8.bf16 %v1335
        %v3620 = vunpack.c.h.s8.bf16 %v1336
        %v3621 = vunpack.c.l.s8.bf16 %v1337
        %v3622 = vunpack.c.l.s8.bf16 %v1338
        %v3623 = vunpack.c.l.s8.bf16 %v1339
        %v3624 = vunpack.c.l.s8.bf16 %v1340
        %v3625 = vunpack.c.h.s8.bf16 %v1337
        %v3626 = vunpack.c.h.s8.bf16 %v1338
        %v3627 = vunpack.c.h.s8.bf16 %v1339
        %v3628 = vunpack.c.h.s8.bf16 %v1340
        %v3629 = vunpack.c.l.s8.bf16 %v1341
        %v3630 = vunpack.c.l.s8.bf16 %v1342
        %v3631 = vunpack.c.l.s8.bf16 %v1343
        %v3632 = vunpack.c.l.s8.bf16 %v1344
        %v3633 = vunpack.c.h.s8.bf16 %v1341
        %v3634 = vunpack.c.h.s8.bf16 %v1342
        %v3635 = vunpack.c.h.s8.bf16 %v1343
        %v3636 = vunpack.c.h.s8.bf16 %v1344
        %v3637 = vunpack.c.l.s8.bf16 %v1345
        %v3638 = vunpack.c.l.s8.bf16 %v1346
        %v3639 = vunpack.c.l.s8.bf16 %v1347
        %v3640 = vunpack.c.l.s8.bf16 %v1348
        %v3641 = vunpack.c.h.s8.bf16 %v1345
        %v3642 = vunpack.c.h.s8.bf16 %v1346
        %v3643 = vunpack.c.h.s8.bf16 %v1347
        %v3644 = vunpack.c.h.s8.bf16 %v1348
        %v3645 = vunpack.c.l.s8.bf16 %v1349
        %v3646 = vunpack.c.l.s8.bf16 %v1350
        %v3647 = vunpack.c.l.s8.bf16 %v1351
        %v3648 = vunpack.c.l.s8.bf16 %v1352
        %v3649 = vunpack.c.h.s8.bf16 %v1349
        %v3650 = vunpack.c.h.s8.bf16 %v1350
        %v3651 = vunpack.c.h.s8.bf16 %v1351
        %v3652 = vunpack.c.h.s8.bf16 %v1352
        %v3653 = vunpack.c.l.s8.bf16 %v1353
        %v3654 = vunpack.c.l.s8.bf16 %v1354
        %v3655 = vunpack.c.l.s8.bf16 %v1355
        %v3656 = vunpack.c.l.s8.bf16 %v1356
        %v3657 = vunpack.c.h.s8.bf16 %v1353
        %v3658 = vunpack.c.h.s8.bf16 %v1354
        %v3659 = vunpack.c.h.s8.bf16 %v1355
        %v3660 = vunpack.c.h.s8.bf16 %v1356
        %v3661 = vunpack.c.l.s8.bf16 %v1357
        %v3662 = vunpack.c.l.s8.bf16 %v1358
        %v3663 = vunpack.c.l.s8.bf16 %v1359
        %v3664 = vunpack.c.l.s8.bf16 %v1360
        %v3665 = vunpack.c.h.s8.bf16 %v1357
        %v3666 = vunpack.c.h.s8.bf16 %v1358
        %v3667 = vunpack.c.h.s8.bf16 %v1359
        %v3668 = vunpack.c.h.s8.bf16 %v1360
        %v3669 = vunpack.c.l.s8.bf16 %v1361
        %v3670 = vunpack.c.l.s8.bf16 %v1362
        %v3671 = vunpack.c.l.s8.bf16 %v1363
        %v3672 = vunpack.c.l.s8.bf16 %v1364
        %v3673 = vunpack.c.h.s8.bf16 %v1361
        %v3674 = vunpack.c.h.s8.bf16 %v1362
        %v3675 = vunpack.c.h.s8.bf16 %v1363
        %v3676 = vunpack.c.h.s8.bf16 %v1364
        %v3677 = vunpack.c.l.s8.bf16 %v1365
        %v3678 = vunpack.c.l.s8.bf16 %v1366
        %v3679 = vunpack.c.l.s8.bf16 %v1367
        %v3680 = vunpack.c.l.s8.bf16 %v1368
        %v3681 = vunpack.c.h.s8.bf16 %v1365
        %v3682 = vunpack.c.h.s8.bf16 %v1366
        %v3683 = vunpack.c.h.s8.bf16 %v1367
        %v3684 = vunpack.c.h.s8.bf16 %v1368
        %v3685 = vunpack.c.l.s8.bf16 %v1369
        %v3686 = vunpack.c.l.s8.bf16 %v1370
        %v3687 = vunpack.c.l.s8.bf16 %v1371
        %v3688 = vunpack.c.l.s8.bf16 %v1372
        %v3689 = vunpack.c.h.s8.bf16 %v1369
        %v3690 = vunpack.c.h.s8.bf16 %v1370
        %v3691 = vunpack.c.h.s8.bf16 %v1371
        %v3692 = vunpack.c.h.s8.bf16 %v1372
        %v3693 = vunpack.c.l.s8.bf16 %v1373
        %v3694 = vunpack.c.l.s8.bf16 %v1374
        %v3695 = vunpack.c.l.s8.bf16 %v1375
        %v3696 = vunpack.c.l.s8.bf16 %v1376
        %v3697 = vunpack.c.h.s8.bf16 %v1373
        %v3698 = vunpack.c.h.s8.bf16 %v1374
        %v3699 = vunpack.c.h.s8.bf16 %v1375
        %v3700 = vunpack.c.h.s8.bf16 %v1376
        %v3701 = vunpack.c.l.s8.bf16 %v1377
        %v3702 = vunpack.c.l.s8.bf16 %v1378
        %v3703 = vunpack.c.l.s8.bf16 %v1379
        %v3704 = vunpack.c.l.s8.bf16 %v1380
        %v3705 = vunpack.c.h.s8.bf16 %v1377
        %v3706 = vunpack.c.h.s8.bf16 %v1378
        %v3707 = vunpack.c.h.s8.bf16 %v1379
        %v3708 = vunpack.c.h.s8.bf16 %v1380
        %v3709 = vunpack.c.l.s8.bf16 %v1381
        %v3710 = vunpack.c.l.s8.bf16 %v1382
        %v3711 = vunpack.c.l.s8.bf16 %v1383
        %v3712 = vunpack.c.l.s8.bf16 %v1384
        %v3713 = vunpack.c.h.s8.bf16 %v1381
        %v3714 = vunpack.c.h.s8.bf16 %v1382
        %v3715 = vunpack.c.h.s8.bf16 %v1383
        %v3716 = vunpack.c.h.s8.bf16 %v1384
        %v3717 = vunpack.c.l.s8.bf16 %v1385
        %v3718 = vunpack.c.l.s8.bf16 %v1386
        %v3719 = vunpack.c.l.s8.bf16 %v1387
        %v3720 = vunpack.c.l.s8.bf16 %v1388
        %v3721 = vunpack.c.h.s8.bf16 %v1385
        %v3722 = vunpack.c.h.s8.bf16 %v1386
        %v3723 = vunpack.c.h.s8.bf16 %v1387
        %v3724 = vunpack.c.h.s8.bf16 %v1388
        %v3725 = vunpack.c.l.s8.bf16 %v1389
        %v3726 = vunpack.c.l.s8.bf16 %v1390
        %v3727 = vunpack.c.l.s8.bf16 %v1391
        %v3728 = vunpack.c.l.s8.bf16 %v1392
        %v3729 = vunpack.c.h.s8.bf16 %v1389
        %v3730 = vunpack.c.h.s8.bf16 %v1390
        %v3731 = vunpack.c.h.s8.bf16 %v1391
        %v3732 = vunpack.c.h.s8.bf16 %v1392
        %v3733 = vunpack.c.l.s8.bf16 %v1393
        %v3734 = vunpack.c.l.s8.bf16 %v1394
        %v3735 = vunpack.c.l.s8.bf16 %v1395
        %v3736 = vunpack.c.l.s8.bf16 %v1396
        %v3737 = vunpack.c.h.s8.bf16 %v1393
        %v3738 = vunpack.c.h.s8.bf16 %v1394
        %v3739 = vunpack.c.h.s8.bf16 %v1395
        %v3740 = vunpack.c.h.s8.bf16 %v1396
        %v3741 = vunpack.c.l.s8.bf16 %v1397
        %v3742 = vunpack.c.l.s8.bf16 %v1398
        %v3743 = vunpack.c.l.s8.bf16 %v1399
        %v3744 = vunpack.c.l.s8.bf16 %v1400
        %v3745 = vunpack.c.h.s8.bf16 %v1397
        %v3746 = vunpack.c.h.s8.bf16 %v1398
        %v3747 = vunpack.c.h.s8.bf16 %v1399
        %v3748 = vunpack.c.h.s8.bf16 %v1400
        %v3749 = vunpack.c.l.s8.bf16 %v1401
        %v3750 = vunpack.c.l.s8.bf16 %v1402
        %v3751 = vunpack.c.l.s8.bf16 %v1403
        %v3752 = vunpack.c.l.s8.bf16 %v1404
        %v3753 = vunpack.c.h.s8.bf16 %v1401
        %v3754 = vunpack.c.h.s8.bf16 %v1402
        %v3755 = vunpack.c.h.s8.bf16 %v1403
        %v3756 = vunpack.c.h.s8.bf16 %v1404
        %v3757 = vunpack.c.l.s8.bf16 %v1405
        %v3758 = vunpack.c.l.s8.bf16 %v1406
        %v3759 = vunpack.c.l.s8.bf16 %v1407
        %v3760 = vunpack.c.l.s8.bf16 %v1408
        %v3761 = vunpack.c.h.s8.bf16 %v1405
        %v3762 = vunpack.c.h.s8.bf16 %v1406
        %v3763 = vunpack.c.h.s8.bf16 %v1407
        %v3764 = vunpack.c.h.s8.bf16 %v1408
        %v3765 = vunpack.c.l.s8.bf16 %v1409
        %v3766 = vunpack.c.l.s8.bf16 %v1410
        %v3767 = vunpack.c.l.s8.bf16 %v1411
        %v3768 = vunpack.c.l.s8.bf16 %v1412
        %v3769 = vunpack.c.h.s8.bf16 %v1409
        %v3770 = vunpack.c.h.s8.bf16 %v1410
        %v3771 = vunpack.c.h.s8.bf16 %v1411
        %v3772 = vunpack.c.h.s8.bf16 %v1412
        %v3773 = vunpack.c.l.s8.bf16 %v1413
        %v3774 = vunpack.c.l.s8.bf16 %v1414
        %v3775 = vunpack.c.l.s8.bf16 %v1415
        %v3776 = vunpack.c.l.s8.bf16 %v1416
        %v3777 = vunpack.c.h.s8.bf16 %v1413
        %v3778 = vunpack.c.h.s8.bf16 %v1414
        %v3779 = vunpack.c.h.s8.bf16 %v1415
        %v3780 = vunpack.c.h.s8.bf16 %v1416
        %v3781 = vunpack.c.l.s8.bf16 %v1417
        %v3782 = vunpack.c.l.s8.bf16 %v1418
        %v3783 = vunpack.c.l.s8.bf16 %v1419
        %v3784 = vunpack.c.l.s8.bf16 %v1420
        %v3785 = vunpack.c.h.s8.bf16 %v1417
        %v3786 = vunpack.c.h.s8.bf16 %v1418
        %v3787 = vunpack.c.h.s8.bf16 %v1419
        %v3788 = vunpack.c.h.s8.bf16 %v1420
        %v3789 = vunpack.c.l.s8.bf16 %v1421
        %v3790 = vunpack.c.l.s8.bf16 %v1422
        %v3791 = vunpack.c.l.s8.bf16 %v1423
        %v3792 = vunpack.c.l.s8.bf16 %v1424
        %v3793 = vunpack.c.h.s8.bf16 %v1421
        %v3794 = vunpack.c.h.s8.bf16 %v1422
        %v3795 = vunpack.c.h.s8.bf16 %v1423
        %v3796 = vunpack.c.h.s8.bf16 %v1424
        %v3797 = vunpack.c.l.s8.bf16 %v1425
        %v3798 = vunpack.c.l.s8.bf16 %v1426
        %v3799 = vunpack.c.l.s8.bf16 %v1427
        %v3800 = vunpack.c.l.s8.bf16 %v1428
        %v3801 = vunpack.c.h.s8.bf16 %v1425
        %v3802 = vunpack.c.h.s8.bf16 %v1426
        %v3803 = vunpack.c.h.s8.bf16 %v1427
        %v3804 = vunpack.c.h.s8.bf16 %v1428
        %v3805 = vunpack.c.l.s8.bf16 %v1429
        %v3806 = vunpack.c.l.s8.bf16 %v1430
        %v3807 = vunpack.c.l.s8.bf16 %v1431
        %v3808 = vunpack.c.l.s8.bf16 %v1432
        %v3809 = vunpack.c.h.s8.bf16 %v1429
        %v3810 = vunpack.c.h.s8.bf16 %v1430
        %v3811 = vunpack.c.h.s8.bf16 %v1431
        %v3812 = vunpack.c.h.s8.bf16 %v1432
        %v3813 = vunpack.c.l.s8.bf16 %v1433
        %v3814 = vunpack.c.l.s8.bf16 %v1434
        %v3815 = vunpack.c.l.s8.bf16 %v1435
        %v3816 = vunpack.c.l.s8.bf16 %v1436
        %v3817 = vunpack.c.h.s8.bf16 %v1433
        %v3818 = vunpack.c.h.s8.bf16 %v1434
        %v3819 = vunpack.c.h.s8.bf16 %v1435
        %v3820 = vunpack.c.h.s8.bf16 %v1436
        %v3821 = vunpack.c.l.s8.bf16 %v1437
        %v3822 = vunpack.c.l.s8.bf16 %v1438
        %v3823 = vunpack.c.l.s8.bf16 %v1439
        %v3824 = vunpack.c.l.s8.bf16 %v1440
        %v3825 = vunpack.c.h.s8.bf16 %v1437
        %v3826 = vunpack.c.h.s8.bf16 %v1438
        %v3827 = vunpack.c.h.s8.bf16 %v1439
        %v3828 = vunpack.c.h.s8.bf16 %v1440
        %v3829 = vunpack.c.l.s8.bf16 %v1441
        %v3830 = vunpack.c.l.s8.bf16 %v1442
        %v3831 = vunpack.c.l.s8.bf16 %v1443
        %v3832 = vunpack.c.l.s8.bf16 %v1444
        %v3833 = vunpack.c.h.s8.bf16 %v1441
        %v3834 = vunpack.c.h.s8.bf16 %v1442
        %v3835 = vunpack.c.h.s8.bf16 %v1443
        %v3836 = vunpack.c.h.s8.bf16 %v1444
        %v3837 = vunpack.c.l.s8.bf16 %v1445
        %v3838 = vunpack.c.l.s8.bf16 %v1446
        %v3839 = vunpack.c.l.s8.bf16 %v1447
        %v3840 = vunpack.c.l.s8.bf16 %v1448
        %v3841 = vunpack.c.h.s8.bf16 %v1445
        %v3842 = vunpack.c.h.s8.bf16 %v1446
        %v3843 = vunpack.c.h.s8.bf16 %v1447
        %v3844 = vunpack.c.h.s8.bf16 %v1448
        %v3845 = vunpack.c.l.s8.bf16 %v1449
        %v3846 = vunpack.c.l.s8.bf16 %v1450
        %v3847 = vunpack.c.l.s8.bf16 %v1451
        %v3848 = vunpack.c.l.s8.bf16 %v1452
        %v3849 = vunpack.c.h.s8.bf16 %v1449
        %v3850 = vunpack.c.h.s8.bf16 %v1450
        %v3851 = vunpack.c.h.s8.bf16 %v1451
        %v3852 = vunpack.c.h.s8.bf16 %v1452
        %v3853 = vunpack.c.l.s8.bf16 %v1453
        %v3854 = vunpack.c.l.s8.bf16 %v1454
        %v3855 = vunpack.c.l.s8.bf16 %v1455
        %v3856 = vunpack.c.l.s8.bf16 %v1456
        %v3857 = vunpack.c.h.s8.bf16 %v1453
        %v3858 = vunpack.c.h.s8.bf16 %v1454
        %v3859 = vunpack.c.h.s8.bf16 %v1455
        %v3860 = vunpack.c.h.s8.bf16 %v1456
        %v3861 = vunpack.c.l.s8.bf16 %v1457
        %v3862 = vunpack.c.l.s8.bf16 %v1458
        %v3863 = vunpack.c.l.s8.bf16 %v1459
        %v3864 = vunpack.c.l.s8.bf16 %v1460
        %v3865 = vunpack.c.h.s8.bf16 %v1457
        %v3866 = vunpack.c.h.s8.bf16 %v1458
        %v3867 = vunpack.c.h.s8.bf16 %v1459
        %v3868 = vunpack.c.h.s8.bf16 %v1460
        %v3869 = vunpack.c.l.s8.bf16 %v1461
        %v3870 = vunpack.c.l.s8.bf16 %v1462
        %v3871 = vunpack.c.l.s8.bf16 %v1463
        %v3872 = vunpack.c.l.s8.bf16 %v1464
        %v3873 = vunpack.c.h.s8.bf16 %v1461
        %v3874 = vunpack.c.h.s8.bf16 %v1462
        %v3875 = vunpack.c.h.s8.bf16 %v1463
        %v3876 = vunpack.c.h.s8.bf16 %v1464
        %v3877 = vunpack.c.l.s8.bf16 %v1465
        %v3878 = vunpack.c.l.s8.bf16 %v1466
        %v3879 = vunpack.c.l.s8.bf16 %v1467
        %v3880 = vunpack.c.l.s8.bf16 %v1468
        %v3881 = vunpack.c.h.s8.bf16 %v1465
        %v3882 = vunpack.c.h.s8.bf16 %v1466
        %v3883 = vunpack.c.h.s8.bf16 %v1467
        %v3884 = vunpack.c.h.s8.bf16 %v1468
        %v3885 = vunpack.c.l.s8.bf16 %v1469
        %v3886 = vunpack.c.l.s8.bf16 %v1470
        %v3887 = vunpack.c.l.s8.bf16 %v1471
        %v3888 = vunpack.c.l.s8.bf16 %v1472
        %v3889 = vunpack.c.h.s8.bf16 %v1469
        %v3890 = vunpack.c.h.s8.bf16 %v1470
        %v3891 = vunpack.c.h.s8.bf16 %v1471
        %v3892 = vunpack.c.h.s8.bf16 %v1472
        %v3893 = vunpack.c.l.s8.bf16 %v1473
        %v3894 = vunpack.c.l.s8.bf16 %v1474
        %v3895 = vunpack.c.l.s8.bf16 %v1475
        %v3896 = vunpack.c.l.s8.bf16 %v1476
        %v3897 = vunpack.c.h.s8.bf16 %v1473
        %v3898 = vunpack.c.h.s8.bf16 %v1474
        %v3899 = vunpack.c.h.s8.bf16 %v1475
        %v3900 = vunpack.c.h.s8.bf16 %v1476
        %v3901 = vunpack.c.l.s8.bf16 %v1477
        %v3902 = vunpack.c.l.s8.bf16 %v1478
        %v3903 = vunpack.c.l.s8.bf16 %v1479
        %v3904 = vunpack.c.l.s8.bf16 %v1480
        %v3905 = vunpack.c.h.s8.bf16 %v1477
        %v3906 = vunpack.c.h.s8.bf16 %v1478
        %v3907 = vunpack.c.h.s8.bf16 %v1479
        %v3908 = vunpack.c.h.s8.bf16 %v1480
        %v3909 = vunpack.c.l.s8.bf16 %v1481
        %v3910 = vunpack.c.l.s8.bf16 %v1482
        %v3911 = vunpack.c.l.s8.bf16 %v1483
        %v3912 = vunpack.c.l.s8.bf16 %v1484
        %v3913 = vunpack.c.h.s8.bf16 %v1481
        %v3914 = vunpack.c.h.s8.bf16 %v1482
        %v3915 = vunpack.c.h.s8.bf16 %v1483
        %v3916 = vunpack.c.h.s8.bf16 %v1484
        %v3917 = vunpack.c.l.s8.bf16 %v1485
        %v3918 = vunpack.c.l.s8.bf16 %v1486
        %v3919 = vunpack.c.l.s8.bf16 %v1487
        %v3920 = vunpack.c.l.s8.bf16 %v1488
        %v3921 = vunpack.c.h.s8.bf16 %v1485
        %v3922 = vunpack.c.h.s8.bf16 %v1486
        %v3923 = vunpack.c.h.s8.bf16 %v1487
        %v3924 = vunpack.c.h.s8.bf16 %v1488
        %v3925 = vunpack.c.l.s8.bf16 %v1489
        %v3926 = vunpack.c.l.s8.bf16 %v1490
        %v3927 = vunpack.c.l.s8.bf16 %v1491
        %v3928 = vunpack.c.l.s8.bf16 %v1492
        %v3929 = vunpack.c.h.s8.bf16 %v1489
        %v3930 = vunpack.c.h.s8.bf16 %v1490
        %v3931 = vunpack.c.h.s8.bf16 %v1491
        %v3932 = vunpack.c.h.s8.bf16 %v1492
        %v3933 = vunpack.c.l.s8.bf16 %v1493
        %v3934 = vunpack.c.l.s8.bf16 %v1494
        %v3935 = vunpack.c.l.s8.bf16 %v1495
        %v3936 = vunpack.c.l.s8.bf16 %v1496
        %v3937 = vunpack.c.h.s8.bf16 %v1493
        %v3938 = vunpack.c.h.s8.bf16 %v1494
        %v3939 = vunpack.c.h.s8.bf16 %v1495
        %v3940 = vunpack.c.h.s8.bf16 %v1496
        %v3941 = vunpack.c.l.s8.bf16 %v1497
        %v3942 = vunpack.c.l.s8.bf16 %v1498
        %v3943 = vunpack.c.l.s8.bf16 %v1499
        %v3944 = vunpack.c.l.s8.bf16 %v1500
        %v3945 = vunpack.c.h.s8.bf16 %v1497
        %v3946 = vunpack.c.h.s8.bf16 %v1498
        %v3947 = vunpack.c.h.s8.bf16 %v1499
        %v3948 = vunpack.c.h.s8.bf16 %v1500
        %v3949 = vunpack.c.l.s8.bf16 %v1501
        %v3950 = vunpack.c.l.s8.bf16 %v1502
        %v3951 = vunpack.c.l.s8.bf16 %v1503
        %v3952 = vunpack.c.l.s8.bf16 %v1504
        %v3953 = vunpack.c.h.s8.bf16 %v1501
        %v3954 = vunpack.c.h.s8.bf16 %v1502
        %v3955 = vunpack.c.h.s8.bf16 %v1503
        %v3956 = vunpack.c.h.s8.bf16 %v1504
        %v3957 = vunpack.c.l.s8.bf16 %v1505
        %v3958 = vunpack.c.l.s8.bf16 %v1506
        %v3959 = vunpack.c.l.s8.bf16 %v1507
        %v3960 = vunpack.c.l.s8.bf16 %v1508
        %v3961 = vunpack.c.h.s8.bf16 %v1505
        %v3962 = vunpack.c.h.s8.bf16 %v1506
        %v3963 = vunpack.c.h.s8.bf16 %v1507
        %v3964 = vunpack.c.h.s8.bf16 %v1508
        %v3965 = vunpack.c.l.s8.bf16 %v1509
        %v3966 = vunpack.c.l.s8.bf16 %v1510
        %v3967 = vunpack.c.l.s8.bf16 %v1511
        %v3968 = vunpack.c.l.s8.bf16 %v1512
        %v3969 = vunpack.c.h.s8.bf16 %v1509
        %v3970 = vunpack.c.h.s8.bf16 %v1510
        %v3971 = vunpack.c.h.s8.bf16 %v1511
        %v3972 = vunpack.c.h.s8.bf16 %v1512
        %v3973 = vunpack.c.l.s8.bf16 %v1513
        %v3974 = vunpack.c.l.s8.bf16 %v1514
        %v3975 = vunpack.c.l.s8.bf16 %v1515
        %v3976 = vunpack.c.l.s8.bf16 %v1516
        %v3977 = vunpack.c.h.s8.bf16 %v1513
        %v3978 = vunpack.c.h.s8.bf16 %v1514
        %v3979 = vunpack.c.h.s8.bf16 %v1515
        %v3980 = vunpack.c.h.s8.bf16 %v1516
        %v3981 = vunpack.c.l.s8.bf16 %v1517
        %v3982 = vunpack.c.l.s8.bf16 %v1518
        %v3983 = vunpack.c.l.s8.bf16 %v1519
        %v3984 = vunpack.c.l.s8.bf16 %v1520
        %v3985 = vunpack.c.h.s8.bf16 %v1517
        %v3986 = vunpack.c.h.s8.bf16 %v1518
        %v3987 = vunpack.c.h.s8.bf16 %v1519
        %v3988 = vunpack.c.h.s8.bf16 %v1520
        %v3989 = vunpack.c.l.s8.bf16 %v1521
        %v3990 = vunpack.c.l.s8.bf16 %v1522
        %v3991 = vunpack.c.l.s8.bf16 %v1523
        %v3992 = vunpack.c.l.s8.bf16 %v1524
        %v3993 = vunpack.c.h.s8.bf16 %v1521
        %v3994 = vunpack.c.h.s8.bf16 %v1522
        %v3995 = vunpack.c.h.s8.bf16 %v1523
        %v3996 = vunpack.c.h.s8.bf16 %v1524
        %v3997 = vunpack.c.l.s8.bf16 %v1525
        %v3998 = vunpack.c.l.s8.bf16 %v1526
        %v3999 = vunpack.c.l.s8.bf16 %v1527
        %v4000 = vunpack.c.l.s8.bf16 %v1528
        %v4001 = vunpack.c.h.s8.bf16 %v1525
        %v4002 = vunpack.c.h.s8.bf16 %v1526
        %v4003 = vunpack.c.h.s8.bf16 %v1527
        %v4004 = vunpack.c.h.s8.bf16 %v1528
        %v4005 = vunpack.c.l.s8.bf16 %v1529
        %v4006 = vunpack.c.l.s8.bf16 %v1530
        %v4007 = vunpack.c.l.s8.bf16 %v1531
        %v4008 = vunpack.c.l.s8.bf16 %v1532
        %v4009 = vunpack.c.h.s8.bf16 %v1529
        %v4010 = vunpack.c.h.s8.bf16 %v1530
        %v4011 = vunpack.c.h.s8.bf16 %v1531
        %v4012 = vunpack.c.h.s8.bf16 %v1532
        %v4013 = vunpack.c.l.s8.bf16 %v1533
        %v4014 = vunpack.c.l.s8.bf16 %v1534
        %v4015 = vunpack.c.l.s8.bf16 %v1535
        %v4016 = vunpack.c.l.s8.bf16 %v1536
        %v4017 = vunpack.c.h.s8.bf16 %v1533
        %v4018 = vunpack.c.h.s8.bf16 %v1534
        %v4019 = vunpack.c.h.s8.bf16 %v1535
        %v4020 = vunpack.c.h.s8.bf16 %v1536
        %v4021 = vunpack.c.l.s8.bf16 %v1537
        %v4022 = vunpack.c.l.s8.bf16 %v1538
        %v4023 = vunpack.c.l.s8.bf16 %v1539
        %v4024 = vunpack.c.l.s8.bf16 %v1540
        %v4025 = vunpack.c.h.s8.bf16 %v1537
        %v4026 = vunpack.c.h.s8.bf16 %v1538
        %v4027 = vunpack.c.h.s8.bf16 %v1539
        %v4028 = vunpack.c.h.s8.bf16 %v1540
        %v4029 = vunpack.c.l.s8.bf16 %v1541
        %v4030 = vunpack.c.l.s8.bf16 %v1542
        %v4031 = vunpack.c.l.s8.bf16 %v1543
        %v4032 = vunpack.c.l.s8.bf16 %v1544
        %v4033 = vunpack.c.h.s8.bf16 %v1541
        %v4034 = vunpack.c.h.s8.bf16 %v1542
        %v4035 = vunpack.c.h.s8.bf16 %v1543
        %v4036 = vunpack.c.h.s8.bf16 %v1544
        %v4037 = vunpack.c.l.s8.bf16 %v1545
        %v4038 = vunpack.c.l.s8.bf16 %v1546
        %v4039 = vunpack.c.l.s8.bf16 %v1547
        %v4040 = vunpack.c.l.s8.bf16 %v1548
        %v4041 = vunpack.c.h.s8.bf16 %v1545
        %v4042 = vunpack.c.h.s8.bf16 %v1546
        %v4043 = vunpack.c.h.s8.bf16 %v1547
        %v4044 = vunpack.c.h.s8.bf16 %v1548
        %v4045 = vunpack.c.l.s8.bf16 %v1549
        %v4046 = vunpack.c.l.s8.bf16 %v1550
        %v4047 = vunpack.c.l.s8.bf16 %v1551
        %v4048 = vunpack.c.l.s8.bf16 %v1552
        %v4049 = vunpack.c.h.s8.bf16 %v1549
        %v4050 = vunpack.c.h.s8.bf16 %v1550
        %v4051 = vunpack.c.h.s8.bf16 %v1551
        %v4052 = vunpack.c.h.s8.bf16 %v1552
        %v4053 = vunpack.c.l.s8.bf16 %v1553
        %v4054 = vunpack.c.l.s8.bf16 %v1554
        %v4055 = vunpack.c.l.s8.bf16 %v1555
        %v4056 = vunpack.c.l.s8.bf16 %v1556
        %v4057 = vunpack.c.h.s8.bf16 %v1553
        %v4058 = vunpack.c.h.s8.bf16 %v1554
        %v4059 = vunpack.c.h.s8.bf16 %v1555
        %v4060 = vunpack.c.h.s8.bf16 %v1556
        %v4061 = vunpack.c.l.s8.bf16 %v1557
        %v4062 = vunpack.c.l.s8.bf16 %v1558
        %v4063 = vunpack.c.l.s8.bf16 %v1559
        %v4064 = vunpack.c.l.s8.bf16 %v1560
        %v4065 = vunpack.c.h.s8.bf16 %v1557
        %v4066 = vunpack.c.h.s8.bf16 %v1558
        %v4067 = vunpack.c.h.s8.bf16 %v1559
        %v4068 = vunpack.c.h.s8.bf16 %v1560
        %v4069 = vunpack.c.l.s8.bf16 %v1561
        %v4070 = vunpack.c.l.s8.bf16 %v1562
        %v4071 = vunpack.c.l.s8.bf16 %v1563
        %v4072 = vunpack.c.l.s8.bf16 %v1564
        %v4073 = vunpack.c.h.s8.bf16 %v1561
        %v4074 = vunpack.c.h.s8.bf16 %v1562
        %v4075 = vunpack.c.h.s8.bf16 %v1563
        %v4076 = vunpack.c.h.s8.bf16 %v1564
        %v4077 = vunpack.c.l.s8.bf16 %v1565
        %v4078 = vunpack.c.l.s8.bf16 %v1566
        %v4079 = vunpack.c.l.s8.bf16 %v1567
        %v4080 = vunpack.c.l.s8.bf16 %v1568
        %v4081 = vunpack.c.h.s8.bf16 %v1565
        %v4082 = vunpack.c.h.s8.bf16 %v1566
        %v4083 = vunpack.c.h.s8.bf16 %v1567
        %v4084 = vunpack.c.h.s8.bf16 %v1568
        %v4085 = vunpack.c.l.s8.bf16 %v1569
        %v4086 = vunpack.c.l.s8.bf16 %v1570
        %v4087 = vunpack.c.l.s8.bf16 %v1571
        %v4088 = vunpack.c.l.s8.bf16 %v1572
        %v4089 = vunpack.c.h.s8.bf16 %v1569
        %v4090 = vunpack.c.h.s8.bf16 %v1570
        %v4091 = vunpack.c.h.s8.bf16 %v1571
        %v4092 = vunpack.c.h.s8.bf16 %v1572
        %v4093 = vunpack.c.l.s8.bf16 %v1573
        %v4094 = vunpack.c.l.s8.bf16 %v1574
        %v4095 = vunpack.c.l.s8.bf16 %v1575
        %v4096 = vunpack.c.l.s8.bf16 %v1576
        %v4097 = vunpack.c.h.s8.bf16 %v1573
        %v4098 = vunpack.c.h.s8.bf16 %v1574
        %v4099 = vunpack.c.h.s8.bf16 %v1575
        %v4100 = vunpack.c.h.s8.bf16 %v1576
        %v4101 = vunpack.c.l.s8.bf16 %v1577
        %v4102 = vunpack.c.l.s8.bf16 %v1578
        %v4103 = vunpack.c.l.s8.bf16 %v1579
        %v4104 = vunpack.c.l.s8.bf16 %v1580
        %v4105 = vunpack.c.h.s8.bf16 %v1577
        %v4106 = vunpack.c.h.s8.bf16 %v1578
        %v4107 = vunpack.c.h.s8.bf16 %v1579
        %v4108 = vunpack.c.h.s8.bf16 %v1580
        %v4109 = vunpack.c.l.s8.bf16 %v1581
        %v4110 = vunpack.c.l.s8.bf16 %v1582
        %v4111 = vunpack.c.l.s8.bf16 %v1583
        %v4112 = vunpack.c.l.s8.bf16 %v1584
        %v4113 = vunpack.c.h.s8.bf16 %v1581
        %v4114 = vunpack.c.h.s8.bf16 %v1582
        %v4115 = vunpack.c.h.s8.bf16 %v1583
        %v4116 = vunpack.c.h.s8.bf16 %v1584
        %v4117 = vunpack.c.l.s8.bf16 %v1585
        %v4118 = vunpack.c.l.s8.bf16 %v1586
        %v4119 = vunpack.c.l.s8.bf16 %v1587
        %v4120 = vunpack.c.l.s8.bf16 %v1588
        %v4121 = vunpack.c.h.s8.bf16 %v1585
        %v4122 = vunpack.c.h.s8.bf16 %v1586
        %v4123 = vunpack.c.h.s8.bf16 %v1587
        %v4124 = vunpack.c.h.s8.bf16 %v1588
        %v4125 = vunpack.c.l.s8.bf16 %v1589
        %v4126 = vunpack.c.l.s8.bf16 %v1590
        %v4127 = vunpack.c.l.s8.bf16 %v1591
        %v4128 = vunpack.c.l.s8.bf16 %v1592
        %v4129 = vunpack.c.h.s8.bf16 %v1589
        %v4130 = vunpack.c.h.s8.bf16 %v1590
        %v4131 = vunpack.c.h.s8.bf16 %v1591
        %v4132 = vunpack.c.h.s8.bf16 %v1592
        %v4133 = vunpack.c.l.s8.bf16 %v1593
        %v4134 = vunpack.c.l.s8.bf16 %v1594
        %v4135 = vunpack.c.l.s8.bf16 %v1595
        %v4136 = vunpack.c.l.s8.bf16 %v1596
        %v4137 = vunpack.c.h.s8.bf16 %v1593
        %v4138 = vunpack.c.h.s8.bf16 %v1594
        %v4139 = vunpack.c.h.s8.bf16 %v1595
        %v4140 = vunpack.c.h.s8.bf16 %v1596
        %v4141 = vunpack.c.l.s8.bf16 %v1597
        %v4142 = vunpack.c.l.s8.bf16 %v1598
        %v4143 = vunpack.c.l.s8.bf16 %v1599
        %v4144 = vunpack.c.l.s8.bf16 %v1600
        %v4145 = vunpack.c.h.s8.bf16 %v1597
        %v4146 = vunpack.c.h.s8.bf16 %v1598
        %v4147 = vunpack.c.h.s8.bf16 %v1599
        %v4148 = vunpack.c.h.s8.bf16 %v1600
        %v4149 = vunpack.c.l.s8.bf16 %v1601
        %v4150 = vunpack.c.l.s8.bf16 %v1602
        %v4151 = vunpack.c.l.s8.bf16 %v1603
        %v4152 = vunpack.c.l.s8.bf16 %v1604
        %v4153 = vunpack.c.h.s8.bf16 %v1601
        %v4154 = vunpack.c.h.s8.bf16 %v1602
        %v4155 = vunpack.c.h.s8.bf16 %v1603
        %v4156 = vunpack.c.h.s8.bf16 %v1604
        %v4157 = vunpack.c.l.s8.bf16 %v1605
        %v4158 = vunpack.c.l.s8.bf16 %v1606
        %v4159 = vunpack.c.l.s8.bf16 %v1607
        %v4160 = vunpack.c.l.s8.bf16 %v1608
        %v4161 = vunpack.c.h.s8.bf16 %v1605
        %v4162 = vunpack.c.h.s8.bf16 %v1606
        %v4163 = vunpack.c.h.s8.bf16 %v1607
        %v4164 = vunpack.c.h.s8.bf16 %v1608
        %v4165 = vunpack.c.l.s8.bf16 %v1609
        %v4166 = vunpack.c.l.s8.bf16 %v1610
        %v4167 = vunpack.c.l.s8.bf16 %v1611
        %v4168 = vunpack.c.l.s8.bf16 %v1612
        %v4169 = vunpack.c.h.s8.bf16 %v1609
        %v4170 = vunpack.c.h.s8.bf16 %v1610
        %v4171 = vunpack.c.h.s8.bf16 %v1611
        %v4172 = vunpack.c.h.s8.bf16 %v1612
        %v4173 = vunpack.c.l.s8.bf16 %v1613
        %v4174 = vunpack.c.l.s8.bf16 %v1614
        %v4175 = vunpack.c.l.s8.bf16 %v1615
        %v4176 = vunpack.c.l.s8.bf16 %v1616
        %v4177 = vunpack.c.h.s8.bf16 %v1613
        %v4178 = vunpack.c.h.s8.bf16 %v1614
        %v4179 = vunpack.c.h.s8.bf16 %v1615
        %v4180 = vunpack.c.h.s8.bf16 %v1616
        %v4181 = vunpack.c.l.s8.bf16 %v1617
        %v4182 = vunpack.c.l.s8.bf16 %v1618
        %v4183 = vunpack.c.l.s8.bf16 %v1619
        %v4184 = vunpack.c.l.s8.bf16 %v1620
        %v4185 = vunpack.c.h.s8.bf16 %v1617
        %v4186 = vunpack.c.h.s8.bf16 %v1618
        %v4187 = vunpack.c.h.s8.bf16 %v1619
        %v4188 = vunpack.c.h.s8.bf16 %v1620
        %v4189 = vunpack.c.l.s8.bf16 %v1621
        %v4190 = vunpack.c.l.s8.bf16 %v1622
        %v4191 = vunpack.c.l.s8.bf16 %v1623
        %v4192 = vunpack.c.l.s8.bf16 %v1624
        %v4193 = vunpack.c.h.s8.bf16 %v1621
        %v4194 = vunpack.c.h.s8.bf16 %v1622
        %v4195 = vunpack.c.h.s8.bf16 %v1623
        %v4196 = vunpack.c.h.s8.bf16 %v1624
        %v4197 = vunpack.c.l.s8.bf16 %v1625
        %v4198 = vunpack.c.l.s8.bf16 %v1626
        %v4199 = vunpack.c.l.s8.bf16 %v1627
        %v4200 = vunpack.c.l.s8.bf16 %v1628
        %v4201 = vunpack.c.h.s8.bf16 %v1625
        %v4202 = vunpack.c.h.s8.bf16 %v1626
        %v4203 = vunpack.c.h.s8.bf16 %v1627
        %v4204 = vunpack.c.h.s8.bf16 %v1628
        %v4205 = vunpack.c.l.s8.bf16 %v1629
        %v4206 = vunpack.c.l.s8.bf16 %v1630
        %v4207 = vunpack.c.l.s8.bf16 %v1631
        %v4208 = vunpack.c.l.s8.bf16 %v1632
        %v4209 = vunpack.c.h.s8.bf16 %v1629
        %v4210 = vunpack.c.h.s8.bf16 %v1630
        %v4211 = vunpack.c.h.s8.bf16 %v1631
        %v4212 = vunpack.c.h.s8.bf16 %v1632
        %v4213 = vunpack.c.l.s8.bf16 %v1633
        %v4214 = vunpack.c.l.s8.bf16 %v1634
        %v4215 = vunpack.c.l.s8.bf16 %v1635
        %v4216 = vunpack.c.l.s8.bf16 %v1636
        %v4217 = vunpack.c.h.s8.bf16 %v1633
        %v4218 = vunpack.c.h.s8.bf16 %v1634
        %v4219 = vunpack.c.h.s8.bf16 %v1635
        %v4220 = vunpack.c.h.s8.bf16 %v1636
        %v4221 = vunpack.c.l.s8.bf16 %v1637
        %v4222 = vunpack.c.l.s8.bf16 %v1638
        %v4223 = vunpack.c.l.s8.bf16 %v1639
        %v4224 = vunpack.c.l.s8.bf16 %v1640
        %v4225 = vunpack.c.h.s8.bf16 %v1637
        %v4226 = vunpack.c.h.s8.bf16 %v1638
        %v4227 = vunpack.c.h.s8.bf16 %v1639
        %v4228 = vunpack.c.h.s8.bf16 %v1640
        %v4229 = vunpack.c.l.s8.bf16 %v1641
        %v4230 = vunpack.c.l.s8.bf16 %v1642
        %v4231 = vunpack.c.l.s8.bf16 %v1643
        %v4232 = vunpack.c.l.s8.bf16 %v1644
        %v4233 = vunpack.c.h.s8.bf16 %v1641
        %v4234 = vunpack.c.h.s8.bf16 %v1642
        %v4235 = vunpack.c.h.s8.bf16 %v1643
        %v4236 = vunpack.c.h.s8.bf16 %v1644
        %v4237 = vunpack.c.l.s8.bf16 %v1645
        %v4238 = vunpack.c.l.s8.bf16 %v1646
        %v4239 = vunpack.c.l.s8.bf16 %v1647
        %v4240 = vunpack.c.l.s8.bf16 %v1648
        %v4241 = vunpack.c.h.s8.bf16 %v1645
        %v4242 = vunpack.c.h.s8.bf16 %v1646
        %v4243 = vunpack.c.h.s8.bf16 %v1647
        %v4244 = vunpack.c.h.s8.bf16 %v1648
        %v4245 = vunpack.c.l.s8.bf16 %v1649
        %v4246 = vunpack.c.l.s8.bf16 %v1650
        %v4247 = vunpack.c.l.s8.bf16 %v1651
        %v4248 = vunpack.c.l.s8.bf16 %v1652
        %v4249 = vunpack.c.h.s8.bf16 %v1649
        %v4250 = vunpack.c.h.s8.bf16 %v1650
        %v4251 = vunpack.c.h.s8.bf16 %v1651
        %v4252 = vunpack.c.h.s8.bf16 %v1652
        %v4253 = vunpack.c.l.s8.bf16 %v1653
        %v4254 = vunpack.c.l.s8.bf16 %v1654
        %v4255 = vunpack.c.l.s8.bf16 %v1655
        %v4256 = vunpack.c.l.s8.bf16 %v1656
        %v4257 = vunpack.c.h.s8.bf16 %v1653
        %v4258 = vunpack.c.h.s8.bf16 %v1654
        %v4259 = vunpack.c.h.s8.bf16 %v1655
        %v4260 = vunpack.c.h.s8.bf16 %v1656
        %v4261 = vunpack.c.l.s8.bf16 %v1657
        %v4262 = vunpack.c.l.s8.bf16 %v1658
        %v4263 = vunpack.c.l.s8.bf16 %v1659
        %v4264 = vunpack.c.l.s8.bf16 %v1660
        %v4265 = vunpack.c.h.s8.bf16 %v1657
        %v4266 = vunpack.c.h.s8.bf16 %v1658
        %v4267 = vunpack.c.h.s8.bf16 %v1659
        %v4268 = vunpack.c.h.s8.bf16 %v1660
        %v4269 = vunpack.c.l.s8.bf16 %v1661
        %v4270 = vunpack.c.l.s8.bf16 %v1662
        %v4271 = vunpack.c.l.s8.bf16 %v1663
        %v4272 = vunpack.c.l.s8.bf16 %v1664
        %v4273 = vunpack.c.h.s8.bf16 %v1661
        %v4274 = vunpack.c.h.s8.bf16 %v1662
        %v4275 = vunpack.c.h.s8.bf16 %v1663
        %v4276 = vunpack.c.h.s8.bf16 %v1664
        %v4277 = vunpack.c.l.s8.bf16 %v1665
        %v4278 = vunpack.c.l.s8.bf16 %v1666
        %v4279 = vunpack.c.l.s8.bf16 %v1667
        %v4280 = vunpack.c.l.s8.bf16 %v1668
        %v4281 = vunpack.c.h.s8.bf16 %v1665
        %v4282 = vunpack.c.h.s8.bf16 %v1666
        %v4283 = vunpack.c.h.s8.bf16 %v1667
        %v4284 = vunpack.c.h.s8.bf16 %v1668
        %v4285 = vunpack.c.l.s8.bf16 %v1669
        %v4286 = vunpack.c.l.s8.bf16 %v1670
        %v4287 = vunpack.c.l.s8.bf16 %v1671
        %v4288 = vunpack.c.l.s8.bf16 %v1672
        %v4289 = vunpack.c.h.s8.bf16 %v1669
        %v4290 = vunpack.c.h.s8.bf16 %v1670
        %v4291 = vunpack.c.h.s8.bf16 %v1671
        %v4292 = vunpack.c.h.s8.bf16 %v1672
        %v4293 = vunpack.c.l.s8.bf16 %v1673
        %v4294 = vunpack.c.l.s8.bf16 %v1674
        %v4295 = vunpack.c.l.s8.bf16 %v1675
        %v4296 = vunpack.c.l.s8.bf16 %v1676
        %v4297 = vunpack.c.h.s8.bf16 %v1673
        %v4298 = vunpack.c.h.s8.bf16 %v1674
        %v4299 = vunpack.c.h.s8.bf16 %v1675
        %v4300 = vunpack.c.h.s8.bf16 %v1676
        %v4301 = vunpack.c.l.s8.bf16 %v1677
        %v4302 = vunpack.c.l.s8.bf16 %v1678
        %v4303 = vunpack.c.l.s8.bf16 %v1679
        %v4304 = vunpack.c.l.s8.bf16 %v1680
        %v4305 = vunpack.c.h.s8.bf16 %v1677
        %v4306 = vunpack.c.h.s8.bf16 %v1678
        %v4307 = vunpack.c.h.s8.bf16 %v1679
        %v4308 = vunpack.c.h.s8.bf16 %v1680
        %v4309 = vunpack.c.l.s8.bf16 %v1681
        %v4310 = vunpack.c.l.s8.bf16 %v1682
        %v4311 = vunpack.c.l.s8.bf16 %v1683
        %v4312 = vunpack.c.l.s8.bf16 %v1684
        %v4313 = vunpack.c.h.s8.bf16 %v1681
        %v4314 = vunpack.c.h.s8.bf16 %v1682
        %v4315 = vunpack.c.h.s8.bf16 %v1683
        %v4316 = vunpack.c.h.s8.bf16 %v1684
        %v4317 = vunpack.c.l.s8.bf16 %v1685
        %v4318 = vunpack.c.l.s8.bf16 %v1686
        %v4319 = vunpack.c.l.s8.bf16 %v1687
        %v4320 = vunpack.c.l.s8.bf16 %v1688
        %v4321 = vunpack.c.h.s8.bf16 %v1685
        %v4322 = vunpack.c.h.s8.bf16 %v1686
        %v4323 = vunpack.c.h.s8.bf16 %v1687
        %v4324 = vunpack.c.h.s8.bf16 %v1688
        %v4325 = vunpack.c.l.s8.bf16 %v1689
        %v4326 = vunpack.c.l.s8.bf16 %v1690
        %v4327 = vunpack.c.l.s8.bf16 %v1691
        %v4328 = vunpack.c.l.s8.bf16 %v1692
        %v4329 = vunpack.c.h.s8.bf16 %v1689
        %v4330 = vunpack.c.h.s8.bf16 %v1690
        %v4331 = vunpack.c.h.s8.bf16 %v1691
        %v4332 = vunpack.c.h.s8.bf16 %v1692
        %v4333 = vunpack.c.l.s8.bf16 %v1693
        %v4334 = vunpack.c.l.s8.bf16 %v1694
        %v4335 = vunpack.c.l.s8.bf16 %v1695
        %v4336 = vunpack.c.l.s8.bf16 %v1696
        %v4337 = vunpack.c.h.s8.bf16 %v1693
        %v4338 = vunpack.c.h.s8.bf16 %v1694
        %v4339 = vunpack.c.h.s8.bf16 %v1695
        %v4340 = vunpack.c.h.s8.bf16 %v1696
        %v4341 = vunpack.c.l.s8.bf16 %v1697
        %v4342 = vunpack.c.l.s8.bf16 %v1698
        %v4343 = vunpack.c.l.s8.bf16 %v1699
        %v4344 = vunpack.c.l.s8.bf16 %v1700
        %v4345 = vunpack.c.h.s8.bf16 %v1697
        %v4346 = vunpack.c.h.s8.bf16 %v1698
        %v4347 = vunpack.c.h.s8.bf16 %v1699
        %v4348 = vunpack.c.h.s8.bf16 %v1700
        %v4349 = vunpack.c.l.s8.bf16 %v1701
        %v4350 = vunpack.c.l.s8.bf16 %v1702
        %v4351 = vunpack.c.l.s8.bf16 %v1703
        %v4352 = vunpack.c.l.s8.bf16 %v1704
        %v4353 = vunpack.c.h.s8.bf16 %v1701
        %v4354 = vunpack.c.h.s8.bf16 %v1702
        %v4355 = vunpack.c.h.s8.bf16 %v1703
        %v4356 = vunpack.c.h.s8.bf16 %v1704
        %v4357 = vunpack.c.l.s8.bf16 %v1705
        %v4358 = vunpack.c.l.s8.bf16 %v1706
        %v4359 = vunpack.c.l.s8.bf16 %v1707
        %v4360 = vunpack.c.l.s8.bf16 %v1708
        %v4361 = vunpack.c.h.s8.bf16 %v1705
        %v4362 = vunpack.c.h.s8.bf16 %v1706
        %v4363 = vunpack.c.h.s8.bf16 %v1707
        %v4364 = vunpack.c.h.s8.bf16 %v1708
        %v4365 = vunpack.c.l.s8.bf16 %v1709
        %v4366 = vunpack.c.l.s8.bf16 %v1710
        %v4367 = vunpack.c.l.s8.bf16 %v1711
        %v4368 = vunpack.c.l.s8.bf16 %v1712
        %v4369 = vunpack.c.h.s8.bf16 %v1709
        %v4370 = vunpack.c.h.s8.bf16 %v1710
        %v4371 = vunpack.c.h.s8.bf16 %v1711
        %v4372 = vunpack.c.h.s8.bf16 %v1712
        %v4373 = vunpack.c.l.s8.bf16 %v1713
        %v4374 = vunpack.c.l.s8.bf16 %v1714
        %v4375 = vunpack.c.l.s8.bf16 %v1715
        %v4376 = vunpack.c.l.s8.bf16 %v1716
        %v4377 = vunpack.c.h.s8.bf16 %v1713
        %v4378 = vunpack.c.h.s8.bf16 %v1714
        %v4379 = vunpack.c.h.s8.bf16 %v1715
        %v4380 = vunpack.c.h.s8.bf16 %v1716
        %v4381 = vunpack.c.l.s8.bf16 %v1717
        %v4382 = vunpack.c.l.s8.bf16 %v1718
        %v4383 = vunpack.c.l.s8.bf16 %v1719
        %v4384 = vunpack.c.l.s8.bf16 %v1720
        %v4385 = vunpack.c.h.s8.bf16 %v1717
        %v4386 = vunpack.c.h.s8.bf16 %v1718
        %v4387 = vunpack.c.h.s8.bf16 %v1719
        %v4388 = vunpack.c.h.s8.bf16 %v1720
        %v4389 = vunpack.c.l.s8.bf16 %v1721
        %v4390 = vunpack.c.l.s8.bf16 %v1722
        %v4391 = vunpack.c.l.s8.bf16 %v1723
        %v4392 = vunpack.c.l.s8.bf16 %v1724
        %v4393 = vunpack.c.h.s8.bf16 %v1721
        %v4394 = vunpack.c.h.s8.bf16 %v1722
        %v4395 = vunpack.c.h.s8.bf16 %v1723
        %v4396 = vunpack.c.h.s8.bf16 %v1724
        %v4397 = vunpack.c.l.s8.bf16 %v1725
        %v4398 = vunpack.c.l.s8.bf16 %v1726
        %v4399 = vunpack.c.l.s8.bf16 %v1727
        %v4400 = vunpack.c.l.s8.bf16 %v1728
        %v4401 = vunpack.c.h.s8.bf16 %v1725
        %v4402 = vunpack.c.h.s8.bf16 %v1726
        %v4403 = vunpack.c.h.s8.bf16 %v1727
        %v4404 = vunpack.c.h.s8.bf16 %v1728
        %v4405 = vunpack.c.l.s8.bf16 %v1729
        %v4406 = vunpack.c.l.s8.bf16 %v1730
        %v4407 = vunpack.c.l.s8.bf16 %v1731
        %v4408 = vunpack.c.l.s8.bf16 %v1732
        %v4409 = vunpack.c.h.s8.bf16 %v1729
        %v4410 = vunpack.c.h.s8.bf16 %v1730
        %v4411 = vunpack.c.h.s8.bf16 %v1731
        %v4412 = vunpack.c.h.s8.bf16 %v1732
        %v4413 = vunpack.c.l.s8.bf16 %v1733
        %v4414 = vunpack.c.l.s8.bf16 %v1734
        %v4415 = vunpack.c.l.s8.bf16 %v1735
        %v4416 = vunpack.c.l.s8.bf16 %v1736
        %v4417 = vunpack.c.h.s8.bf16 %v1733
        %v4418 = vunpack.c.h.s8.bf16 %v1734
        %v4419 = vunpack.c.h.s8.bf16 %v1735
        %v4420 = vunpack.c.h.s8.bf16 %v1736
        %v4421 = vunpack.c.l.s8.bf16 %v1737
        %v4422 = vunpack.c.l.s8.bf16 %v1738
        %v4423 = vunpack.c.l.s8.bf16 %v1739
        %v4424 = vunpack.c.l.s8.bf16 %v1740
        %v4425 = vunpack.c.h.s8.bf16 %v1737
        %v4426 = vunpack.c.h.s8.bf16 %v1738
        %v4427 = vunpack.c.h.s8.bf16 %v1739
        %v4428 = vunpack.c.h.s8.bf16 %v1740
        %v4440 = vcombine.high %v386, %v386
        %v4442 = vunpack.c.l.s4 1966171168
        %v4443 = vunpack.c.0.s8 %v4442
        %v4444 = vlaneseq
        %v4445 = vshrl.u32 %v4444, 7
        %v4446 = vsub.s32 %v4443, %v4445
        %v4447 = vrot.slane %v386, %v4446
        %v4449 = vunpack.c.l.s4 1966171168
        %v4450 = vunpack.c.0.s8 %v4449
        %v4451 = vlaneseq
        %v4452 = vshrl.u32 %v4451, 7
        %v4453 = vsub.s32 %v4450, %v4452
        %v4454 = vrot.slane %v4440, %v4453
        %v4455 = vcombine.high %v4447, %v4447
        %v4456 = vcombine.high %v4454, %v4454
        %v4458 = vunpack.c.l.s4 1966171168
        %v4459 = vunpack.c.0.s8 %v4458
        %v4460 = vlaneseq
        %v4461 = vshrl.u32 %v4460, 7
        %v4462 = vsub.s32 %v4459, %v4461
        %v4463 = vrot.slane %v4447, %v4462
        %v4465 = vunpack.c.l.s4 1966171168
        %v4466 = vunpack.c.0.s8 %v4465
        %v4467 = vlaneseq
        %v4468 = vshrl.u32 %v4467, 7
        %v4469 = vsub.s32 %v4466, %v4468
        %v4470 = vrot.slane %v4454, %v4469
        %v4472 = vunpack.c.l.s4 1966171168
        %v4473 = vunpack.c.0.s8 %v4472
        %v4474 = vlaneseq
        %v4475 = vshrl.u32 %v4474, 7
        %v4476 = vsub.s32 %v4473, %v4475
        %v4477 = vrot.slane %v4455, %v4476
        %v4479 = vunpack.c.l.s4 1966171168
        %v4480 = vunpack.c.0.s8 %v4479
        %v4481 = vlaneseq
        %v4482 = vshrl.u32 %v4481, 7
        %v4483 = vsub.s32 %v4480, %v4482
        %v4484 = vrot.slane %v4456, %v4483
        %v4485 = vcombine.high %v4463, %v4463
        %v4486 = vcombine.high %v4470, %v4470
        %v4487 = vcombine.high %v4477, %v4477
        %v4488 = vcombine.high %v4484, %v4484
        %v4489 = vcombine.high %v387, %v387
        %v4491 = vunpack.c.l.s4 1966171168
        %v4492 = vunpack.c.0.s8 %v4491
        %v4493 = vlaneseq
        %v4494 = vshrl.u32 %v4493, 7
        %v4495 = vsub.s32 %v4492, %v4494
        %v4496 = vrot.slane %v387, %v4495
        %v4498 = vunpack.c.l.s4 1966171168
        %v4499 = vunpack.c.0.s8 %v4498
        %v4500 = vlaneseq
        %v4501 = vshrl.u32 %v4500, 7
        %v4502 = vsub.s32 %v4499, %v4501
        %v4503 = vrot.slane %v4489, %v4502
        %v4504 = vcombine.high %v4496, %v4496
        %v4505 = vcombine.high %v4503, %v4503
        %v4507 = vunpack.c.l.s4 1966171168
        %v4508 = vunpack.c.0.s8 %v4507
        %v4509 = vlaneseq
        %v4510 = vshrl.u32 %v4509, 7
        %v4511 = vsub.s32 %v4508, %v4510
        %v4512 = vrot.slane %v4496, %v4511
        %v4514 = vunpack.c.l.s4 1966171168
        %v4515 = vunpack.c.0.s8 %v4514
        %v4516 = vlaneseq
        %v4517 = vshrl.u32 %v4516, 7
        %v4518 = vsub.s32 %v4515, %v4517
        %v4519 = vrot.slane %v4503, %v4518
        %v4521 = vunpack.c.l.s4 1966171168
        %v4522 = vunpack.c.0.s8 %v4521
        %v4523 = vlaneseq
        %v4524 = vshrl.u32 %v4523, 7
        %v4525 = vsub.s32 %v4522, %v4524
        %v4526 = vrot.slane %v4504, %v4525
        %v4528 = vunpack.c.l.s4 1966171168
        %v4529 = vunpack.c.0.s8 %v4528
        %v4530 = vlaneseq
        %v4531 = vshrl.u32 %v4530, 7
        %v4532 = vsub.s32 %v4529, %v4531
        %v4533 = vrot.slane %v4505, %v4532
        %v4534 = vcombine.high %v4512, %v4512
        %v4535 = vcombine.high %v4519, %v4519
        %v4536 = vcombine.high %v4526, %v4526
        %v4537 = vcombine.high %v4533, %v4533
        %v4538 = vcombine.high %v388, %v388
        %v4540 = vunpack.c.l.s4 1966171168
        %v4541 = vunpack.c.0.s8 %v4540
        %v4542 = vlaneseq
        %v4543 = vshrl.u32 %v4542, 7
        %v4544 = vsub.s32 %v4541, %v4543
        %v4545 = vrot.slane %v388, %v4544
        %v4547 = vunpack.c.l.s4 1966171168
        %v4548 = vunpack.c.0.s8 %v4547
        %v4549 = vlaneseq
        %v4550 = vshrl.u32 %v4549, 7
        %v4551 = vsub.s32 %v4548, %v4550
        %v4552 = vrot.slane %v4538, %v4551
        %v4553 = vcombine.high %v4545, %v4545
        %v4554 = vcombine.high %v4552, %v4552
        %v4556 = vunpack.c.l.s4 1966171168
        %v4557 = vunpack.c.0.s8 %v4556
        %v4558 = vlaneseq
        %v4559 = vshrl.u32 %v4558, 7
        %v4560 = vsub.s32 %v4557, %v4559
        %v4561 = vrot.slane %v4545, %v4560
        %v4563 = vunpack.c.l.s4 1966171168
        %v4564 = vunpack.c.0.s8 %v4563
        %v4565 = vlaneseq
        %v4566 = vshrl.u32 %v4565, 7
        %v4567 = vsub.s32 %v4564, %v4566
        %v4568 = vrot.slane %v4552, %v4567
        %v4570 = vunpack.c.l.s4 1966171168
        %v4571 = vunpack.c.0.s8 %v4570
        %v4572 = vlaneseq
        %v4573 = vshrl.u32 %v4572, 7
        %v4574 = vsub.s32 %v4571, %v4573
        %v4575 = vrot.slane %v4553, %v4574
        %v4577 = vunpack.c.l.s4 1966171168
        %v4578 = vunpack.c.0.s8 %v4577
        %v4579 = vlaneseq
        %v4580 = vshrl.u32 %v4579, 7
        %v4581 = vsub.s32 %v4578, %v4580
        %v4582 = vrot.slane %v4554, %v4581
        %v4583 = vcombine.high %v4561, %v4561
        %v4584 = vcombine.high %v4568, %v4568
        %v4585 = vcombine.high %v4575, %v4575
        %v4586 = vcombine.high %v4582, %v4582
        %v4587 = vcombine.high %v389, %v389
        %v4589 = vunpack.c.l.s4 1966171168
        %v4590 = vunpack.c.0.s8 %v4589
        %v4591 = vlaneseq
        %v4592 = vshrl.u32 %v4591, 7
        %v4593 = vsub.s32 %v4590, %v4592
        %v4594 = vrot.slane %v389, %v4593
        %v4596 = vunpack.c.l.s4 1966171168
        %v4597 = vunpack.c.0.s8 %v4596
        %v4598 = vlaneseq
        %v4599 = vshrl.u32 %v4598, 7
        %v4600 = vsub.s32 %v4597, %v4599
        %v4601 = vrot.slane %v4587, %v4600
        %v4602 = vcombine.high %v4594, %v4594
        %v4603 = vcombine.high %v4601, %v4601
        %v4605 = vunpack.c.l.s4 1966171168
        %v4606 = vunpack.c.0.s8 %v4605
        %v4607 = vlaneseq
        %v4608 = vshrl.u32 %v4607, 7
        %v4609 = vsub.s32 %v4606, %v4608
        %v4610 = vrot.slane %v4594, %v4609
        %v4612 = vunpack.c.l.s4 1966171168
        %v4613 = vunpack.c.0.s8 %v4612
        %v4614 = vlaneseq
        %v4615 = vshrl.u32 %v4614, 7
        %v4616 = vsub.s32 %v4613, %v4615
        %v4617 = vrot.slane %v4601, %v4616
        %v4619 = vunpack.c.l.s4 1966171168
        %v4620 = vunpack.c.0.s8 %v4619
        %v4621 = vlaneseq
        %v4622 = vshrl.u32 %v4621, 7
        %v4623 = vsub.s32 %v4620, %v4622
        %v4624 = vrot.slane %v4602, %v4623
        %v4626 = vunpack.c.l.s4 1966171168
        %v4627 = vunpack.c.0.s8 %v4626
        %v4628 = vlaneseq
        %v4629 = vshrl.u32 %v4628, 7
        %v4630 = vsub.s32 %v4627, %v4629
        %v4631 = vrot.slane %v4603, %v4630
        %v4632 = vcombine.high %v4610, %v4610
        %v4633 = vcombine.high %v4617, %v4617
        %v4634 = vcombine.high %v4624, %v4624
        %v4635 = vcombine.high %v4631, %v4631
        %v4636 = vcombine.high %v390, %v390
        %v4638 = vunpack.c.l.s4 1966171168
        %v4639 = vunpack.c.0.s8 %v4638
        %v4640 = vlaneseq
        %v4641 = vshrl.u32 %v4640, 7
        %v4642 = vsub.s32 %v4639, %v4641
        %v4643 = vrot.slane %v390, %v4642
        %v4645 = vunpack.c.l.s4 1966171168
        %v4646 = vunpack.c.0.s8 %v4645
        %v4647 = vlaneseq
        %v4648 = vshrl.u32 %v4647, 7
        %v4649 = vsub.s32 %v4646, %v4648
        %v4650 = vrot.slane %v4636, %v4649
        %v4651 = vcombine.high %v4643, %v4643
        %v4652 = vcombine.high %v4650, %v4650
        %v4654 = vunpack.c.l.s4 1966171168
        %v4655 = vunpack.c.0.s8 %v4654
        %v4656 = vlaneseq
        %v4657 = vshrl.u32 %v4656, 7
        %v4658 = vsub.s32 %v4655, %v4657
        %v4659 = vrot.slane %v4643, %v4658
        %v4661 = vunpack.c.l.s4 1966171168
        %v4662 = vunpack.c.0.s8 %v4661
        %v4663 = vlaneseq
        %v4664 = vshrl.u32 %v4663, 7
        %v4665 = vsub.s32 %v4662, %v4664
        %v4666 = vrot.slane %v4650, %v4665
        %v4668 = vunpack.c.l.s4 1966171168
        %v4669 = vunpack.c.0.s8 %v4668
        %v4670 = vlaneseq
        %v4671 = vshrl.u32 %v4670, 7
        %v4672 = vsub.s32 %v4669, %v4671
        %v4673 = vrot.slane %v4651, %v4672
        %v4675 = vunpack.c.l.s4 1966171168
        %v4676 = vunpack.c.0.s8 %v4675
        %v4677 = vlaneseq
        %v4678 = vshrl.u32 %v4677, 7
        %v4679 = vsub.s32 %v4676, %v4678
        %v4680 = vrot.slane %v4652, %v4679
        %v4681 = vcombine.high %v4659, %v4659
        %v4682 = vcombine.high %v4666, %v4666
        %v4683 = vcombine.high %v4673, %v4673
        %v4684 = vcombine.high %v4680, %v4680
        %v4685 = vcombine.high %v391, %v391
        %v4687 = vunpack.c.l.s4 1966171168
        %v4688 = vunpack.c.0.s8 %v4687
        %v4689 = vlaneseq
        %v4690 = vshrl.u32 %v4689, 7
        %v4691 = vsub.s32 %v4688, %v4690
        %v4692 = vrot.slane %v391, %v4691
        %v4694 = vunpack.c.l.s4 1966171168
        %v4695 = vunpack.c.0.s8 %v4694
        %v4696 = vlaneseq
        %v4697 = vshrl.u32 %v4696, 7
        %v4698 = vsub.s32 %v4695, %v4697
        %v4699 = vrot.slane %v4685, %v4698
        %v4700 = vcombine.high %v4692, %v4692
        %v4701 = vcombine.high %v4699, %v4699
        %v4703 = vunpack.c.l.s4 1966171168
        %v4704 = vunpack.c.0.s8 %v4703
        %v4705 = vlaneseq
        %v4706 = vshrl.u32 %v4705, 7
        %v4707 = vsub.s32 %v4704, %v4706
        %v4708 = vrot.slane %v4692, %v4707
        %v4710 = vunpack.c.l.s4 1966171168
        %v4711 = vunpack.c.0.s8 %v4710
        %v4712 = vlaneseq
        %v4713 = vshrl.u32 %v4712, 7
        %v4714 = vsub.s32 %v4711, %v4713
        %v4715 = vrot.slane %v4699, %v4714
        %v4717 = vunpack.c.l.s4 1966171168
        %v4718 = vunpack.c.0.s8 %v4717
        %v4719 = vlaneseq
        %v4720 = vshrl.u32 %v4719, 7
        %v4721 = vsub.s32 %v4718, %v4720
        %v4722 = vrot.slane %v4700, %v4721
        %v4724 = vunpack.c.l.s4 1966171168
        %v4725 = vunpack.c.0.s8 %v4724
        %v4726 = vlaneseq
        %v4727 = vshrl.u32 %v4726, 7
        %v4728 = vsub.s32 %v4725, %v4727
        %v4729 = vrot.slane %v4701, %v4728
        %v4730 = vcombine.high %v4708, %v4708
        %v4731 = vcombine.high %v4715, %v4715
        %v4732 = vcombine.high %v4722, %v4722
        %v4733 = vcombine.high %v4729, %v4729
        %v4734 = vcombine.high %v392, %v392
        %v4736 = vunpack.c.l.s4 1966171168
        %v4737 = vunpack.c.0.s8 %v4736
        %v4738 = vlaneseq
        %v4739 = vshrl.u32 %v4738, 7
        %v4740 = vsub.s32 %v4737, %v4739
        %v4741 = vrot.slane %v392, %v4740
        %v4743 = vunpack.c.l.s4 1966171168
        %v4744 = vunpack.c.0.s8 %v4743
        %v4745 = vlaneseq
        %v4746 = vshrl.u32 %v4745, 7
        %v4747 = vsub.s32 %v4744, %v4746
        %v4748 = vrot.slane %v4734, %v4747
        %v4749 = vcombine.high %v4741, %v4741
        %v4750 = vcombine.high %v4748, %v4748
        %v4752 = vunpack.c.l.s4 1966171168
        %v4753 = vunpack.c.0.s8 %v4752
        %v4754 = vlaneseq
        %v4755 = vshrl.u32 %v4754, 7
        %v4756 = vsub.s32 %v4753, %v4755
        %v4757 = vrot.slane %v4741, %v4756
        %v4759 = vunpack.c.l.s4 1966171168
        %v4760 = vunpack.c.0.s8 %v4759
        %v4761 = vlaneseq
        %v4762 = vshrl.u32 %v4761, 7
        %v4763 = vsub.s32 %v4760, %v4762
        %v4764 = vrot.slane %v4748, %v4763
        %v4766 = vunpack.c.l.s4 1966171168
        %v4767 = vunpack.c.0.s8 %v4766
        %v4768 = vlaneseq
        %v4769 = vshrl.u32 %v4768, 7
        %v4770 = vsub.s32 %v4767, %v4769
        %v4771 = vrot.slane %v4749, %v4770
        %v4773 = vunpack.c.l.s4 1966171168
        %v4774 = vunpack.c.0.s8 %v4773
        %v4775 = vlaneseq
        %v4776 = vshrl.u32 %v4775, 7
        %v4777 = vsub.s32 %v4774, %v4776
        %v4778 = vrot.slane %v4750, %v4777
        %v4779 = vcombine.high %v4757, %v4757
        %v4780 = vcombine.high %v4764, %v4764
        %v4781 = vcombine.high %v4771, %v4771
        %v4782 = vcombine.high %v4778, %v4778
        %v4783 = vcombine.high %v393, %v393
        %v4785 = vunpack.c.l.s4 1966171168
        %v4786 = vunpack.c.0.s8 %v4785
        %v4787 = vlaneseq
        %v4788 = vshrl.u32 %v4787, 7
        %v4789 = vsub.s32 %v4786, %v4788
        %v4790 = vrot.slane %v393, %v4789
        %v4792 = vunpack.c.l.s4 1966171168
        %v4793 = vunpack.c.0.s8 %v4792
        %v4794 = vlaneseq
        %v4795 = vshrl.u32 %v4794, 7
        %v4796 = vsub.s32 %v4793, %v4795
        %v4797 = vrot.slane %v4783, %v4796
        %v4798 = vcombine.high %v4790, %v4790
        %v4799 = vcombine.high %v4797, %v4797
        %v4801 = vunpack.c.l.s4 1966171168
        %v4802 = vunpack.c.0.s8 %v4801
        %v4803 = vlaneseq
        %v4804 = vshrl.u32 %v4803, 7
        %v4805 = vsub.s32 %v4802, %v4804
        %v4806 = vrot.slane %v4790, %v4805
        %v4808 = vunpack.c.l.s4 1966171168
        %v4809 = vunpack.c.0.s8 %v4808
        %v4810 = vlaneseq
        %v4811 = vshrl.u32 %v4810, 7
        %v4812 = vsub.s32 %v4809, %v4811
        %v4813 = vrot.slane %v4797, %v4812
        %v4815 = vunpack.c.l.s4 1966171168
        %v4816 = vunpack.c.0.s8 %v4815
        %v4817 = vlaneseq
        %v4818 = vshrl.u32 %v4817, 7
        %v4819 = vsub.s32 %v4816, %v4818
        %v4820 = vrot.slane %v4798, %v4819
        %v4822 = vunpack.c.l.s4 1966171168
        %v4823 = vunpack.c.0.s8 %v4822
        %v4824 = vlaneseq
        %v4825 = vshrl.u32 %v4824, 7
        %v4826 = vsub.s32 %v4823, %v4825
        %v4827 = vrot.slane %v4799, %v4826
        %v4828 = vcombine.high %v4806, %v4806
        %v4829 = vcombine.high %v4813, %v4813
        %v4830 = vcombine.high %v4820, %v4820
        %v4831 = vcombine.high %v4827, %v4827
        %v4832 = vcombine.high %v394, %v394
        %v4834 = vunpack.c.l.s4 1966171168
        %v4835 = vunpack.c.0.s8 %v4834
        %v4836 = vlaneseq
        %v4837 = vshrl.u32 %v4836, 7
        %v4838 = vsub.s32 %v4835, %v4837
        %v4839 = vrot.slane %v394, %v4838
        %v4841 = vunpack.c.l.s4 1966171168
        %v4842 = vunpack.c.0.s8 %v4841
        %v4843 = vlaneseq
        %v4844 = vshrl.u32 %v4843, 7
        %v4845 = vsub.s32 %v4842, %v4844
        %v4846 = vrot.slane %v4832, %v4845
        %v4847 = vcombine.high %v4839, %v4839
        %v4848 = vcombine.high %v4846, %v4846
        %v4850 = vunpack.c.l.s4 1966171168
        %v4851 = vunpack.c.0.s8 %v4850
        %v4852 = vlaneseq
        %v4853 = vshrl.u32 %v4852, 7
        %v4854 = vsub.s32 %v4851, %v4853
        %v4855 = vrot.slane %v4839, %v4854
        %v4857 = vunpack.c.l.s4 1966171168
        %v4858 = vunpack.c.0.s8 %v4857
        %v4859 = vlaneseq
        %v4860 = vshrl.u32 %v4859, 7
        %v4861 = vsub.s32 %v4858, %v4860
        %v4862 = vrot.slane %v4846, %v4861
        %v4864 = vunpack.c.l.s4 1966171168
        %v4865 = vunpack.c.0.s8 %v4864
        %v4866 = vlaneseq
        %v4867 = vshrl.u32 %v4866, 7
        %v4868 = vsub.s32 %v4865, %v4867
        %v4869 = vrot.slane %v4847, %v4868
        %v4871 = vunpack.c.l.s4 1966171168
        %v4872 = vunpack.c.0.s8 %v4871
        %v4873 = vlaneseq
        %v4874 = vshrl.u32 %v4873, 7
        %v4875 = vsub.s32 %v4872, %v4874
        %v4876 = vrot.slane %v4848, %v4875
        %v4877 = vcombine.high %v4855, %v4855
        %v4878 = vcombine.high %v4862, %v4862
        %v4879 = vcombine.high %v4869, %v4869
        %v4880 = vcombine.high %v4876, %v4876
        %v4881 = vcombine.high %v395, %v395
        %v4883 = vunpack.c.l.s4 1966171168
        %v4884 = vunpack.c.0.s8 %v4883
        %v4885 = vlaneseq
        %v4886 = vshrl.u32 %v4885, 7
        %v4887 = vsub.s32 %v4884, %v4886
        %v4888 = vrot.slane %v395, %v4887
        %v4890 = vunpack.c.l.s4 1966171168
        %v4891 = vunpack.c.0.s8 %v4890
        %v4892 = vlaneseq
        %v4893 = vshrl.u32 %v4892, 7
        %v4894 = vsub.s32 %v4891, %v4893
        %v4895 = vrot.slane %v4881, %v4894
        %v4896 = vcombine.high %v4888, %v4888
        %v4897 = vcombine.high %v4895, %v4895
        %v4899 = vunpack.c.l.s4 1966171168
        %v4900 = vunpack.c.0.s8 %v4899
        %v4901 = vlaneseq
        %v4902 = vshrl.u32 %v4901, 7
        %v4903 = vsub.s32 %v4900, %v4902
        %v4904 = vrot.slane %v4888, %v4903
        %v4906 = vunpack.c.l.s4 1966171168
        %v4907 = vunpack.c.0.s8 %v4906
        %v4908 = vlaneseq
        %v4909 = vshrl.u32 %v4908, 7
        %v4910 = vsub.s32 %v4907, %v4909
        %v4911 = vrot.slane %v4895, %v4910
        %v4913 = vunpack.c.l.s4 1966171168
        %v4914 = vunpack.c.0.s8 %v4913
        %v4915 = vlaneseq
        %v4916 = vshrl.u32 %v4915, 7
        %v4917 = vsub.s32 %v4914, %v4916
        %v4918 = vrot.slane %v4896, %v4917
        %v4920 = vunpack.c.l.s4 1966171168
        %v4921 = vunpack.c.0.s8 %v4920
        %v4922 = vlaneseq
        %v4923 = vshrl.u32 %v4922, 7
        %v4924 = vsub.s32 %v4921, %v4923
        %v4925 = vrot.slane %v4897, %v4924
        %v4926 = vcombine.high %v4904, %v4904
        %v4927 = vcombine.high %v4911, %v4911
        %v4928 = vcombine.high %v4918, %v4918
        %v4929 = vcombine.high %v4925, %v4925
        %v4931 = vunpack.c.l.s4 1966171168
        %v4932 = vunpack.c.0.s8 %v4931
        %v4933 = vlaneseq
        %v4934 = vshrl.u32 %v4933, 7
        %v4935 = vsub.s32 %v4932, %v4934
        %v4936 = vrot.slane %v396, %v4935
        %v4937 = vcombine.high %v4936, %v4936
        %v4939 = vunpack.c.l.s4 1966171168
        %v4940 = vunpack.c.0.s8 %v4939
        %v4941 = vlaneseq
        %v4942 = vshrl.u32 %v4941, 7
        %v4943 = vsub.s32 %v4940, %v4942
        %v4944 = vrot.slane %v4936, %v4943
        %v4946 = vunpack.c.l.s4 1966171168
        %v4947 = vunpack.c.0.s8 %v4946
        %v4948 = vlaneseq
        %v4949 = vshrl.u32 %v4948, 7
        %v4950 = vsub.s32 %v4947, %v4949
        %v4951 = vrot.slane %v4937, %v4950
        %v4952 = vcombine.high %v4944, %v4944
        %v4953 = vcombine.high %v4951, %v4951
        %5038 = vmatprep.subr.bf16.mxu0 %v1770
        %5039 = vmatpush1.bf16.msra.mxu0 %v1769
        %5040 = vmatprep.subr.bf16.mxu0 %v1766
        %5041 = vmatpush1.bf16.msra.mxu0 %v1765
        %5042 = vmatprep.subr.bf16.mxu0 %v1762
        %5043 = vmatpush1.bf16.msra.mxu0 %v1761
        %5044 = vmatprep.subr.bf16.mxu0 %v1758
        %5045 = vmatpush1.bf16.msra.mxu0 %v1757
        %5046 = vmatprep.subr.bf16.mxu0 %v1754
        %5047 = vmatpush1.bf16.msra.mxu0 %v1753
        %5048 = vmatprep.subr.bf16.mxu0 %v1750
        %5049 = vmatpush1.bf16.msra.mxu0 %v1749
        %5050 = vmatprep.subr.bf16.mxu0 %v1746
        %5051 = vmatpush1.bf16.msra.mxu0 %v1745
        %5052 = vmatprep.subr.bf16.mxu0 %v1742
        %5053 = vmatpush1.bf16.msra.mxu0 %v1741
        %5054 = vmatprep.subr.bf16.mxu0 %v1802
        %5055 = vmatpush2.bf16.msra.mxu0 %v1801
        %5056 = vmatprep.subr.bf16.mxu0 %v1798
        %5057 = vmatpush2.bf16.msra.mxu0 %v1797
        %5058 = vmatprep.subr.bf16.mxu0 %v1794
        %5059 = vmatpush2.bf16.msra.mxu0 %v1793
        %5060 = vmatprep.subr.bf16.mxu0 %v1790
        %5061 = vmatpush2.bf16.msra.mxu0 %v1789
        %5062 = vmatprep.subr.bf16.mxu0 %v1786
        %5063 = vmatpush2.bf16.msra.mxu0 %v1785
        %5064 = vmatprep.subr.bf16.mxu0 %v1782
        %5065 = vmatpush2.bf16.msra.mxu0 %v1781
        %5066 = vmatprep.subr.bf16.mxu0 %v1778
        %5067 = vmatpush2.bf16.msra.mxu0 %v1777
        %5068 = vmatprep.subr.bf16.mxu0 %v1774
        %5069 = vmatpush2.bf16.msra.mxu0 %v1773
        %5070 = vmatprep.mubr.bf16.mxu0 %v4477
        %5071 = vmatmul.mubr.bf16.gmra.mxu0 %v4463
        %v5072 = vpop.f32.mrf.mxu0
        %v5073 = vadd.f32 0.0, %v5072
        %v5074 = vpop.f32.mrf.mxu0
        %v5075 = vadd.f32 0.0, %v5074
        %v5076 = vpop.f32.mrf.mxu0
        %v5077 = vpop.f32.mrf.mxu0
        %5078 = vdwg.mxu0
        %5079 = vmatprep.subr.bf16.mxu0 %v1834
        %5080 = vmatpush1.bf16.msra.mxu0 %v1833
        %5081 = vmatprep.subr.bf16.mxu0 %v1830
        %5082 = vmatpush1.bf16.msra.mxu0 %v1829
        %5083 = vmatprep.subr.bf16.mxu0 %v1826
        %5084 = vmatpush1.bf16.msra.mxu0 %v1825
        %5085 = vmatprep.subr.bf16.mxu0 %v1822
        %5086 = vmatpush1.bf16.msra.mxu0 %v1821
        %5087 = vmatprep.subr.bf16.mxu0 %v1818
        %5088 = vmatpush1.bf16.msra.mxu0 %v1817
        %5089 = vmatprep.subr.bf16.mxu0 %v1814
        %5090 = vmatpush1.bf16.msra.mxu0 %v1813
        %5091 = vmatprep.subr.bf16.mxu0 %v1810
        %5092 = vmatpush1.bf16.msra.mxu0 %v1809
        %5093 = vmatprep.subr.bf16.mxu0 %v1806
        %5094 = vmatpush1.bf16.msra.mxu0 %v1805
        %5095 = vmatprep.subr.bf16.mxu0 %v1866
        %5096 = vmatpush2.bf16.msra.mxu0 %v1865
        %5097 = vmatprep.subr.bf16.mxu0 %v1862
        %5098 = vmatpush2.bf16.msra.mxu0 %v1861
        %5099 = vmatprep.subr.bf16.mxu0 %v1858
        %5100 = vmatpush2.bf16.msra.mxu0 %v1857
        %5101 = vmatprep.subr.bf16.mxu0 %v1854
        %5102 = vmatpush2.bf16.msra.mxu0 %v1853
        %5103 = vmatprep.subr.bf16.mxu0 %v1850
        %5104 = vmatpush2.bf16.msra.mxu0 %v1849
        %5105 = vmatprep.subr.bf16.mxu0 %v1846
        %5106 = vmatpush2.bf16.msra.mxu0 %v1845
        %5107 = vmatprep.subr.bf16.mxu0 %v1842
        %5108 = vmatpush2.bf16.msra.mxu0 %v1841
        %5109 = vmatprep.subr.bf16.mxu0 %v1838
        %5110 = vmatpush2.bf16.msra.mxu0 %v1837
        %5111 = vmatprep.mubr.bf16.mxu0 %v4487
        %5112 = vmatmul.mubr.bf16.gmra.mxu0 %v4485
        %v5113 = vpop.f32.mrf.mxu0
        %v5114 = vadd.f32 %v5073, %v5113
        %v5115 = vpop.f32.mrf.mxu0
        %v5116 = vadd.f32 %v5075, %v5115
        %v5117 = vpop.f32.mrf.mxu0
        %v5118 = vpop.f32.mrf.mxu0
        %5119 = vdwg.mxu0
        %5120 = vmatprep.subr.bf16.mxu0 %v1898
        %5121 = vmatpush1.bf16.msra.mxu0 %v1897
        %5122 = vmatprep.subr.bf16.mxu0 %v1894
        %5123 = vmatpush1.bf16.msra.mxu0 %v1893
        %5124 = vmatprep.subr.bf16.mxu0 %v1890
        %5125 = vmatpush1.bf16.msra.mxu0 %v1889
        %5126 = vmatprep.subr.bf16.mxu0 %v1886
        %5127 = vmatpush1.bf16.msra.mxu0 %v1885
        %5128 = vmatprep.subr.bf16.mxu0 %v1882
        %5129 = vmatpush1.bf16.msra.mxu0 %v1881
        %5130 = vmatprep.subr.bf16.mxu0 %v1878
        %5131 = vmatpush1.bf16.msra.mxu0 %v1877
        %5132 = vmatprep.subr.bf16.mxu0 %v1874
        %5133 = vmatpush1.bf16.msra.mxu0 %v1873
        %5134 = vmatprep.subr.bf16.mxu0 %v1870
        %5135 = vmatpush1.bf16.msra.mxu0 %v1869
        %5136 = vmatprep.subr.bf16.mxu0 %v1930
        %5137 = vmatpush2.bf16.msra.mxu0 %v1929
        %5138 = vmatprep.subr.bf16.mxu0 %v1926
        %5139 = vmatpush2.bf16.msra.mxu0 %v1925
        %5140 = vmatprep.subr.bf16.mxu0 %v1922
        %5141 = vmatpush2.bf16.msra.mxu0 %v1921
        %5142 = vmatprep.subr.bf16.mxu0 %v1918
        %5143 = vmatpush2.bf16.msra.mxu0 %v1917
        %5144 = vmatprep.subr.bf16.mxu0 %v1914
        %5145 = vmatpush2.bf16.msra.mxu0 %v1913
        %5146 = vmatprep.subr.bf16.mxu0 %v1910
        %5147 = vmatpush2.bf16.msra.mxu0 %v1909
        %5148 = vmatprep.subr.bf16.mxu0 %v1906
        %5149 = vmatpush2.bf16.msra.mxu0 %v1905
        %5150 = vmatprep.subr.bf16.mxu0 %v1902
        %5151 = vmatpush2.bf16.msra.mxu0 %v1901
        %5152 = vmatprep.mubr.bf16.mxu0 %v4484
        %5153 = vmatmul.mubr.bf16.gmra.mxu0 %v4470
        %v5154 = vpop.f32.mrf.mxu0
        %v5155 = vadd.f32 %v5114, %v5154
        %v5156 = vpop.f32.mrf.mxu0
        %v5157 = vadd.f32 %v5116, %v5156
        %v5158 = vpop.f32.mrf.mxu0
        %v5159 = vpop.f32.mrf.mxu0
        %5160 = vdwg.mxu0
        %5161 = vmatprep.subr.bf16.mxu0 %v1962
        %5162 = vmatpush1.bf16.msra.mxu0 %v1961
        %5163 = vmatprep.subr.bf16.mxu0 %v1958
        %5164 = vmatpush1.bf16.msra.mxu0 %v1957
        %5165 = vmatprep.subr.bf16.mxu0 %v1954
        %5166 = vmatpush1.bf16.msra.mxu0 %v1953
        %5167 = vmatprep.subr.bf16.mxu0 %v1950
        %5168 = vmatpush1.bf16.msra.mxu0 %v1949
        %5169 = vmatprep.subr.bf16.mxu0 %v1946
        %5170 = vmatpush1.bf16.msra.mxu0 %v1945
        %5171 = vmatprep.subr.bf16.mxu0 %v1942
        %5172 = vmatpush1.bf16.msra.mxu0 %v1941
        %5173 = vmatprep.subr.bf16.mxu0 %v1938
        %5174 = vmatpush1.bf16.msra.mxu0 %v1937
        %5175 = vmatprep.subr.bf16.mxu0 %v1934
        %5176 = vmatpush1.bf16.msra.mxu0 %v1933
        %5177 = vmatprep.subr.bf16.mxu0 %v1994
        %5178 = vmatpush2.bf16.msra.mxu0 %v1993
        %5179 = vmatprep.subr.bf16.mxu0 %v1990
        %5180 = vmatpush2.bf16.msra.mxu0 %v1989
        %5181 = vmatprep.subr.bf16.mxu0 %v1986
        %5182 = vmatpush2.bf16.msra.mxu0 %v1985
        %5183 = vmatprep.subr.bf16.mxu0 %v1982
        %5184 = vmatpush2.bf16.msra.mxu0 %v1981
        %5185 = vmatprep.subr.bf16.mxu0 %v1978
        %5186 = vmatpush2.bf16.msra.mxu0 %v1977
        %5187 = vmatprep.subr.bf16.mxu0 %v1974
        %5188 = vmatpush2.bf16.msra.mxu0 %v1973
        %5189 = vmatprep.subr.bf16.mxu0 %v1970
        %5190 = vmatpush2.bf16.msra.mxu0 %v1969
        %5191 = vmatprep.subr.bf16.mxu0 %v1966
        %5192 = vmatpush2.bf16.msra.mxu0 %v1965
        %5193 = vmatprep.mubr.bf16.mxu0 %v4488
        %5194 = vmatmul.mubr.bf16.gmra.mxu0 %v4486
        %v5195 = vpop.f32.mrf.mxu0
        %v5196 = vadd.f32 %v5155, %v5195
        %v5197 = vpop.f32.mrf.mxu0
        %v5198 = vadd.f32 %v5157, %v5197
        %v5199 = vpop.f32.mrf.mxu0
        %v5200 = vpop.f32.mrf.mxu0
        %5201 = vdwg.mxu0
        %5202 = vmatprep.subr.bf16.mxu0 %v2026
        %5203 = vmatpush1.bf16.msra.mxu0 %v2025
        %5204 = vmatprep.subr.bf16.mxu0 %v2022
        %5205 = vmatpush1.bf16.msra.mxu0 %v2021
        %5206 = vmatprep.subr.bf16.mxu0 %v2018
        %5207 = vmatpush1.bf16.msra.mxu0 %v2017
        %5208 = vmatprep.subr.bf16.mxu0 %v2014
        %5209 = vmatpush1.bf16.msra.mxu0 %v2013
        %5210 = vmatprep.subr.bf16.mxu0 %v2010
        %5211 = vmatpush1.bf16.msra.mxu0 %v2009
        %5212 = vmatprep.subr.bf16.mxu0 %v2006
        %5213 = vmatpush1.bf16.msra.mxu0 %v2005
        %5214 = vmatprep.subr.bf16.mxu0 %v2002
        %5215 = vmatpush1.bf16.msra.mxu0 %v2001
        %5216 = vmatprep.subr.bf16.mxu0 %v1998
        %5217 = vmatpush1.bf16.msra.mxu0 %v1997
        %5218 = vmatprep.subr.bf16.mxu0 %v2058
        %5219 = vmatpush2.bf16.msra.mxu0 %v2057
        %5220 = vmatprep.subr.bf16.mxu0 %v2054
        %5221 = vmatpush2.bf16.msra.mxu0 %v2053
        %5222 = vmatprep.subr.bf16.mxu0 %v2050
        %5223 = vmatpush2.bf16.msra.mxu0 %v2049
        %5224 = vmatprep.subr.bf16.mxu0 %v2046
        %5225 = vmatpush2.bf16.msra.mxu0 %v2045
        %5226 = vmatprep.subr.bf16.mxu0 %v2042
        %5227 = vmatpush2.bf16.msra.mxu0 %v2041
        %5228 = vmatprep.subr.bf16.mxu0 %v2038
        %5229 = vmatpush2.bf16.msra.mxu0 %v2037
        %5230 = vmatprep.subr.bf16.mxu0 %v2034
        %5231 = vmatpush2.bf16.msra.mxu0 %v2033
        %5232 = vmatprep.subr.bf16.mxu0 %v2030
        %5233 = vmatpush2.bf16.msra.mxu0 %v2029
        %5234 = vmatprep.mubr.bf16.mxu0 %v4526
        %5235 = vmatmul.mubr.bf16.gmra.mxu0 %v4512
        %v5236 = vpop.f32.mrf.mxu0
        %v5237 = vadd.f32 %v5196, %v5236
        %v5238 = vpop.f32.mrf.mxu0
        %v5239 = vadd.f32 %v5198, %v5238
        %v5240 = vpop.f32.mrf.mxu0
        %v5241 = vpop.f32.mrf.mxu0
        %5242 = vdwg.mxu0
        %5243 = vmatprep.subr.bf16.mxu0 %v2090
        %5244 = vmatpush1.bf16.msra.mxu0 %v2089
        %5245 = vmatprep.subr.bf16.mxu0 %v2086
        %5246 = vmatpush1.bf16.msra.mxu0 %v2085
        %5247 = vmatprep.subr.bf16.mxu0 %v2082
        %5248 = vmatpush1.bf16.msra.mxu0 %v2081
        %5249 = vmatprep.subr.bf16.mxu0 %v2078
        %5250 = vmatpush1.bf16.msra.mxu0 %v2077
        %5251 = vmatprep.subr.bf16.mxu0 %v2074
        %5252 = vmatpush1.bf16.msra.mxu0 %v2073
        %5253 = vmatprep.subr.bf16.mxu0 %v2070
        %5254 = vmatpush1.bf16.msra.mxu0 %v2069
        %5255 = vmatprep.subr.bf16.mxu0 %v2066
        %5256 = vmatpush1.bf16.msra.mxu0 %v2065
        %5257 = vmatprep.subr.bf16.mxu0 %v2062
        %5258 = vmatpush1.bf16.msra.mxu0 %v2061
        %5259 = vmatprep.subr.bf16.mxu0 %v2122
        %5260 = vmatpush2.bf16.msra.mxu0 %v2121
        %5261 = vmatprep.subr.bf16.mxu0 %v2118
        %5262 = vmatpush2.bf16.msra.mxu0 %v2117
        %5263 = vmatprep.subr.bf16.mxu0 %v2114
        %5264 = vmatpush2.bf16.msra.mxu0 %v2113
        %5265 = vmatprep.subr.bf16.mxu0 %v2110
        %5266 = vmatpush2.bf16.msra.mxu0 %v2109
        %5267 = vmatprep.subr.bf16.mxu0 %v2106
        %5268 = vmatpush2.bf16.msra.mxu0 %v2105
        %5269 = vmatprep.subr.bf16.mxu0 %v2102
        %5270 = vmatpush2.bf16.msra.mxu0 %v2101
        %5271 = vmatprep.subr.bf16.mxu0 %v2098
        %5272 = vmatpush2.bf16.msra.mxu0 %v2097
        %5273 = vmatprep.subr.bf16.mxu0 %v2094
        %5274 = vmatpush2.bf16.msra.mxu0 %v2093
        %5275 = vmatprep.mubr.bf16.mxu0 %v4536
        %5276 = vmatmul.mubr.bf16.gmra.mxu0 %v4534
        %v5277 = vpop.f32.mrf.mxu0
        %v5278 = vadd.f32 %v5237, %v5277
        %v5279 = vpop.f32.mrf.mxu0
        %v5280 = vadd.f32 %v5239, %v5279
        %v5281 = vpop.f32.mrf.mxu0
        %v5282 = vpop.f32.mrf.mxu0
        %5283 = vdwg.mxu0
        %5284 = vmatprep.subr.bf16.mxu0 %v2154
        %5285 = vmatpush1.bf16.msra.mxu0 %v2153
        %5286 = vmatprep.subr.bf16.mxu0 %v2150
        %5287 = vmatpush1.bf16.msra.mxu0 %v2149
        %5288 = vmatprep.subr.bf16.mxu0 %v2146
        %5289 = vmatpush1.bf16.msra.mxu0 %v2145
        %5290 = vmatprep.subr.bf16.mxu0 %v2142
        %5291 = vmatpush1.bf16.msra.mxu0 %v2141
        %5292 = vmatprep.subr.bf16.mxu0 %v2138
        %5293 = vmatpush1.bf16.msra.mxu0 %v2137
        %5294 = vmatprep.subr.bf16.mxu0 %v2134
        %5295 = vmatpush1.bf16.msra.mxu0 %v2133
        %5296 = vmatprep.subr.bf16.mxu0 %v2130
        %5297 = vmatpush1.bf16.msra.mxu0 %v2129
        %5298 = vmatprep.subr.bf16.mxu0 %v2126
        %5299 = vmatpush1.bf16.msra.mxu0 %v2125
        %5300 = vmatprep.subr.bf16.mxu0 %v2186
        %5301 = vmatpush2.bf16.msra.mxu0 %v2185
        %5302 = vmatprep.subr.bf16.mxu0 %v2182
        %5303 = vmatpush2.bf16.msra.mxu0 %v2181
        %5304 = vmatprep.subr.bf16.mxu0 %v2178
        %5305 = vmatpush2.bf16.msra.mxu0 %v2177
        %5306 = vmatprep.subr.bf16.mxu0 %v2174
        %5307 = vmatpush2.bf16.msra.mxu0 %v2173
        %5308 = vmatprep.subr.bf16.mxu0 %v2170
        %5309 = vmatpush2.bf16.msra.mxu0 %v2169
        %5310 = vmatprep.subr.bf16.mxu0 %v2166
        %5311 = vmatpush2.bf16.msra.mxu0 %v2165
        %5312 = vmatprep.subr.bf16.mxu0 %v2162
        %5313 = vmatpush2.bf16.msra.mxu0 %v2161
        %5314 = vmatprep.subr.bf16.mxu0 %v2158
        %5315 = vmatpush2.bf16.msra.mxu0 %v2157
        %5316 = vmatprep.mubr.bf16.mxu0 %v4533
        %5317 = vmatmul.mubr.bf16.gmra.mxu0 %v4519
        %v5318 = vpop.f32.mrf.mxu0
        %v5319 = vadd.f32 %v5278, %v5318
        %v5320 = vpop.f32.mrf.mxu0
        %v5321 = vadd.f32 %v5280, %v5320
        %v5322 = vpop.f32.mrf.mxu0
        %v5323 = vpop.f32.mrf.mxu0
        %5324 = vdwg.mxu0
        %5325 = vmatprep.subr.bf16.mxu0 %v2218
        %5326 = vmatpush1.bf16.msra.mxu0 %v2217
        %5327 = vmatprep.subr.bf16.mxu0 %v2214
        %5328 = vmatpush1.bf16.msra.mxu0 %v2213
        %5329 = vmatprep.subr.bf16.mxu0 %v2210
        %5330 = vmatpush1.bf16.msra.mxu0 %v2209
        %5331 = vmatprep.subr.bf16.mxu0 %v2206
        %5332 = vmatpush1.bf16.msra.mxu0 %v2205
        %5333 = vmatprep.subr.bf16.mxu0 %v2202
        %5334 = vmatpush1.bf16.msra.mxu0 %v2201
        %5335 = vmatprep.subr.bf16.mxu0 %v2198
        %5336 = vmatpush1.bf16.msra.mxu0 %v2197
        %5337 = vmatprep.subr.bf16.mxu0 %v2194
        %5338 = vmatpush1.bf16.msra.mxu0 %v2193
        %5339 = vmatprep.subr.bf16.mxu0 %v2190
        %5340 = vmatpush1.bf16.msra.mxu0 %v2189
        %5341 = vmatprep.subr.bf16.mxu0 %v2250
        %5342 = vmatpush2.bf16.msra.mxu0 %v2249
        %5343 = vmatprep.subr.bf16.mxu0 %v2246
        %5344 = vmatpush2.bf16.msra.mxu0 %v2245
        %5345 = vmatprep.subr.bf16.mxu0 %v2242
        %5346 = vmatpush2.bf16.msra.mxu0 %v2241
        %5347 = vmatprep.subr.bf16.mxu0 %v2238
        %5348 = vmatpush2.bf16.msra.mxu0 %v2237
        %5349 = vmatprep.subr.bf16.mxu0 %v2234
        %5350 = vmatpush2.bf16.msra.mxu0 %v2233
        %5351 = vmatprep.subr.bf16.mxu0 %v2230
        %5352 = vmatpush2.bf16.msra.mxu0 %v2229
        %5353 = vmatprep.subr.bf16.mxu0 %v2226
        %5354 = vmatpush2.bf16.msra.mxu0 %v2225
        %5355 = vmatprep.subr.bf16.mxu0 %v2222
        %5356 = vmatpush2.bf16.msra.mxu0 %v2221
        %5357 = vmatprep.mubr.bf16.mxu0 %v4537
        %5358 = vmatmul.mubr.bf16.gmra.mxu0 %v4535
        %v5359 = vpop.f32.mrf.mxu0
        %v5360 = vadd.f32 %v5319, %v5359
        %v5361 = vpop.f32.mrf.mxu0
        %v5362 = vadd.f32 %v5321, %v5361
        %v5363 = vpop.f32.mrf.mxu0
        %v5364 = vpop.f32.mrf.mxu0
        %5365 = vdwg.mxu0
        %5366 = vmatprep.subr.bf16.mxu0 %v2282
        %5367 = vmatpush1.bf16.msra.mxu0 %v2281
        %5368 = vmatprep.subr.bf16.mxu0 %v2278
        %5369 = vmatpush1.bf16.msra.mxu0 %v2277
        %5370 = vmatprep.subr.bf16.mxu0 %v2274
        %5371 = vmatpush1.bf16.msra.mxu0 %v2273
        %5372 = vmatprep.subr.bf16.mxu0 %v2270
        %5373 = vmatpush1.bf16.msra.mxu0 %v2269
        %5374 = vmatprep.subr.bf16.mxu0 %v2266
        %5375 = vmatpush1.bf16.msra.mxu0 %v2265
        %5376 = vmatprep.subr.bf16.mxu0 %v2262
        %5377 = vmatpush1.bf16.msra.mxu0 %v2261
        %5378 = vmatprep.subr.bf16.mxu0 %v2258
        %5379 = vmatpush1.bf16.msra.mxu0 %v2257
        %5380 = vmatprep.subr.bf16.mxu0 %v2254
        %5381 = vmatpush1.bf16.msra.mxu0 %v2253
        %5382 = vmatprep.subr.bf16.mxu0 %v2314
        %5383 = vmatpush2.bf16.msra.mxu0 %v2313
        %5384 = vmatprep.subr.bf16.mxu0 %v2310
        %5385 = vmatpush2.bf16.msra.mxu0 %v2309
        %5386 = vmatprep.subr.bf16.mxu0 %v2306
        %5387 = vmatpush2.bf16.msra.mxu0 %v2305
        %5388 = vmatprep.subr.bf16.mxu0 %v2302
        %5389 = vmatpush2.bf16.msra.mxu0 %v2301
        %5390 = vmatprep.subr.bf16.mxu0 %v2298
        %5391 = vmatpush2.bf16.msra.mxu0 %v2297
        %5392 = vmatprep.subr.bf16.mxu0 %v2294
        %5393 = vmatpush2.bf16.msra.mxu0 %v2293
        %5394 = vmatprep.subr.bf16.mxu0 %v2290
        %5395 = vmatpush2.bf16.msra.mxu0 %v2289
        %5396 = vmatprep.subr.bf16.mxu0 %v2286
        %5397 = vmatpush2.bf16.msra.mxu0 %v2285
        %5398 = vmatprep.mubr.bf16.mxu0 %v4575
        %5399 = vmatmul.mubr.bf16.gmra.mxu0 %v4561
        %v5400 = vpop.f32.mrf.mxu0
        %v5401 = vadd.f32 %v5360, %v5400
        %v5402 = vpop.f32.mrf.mxu0
        %v5403 = vadd.f32 %v5362, %v5402
        %v5404 = vpop.f32.mrf.mxu0
        %v5405 = vpop.f32.mrf.mxu0
        %5406 = vdwg.mxu0
        %5407 = vmatprep.subr.bf16.mxu0 %v2346
        %5408 = vmatpush1.bf16.msra.mxu0 %v2345
        %5409 = vmatprep.subr.bf16.mxu0 %v2342
        %5410 = vmatpush1.bf16.msra.mxu0 %v2341
        %5411 = vmatprep.subr.bf16.mxu0 %v2338
        %5412 = vmatpush1.bf16.msra.mxu0 %v2337
        %5413 = vmatprep.subr.bf16.mxu0 %v2334
        %5414 = vmatpush1.bf16.msra.mxu0 %v2333
        %5415 = vmatprep.subr.bf16.mxu0 %v2330
        %5416 = vmatpush1.bf16.msra.mxu0 %v2329
        %5417 = vmatprep.subr.bf16.mxu0 %v2326
        %5418 = vmatpush1.bf16.msra.mxu0 %v2325
        %5419 = vmatprep.subr.bf16.mxu0 %v2322
        %5420 = vmatpush1.bf16.msra.mxu0 %v2321
        %5421 = vmatprep.subr.bf16.mxu0 %v2318
        %5422 = vmatpush1.bf16.msra.mxu0 %v2317
        %5423 = vmatprep.subr.bf16.mxu0 %v2378
        %5424 = vmatpush2.bf16.msra.mxu0 %v2377
        %5425 = vmatprep.subr.bf16.mxu0 %v2374
        %5426 = vmatpush2.bf16.msra.mxu0 %v2373
        %5427 = vmatprep.subr.bf16.mxu0 %v2370
        %5428 = vmatpush2.bf16.msra.mxu0 %v2369
        %5429 = vmatprep.subr.bf16.mxu0 %v2366
        %5430 = vmatpush2.bf16.msra.mxu0 %v2365
        %5431 = vmatprep.subr.bf16.mxu0 %v2362
        %5432 = vmatpush2.bf16.msra.mxu0 %v2361
        %5433 = vmatprep.subr.bf16.mxu0 %v2358
        %5434 = vmatpush2.bf16.msra.mxu0 %v2357
        %5435 = vmatprep.subr.bf16.mxu0 %v2354
        %5436 = vmatpush2.bf16.msra.mxu0 %v2353
        %5437 = vmatprep.subr.bf16.mxu0 %v2350
        %5438 = vmatpush2.bf16.msra.mxu0 %v2349
        %5439 = vmatprep.mubr.bf16.mxu0 %v4585
        %5440 = vmatmul.mubr.bf16.gmra.mxu0 %v4583
        %v5441 = vpop.f32.mrf.mxu0
        %v5442 = vadd.f32 %v5401, %v5441
        %v5443 = vpop.f32.mrf.mxu0
        %v5444 = vadd.f32 %v5403, %v5443
        %v5445 = vpop.f32.mrf.mxu0
        %v5446 = vpop.f32.mrf.mxu0
        %5447 = vdwg.mxu0
        %5448 = vmatprep.subr.bf16.mxu0 %v2410
        %5449 = vmatpush1.bf16.msra.mxu0 %v2409
        %5450 = vmatprep.subr.bf16.mxu0 %v2406
        %5451 = vmatpush1.bf16.msra.mxu0 %v2405
        %5452 = vmatprep.subr.bf16.mxu0 %v2402
        %5453 = vmatpush1.bf16.msra.mxu0 %v2401
        %5454 = vmatprep.subr.bf16.mxu0 %v2398
        %5455 = vmatpush1.bf16.msra.mxu0 %v2397
        %5456 = vmatprep.subr.bf16.mxu0 %v2394
        %5457 = vmatpush1.bf16.msra.mxu0 %v2393
        %5458 = vmatprep.subr.bf16.mxu0 %v2390
        %5459 = vmatpush1.bf16.msra.mxu0 %v2389
        %5460 = vmatprep.subr.bf16.mxu0 %v2386
        %5461 = vmatpush1.bf16.msra.mxu0 %v2385
        %5462 = vmatprep.subr.bf16.mxu0 %v2382
        %5463 = vmatpush1.bf16.msra.mxu0 %v2381
        %5464 = vmatprep.subr.bf16.mxu0 %v2442
        %5465 = vmatpush2.bf16.msra.mxu0 %v2441
        %5466 = vmatprep.subr.bf16.mxu0 %v2438
        %5467 = vmatpush2.bf16.msra.mxu0 %v2437
        %5468 = vmatprep.subr.bf16.mxu0 %v2434
        %5469 = vmatpush2.bf16.msra.mxu0 %v2433
        %5470 = vmatprep.subr.bf16.mxu0 %v2430
        %5471 = vmatpush2.bf16.msra.mxu0 %v2429
        %5472 = vmatprep.subr.bf16.mxu0 %v2426
        %5473 = vmatpush2.bf16.msra.mxu0 %v2425
        %5474 = vmatprep.subr.bf16.mxu0 %v2422
        %5475 = vmatpush2.bf16.msra.mxu0 %v2421
        %5476 = vmatprep.subr.bf16.mxu0 %v2418
        %5477 = vmatpush2.bf16.msra.mxu0 %v2417
        %5478 = vmatprep.subr.bf16.mxu0 %v2414
        %5479 = vmatpush2.bf16.msra.mxu0 %v2413
        %5480 = vmatprep.mubr.bf16.mxu0 %v4582
        %5481 = vmatmul.mubr.bf16.gmra.mxu0 %v4568
        %v5482 = vpop.f32.mrf.mxu0
        %v5483 = vadd.f32 %v5442, %v5482
        %v5484 = vpop.f32.mrf.mxu0
        %v5485 = vadd.f32 %v5444, %v5484
        %v5486 = vpop.f32.mrf.mxu0
        %v5487 = vpop.f32.mrf.mxu0
        %5488 = vdwg.mxu0
        %5489 = vmatprep.subr.bf16.mxu0 %v2474
        %5490 = vmatpush1.bf16.msra.mxu0 %v2473
        %5491 = vmatprep.subr.bf16.mxu0 %v2470
        %5492 = vmatpush1.bf16.msra.mxu0 %v2469
        %5493 = vmatprep.subr.bf16.mxu0 %v2466
        %5494 = vmatpush1.bf16.msra.mxu0 %v2465
        %5495 = vmatprep.subr.bf16.mxu0 %v2462
        %5496 = vmatpush1.bf16.msra.mxu0 %v2461
        %5497 = vmatprep.subr.bf16.mxu0 %v2458
        %5498 = vmatpush1.bf16.msra.mxu0 %v2457
        %5499 = vmatprep.subr.bf16.mxu0 %v2454
        %5500 = vmatpush1.bf16.msra.mxu0 %v2453
        %5501 = vmatprep.subr.bf16.mxu0 %v2450
        %5502 = vmatpush1.bf16.msra.mxu0 %v2449
        %5503 = vmatprep.subr.bf16.mxu0 %v2446
        %5504 = vmatpush1.bf16.msra.mxu0 %v2445
        %5505 = vmatprep.subr.bf16.mxu0 %v2506
        %5506 = vmatpush2.bf16.msra.mxu0 %v2505
        %5507 = vmatprep.subr.bf16.mxu0 %v2502
        %5508 = vmatpush2.bf16.msra.mxu0 %v2501
        %5509 = vmatprep.subr.bf16.mxu0 %v2498
        %5510 = vmatpush2.bf16.msra.mxu0 %v2497
        %5511 = vmatprep.subr.bf16.mxu0 %v2494
        %5512 = vmatpush2.bf16.msra.mxu0 %v2493
        %5513 = vmatprep.subr.bf16.mxu0 %v2490
        %5514 = vmatpush2.bf16.msra.mxu0 %v2489
        %5515 = vmatprep.subr.bf16.mxu0 %v2486
        %5516 = vmatpush2.bf16.msra.mxu0 %v2485
        %5517 = vmatprep.subr.bf16.mxu0 %v2482
        %5518 = vmatpush2.bf16.msra.mxu0 %v2481
        %5519 = vmatprep.subr.bf16.mxu0 %v2478
        %5520 = vmatpush2.bf16.msra.mxu0 %v2477
        %5521 = vmatprep.mubr.bf16.mxu0 %v4586
        %5522 = vmatmul.mubr.bf16.gmra.mxu0 %v4584
        %v5523 = vpop.f32.mrf.mxu0
        %v5524 = vadd.f32 %v5483, %v5523
        %v5525 = vpop.f32.mrf.mxu0
        %v5526 = vadd.f32 %v5485, %v5525
        %v5527 = vpop.f32.mrf.mxu0
        %v5528 = vpop.f32.mrf.mxu0
        %5529 = vdwg.mxu0
        %5530 = vmatprep.subr.bf16.mxu0 %v2538
        %5531 = vmatpush1.bf16.msra.mxu0 %v2537
        %5532 = vmatprep.subr.bf16.mxu0 %v2534
        %5533 = vmatpush1.bf16.msra.mxu0 %v2533
        %5534 = vmatprep.subr.bf16.mxu0 %v2530
        %5535 = vmatpush1.bf16.msra.mxu0 %v2529
        %5536 = vmatprep.subr.bf16.mxu0 %v2526
        %5537 = vmatpush1.bf16.msra.mxu0 %v2525
        %5538 = vmatprep.subr.bf16.mxu0 %v2522
        %5539 = vmatpush1.bf16.msra.mxu0 %v2521
        %5540 = vmatprep.subr.bf16.mxu0 %v2518
        %5541 = vmatpush1.bf16.msra.mxu0 %v2517
        %5542 = vmatprep.subr.bf16.mxu0 %v2514
        %5543 = vmatpush1.bf16.msra.mxu0 %v2513
        %5544 = vmatprep.subr.bf16.mxu0 %v2510
        %5545 = vmatpush1.bf16.msra.mxu0 %v2509
        %5546 = vmatprep.subr.bf16.mxu0 %v2570
        %5547 = vmatpush2.bf16.msra.mxu0 %v2569
        %5548 = vmatprep.subr.bf16.mxu0 %v2566
        %5549 = vmatpush2.bf16.msra.mxu0 %v2565
        %5550 = vmatprep.subr.bf16.mxu0 %v2562
        %5551 = vmatpush2.bf16.msra.mxu0 %v2561
        %5552 = vmatprep.subr.bf16.mxu0 %v2558
        %5553 = vmatpush2.bf16.msra.mxu0 %v2557
        %5554 = vmatprep.subr.bf16.mxu0 %v2554
        %5555 = vmatpush2.bf16.msra.mxu0 %v2553
        %5556 = vmatprep.subr.bf16.mxu0 %v2550
        %5557 = vmatpush2.bf16.msra.mxu0 %v2549
        %5558 = vmatprep.subr.bf16.mxu0 %v2546
        %5559 = vmatpush2.bf16.msra.mxu0 %v2545
        %5560 = vmatprep.subr.bf16.mxu0 %v2542
        %5561 = vmatpush2.bf16.msra.mxu0 %v2541
        %5562 = vmatprep.mubr.bf16.mxu0 %v4624
        %5563 = vmatmul.mubr.bf16.gmra.mxu0 %v4610
        %v5564 = vpop.f32.mrf.mxu0
        %v5565 = vadd.f32 %v5524, %v5564
        %v5566 = vpop.f32.mrf.mxu0
        %v5567 = vadd.f32 %v5526, %v5566
        %v5568 = vpop.f32.mrf.mxu0
        %v5569 = vpop.f32.mrf.mxu0
        %5570 = vdwg.mxu0
        %5571 = vmatprep.subr.bf16.mxu0 %v2602
        %5572 = vmatpush1.bf16.msra.mxu0 %v2601
        %5573 = vmatprep.subr.bf16.mxu0 %v2598
        %5574 = vmatpush1.bf16.msra.mxu0 %v2597
        %5575 = vmatprep.subr.bf16.mxu0 %v2594
        %5576 = vmatpush1.bf16.msra.mxu0 %v2593
        %5577 = vmatprep.subr.bf16.mxu0 %v2590
        %5578 = vmatpush1.bf16.msra.mxu0 %v2589
        %5579 = vmatprep.subr.bf16.mxu0 %v2586
        %5580 = vmatpush1.bf16.msra.mxu0 %v2585
        %5581 = vmatprep.subr.bf16.mxu0 %v2582
        %5582 = vmatpush1.bf16.msra.mxu0 %v2581
        %5583 = vmatprep.subr.bf16.mxu0 %v2578
        %5584 = vmatpush1.bf16.msra.mxu0 %v2577
        %5585 = vmatprep.subr.bf16.mxu0 %v2574
        %5586 = vmatpush1.bf16.msra.mxu0 %v2573
        %5587 = vmatprep.subr.bf16.mxu0 %v2634
        %5588 = vmatpush2.bf16.msra.mxu0 %v2633
        %5589 = vmatprep.subr.bf16.mxu0 %v2630
        %5590 = vmatpush2.bf16.msra.mxu0 %v2629
        %5591 = vmatprep.subr.bf16.mxu0 %v2626
        %5592 = vmatpush2.bf16.msra.mxu0 %v2625
        %5593 = vmatprep.subr.bf16.mxu0 %v2622
        %5594 = vmatpush2.bf16.msra.mxu0 %v2621
        %5595 = vmatprep.subr.bf16.mxu0 %v2618
        %5596 = vmatpush2.bf16.msra.mxu0 %v2617
        %5597 = vmatprep.subr.bf16.mxu0 %v2614
        %5598 = vmatpush2.bf16.msra.mxu0 %v2613
        %5599 = vmatprep.subr.bf16.mxu0 %v2610
        %5600 = vmatpush2.bf16.msra.mxu0 %v2609
        %5601 = vmatprep.subr.bf16.mxu0 %v2606
        %5602 = vmatpush2.bf16.msra.mxu0 %v2605
        %5603 = vmatprep.mubr.bf16.mxu0 %v4634
        %5604 = vmatmul.mubr.bf16.gmra.mxu0 %v4632
        %v5605 = vpop.f32.mrf.mxu0
        %v5606 = vadd.f32 %v5565, %v5605
        %v5607 = vpop.f32.mrf.mxu0
        %v5608 = vadd.f32 %v5567, %v5607
        %v5609 = vpop.f32.mrf.mxu0
        %v5610 = vpop.f32.mrf.mxu0
        %5611 = vdwg.mxu0
        %5612 = vmatprep.subr.bf16.mxu0 %v2666
        %5613 = vmatpush1.bf16.msra.mxu0 %v2665
        %5614 = vmatprep.subr.bf16.mxu0 %v2662
        %5615 = vmatpush1.bf16.msra.mxu0 %v2661
        %5616 = vmatprep.subr.bf16.mxu0 %v2658
        %5617 = vmatpush1.bf16.msra.mxu0 %v2657
        %5618 = vmatprep.subr.bf16.mxu0 %v2654
        %5619 = vmatpush1.bf16.msra.mxu0 %v2653
        %5620 = vmatprep.subr.bf16.mxu0 %v2650
        %5621 = vmatpush1.bf16.msra.mxu0 %v2649
        %5622 = vmatprep.subr.bf16.mxu0 %v2646
        %5623 = vmatpush1.bf16.msra.mxu0 %v2645
        %5624 = vmatprep.subr.bf16.mxu0 %v2642
        %5625 = vmatpush1.bf16.msra.mxu0 %v2641
        %5626 = vmatprep.subr.bf16.mxu0 %v2638
        %5627 = vmatpush1.bf16.msra.mxu0 %v2637
        %5628 = vmatprep.subr.bf16.mxu0 %v2698
        %5629 = vmatpush2.bf16.msra.mxu0 %v2697
        %5630 = vmatprep.subr.bf16.mxu0 %v2694
        %5631 = vmatpush2.bf16.msra.mxu0 %v2693
        %5632 = vmatprep.subr.bf16.mxu0 %v2690
        %5633 = vmatpush2.bf16.msra.mxu0 %v2689
        %5634 = vmatprep.subr.bf16.mxu0 %v2686
        %5635 = vmatpush2.bf16.msra.mxu0 %v2685
        %5636 = vmatprep.subr.bf16.mxu0 %v2682
        %5637 = vmatpush2.bf16.msra.mxu0 %v2681
        %5638 = vmatprep.subr.bf16.mxu0 %v2678
        %5639 = vmatpush2.bf16.msra.mxu0 %v2677
        %5640 = vmatprep.subr.bf16.mxu0 %v2674
        %5641 = vmatpush2.bf16.msra.mxu0 %v2673
        %5642 = vmatprep.subr.bf16.mxu0 %v2670
        %5643 = vmatpush2.bf16.msra.mxu0 %v2669
        %5644 = vmatprep.mubr.bf16.mxu0 %v4631
        %5645 = vmatmul.mubr.bf16.gmra.mxu0 %v4617
        %v5646 = vpop.f32.mrf.mxu0
        %v5647 = vadd.f32 %v5606, %v5646
        %v5648 = vpop.f32.mrf.mxu0
        %v5649 = vadd.f32 %v5608, %v5648
        %v5650 = vpop.f32.mrf.mxu0
        %v5651 = vpop.f32.mrf.mxu0
        %5652 = vdwg.mxu0
        %5653 = vmatprep.subr.bf16.mxu0 %v2730
        %5654 = vmatpush1.bf16.msra.mxu0 %v2729
        %5655 = vmatprep.subr.bf16.mxu0 %v2726
        %5656 = vmatpush1.bf16.msra.mxu0 %v2725
        %5657 = vmatprep.subr.bf16.mxu0 %v2722
        %5658 = vmatpush1.bf16.msra.mxu0 %v2721
        %5659 = vmatprep.subr.bf16.mxu0 %v2718
        %5660 = vmatpush1.bf16.msra.mxu0 %v2717
        %5661 = vmatprep.subr.bf16.mxu0 %v2714
        %5662 = vmatpush1.bf16.msra.mxu0 %v2713
        %5663 = vmatprep.subr.bf16.mxu0 %v2710
        %5664 = vmatpush1.bf16.msra.mxu0 %v2709
        %5665 = vmatprep.subr.bf16.mxu0 %v2706
        %5666 = vmatpush1.bf16.msra.mxu0 %v2705
        %5667 = vmatprep.subr.bf16.mxu0 %v2702
        %5668 = vmatpush1.bf16.msra.mxu0 %v2701
        %5669 = vmatprep.subr.bf16.mxu0 %v2762
        %5670 = vmatpush2.bf16.msra.mxu0 %v2761
        %5671 = vmatprep.subr.bf16.mxu0 %v2758
        %5672 = vmatpush2.bf16.msra.mxu0 %v2757
        %5673 = vmatprep.subr.bf16.mxu0 %v2754
        %5674 = vmatpush2.bf16.msra.mxu0 %v2753
        %5675 = vmatprep.subr.bf16.mxu0 %v2750
        %5676 = vmatpush2.bf16.msra.mxu0 %v2749
        %5677 = vmatprep.subr.bf16.mxu0 %v2746
        %5678 = vmatpush2.bf16.msra.mxu0 %v2745
        %5679 = vmatprep.subr.bf16.mxu0 %v2742
        %5680 = vmatpush2.bf16.msra.mxu0 %v2741
        %5681 = vmatprep.subr.bf16.mxu0 %v2738
        %5682 = vmatpush2.bf16.msra.mxu0 %v2737
        %5683 = vmatprep.subr.bf16.mxu0 %v2734
        %5684 = vmatpush2.bf16.msra.mxu0 %v2733
        %5685 = vmatprep.mubr.bf16.mxu0 %v4635
        %5686 = vmatmul.mubr.bf16.gmra.mxu0 %v4633
        %v5687 = vpop.f32.mrf.mxu0
        %v5688 = vadd.f32 %v5647, %v5687
        %v5689 = vpop.f32.mrf.mxu0
        %v5690 = vadd.f32 %v5649, %v5689
        %v5691 = vpop.f32.mrf.mxu0
        %v5692 = vpop.f32.mrf.mxu0
        %5693 = vdwg.mxu0
        %5694 = vmatprep.subr.bf16.mxu0 %v2794
        %5695 = vmatpush1.bf16.msra.mxu0 %v2793
        %5696 = vmatprep.subr.bf16.mxu0 %v2790
        %5697 = vmatpush1.bf16.msra.mxu0 %v2789
        %5698 = vmatprep.subr.bf16.mxu0 %v2786
        %5699 = vmatpush1.bf16.msra.mxu0 %v2785
        %5700 = vmatprep.subr.bf16.mxu0 %v2782
        %5701 = vmatpush1.bf16.msra.mxu0 %v2781
        %5702 = vmatprep.subr.bf16.mxu0 %v2778
        %5703 = vmatpush1.bf16.msra.mxu0 %v2777
        %5704 = vmatprep.subr.bf16.mxu0 %v2774
        %5705 = vmatpush1.bf16.msra.mxu0 %v2773
        %5706 = vmatprep.subr.bf16.mxu0 %v2770
        %5707 = vmatpush1.bf16.msra.mxu0 %v2769
        %5708 = vmatprep.subr.bf16.mxu0 %v2766
        %5709 = vmatpush1.bf16.msra.mxu0 %v2765
        %5710 = vmatprep.subr.bf16.mxu0 %v2826
        %5711 = vmatpush2.bf16.msra.mxu0 %v2825
        %5712 = vmatprep.subr.bf16.mxu0 %v2822
        %5713 = vmatpush2.bf16.msra.mxu0 %v2821
        %5714 = vmatprep.subr.bf16.mxu0 %v2818
        %5715 = vmatpush2.bf16.msra.mxu0 %v2817
        %5716 = vmatprep.subr.bf16.mxu0 %v2814
        %5717 = vmatpush2.bf16.msra.mxu0 %v2813
        %5718 = vmatprep.subr.bf16.mxu0 %v2810
        %5719 = vmatpush2.bf16.msra.mxu0 %v2809
        %5720 = vmatprep.subr.bf16.mxu0 %v2806
        %5721 = vmatpush2.bf16.msra.mxu0 %v2805
        %5722 = vmatprep.subr.bf16.mxu0 %v2802
        %5723 = vmatpush2.bf16.msra.mxu0 %v2801
        %5724 = vmatprep.subr.bf16.mxu0 %v2798
        %5725 = vmatpush2.bf16.msra.mxu0 %v2797
        %5726 = vmatprep.mubr.bf16.mxu0 %v4673
        %5727 = vmatmul.mubr.bf16.gmra.mxu0 %v4659
        %v5728 = vpop.f32.mrf.mxu0
        %v5729 = vadd.f32 %v5688, %v5728
        %v5730 = vpop.f32.mrf.mxu0
        %v5731 = vadd.f32 %v5690, %v5730
        %v5732 = vpop.f32.mrf.mxu0
        %v5733 = vpop.f32.mrf.mxu0
        %5734 = vdwg.mxu0
        %5735 = vmatprep.subr.bf16.mxu0 %v2858
        %5736 = vmatpush1.bf16.msra.mxu0 %v2857
        %5737 = vmatprep.subr.bf16.mxu0 %v2854
        %5738 = vmatpush1.bf16.msra.mxu0 %v2853
        %5739 = vmatprep.subr.bf16.mxu0 %v2850
        %5740 = vmatpush1.bf16.msra.mxu0 %v2849
        %5741 = vmatprep.subr.bf16.mxu0 %v2846
        %5742 = vmatpush1.bf16.msra.mxu0 %v2845
        %5743 = vmatprep.subr.bf16.mxu0 %v2842
        %5744 = vmatpush1.bf16.msra.mxu0 %v2841
        %5745 = vmatprep.subr.bf16.mxu0 %v2838
        %5746 = vmatpush1.bf16.msra.mxu0 %v2837
        %5747 = vmatprep.subr.bf16.mxu0 %v2834
        %5748 = vmatpush1.bf16.msra.mxu0 %v2833
        %5749 = vmatprep.subr.bf16.mxu0 %v2830
        %5750 = vmatpush1.bf16.msra.mxu0 %v2829
        %5751 = vmatprep.subr.bf16.mxu0 %v2890
        %5752 = vmatpush2.bf16.msra.mxu0 %v2889
        %5753 = vmatprep.subr.bf16.mxu0 %v2886
        %5754 = vmatpush2.bf16.msra.mxu0 %v2885
        %5755 = vmatprep.subr.bf16.mxu0 %v2882
        %5756 = vmatpush2.bf16.msra.mxu0 %v2881
        %5757 = vmatprep.subr.bf16.mxu0 %v2878
        %5758 = vmatpush2.bf16.msra.mxu0 %v2877
        %5759 = vmatprep.subr.bf16.mxu0 %v2874
        %5760 = vmatpush2.bf16.msra.mxu0 %v2873
        %5761 = vmatprep.subr.bf16.mxu0 %v2870
        %5762 = vmatpush2.bf16.msra.mxu0 %v2869
        %5763 = vmatprep.subr.bf16.mxu0 %v2866
        %5764 = vmatpush2.bf16.msra.mxu0 %v2865
        %5765 = vmatprep.subr.bf16.mxu0 %v2862
        %5766 = vmatpush2.bf16.msra.mxu0 %v2861
        %5767 = vmatprep.mubr.bf16.mxu0 %v4683
        %5768 = vmatmul.mubr.bf16.gmra.mxu0 %v4681
        %v5769 = vpop.f32.mrf.mxu0
        %v5770 = vadd.f32 %v5729, %v5769
        %v5771 = vpop.f32.mrf.mxu0
        %v5772 = vadd.f32 %v5731, %v5771
        %v5773 = vpop.f32.mrf.mxu0
        %v5774 = vpop.f32.mrf.mxu0
        %5775 = vdwg.mxu0
        %5776 = vmatprep.subr.bf16.mxu0 %v2922
        %5777 = vmatpush1.bf16.msra.mxu0 %v2921
        %5778 = vmatprep.subr.bf16.mxu0 %v2918
        %5779 = vmatpush1.bf16.msra.mxu0 %v2917
        %5780 = vmatprep.subr.bf16.mxu0 %v2914
        %5781 = vmatpush1.bf16.msra.mxu0 %v2913
        %5782 = vmatprep.subr.bf16.mxu0 %v2910
        %5783 = vmatpush1.bf16.msra.mxu0 %v2909
        %5784 = vmatprep.subr.bf16.mxu0 %v2906
        %5785 = vmatpush1.bf16.msra.mxu0 %v2905
        %5786 = vmatprep.subr.bf16.mxu0 %v2902
        %5787 = vmatpush1.bf16.msra.mxu0 %v2901
        %5788 = vmatprep.subr.bf16.mxu0 %v2898
        %5789 = vmatpush1.bf16.msra.mxu0 %v2897
        %5790 = vmatprep.subr.bf16.mxu0 %v2894
        %5791 = vmatpush1.bf16.msra.mxu0 %v2893
        %5792 = vmatprep.subr.bf16.mxu0 %v2954
        %5793 = vmatpush2.bf16.msra.mxu0 %v2953
        %5794 = vmatprep.subr.bf16.mxu0 %v2950
        %5795 = vmatpush2.bf16.msra.mxu0 %v2949
        %5796 = vmatprep.subr.bf16.mxu0 %v2946
        %5797 = vmatpush2.bf16.msra.mxu0 %v2945
        %5798 = vmatprep.subr.bf16.mxu0 %v2942
        %5799 = vmatpush2.bf16.msra.mxu0 %v2941
        %5800 = vmatprep.subr.bf16.mxu0 %v2938
        %5801 = vmatpush2.bf16.msra.mxu0 %v2937
        %5802 = vmatprep.subr.bf16.mxu0 %v2934
        %5803 = vmatpush2.bf16.msra.mxu0 %v2933
        %5804 = vmatprep.subr.bf16.mxu0 %v2930
        %5805 = vmatpush2.bf16.msra.mxu0 %v2929
        %5806 = vmatprep.subr.bf16.mxu0 %v2926
        %5807 = vmatpush2.bf16.msra.mxu0 %v2925
        %5808 = vmatprep.mubr.bf16.mxu0 %v4680
        %5809 = vmatmul.mubr.bf16.gmra.mxu0 %v4666
        %v5810 = vpop.f32.mrf.mxu0
        %v5811 = vadd.f32 %v5770, %v5810
        %v5812 = vpop.f32.mrf.mxu0
        %v5813 = vadd.f32 %v5772, %v5812
        %v5814 = vpop.f32.mrf.mxu0
        %v5815 = vpop.f32.mrf.mxu0
        %5816 = vdwg.mxu0
        %5817 = vmatprep.subr.bf16.mxu0 %v2986
        %5818 = vmatpush1.bf16.msra.mxu0 %v2985
        %5819 = vmatprep.subr.bf16.mxu0 %v2982
        %5820 = vmatpush1.bf16.msra.mxu0 %v2981
        %5821 = vmatprep.subr.bf16.mxu0 %v2978
        %5822 = vmatpush1.bf16.msra.mxu0 %v2977
        %5823 = vmatprep.subr.bf16.mxu0 %v2974
        %5824 = vmatpush1.bf16.msra.mxu0 %v2973
        %5825 = vmatprep.subr.bf16.mxu0 %v2970
        %5826 = vmatpush1.bf16.msra.mxu0 %v2969
        %5827 = vmatprep.subr.bf16.mxu0 %v2966
        %5828 = vmatpush1.bf16.msra.mxu0 %v2965
        %5829 = vmatprep.subr.bf16.mxu0 %v2962
        %5830 = vmatpush1.bf16.msra.mxu0 %v2961
        %5831 = vmatprep.subr.bf16.mxu0 %v2958
        %5832 = vmatpush1.bf16.msra.mxu0 %v2957
        %5833 = vmatprep.subr.bf16.mxu0 %v3018
        %5834 = vmatpush2.bf16.msra.mxu0 %v3017
        %5835 = vmatprep.subr.bf16.mxu0 %v3014
        %5836 = vmatpush2.bf16.msra.mxu0 %v3013
        %5837 = vmatprep.subr.bf16.mxu0 %v3010
        %5838 = vmatpush2.bf16.msra.mxu0 %v3009
        %5839 = vmatprep.subr.bf16.mxu0 %v3006
        %5840 = vmatpush2.bf16.msra.mxu0 %v3005
        %5841 = vmatprep.subr.bf16.mxu0 %v3002
        %5842 = vmatpush2.bf16.msra.mxu0 %v3001
        %5843 = vmatprep.subr.bf16.mxu0 %v2998
        %5844 = vmatpush2.bf16.msra.mxu0 %v2997
        %5845 = vmatprep.subr.bf16.mxu0 %v2994
        %5846 = vmatpush2.bf16.msra.mxu0 %v2993
        %5847 = vmatprep.subr.bf16.mxu0 %v2990
        %5848 = vmatpush2.bf16.msra.mxu0 %v2989
        %5849 = vmatprep.mubr.bf16.mxu0 %v4684
        %5850 = vmatmul.mubr.bf16.gmra.mxu0 %v4682
        %v5851 = vpop.f32.mrf.mxu0
        %v5852 = vadd.f32 %v5811, %v5851
        %v5853 = vpop.f32.mrf.mxu0
        %v5854 = vadd.f32 %v5813, %v5853
        %v5855 = vpop.f32.mrf.mxu0
        %v5856 = vpop.f32.mrf.mxu0
        %5857 = vdwg.mxu0
        %5858 = vmatprep.subr.bf16.mxu0 %v3050
        %5859 = vmatpush1.bf16.msra.mxu0 %v3049
        %5860 = vmatprep.subr.bf16.mxu0 %v3046
        %5861 = vmatpush1.bf16.msra.mxu0 %v3045
        %5862 = vmatprep.subr.bf16.mxu0 %v3042
        %5863 = vmatpush1.bf16.msra.mxu0 %v3041
        %5864 = vmatprep.subr.bf16.mxu0 %v3038
        %5865 = vmatpush1.bf16.msra.mxu0 %v3037
        %5866 = vmatprep.subr.bf16.mxu0 %v3034
        %5867 = vmatpush1.bf16.msra.mxu0 %v3033
        %5868 = vmatprep.subr.bf16.mxu0 %v3030
        %5869 = vmatpush1.bf16.msra.mxu0 %v3029
        %5870 = vmatprep.subr.bf16.mxu0 %v3026
        %5871 = vmatpush1.bf16.msra.mxu0 %v3025
        %5872 = vmatprep.subr.bf16.mxu0 %v3022
        %5873 = vmatpush1.bf16.msra.mxu0 %v3021
        %5874 = vmatprep.subr.bf16.mxu0 %v3082
        %5875 = vmatpush2.bf16.msra.mxu0 %v3081
        %5876 = vmatprep.subr.bf16.mxu0 %v3078
        %5877 = vmatpush2.bf16.msra.mxu0 %v3077
        %5878 = vmatprep.subr.bf16.mxu0 %v3074
        %5879 = vmatpush2.bf16.msra.mxu0 %v3073
        %5880 = vmatprep.subr.bf16.mxu0 %v3070
        %5881 = vmatpush2.bf16.msra.mxu0 %v3069
        %5882 = vmatprep.subr.bf16.mxu0 %v3066
        %5883 = vmatpush2.bf16.msra.mxu0 %v3065
        %5884 = vmatprep.subr.bf16.mxu0 %v3062
        %5885 = vmatpush2.bf16.msra.mxu0 %v3061
        %5886 = vmatprep.subr.bf16.mxu0 %v3058
        %5887 = vmatpush2.bf16.msra.mxu0 %v3057
        %5888 = vmatprep.subr.bf16.mxu0 %v3054
        %5889 = vmatpush2.bf16.msra.mxu0 %v3053
        %5890 = vmatprep.mubr.bf16.mxu0 %v4722
        %5891 = vmatmul.mubr.bf16.gmra.mxu0 %v4708
        %v5892 = vpop.f32.mrf.mxu0
        %v5893 = vadd.f32 %v5852, %v5892
        %v5894 = vpop.f32.mrf.mxu0
        %v5895 = vadd.f32 %v5854, %v5894
        %v5896 = vpop.f32.mrf.mxu0
        %v5897 = vpop.f32.mrf.mxu0
        %5898 = vdwg.mxu0
        %5899 = vmatprep.subr.bf16.mxu0 %v3114
        %5900 = vmatpush1.bf16.msra.mxu0 %v3113
        %5901 = vmatprep.subr.bf16.mxu0 %v3110
        %5902 = vmatpush1.bf16.msra.mxu0 %v3109
        %5903 = vmatprep.subr.bf16.mxu0 %v3106
        %5904 = vmatpush1.bf16.msra.mxu0 %v3105
        %5905 = vmatprep.subr.bf16.mxu0 %v3102
        %5906 = vmatpush1.bf16.msra.mxu0 %v3101
        %5907 = vmatprep.subr.bf16.mxu0 %v3098
        %5908 = vmatpush1.bf16.msra.mxu0 %v3097
        %5909 = vmatprep.subr.bf16.mxu0 %v3094
        %5910 = vmatpush1.bf16.msra.mxu0 %v3093
        %5911 = vmatprep.subr.bf16.mxu0 %v3090
        %5912 = vmatpush1.bf16.msra.mxu0 %v3089
        %5913 = vmatprep.subr.bf16.mxu0 %v3086
        %5914 = vmatpush1.bf16.msra.mxu0 %v3085
        %5915 = vmatprep.subr.bf16.mxu0 %v3146
        %5916 = vmatpush2.bf16.msra.mxu0 %v3145
        %5917 = vmatprep.subr.bf16.mxu0 %v3142
        %5918 = vmatpush2.bf16.msra.mxu0 %v3141
        %5919 = vmatprep.subr.bf16.mxu0 %v3138
        %5920 = vmatpush2.bf16.msra.mxu0 %v3137
        %5921 = vmatprep.subr.bf16.mxu0 %v3134
        %5922 = vmatpush2.bf16.msra.mxu0 %v3133
        %5923 = vmatprep.subr.bf16.mxu0 %v3130
        %5924 = vmatpush2.bf16.msra.mxu0 %v3129
        %5925 = vmatprep.subr.bf16.mxu0 %v3126
        %5926 = vmatpush2.bf16.msra.mxu0 %v3125
        %5927 = vmatprep.subr.bf16.mxu0 %v3122
        %5928 = vmatpush2.bf16.msra.mxu0 %v3121
        %5929 = vmatprep.subr.bf16.mxu0 %v3118
        %5930 = vmatpush2.bf16.msra.mxu0 %v3117
        %5931 = vmatprep.mubr.bf16.mxu0 %v4732
        %5932 = vmatmul.mubr.bf16.gmra.mxu0 %v4730
        %v5933 = vpop.f32.mrf.mxu0
        %v5934 = vadd.f32 %v5893, %v5933
        %v5935 = vpop.f32.mrf.mxu0
        %v5936 = vadd.f32 %v5895, %v5935
        %v5937 = vpop.f32.mrf.mxu0
        %v5938 = vpop.f32.mrf.mxu0
        %5939 = vdwg.mxu0
        %5940 = vmatprep.subr.bf16.mxu0 %v3178
        %5941 = vmatpush1.bf16.msra.mxu0 %v3177
        %5942 = vmatprep.subr.bf16.mxu0 %v3174
        %5943 = vmatpush1.bf16.msra.mxu0 %v3173
        %5944 = vmatprep.subr.bf16.mxu0 %v3170
        %5945 = vmatpush1.bf16.msra.mxu0 %v3169
        %5946 = vmatprep.subr.bf16.mxu0 %v3166
        %5947 = vmatpush1.bf16.msra.mxu0 %v3165
        %5948 = vmatprep.subr.bf16.mxu0 %v3162
        %5949 = vmatpush1.bf16.msra.mxu0 %v3161
        %5950 = vmatprep.subr.bf16.mxu0 %v3158
        %5951 = vmatpush1.bf16.msra.mxu0 %v3157
        %5952 = vmatprep.subr.bf16.mxu0 %v3154
        %5953 = vmatpush1.bf16.msra.mxu0 %v3153
        %5954 = vmatprep.subr.bf16.mxu0 %v3150
        %5955 = vmatpush1.bf16.msra.mxu0 %v3149
        %5956 = vmatprep.subr.bf16.mxu0 %v3210
        %5957 = vmatpush2.bf16.msra.mxu0 %v3209
        %5958 = vmatprep.subr.bf16.mxu0 %v3206
        %5959 = vmatpush2.bf16.msra.mxu0 %v3205
        %5960 = vmatprep.subr.bf16.mxu0 %v3202
        %5961 = vmatpush2.bf16.msra.mxu0 %v3201
        %5962 = vmatprep.subr.bf16.mxu0 %v3198
        %5963 = vmatpush2.bf16.msra.mxu0 %v3197
        %5964 = vmatprep.subr.bf16.mxu0 %v3194
        %5965 = vmatpush2.bf16.msra.mxu0 %v3193
        %5966 = vmatprep.subr.bf16.mxu0 %v3190
        %5967 = vmatpush2.bf16.msra.mxu0 %v3189
        %5968 = vmatprep.subr.bf16.mxu0 %v3186
        %5969 = vmatpush2.bf16.msra.mxu0 %v3185
        %5970 = vmatprep.subr.bf16.mxu0 %v3182
        %5971 = vmatpush2.bf16.msra.mxu0 %v3181
        %5972 = vmatprep.mubr.bf16.mxu0 %v4729
        %5973 = vmatmul.mubr.bf16.gmra.mxu0 %v4715
        %v5974 = vpop.f32.mrf.mxu0
        %v5975 = vadd.f32 %v5934, %v5974
        %v5976 = vpop.f32.mrf.mxu0
        %v5977 = vadd.f32 %v5936, %v5976
        %v5978 = vpop.f32.mrf.mxu0
        %v5979 = vpop.f32.mrf.mxu0
        %5980 = vdwg.mxu0
        %5981 = vmatprep.subr.bf16.mxu0 %v3242
        %5982 = vmatpush1.bf16.msra.mxu0 %v3241
        %5983 = vmatprep.subr.bf16.mxu0 %v3238
        %5984 = vmatpush1.bf16.msra.mxu0 %v3237
        %5985 = vmatprep.subr.bf16.mxu0 %v3234
        %5986 = vmatpush1.bf16.msra.mxu0 %v3233
        %5987 = vmatprep.subr.bf16.mxu0 %v3230
        %5988 = vmatpush1.bf16.msra.mxu0 %v3229
        %5989 = vmatprep.subr.bf16.mxu0 %v3226
        %5990 = vmatpush1.bf16.msra.mxu0 %v3225
        %5991 = vmatprep.subr.bf16.mxu0 %v3222
        %5992 = vmatpush1.bf16.msra.mxu0 %v3221
        %5993 = vmatprep.subr.bf16.mxu0 %v3218
        %5994 = vmatpush1.bf16.msra.mxu0 %v3217
        %5995 = vmatprep.subr.bf16.mxu0 %v3214
        %5996 = vmatpush1.bf16.msra.mxu0 %v3213
        %5997 = vmatprep.subr.bf16.mxu0 %v3274
        %5998 = vmatpush2.bf16.msra.mxu0 %v3273
        %5999 = vmatprep.subr.bf16.mxu0 %v3270
        %6000 = vmatpush2.bf16.msra.mxu0 %v3269
        %6001 = vmatprep.subr.bf16.mxu0 %v3266
        %6002 = vmatpush2.bf16.msra.mxu0 %v3265
        %6003 = vmatprep.subr.bf16.mxu0 %v3262
        %6004 = vmatpush2.bf16.msra.mxu0 %v3261
        %6005 = vmatprep.subr.bf16.mxu0 %v3258
        %6006 = vmatpush2.bf16.msra.mxu0 %v3257
        %6007 = vmatprep.subr.bf16.mxu0 %v3254
        %6008 = vmatpush2.bf16.msra.mxu0 %v3253
        %6009 = vmatprep.subr.bf16.mxu0 %v3250
        %6010 = vmatpush2.bf16.msra.mxu0 %v3249
        %6011 = vmatprep.subr.bf16.mxu0 %v3246
        %6012 = vmatpush2.bf16.msra.mxu0 %v3245
        %6013 = vmatprep.mubr.bf16.mxu0 %v4733
        %6014 = vmatmul.mubr.bf16.gmra.mxu0 %v4731
        %v6015 = vpop.f32.mrf.mxu0
        %v6016 = vadd.f32 %v5975, %v6015
        %v6017 = vpop.f32.mrf.mxu0
        %v6018 = vadd.f32 %v5977, %v6017
        %v6019 = vpop.f32.mrf.mxu0
        %v6020 = vpop.f32.mrf.mxu0
        %6021 = vdwg.mxu0
        %6022 = vmatprep.subr.bf16.mxu0 %v3306
        %6023 = vmatpush1.bf16.msra.mxu0 %v3305
        %6024 = vmatprep.subr.bf16.mxu0 %v3302
        %6025 = vmatpush1.bf16.msra.mxu0 %v3301
        %6026 = vmatprep.subr.bf16.mxu0 %v3298
        %6027 = vmatpush1.bf16.msra.mxu0 %v3297
        %6028 = vmatprep.subr.bf16.mxu0 %v3294
        %6029 = vmatpush1.bf16.msra.mxu0 %v3293
        %6030 = vmatprep.subr.bf16.mxu0 %v3290
        %6031 = vmatpush1.bf16.msra.mxu0 %v3289
        %6032 = vmatprep.subr.bf16.mxu0 %v3286
        %6033 = vmatpush1.bf16.msra.mxu0 %v3285
        %6034 = vmatprep.subr.bf16.mxu0 %v3282
        %6035 = vmatpush1.bf16.msra.mxu0 %v3281
        %6036 = vmatprep.subr.bf16.mxu0 %v3278
        %6037 = vmatpush1.bf16.msra.mxu0 %v3277
        %6038 = vmatprep.subr.bf16.mxu0 %v3338
        %6039 = vmatpush2.bf16.msra.mxu0 %v3337
        %6040 = vmatprep.subr.bf16.mxu0 %v3334
        %6041 = vmatpush2.bf16.msra.mxu0 %v3333
        %6042 = vmatprep.subr.bf16.mxu0 %v3330
        %6043 = vmatpush2.bf16.msra.mxu0 %v3329
        %6044 = vmatprep.subr.bf16.mxu0 %v3326
        %6045 = vmatpush2.bf16.msra.mxu0 %v3325
        %6046 = vmatprep.subr.bf16.mxu0 %v3322
        %6047 = vmatpush2.bf16.msra.mxu0 %v3321
        %6048 = vmatprep.subr.bf16.mxu0 %v3318
        %6049 = vmatpush2.bf16.msra.mxu0 %v3317
        %6050 = vmatprep.subr.bf16.mxu0 %v3314
        %6051 = vmatpush2.bf16.msra.mxu0 %v3313
        %6052 = vmatprep.subr.bf16.mxu0 %v3310
        %6053 = vmatpush2.bf16.msra.mxu0 %v3309
        %6054 = vmatprep.mubr.bf16.mxu0 %v4771
        %6055 = vmatmul.mubr.bf16.gmra.mxu0 %v4757
        %v6056 = vpop.f32.mrf.mxu0
        %v6057 = vadd.f32 %v6016, %v6056
        %v6058 = vpop.f32.mrf.mxu0
        %v6059 = vadd.f32 %v6018, %v6058
        %v6060 = vpop.f32.mrf.mxu0
        %v6061 = vpop.f32.mrf.mxu0
        %6062 = vdwg.mxu0
        %6063 = vmatprep.subr.bf16.mxu0 %v3370
        %6064 = vmatpush1.bf16.msra.mxu0 %v3369
        %6065 = vmatprep.subr.bf16.mxu0 %v3366
        %6066 = vmatpush1.bf16.msra.mxu0 %v3365
        %6067 = vmatprep.subr.bf16.mxu0 %v3362
        %6068 = vmatpush1.bf16.msra.mxu0 %v3361
        %6069 = vmatprep.subr.bf16.mxu0 %v3358
        %6070 = vmatpush1.bf16.msra.mxu0 %v3357
        %6071 = vmatprep.subr.bf16.mxu0 %v3354
        %6072 = vmatpush1.bf16.msra.mxu0 %v3353
        %6073 = vmatprep.subr.bf16.mxu0 %v3350
        %6074 = vmatpush1.bf16.msra.mxu0 %v3349
        %6075 = vmatprep.subr.bf16.mxu0 %v3346
        %6076 = vmatpush1.bf16.msra.mxu0 %v3345
        %6077 = vmatprep.subr.bf16.mxu0 %v3342
        %6078 = vmatpush1.bf16.msra.mxu0 %v3341
        %6079 = vmatprep.subr.bf16.mxu0 %v3402
        %6080 = vmatpush2.bf16.msra.mxu0 %v3401
        %6081 = vmatprep.subr.bf16.mxu0 %v3398
        %6082 = vmatpush2.bf16.msra.mxu0 %v3397
        %6083 = vmatprep.subr.bf16.mxu0 %v3394
        %6084 = vmatpush2.bf16.msra.mxu0 %v3393
        %6085 = vmatprep.subr.bf16.mxu0 %v3390
        %6086 = vmatpush2.bf16.msra.mxu0 %v3389
        %6087 = vmatprep.subr.bf16.mxu0 %v3386
        %6088 = vmatpush2.bf16.msra.mxu0 %v3385
        %6089 = vmatprep.subr.bf16.mxu0 %v3382
        %6090 = vmatpush2.bf16.msra.mxu0 %v3381
        %6091 = vmatprep.subr.bf16.mxu0 %v3378
        %6092 = vmatpush2.bf16.msra.mxu0 %v3377
        %6093 = vmatprep.subr.bf16.mxu0 %v3374
        %6094 = vmatpush2.bf16.msra.mxu0 %v3373
        %6095 = vmatprep.mubr.bf16.mxu0 %v4781
        %6096 = vmatmul.mubr.bf16.gmra.mxu0 %v4779
        %v6097 = vpop.f32.mrf.mxu0
        %v6098 = vadd.f32 %v6057, %v6097
        %v6099 = vpop.f32.mrf.mxu0
        %v6100 = vadd.f32 %v6059, %v6099
        %v6101 = vpop.f32.mrf.mxu0
        %v6102 = vpop.f32.mrf.mxu0
        %6103 = vdwg.mxu0
        %6104 = vmatprep.subr.bf16.mxu0 %v3434
        %6105 = vmatpush1.bf16.msra.mxu0 %v3433
        %6106 = vmatprep.subr.bf16.mxu0 %v3430
        %6107 = vmatpush1.bf16.msra.mxu0 %v3429
        %6108 = vmatprep.subr.bf16.mxu0 %v3426
        %6109 = vmatpush1.bf16.msra.mxu0 %v3425
        %6110 = vmatprep.subr.bf16.mxu0 %v3422
        %6111 = vmatpush1.bf16.msra.mxu0 %v3421
        %6112 = vmatprep.subr.bf16.mxu0 %v3418
        %6113 = vmatpush1.bf16.msra.mxu0 %v3417
        %6114 = vmatprep.subr.bf16.mxu0 %v3414
        %6115 = vmatpush1.bf16.msra.mxu0 %v3413
        %6116 = vmatprep.subr.bf16.mxu0 %v3410
        %6117 = vmatpush1.bf16.msra.mxu0 %v3409
        %6118 = vmatprep.subr.bf16.mxu0 %v3406
        %6119 = vmatpush1.bf16.msra.mxu0 %v3405
        %6120 = vmatprep.subr.bf16.mxu0 %v3466
        %6121 = vmatpush2.bf16.msra.mxu0 %v3465
        %6122 = vmatprep.subr.bf16.mxu0 %v3462
        %6123 = vmatpush2.bf16.msra.mxu0 %v3461
        %6124 = vmatprep.subr.bf16.mxu0 %v3458
        %6125 = vmatpush2.bf16.msra.mxu0 %v3457
        %6126 = vmatprep.subr.bf16.mxu0 %v3454
        %6127 = vmatpush2.bf16.msra.mxu0 %v3453
        %6128 = vmatprep.subr.bf16.mxu0 %v3450
        %6129 = vmatpush2.bf16.msra.mxu0 %v3449
        %6130 = vmatprep.subr.bf16.mxu0 %v3446
        %6131 = vmatpush2.bf16.msra.mxu0 %v3445
        %6132 = vmatprep.subr.bf16.mxu0 %v3442
        %6133 = vmatpush2.bf16.msra.mxu0 %v3441
        %6134 = vmatprep.subr.bf16.mxu0 %v3438
        %6135 = vmatpush2.bf16.msra.mxu0 %v3437
        %6136 = vmatprep.mubr.bf16.mxu0 %v4778
        %6137 = vmatmul.mubr.bf16.gmra.mxu0 %v4764
        %v6138 = vpop.f32.mrf.mxu0
        %v6139 = vadd.f32 %v6098, %v6138
        %v6140 = vpop.f32.mrf.mxu0
        %v6141 = vadd.f32 %v6100, %v6140
        %v6142 = vpop.f32.mrf.mxu0
        %v6143 = vpop.f32.mrf.mxu0
        %6144 = vdwg.mxu0
        %6145 = vmatprep.subr.bf16.mxu0 %v3498
        %6146 = vmatpush1.bf16.msra.mxu0 %v3497
        %6147 = vmatprep.subr.bf16.mxu0 %v3494
        %6148 = vmatpush1.bf16.msra.mxu0 %v3493
        %6149 = vmatprep.subr.bf16.mxu0 %v3490
        %6150 = vmatpush1.bf16.msra.mxu0 %v3489
        %6151 = vmatprep.subr.bf16.mxu0 %v3486
        %6152 = vmatpush1.bf16.msra.mxu0 %v3485
        %6153 = vmatprep.subr.bf16.mxu0 %v3482
        %6154 = vmatpush1.bf16.msra.mxu0 %v3481
        %6155 = vmatprep.subr.bf16.mxu0 %v3478
        %6156 = vmatpush1.bf16.msra.mxu0 %v3477
        %6157 = vmatprep.subr.bf16.mxu0 %v3474
        %6158 = vmatpush1.bf16.msra.mxu0 %v3473
        %6159 = vmatprep.subr.bf16.mxu0 %v3470
        %6160 = vmatpush1.bf16.msra.mxu0 %v3469
        %6161 = vmatprep.subr.bf16.mxu0 %v3530
        %6162 = vmatpush2.bf16.msra.mxu0 %v3529
        %6163 = vmatprep.subr.bf16.mxu0 %v3526
        %6164 = vmatpush2.bf16.msra.mxu0 %v3525
        %6165 = vmatprep.subr.bf16.mxu0 %v3522
        %6166 = vmatpush2.bf16.msra.mxu0 %v3521
        %6167 = vmatprep.subr.bf16.mxu0 %v3518
        %6168 = vmatpush2.bf16.msra.mxu0 %v3517
        %6169 = vmatprep.subr.bf16.mxu0 %v3514
        %6170 = vmatpush2.bf16.msra.mxu0 %v3513
        %6171 = vmatprep.subr.bf16.mxu0 %v3510
        %6172 = vmatpush2.bf16.msra.mxu0 %v3509
        %6173 = vmatprep.subr.bf16.mxu0 %v3506
        %6174 = vmatpush2.bf16.msra.mxu0 %v3505
        %6175 = vmatprep.subr.bf16.mxu0 %v3502
        %6176 = vmatpush2.bf16.msra.mxu0 %v3501
        %6177 = vmatprep.mubr.bf16.mxu0 %v4782
        %6178 = vmatmul.mubr.bf16.gmra.mxu0 %v4780
        %v6179 = vpop.f32.mrf.mxu0
        %v6180 = vadd.f32 %v6139, %v6179
        %v6181 = vpop.f32.mrf.mxu0
        %v6182 = vadd.f32 %v6141, %v6181
        %v6183 = vpop.f32.mrf.mxu0
        %v6184 = vpop.f32.mrf.mxu0
        %6185 = vdwg.mxu0
        %6186 = vmatprep.subr.bf16.mxu0 %v3562
        %6187 = vmatpush1.bf16.msra.mxu0 %v3561
        %6188 = vmatprep.subr.bf16.mxu0 %v3558
        %6189 = vmatpush1.bf16.msra.mxu0 %v3557
        %6190 = vmatprep.subr.bf16.mxu0 %v3554
        %6191 = vmatpush1.bf16.msra.mxu0 %v3553
        %6192 = vmatprep.subr.bf16.mxu0 %v3550
        %6193 = vmatpush1.bf16.msra.mxu0 %v3549
        %6194 = vmatprep.subr.bf16.mxu0 %v3546
        %6195 = vmatpush1.bf16.msra.mxu0 %v3545
        %6196 = vmatprep.subr.bf16.mxu0 %v3542
        %6197 = vmatpush1.bf16.msra.mxu0 %v3541
        %6198 = vmatprep.subr.bf16.mxu0 %v3538
        %6199 = vmatpush1.bf16.msra.mxu0 %v3537
        %6200 = vmatprep.subr.bf16.mxu0 %v3534
        %6201 = vmatpush1.bf16.msra.mxu0 %v3533
        %6202 = vmatprep.subr.bf16.mxu0 %v3594
        %6203 = vmatpush2.bf16.msra.mxu0 %v3593
        %6204 = vmatprep.subr.bf16.mxu0 %v3590
        %6205 = vmatpush2.bf16.msra.mxu0 %v3589
        %6206 = vmatprep.subr.bf16.mxu0 %v3586
        %6207 = vmatpush2.bf16.msra.mxu0 %v3585
        %6208 = vmatprep.subr.bf16.mxu0 %v3582
        %6209 = vmatpush2.bf16.msra.mxu0 %v3581
        %6210 = vmatprep.subr.bf16.mxu0 %v3578
        %6211 = vmatpush2.bf16.msra.mxu0 %v3577
        %6212 = vmatprep.subr.bf16.mxu0 %v3574
        %6213 = vmatpush2.bf16.msra.mxu0 %v3573
        %6214 = vmatprep.subr.bf16.mxu0 %v3570
        %6215 = vmatpush2.bf16.msra.mxu0 %v3569
        %6216 = vmatprep.subr.bf16.mxu0 %v3566
        %6217 = vmatpush2.bf16.msra.mxu0 %v3565
        %6218 = vmatprep.mubr.bf16.mxu0 %v4820
        %6219 = vmatmul.mubr.bf16.gmra.mxu0 %v4806
        %v6220 = vpop.f32.mrf.mxu0
        %v6221 = vadd.f32 %v6180, %v6220
        %v6222 = vpop.f32.mrf.mxu0
        %v6223 = vadd.f32 %v6182, %v6222
        %v6224 = vpop.f32.mrf.mxu0
        %v6225 = vpop.f32.mrf.mxu0
        %6226 = vdwg.mxu0
        %6227 = vmatprep.subr.bf16.mxu0 %v3626
        %6228 = vmatpush1.bf16.msra.mxu0 %v3625
        %6229 = vmatprep.subr.bf16.mxu0 %v3622
        %6230 = vmatpush1.bf16.msra.mxu0 %v3621
        %6231 = vmatprep.subr.bf16.mxu0 %v3618
        %6232 = vmatpush1.bf16.msra.mxu0 %v3617
        %6233 = vmatprep.subr.bf16.mxu0 %v3614
        %6234 = vmatpush1.bf16.msra.mxu0 %v3613
        %6235 = vmatprep.subr.bf16.mxu0 %v3610
        %6236 = vmatpush1.bf16.msra.mxu0 %v3609
        %6237 = vmatprep.subr.bf16.mxu0 %v3606
        %6238 = vmatpush1.bf16.msra.mxu0 %v3605
        %6239 = vmatprep.subr.bf16.mxu0 %v3602
        %6240 = vmatpush1.bf16.msra.mxu0 %v3601
        %6241 = vmatprep.subr.bf16.mxu0 %v3598
        %6242 = vmatpush1.bf16.msra.mxu0 %v3597
        %6243 = vmatprep.subr.bf16.mxu0 %v3658
        %6244 = vmatpush2.bf16.msra.mxu0 %v3657
        %6245 = vmatprep.subr.bf16.mxu0 %v3654
        %6246 = vmatpush2.bf16.msra.mxu0 %v3653
        %6247 = vmatprep.subr.bf16.mxu0 %v3650
        %6248 = vmatpush2.bf16.msra.mxu0 %v3649
        %6249 = vmatprep.subr.bf16.mxu0 %v3646
        %6250 = vmatpush2.bf16.msra.mxu0 %v3645
        %6251 = vmatprep.subr.bf16.mxu0 %v3642
        %6252 = vmatpush2.bf16.msra.mxu0 %v3641
        %6253 = vmatprep.subr.bf16.mxu0 %v3638
        %6254 = vmatpush2.bf16.msra.mxu0 %v3637
        %6255 = vmatprep.subr.bf16.mxu0 %v3634
        %6256 = vmatpush2.bf16.msra.mxu0 %v3633
        %6257 = vmatprep.subr.bf16.mxu0 %v3630
        %6258 = vmatpush2.bf16.msra.mxu0 %v3629
        %6259 = vmatprep.mubr.bf16.mxu0 %v4830
        %6260 = vmatmul.mubr.bf16.gmra.mxu0 %v4828
        %v6261 = vpop.f32.mrf.mxu0
        %v6262 = vadd.f32 %v6221, %v6261
        %v6263 = vpop.f32.mrf.mxu0
        %v6264 = vadd.f32 %v6223, %v6263
        %v6265 = vpop.f32.mrf.mxu0
        %v6266 = vpop.f32.mrf.mxu0
        %6267 = vdwg.mxu0
        %6268 = vmatprep.subr.bf16.mxu0 %v3690
        %6269 = vmatpush1.bf16.msra.mxu0 %v3689
        %6270 = vmatprep.subr.bf16.mxu0 %v3686
        %6271 = vmatpush1.bf16.msra.mxu0 %v3685
        %6272 = vmatprep.subr.bf16.mxu0 %v3682
        %6273 = vmatpush1.bf16.msra.mxu0 %v3681
        %6274 = vmatprep.subr.bf16.mxu0 %v3678
        %6275 = vmatpush1.bf16.msra.mxu0 %v3677
        %6276 = vmatprep.subr.bf16.mxu0 %v3674
        %6277 = vmatpush1.bf16.msra.mxu0 %v3673
        %6278 = vmatprep.subr.bf16.mxu0 %v3670
        %6279 = vmatpush1.bf16.msra.mxu0 %v3669
        %6280 = vmatprep.subr.bf16.mxu0 %v3666
        %6281 = vmatpush1.bf16.msra.mxu0 %v3665
        %6282 = vmatprep.subr.bf16.mxu0 %v3662
        %6283 = vmatpush1.bf16.msra.mxu0 %v3661
        %6284 = vmatprep.subr.bf16.mxu0 %v3722
        %6285 = vmatpush2.bf16.msra.mxu0 %v3721
        %6286 = vmatprep.subr.bf16.mxu0 %v3718
        %6287 = vmatpush2.bf16.msra.mxu0 %v3717
        %6288 = vmatprep.subr.bf16.mxu0 %v3714
        %6289 = vmatpush2.bf16.msra.mxu0 %v3713
        %6290 = vmatprep.subr.bf16.mxu0 %v3710
        %6291 = vmatpush2.bf16.msra.mxu0 %v3709
        %6292 = vmatprep.subr.bf16.mxu0 %v3706
        %6293 = vmatpush2.bf16.msra.mxu0 %v3705
        %6294 = vmatprep.subr.bf16.mxu0 %v3702
        %6295 = vmatpush2.bf16.msra.mxu0 %v3701
        %6296 = vmatprep.subr.bf16.mxu0 %v3698
        %6297 = vmatpush2.bf16.msra.mxu0 %v3697
        %6298 = vmatprep.subr.bf16.mxu0 %v3694
        %6299 = vmatpush2.bf16.msra.mxu0 %v3693
        %6300 = vmatprep.mubr.bf16.mxu0 %v4827
        %6301 = vmatmul.mubr.bf16.gmra.mxu0 %v4813
        %v6302 = vpop.f32.mrf.mxu0
        %v6303 = vadd.f32 %v6262, %v6302
        %v6304 = vpop.f32.mrf.mxu0
        %v6305 = vadd.f32 %v6264, %v6304
        %v6306 = vpop.f32.mrf.mxu0
        %v6307 = vpop.f32.mrf.mxu0
        %6308 = vdwg.mxu0
        %6309 = vmatprep.subr.bf16.mxu0 %v3754
        %6310 = vmatpush1.bf16.msra.mxu0 %v3753
        %6311 = vmatprep.subr.bf16.mxu0 %v3750
        %6312 = vmatpush1.bf16.msra.mxu0 %v3749
        %6313 = vmatprep.subr.bf16.mxu0 %v3746
        %6314 = vmatpush1.bf16.msra.mxu0 %v3745
        %6315 = vmatprep.subr.bf16.mxu0 %v3742
        %6316 = vmatpush1.bf16.msra.mxu0 %v3741
        %6317 = vmatprep.subr.bf16.mxu0 %v3738
        %6318 = vmatpush1.bf16.msra.mxu0 %v3737
        %6319 = vmatprep.subr.bf16.mxu0 %v3734
        %6320 = vmatpush1.bf16.msra.mxu0 %v3733
        %6321 = vmatprep.subr.bf16.mxu0 %v3730
        %6322 = vmatpush1.bf16.msra.mxu0 %v3729
        %6323 = vmatprep.subr.bf16.mxu0 %v3726
        %6324 = vmatpush1.bf16.msra.mxu0 %v3725
        %6325 = vmatprep.subr.bf16.mxu0 %v3786
        %6326 = vmatpush2.bf16.msra.mxu0 %v3785
        %6327 = vmatprep.subr.bf16.mxu0 %v3782
        %6328 = vmatpush2.bf16.msra.mxu0 %v3781
        %6329 = vmatprep.subr.bf16.mxu0 %v3778
        %6330 = vmatpush2.bf16.msra.mxu0 %v3777
        %6331 = vmatprep.subr.bf16.mxu0 %v3774
        %6332 = vmatpush2.bf16.msra.mxu0 %v3773
        %6333 = vmatprep.subr.bf16.mxu0 %v3770
        %6334 = vmatpush2.bf16.msra.mxu0 %v3769
        %6335 = vmatprep.subr.bf16.mxu0 %v3766
        %6336 = vmatpush2.bf16.msra.mxu0 %v3765
        %6337 = vmatprep.subr.bf16.mxu0 %v3762
        %6338 = vmatpush2.bf16.msra.mxu0 %v3761
        %6339 = vmatprep.subr.bf16.mxu0 %v3758
        %6340 = vmatpush2.bf16.msra.mxu0 %v3757
        %6341 = vmatprep.mubr.bf16.mxu0 %v4831
        %6342 = vmatmul.mubr.bf16.gmra.mxu0 %v4829
        %v6343 = vpop.f32.mrf.mxu0
        %v6344 = vadd.f32 %v6303, %v6343
        %v6345 = vpop.f32.mrf.mxu0
        %v6346 = vadd.f32 %v6305, %v6345
        %v6347 = vpop.f32.mrf.mxu0
        %v6348 = vpop.f32.mrf.mxu0
        %6349 = vdwg.mxu0
        %6350 = vmatprep.subr.bf16.mxu0 %v3818
        %6351 = vmatpush1.bf16.msra.mxu0 %v3817
        %6352 = vmatprep.subr.bf16.mxu0 %v3814
        %6353 = vmatpush1.bf16.msra.mxu0 %v3813
        %6354 = vmatprep.subr.bf16.mxu0 %v3810
        %6355 = vmatpush1.bf16.msra.mxu0 %v3809
        %6356 = vmatprep.subr.bf16.mxu0 %v3806
        %6357 = vmatpush1.bf16.msra.mxu0 %v3805
        %6358 = vmatprep.subr.bf16.mxu0 %v3802
        %6359 = vmatpush1.bf16.msra.mxu0 %v3801
        %6360 = vmatprep.subr.bf16.mxu0 %v3798
        %6361 = vmatpush1.bf16.msra.mxu0 %v3797
        %6362 = vmatprep.subr.bf16.mxu0 %v3794
        %6363 = vmatpush1.bf16.msra.mxu0 %v3793
        %6364 = vmatprep.subr.bf16.mxu0 %v3790
        %6365 = vmatpush1.bf16.msra.mxu0 %v3789
        %6366 = vmatprep.subr.bf16.mxu0 %v3850
        %6367 = vmatpush2.bf16.msra.mxu0 %v3849
        %6368 = vmatprep.subr.bf16.mxu0 %v3846
        %6369 = vmatpush2.bf16.msra.mxu0 %v3845
        %6370 = vmatprep.subr.bf16.mxu0 %v3842
        %6371 = vmatpush2.bf16.msra.mxu0 %v3841
        %6372 = vmatprep.subr.bf16.mxu0 %v3838
        %6373 = vmatpush2.bf16.msra.mxu0 %v3837
        %6374 = vmatprep.subr.bf16.mxu0 %v3834
        %6375 = vmatpush2.bf16.msra.mxu0 %v3833
        %6376 = vmatprep.subr.bf16.mxu0 %v3830
        %6377 = vmatpush2.bf16.msra.mxu0 %v3829
        %6378 = vmatprep.subr.bf16.mxu0 %v3826
        %6379 = vmatpush2.bf16.msra.mxu0 %v3825
        %6380 = vmatprep.subr.bf16.mxu0 %v3822
        %6381 = vmatpush2.bf16.msra.mxu0 %v3821
        %6382 = vmatprep.mubr.bf16.mxu0 %v4869
        %6383 = vmatmul.mubr.bf16.gmra.mxu0 %v4855
        %v6384 = vpop.f32.mrf.mxu0
        %v6385 = vadd.f32 %v6344, %v6384
        %v6386 = vpop.f32.mrf.mxu0
        %v6387 = vadd.f32 %v6346, %v6386
        %v6388 = vpop.f32.mrf.mxu0
        %v6389 = vpop.f32.mrf.mxu0
        %6390 = vdwg.mxu0
        %6391 = vmatprep.subr.bf16.mxu0 %v3882
        %6392 = vmatpush1.bf16.msra.mxu0 %v3881
        %6393 = vmatprep.subr.bf16.mxu0 %v3878
        %6394 = vmatpush1.bf16.msra.mxu0 %v3877
        %6395 = vmatprep.subr.bf16.mxu0 %v3874
        %6396 = vmatpush1.bf16.msra.mxu0 %v3873
        %6397 = vmatprep.subr.bf16.mxu0 %v3870
        %6398 = vmatpush1.bf16.msra.mxu0 %v3869
        %6399 = vmatprep.subr.bf16.mxu0 %v3866
        %6400 = vmatpush1.bf16.msra.mxu0 %v3865
        %6401 = vmatprep.subr.bf16.mxu0 %v3862
        %6402 = vmatpush1.bf16.msra.mxu0 %v3861
        %6403 = vmatprep.subr.bf16.mxu0 %v3858
        %6404 = vmatpush1.bf16.msra.mxu0 %v3857
        %6405 = vmatprep.subr.bf16.mxu0 %v3854
        %6406 = vmatpush1.bf16.msra.mxu0 %v3853
        %6407 = vmatprep.subr.bf16.mxu0 %v3914
        %6408 = vmatpush2.bf16.msra.mxu0 %v3913
        %6409 = vmatprep.subr.bf16.mxu0 %v3910
        %6410 = vmatpush2.bf16.msra.mxu0 %v3909
        %6411 = vmatprep.subr.bf16.mxu0 %v3906
        %6412 = vmatpush2.bf16.msra.mxu0 %v3905
        %6413 = vmatprep.subr.bf16.mxu0 %v3902
        %6414 = vmatpush2.bf16.msra.mxu0 %v3901
        %6415 = vmatprep.subr.bf16.mxu0 %v3898
        %6416 = vmatpush2.bf16.msra.mxu0 %v3897
        %6417 = vmatprep.subr.bf16.mxu0 %v3894
        %6418 = vmatpush2.bf16.msra.mxu0 %v3893
        %6419 = vmatprep.subr.bf16.mxu0 %v3890
        %6420 = vmatpush2.bf16.msra.mxu0 %v3889
        %6421 = vmatprep.subr.bf16.mxu0 %v3886
        %6422 = vmatpush2.bf16.msra.mxu0 %v3885
        %6423 = vmatprep.mubr.bf16.mxu0 %v4879
        %6424 = vmatmul.mubr.bf16.gmra.mxu0 %v4877
        %v6425 = vpop.f32.mrf.mxu0
        %v6426 = vadd.f32 %v6385, %v6425
        %v6427 = vpop.f32.mrf.mxu0
        %v6428 = vadd.f32 %v6387, %v6427
        %v6429 = vpop.f32.mrf.mxu0
        %v6430 = vpop.f32.mrf.mxu0
        %6431 = vdwg.mxu0
        %6432 = vmatprep.subr.bf16.mxu0 %v3946
        %6433 = vmatpush1.bf16.msra.mxu0 %v3945
        %6434 = vmatprep.subr.bf16.mxu0 %v3942
        %6435 = vmatpush1.bf16.msra.mxu0 %v3941
        %6436 = vmatprep.subr.bf16.mxu0 %v3938
        %6437 = vmatpush1.bf16.msra.mxu0 %v3937
        %6438 = vmatprep.subr.bf16.mxu0 %v3934
        %6439 = vmatpush1.bf16.msra.mxu0 %v3933
        %6440 = vmatprep.subr.bf16.mxu0 %v3930
        %6441 = vmatpush1.bf16.msra.mxu0 %v3929
        %6442 = vmatprep.subr.bf16.mxu0 %v3926
        %6443 = vmatpush1.bf16.msra.mxu0 %v3925
        %6444 = vmatprep.subr.bf16.mxu0 %v3922
        %6445 = vmatpush1.bf16.msra.mxu0 %v3921
        %6446 = vmatprep.subr.bf16.mxu0 %v3918
        %6447 = vmatpush1.bf16.msra.mxu0 %v3917
        %6448 = vmatprep.subr.bf16.mxu0 %v3978
        %6449 = vmatpush2.bf16.msra.mxu0 %v3977
        %6450 = vmatprep.subr.bf16.mxu0 %v3974
        %6451 = vmatpush2.bf16.msra.mxu0 %v3973
        %6452 = vmatprep.subr.bf16.mxu0 %v3970
        %6453 = vmatpush2.bf16.msra.mxu0 %v3969
        %6454 = vmatprep.subr.bf16.mxu0 %v3966
        %6455 = vmatpush2.bf16.msra.mxu0 %v3965
        %6456 = vmatprep.subr.bf16.mxu0 %v3962
        %6457 = vmatpush2.bf16.msra.mxu0 %v3961
        %6458 = vmatprep.subr.bf16.mxu0 %v3958
        %6459 = vmatpush2.bf16.msra.mxu0 %v3957
        %6460 = vmatprep.subr.bf16.mxu0 %v3954
        %6461 = vmatpush2.bf16.msra.mxu0 %v3953
        %6462 = vmatprep.subr.bf16.mxu0 %v3950
        %6463 = vmatpush2.bf16.msra.mxu0 %v3949
        %6464 = vmatprep.mubr.bf16.mxu0 %v4876
        %6465 = vmatmul.mubr.bf16.gmra.mxu0 %v4862
        %v6466 = vpop.f32.mrf.mxu0
        %v6467 = vadd.f32 %v6426, %v6466
        %v6468 = vpop.f32.mrf.mxu0
        %v6469 = vadd.f32 %v6428, %v6468
        %v6470 = vpop.f32.mrf.mxu0
        %v6471 = vpop.f32.mrf.mxu0
        %6472 = vdwg.mxu0
        %6473 = vmatprep.subr.bf16.mxu0 %v4010
        %6474 = vmatpush1.bf16.msra.mxu0 %v4009
        %6475 = vmatprep.subr.bf16.mxu0 %v4006
        %6476 = vmatpush1.bf16.msra.mxu0 %v4005
        %6477 = vmatprep.subr.bf16.mxu0 %v4002
        %6478 = vmatpush1.bf16.msra.mxu0 %v4001
        %6479 = vmatprep.subr.bf16.mxu0 %v3998
        %6480 = vmatpush1.bf16.msra.mxu0 %v3997
        %6481 = vmatprep.subr.bf16.mxu0 %v3994
        %6482 = vmatpush1.bf16.msra.mxu0 %v3993
        %6483 = vmatprep.subr.bf16.mxu0 %v3990
        %6484 = vmatpush1.bf16.msra.mxu0 %v3989
        %6485 = vmatprep.subr.bf16.mxu0 %v3986
        %6486 = vmatpush1.bf16.msra.mxu0 %v3985
        %6487 = vmatprep.subr.bf16.mxu0 %v3982
        %6488 = vmatpush1.bf16.msra.mxu0 %v3981
        %6489 = vmatprep.subr.bf16.mxu0 %v4042
        %6490 = vmatpush2.bf16.msra.mxu0 %v4041
        %6491 = vmatprep.subr.bf16.mxu0 %v4038
        %6492 = vmatpush2.bf16.msra.mxu0 %v4037
        %6493 = vmatprep.subr.bf16.mxu0 %v4034
        %6494 = vmatpush2.bf16.msra.mxu0 %v4033
        %6495 = vmatprep.subr.bf16.mxu0 %v4030
        %6496 = vmatpush2.bf16.msra.mxu0 %v4029
        %6497 = vmatprep.subr.bf16.mxu0 %v4026
        %6498 = vmatpush2.bf16.msra.mxu0 %v4025
        %6499 = vmatprep.subr.bf16.mxu0 %v4022
        %6500 = vmatpush2.bf16.msra.mxu0 %v4021
        %6501 = vmatprep.subr.bf16.mxu0 %v4018
        %6502 = vmatpush2.bf16.msra.mxu0 %v4017
        %6503 = vmatprep.subr.bf16.mxu0 %v4014
        %6504 = vmatpush2.bf16.msra.mxu0 %v4013
        %6505 = vmatprep.mubr.bf16.mxu0 %v4880
        %6506 = vmatmul.mubr.bf16.gmra.mxu0 %v4878
        %v6507 = vpop.f32.mrf.mxu0
        %v6508 = vadd.f32 %v6467, %v6507
        %v6509 = vpop.f32.mrf.mxu0
        %v6510 = vadd.f32 %v6469, %v6509
        %v6511 = vpop.f32.mrf.mxu0
        %v6512 = vpop.f32.mrf.mxu0
        %6513 = vdwg.mxu0
        %6514 = vmatprep.subr.bf16.mxu0 %v4074
        %6515 = vmatpush1.bf16.msra.mxu0 %v4073
        %6516 = vmatprep.subr.bf16.mxu0 %v4070
        %6517 = vmatpush1.bf16.msra.mxu0 %v4069
        %6518 = vmatprep.subr.bf16.mxu0 %v4066
        %6519 = vmatpush1.bf16.msra.mxu0 %v4065
        %6520 = vmatprep.subr.bf16.mxu0 %v4062
        %6521 = vmatpush1.bf16.msra.mxu0 %v4061
        %6522 = vmatprep.subr.bf16.mxu0 %v4058
        %6523 = vmatpush1.bf16.msra.mxu0 %v4057
        %6524 = vmatprep.subr.bf16.mxu0 %v4054
        %6525 = vmatpush1.bf16.msra.mxu0 %v4053
        %6526 = vmatprep.subr.bf16.mxu0 %v4050
        %6527 = vmatpush1.bf16.msra.mxu0 %v4049
        %6528 = vmatprep.subr.bf16.mxu0 %v4046
        %6529 = vmatpush1.bf16.msra.mxu0 %v4045
        %6530 = vmatprep.subr.bf16.mxu0 %v4106
        %6531 = vmatpush2.bf16.msra.mxu0 %v4105
        %6532 = vmatprep.subr.bf16.mxu0 %v4102
        %6533 = vmatpush2.bf16.msra.mxu0 %v4101
        %6534 = vmatprep.subr.bf16.mxu0 %v4098
        %6535 = vmatpush2.bf16.msra.mxu0 %v4097
        %6536 = vmatprep.subr.bf16.mxu0 %v4094
        %6537 = vmatpush2.bf16.msra.mxu0 %v4093
        %6538 = vmatprep.subr.bf16.mxu0 %v4090
        %6539 = vmatpush2.bf16.msra.mxu0 %v4089
        %6540 = vmatprep.subr.bf16.mxu0 %v4086
        %6541 = vmatpush2.bf16.msra.mxu0 %v4085
        %6542 = vmatprep.subr.bf16.mxu0 %v4082
        %6543 = vmatpush2.bf16.msra.mxu0 %v4081
        %6544 = vmatprep.subr.bf16.mxu0 %v4078
        %6545 = vmatpush2.bf16.msra.mxu0 %v4077
        %6546 = vmatprep.mubr.bf16.mxu0 %v4918
        %6547 = vmatmul.mubr.bf16.gmra.mxu0 %v4904
        %v6548 = vpop.f32.mrf.mxu0
        %v6549 = vadd.f32 %v6508, %v6548
        %v6550 = vpop.f32.mrf.mxu0
        %v6551 = vadd.f32 %v6510, %v6550
        %v6552 = vpop.f32.mrf.mxu0
        %v6553 = vpop.f32.mrf.mxu0
        %6554 = vdwg.mxu0
        %6555 = vmatprep.subr.bf16.mxu0 %v4138
        %6556 = vmatpush1.bf16.msra.mxu0 %v4137
        %6557 = vmatprep.subr.bf16.mxu0 %v4134
        %6558 = vmatpush1.bf16.msra.mxu0 %v4133
        %6559 = vmatprep.subr.bf16.mxu0 %v4130
        %6560 = vmatpush1.bf16.msra.mxu0 %v4129
        %6561 = vmatprep.subr.bf16.mxu0 %v4126
        %6562 = vmatpush1.bf16.msra.mxu0 %v4125
        %6563 = vmatprep.subr.bf16.mxu0 %v4122
        %6564 = vmatpush1.bf16.msra.mxu0 %v4121
        %6565 = vmatprep.subr.bf16.mxu0 %v4118
        %6566 = vmatpush1.bf16.msra.mxu0 %v4117
        %6567 = vmatprep.subr.bf16.mxu0 %v4114
        %6568 = vmatpush1.bf16.msra.mxu0 %v4113
        %6569 = vmatprep.subr.bf16.mxu0 %v4110
        %6570 = vmatpush1.bf16.msra.mxu0 %v4109
        %6571 = vmatprep.subr.bf16.mxu0 %v4170
        %6572 = vmatpush2.bf16.msra.mxu0 %v4169
        %6573 = vmatprep.subr.bf16.mxu0 %v4166
        %6574 = vmatpush2.bf16.msra.mxu0 %v4165
        %6575 = vmatprep.subr.bf16.mxu0 %v4162
        %6576 = vmatpush2.bf16.msra.mxu0 %v4161
        %6577 = vmatprep.subr.bf16.mxu0 %v4158
        %6578 = vmatpush2.bf16.msra.mxu0 %v4157
        %6579 = vmatprep.subr.bf16.mxu0 %v4154
        %6580 = vmatpush2.bf16.msra.mxu0 %v4153
        %6581 = vmatprep.subr.bf16.mxu0 %v4150
        %6582 = vmatpush2.bf16.msra.mxu0 %v4149
        %6583 = vmatprep.subr.bf16.mxu0 %v4146
        %6584 = vmatpush2.bf16.msra.mxu0 %v4145
        %6585 = vmatprep.subr.bf16.mxu0 %v4142
        %6586 = vmatpush2.bf16.msra.mxu0 %v4141
        %6587 = vmatprep.mubr.bf16.mxu0 %v4928
        %6588 = vmatmul.mubr.bf16.gmra.mxu0 %v4926
        %v6589 = vpop.f32.mrf.mxu0
        %v6590 = vadd.f32 %v6549, %v6589
        %v6591 = vpop.f32.mrf.mxu0
        %v6592 = vadd.f32 %v6551, %v6591
        %v6593 = vpop.f32.mrf.mxu0
        %v6594 = vpop.f32.mrf.mxu0
        %6595 = vdwg.mxu0
        %6596 = vmatprep.subr.bf16.mxu0 %v4202
        %6597 = vmatpush1.bf16.msra.mxu0 %v4201
        %6598 = vmatprep.subr.bf16.mxu0 %v4198
        %6599 = vmatpush1.bf16.msra.mxu0 %v4197
        %6600 = vmatprep.subr.bf16.mxu0 %v4194
        %6601 = vmatpush1.bf16.msra.mxu0 %v4193
        %6602 = vmatprep.subr.bf16.mxu0 %v4190
        %6603 = vmatpush1.bf16.msra.mxu0 %v4189
        %6604 = vmatprep.subr.bf16.mxu0 %v4186
        %6605 = vmatpush1.bf16.msra.mxu0 %v4185
        %6606 = vmatprep.subr.bf16.mxu0 %v4182
        %6607 = vmatpush1.bf16.msra.mxu0 %v4181
        %6608 = vmatprep.subr.bf16.mxu0 %v4178
        %6609 = vmatpush1.bf16.msra.mxu0 %v4177
        %6610 = vmatprep.subr.bf16.mxu0 %v4174
        %6611 = vmatpush1.bf16.msra.mxu0 %v4173
        %6612 = vmatprep.subr.bf16.mxu0 %v4234
        %6613 = vmatpush2.bf16.msra.mxu0 %v4233
        %6614 = vmatprep.subr.bf16.mxu0 %v4230
        %6615 = vmatpush2.bf16.msra.mxu0 %v4229
        %6616 = vmatprep.subr.bf16.mxu0 %v4226
        %6617 = vmatpush2.bf16.msra.mxu0 %v4225
        %6618 = vmatprep.subr.bf16.mxu0 %v4222
        %6619 = vmatpush2.bf16.msra.mxu0 %v4221
        %6620 = vmatprep.subr.bf16.mxu0 %v4218
        %6621 = vmatpush2.bf16.msra.mxu0 %v4217
        %6622 = vmatprep.subr.bf16.mxu0 %v4214
        %6623 = vmatpush2.bf16.msra.mxu0 %v4213
        %6624 = vmatprep.subr.bf16.mxu0 %v4210
        %6625 = vmatpush2.bf16.msra.mxu0 %v4209
        %6626 = vmatprep.subr.bf16.mxu0 %v4206
        %6627 = vmatpush2.bf16.msra.mxu0 %v4205
        %6628 = vmatprep.mubr.bf16.mxu0 %v4925
        %6629 = vmatmul.mubr.bf16.gmra.mxu0 %v4911
        %v6630 = vpop.f32.mrf.mxu0
        %v6631 = vadd.f32 %v6590, %v6630
        %v6632 = vpop.f32.mrf.mxu0
        %v6633 = vadd.f32 %v6592, %v6632
        %v6634 = vpop.f32.mrf.mxu0
        %v6635 = vpop.f32.mrf.mxu0
        %6636 = vdwg.mxu0
        %6637 = vmatprep.subr.bf16.mxu0 %v4266
        %6638 = vmatpush1.bf16.msra.mxu0 %v4265
        %6639 = vmatprep.subr.bf16.mxu0 %v4262
        %6640 = vmatpush1.bf16.msra.mxu0 %v4261
        %6641 = vmatprep.subr.bf16.mxu0 %v4258
        %6642 = vmatpush1.bf16.msra.mxu0 %v4257
        %6643 = vmatprep.subr.bf16.mxu0 %v4254
        %6644 = vmatpush1.bf16.msra.mxu0 %v4253
        %6645 = vmatprep.subr.bf16.mxu0 %v4250
        %6646 = vmatpush1.bf16.msra.mxu0 %v4249
        %6647 = vmatprep.subr.bf16.mxu0 %v4246
        %6648 = vmatpush1.bf16.msra.mxu0 %v4245
        %6649 = vmatprep.subr.bf16.mxu0 %v4242
        %6650 = vmatpush1.bf16.msra.mxu0 %v4241
        %6651 = vmatprep.subr.bf16.mxu0 %v4238
        %6652 = vmatpush1.bf16.msra.mxu0 %v4237
        %6653 = vmatprep.subr.bf16.mxu0 %v4298
        %6654 = vmatpush2.bf16.msra.mxu0 %v4297
        %6655 = vmatprep.subr.bf16.mxu0 %v4294
        %6656 = vmatpush2.bf16.msra.mxu0 %v4293
        %6657 = vmatprep.subr.bf16.mxu0 %v4290
        %6658 = vmatpush2.bf16.msra.mxu0 %v4289
        %6659 = vmatprep.subr.bf16.mxu0 %v4286
        %6660 = vmatpush2.bf16.msra.mxu0 %v4285
        %6661 = vmatprep.subr.bf16.mxu0 %v4282
        %6662 = vmatpush2.bf16.msra.mxu0 %v4281
        %6663 = vmatprep.subr.bf16.mxu0 %v4278
        %6664 = vmatpush2.bf16.msra.mxu0 %v4277
        %6665 = vmatprep.subr.bf16.mxu0 %v4274
        %6666 = vmatpush2.bf16.msra.mxu0 %v4273
        %6667 = vmatprep.subr.bf16.mxu0 %v4270
        %6668 = vmatpush2.bf16.msra.mxu0 %v4269
        %6669 = vmatprep.mubr.bf16.mxu0 %v4929
        %6670 = vmatmul.mubr.bf16.gmra.mxu0 %v4927
        %v6671 = vpop.f32.mrf.mxu0
        %v6672 = vadd.f32 %v6631, %v6671
        %v6673 = vpop.f32.mrf.mxu0
        %v6674 = vadd.f32 %v6633, %v6673
        %v6675 = vpop.f32.mrf.mxu0
        %v6676 = vpop.f32.mrf.mxu0
        %6677 = vdwg.mxu0
        %6678 = vmatprep.subr.bf16.mxu0 %v4330
        %6679 = vmatpush1.bf16.msra.mxu0 %v4329
        %6680 = vmatprep.subr.bf16.mxu0 %v4326
        %6681 = vmatpush1.bf16.msra.mxu0 %v4325
        %6682 = vmatprep.subr.bf16.mxu0 %v4322
        %6683 = vmatpush1.bf16.msra.mxu0 %v4321
        %6684 = vmatprep.subr.bf16.mxu0 %v4318
        %6685 = vmatpush1.bf16.msra.mxu0 %v4317
        %6686 = vmatprep.subr.bf16.mxu0 %v4314
        %6687 = vmatpush1.bf16.msra.mxu0 %v4313
        %6688 = vmatprep.subr.bf16.mxu0 %v4310
        %6689 = vmatpush1.bf16.msra.mxu0 %v4309
        %6690 = vmatprep.subr.bf16.mxu0 %v4306
        %6691 = vmatpush1.bf16.msra.mxu0 %v4305
        %6692 = vmatprep.subr.bf16.mxu0 %v4302
        %6693 = vmatpush1.bf16.msra.mxu0 %v4301
        %6694 = vmatprep.subr.bf16.mxu0 %v4362
        %6695 = vmatpush2.bf16.msra.mxu0 %v4361
        %6696 = vmatprep.subr.bf16.mxu0 %v4358
        %6697 = vmatpush2.bf16.msra.mxu0 %v4357
        %6698 = vmatprep.subr.bf16.mxu0 %v4354
        %6699 = vmatpush2.bf16.msra.mxu0 %v4353
        %6700 = vmatprep.subr.bf16.mxu0 %v4350
        %6701 = vmatpush2.bf16.msra.mxu0 %v4349
        %6702 = vmatprep.subr.bf16.mxu0 %v4346
        %6703 = vmatpush2.bf16.msra.mxu0 %v4345
        %6704 = vmatprep.subr.bf16.mxu0 %v4342
        %6705 = vmatpush2.bf16.msra.mxu0 %v4341
        %6706 = vmatprep.subr.bf16.mxu0 %v4338
        %6707 = vmatpush2.bf16.msra.mxu0 %v4337
        %6708 = vmatprep.subr.bf16.mxu0 %v4334
        %6709 = vmatpush2.bf16.msra.mxu0 %v4333
        %6710 = vmatprep.mubr.bf16.mxu0 %v4951
        %6711 = vmatmul.mubr.bf16.gmra.mxu0 %v4944
        %v6712 = vpop.f32.mrf.mxu0
        %v6713 = vadd.f32 %v6672, %v6712
        %v6714 = vpop.f32.mrf.mxu0
        %v6715 = vadd.f32 %v6674, %v6714
        %v6716 = vpop.f32.mrf.mxu0
        %v6717 = vpop.f32.mrf.mxu0
        %6718 = vdwg.mxu0
        %6719 = vmatprep.subr.bf16.mxu0 %v4394
        %6720 = vmatpush1.bf16.msra.mxu0 %v4393
        %6721 = vmatprep.subr.bf16.mxu0 %v4390
        %6722 = vmatpush1.bf16.msra.mxu0 %v4389
        %6723 = vmatprep.subr.bf16.mxu0 %v4386
        %6724 = vmatpush1.bf16.msra.mxu0 %v4385
        %6725 = vmatprep.subr.bf16.mxu0 %v4382
        %6726 = vmatpush1.bf16.msra.mxu0 %v4381
        %6727 = vmatprep.subr.bf16.mxu0 %v4378
        %6728 = vmatpush1.bf16.msra.mxu0 %v4377
        %6729 = vmatprep.subr.bf16.mxu0 %v4374
        %6730 = vmatpush1.bf16.msra.mxu0 %v4373
        %6731 = vmatprep.subr.bf16.mxu0 %v4370
        %6732 = vmatpush1.bf16.msra.mxu0 %v4369
        %6733 = vmatprep.subr.bf16.mxu0 %v4366
        %6734 = vmatpush1.bf16.msra.mxu0 %v4365
        %6735 = vmatprep.subr.bf16.mxu0 %v4426
        %6736 = vmatpush2.bf16.msra.mxu0 %v4425
        %6737 = vmatprep.subr.bf16.mxu0 %v4422
        %6738 = vmatpush2.bf16.msra.mxu0 %v4421
        %6739 = vmatprep.subr.bf16.mxu0 %v4418
        %6740 = vmatpush2.bf16.msra.mxu0 %v4417
        %6741 = vmatprep.subr.bf16.mxu0 %v4414
        %6742 = vmatpush2.bf16.msra.mxu0 %v4413
        %6743 = vmatprep.subr.bf16.mxu0 %v4410
        %6744 = vmatpush2.bf16.msra.mxu0 %v4409
        %6745 = vmatprep.subr.bf16.mxu0 %v4406
        %6746 = vmatpush2.bf16.msra.mxu0 %v4405
        %6747 = vmatprep.subr.bf16.mxu0 %v4402
        %6748 = vmatpush2.bf16.msra.mxu0 %v4401
        %6749 = vmatprep.subr.bf16.mxu0 %v4398
        %6750 = vmatpush2.bf16.msra.mxu0 %v4397
        %6751 = vmatprep.mubr.bf16.mxu0 %v4953
        %6752 = vmatmul.mubr.bf16.gmra.mxu0 %v4952
        %v6753 = vpop.f32.mrf.mxu0
        %v6754 = vadd.f32 %v6713, %v6753
        %v6755 = vpop.f32.mrf.mxu0
        %v6756 = vadd.f32 %v6715, %v6755
        %v6757 = vpop.f32.mrf.mxu0
        %v6758 = vpop.f32.mrf.mxu0
        %6759 = vdwg.mxu0
        %6760 = vmatprep.subr.bf16.mxu0 %v1772
        %6761 = vmatpush1.bf16.msra.mxu0 %v1771
        %6762 = vmatprep.subr.bf16.mxu0 %v1768
        %6763 = vmatpush1.bf16.msra.mxu0 %v1767
        %6764 = vmatprep.subr.bf16.mxu0 %v1764
        %6765 = vmatpush1.bf16.msra.mxu0 %v1763
        %6766 = vmatprep.subr.bf16.mxu0 %v1760
        %6767 = vmatpush1.bf16.msra.mxu0 %v1759
        %6768 = vmatprep.subr.bf16.mxu0 %v1756
        %6769 = vmatpush1.bf16.msra.mxu0 %v1755
        %6770 = vmatprep.subr.bf16.mxu0 %v1752
        %6771 = vmatpush1.bf16.msra.mxu0 %v1751
        %6772 = vmatprep.subr.bf16.mxu0 %v1748
        %6773 = vmatpush1.bf16.msra.mxu0 %v1747
        %6774 = vmatprep.subr.bf16.mxu0 %v1744
        %6775 = vmatpush1.bf16.msra.mxu0 %v1743
        %6776 = vmatprep.subr.bf16.mxu0 %v1804
        %6777 = vmatpush2.bf16.msra.mxu0 %v1803
        %6778 = vmatprep.subr.bf16.mxu0 %v1800
        %6779 = vmatpush2.bf16.msra.mxu0 %v1799
        %6780 = vmatprep.subr.bf16.mxu0 %v1796
        %6781 = vmatpush2.bf16.msra.mxu0 %v1795
        %6782 = vmatprep.subr.bf16.mxu0 %v1792
        %6783 = vmatpush2.bf16.msra.mxu0 %v1791
        %6784 = vmatprep.subr.bf16.mxu0 %v1788
        %6785 = vmatpush2.bf16.msra.mxu0 %v1787
        %6786 = vmatprep.subr.bf16.mxu0 %v1784
        %6787 = vmatpush2.bf16.msra.mxu0 %v1783
        %6788 = vmatprep.subr.bf16.mxu0 %v1780
        %6789 = vmatpush2.bf16.msra.mxu0 %v1779
        %6790 = vmatprep.subr.bf16.mxu0 %v1776
        %6791 = vmatpush2.bf16.msra.mxu0 %v1775
        %6792 = vmatprep.mubr.bf16.mxu0 %v4477
        %6793 = vmatmul.mubr.bf16.gmra.mxu0 %v4463
        %v6794 = vpop.f32.mrf.mxu0
        %v6795 = vadd.f32 0.0, %v6794
        %v6796 = vpop.f32.mrf.mxu0
        %v6797 = vadd.f32 0.0, %v6796
        %v6798 = vpop.f32.mrf.mxu0
        %v6799 = vpop.f32.mrf.mxu0
        %6800 = vdwg.mxu0
        %6801 = vmatprep.subr.bf16.mxu0 %v1836
        %6802 = vmatpush1.bf16.msra.mxu0 %v1835
        %6803 = vmatprep.subr.bf16.mxu0 %v1832
        %6804 = vmatpush1.bf16.msra.mxu0 %v1831
        %6805 = vmatprep.subr.bf16.mxu0 %v1828
        %6806 = vmatpush1.bf16.msra.mxu0 %v1827
        %6807 = vmatprep.subr.bf16.mxu0 %v1824
        %6808 = vmatpush1.bf16.msra.mxu0 %v1823
        %6809 = vmatprep.subr.bf16.mxu0 %v1820
        %6810 = vmatpush1.bf16.msra.mxu0 %v1819
        %6811 = vmatprep.subr.bf16.mxu0 %v1816
        %6812 = vmatpush1.bf16.msra.mxu0 %v1815
        %6813 = vmatprep.subr.bf16.mxu0 %v1812
        %6814 = vmatpush1.bf16.msra.mxu0 %v1811
        %6815 = vmatprep.subr.bf16.mxu0 %v1808
        %6816 = vmatpush1.bf16.msra.mxu0 %v1807
        %6817 = vmatprep.subr.bf16.mxu0 %v1868
        %6818 = vmatpush2.bf16.msra.mxu0 %v1867
        %6819 = vmatprep.subr.bf16.mxu0 %v1864
        %6820 = vmatpush2.bf16.msra.mxu0 %v1863
        %6821 = vmatprep.subr.bf16.mxu0 %v1860
        %6822 = vmatpush2.bf16.msra.mxu0 %v1859
        %6823 = vmatprep.subr.bf16.mxu0 %v1856
        %6824 = vmatpush2.bf16.msra.mxu0 %v1855
        %6825 = vmatprep.subr.bf16.mxu0 %v1852
        %6826 = vmatpush2.bf16.msra.mxu0 %v1851
        %6827 = vmatprep.subr.bf16.mxu0 %v1848
        %6828 = vmatpush2.bf16.msra.mxu0 %v1847
        %6829 = vmatprep.subr.bf16.mxu0 %v1844
        %6830 = vmatpush2.bf16.msra.mxu0 %v1843
        %6831 = vmatprep.subr.bf16.mxu0 %v1840
        %6832 = vmatpush2.bf16.msra.mxu0 %v1839
        %6833 = vmatprep.mubr.bf16.mxu0 %v4487
        %6834 = vmatmul.mubr.bf16.gmra.mxu0 %v4485
        %v6835 = vpop.f32.mrf.mxu0
        %v6836 = vadd.f32 %v6795, %v6835
        %v6837 = vpop.f32.mrf.mxu0
        %v6838 = vadd.f32 %v6797, %v6837
        %v6839 = vpop.f32.mrf.mxu0
        %v6840 = vpop.f32.mrf.mxu0
        %6841 = vdwg.mxu0
        %6842 = vmatprep.subr.bf16.mxu0 %v1900
        %6843 = vmatpush1.bf16.msra.mxu0 %v1899
        %6844 = vmatprep.subr.bf16.mxu0 %v1896
        %6845 = vmatpush1.bf16.msra.mxu0 %v1895
        %6846 = vmatprep.subr.bf16.mxu0 %v1892
        %6847 = vmatpush1.bf16.msra.mxu0 %v1891
        %6848 = vmatprep.subr.bf16.mxu0 %v1888
        %6849 = vmatpush1.bf16.msra.mxu0 %v1887
        %6850 = vmatprep.subr.bf16.mxu0 %v1884
        %6851 = vmatpush1.bf16.msra.mxu0 %v1883
        %6852 = vmatprep.subr.bf16.mxu0 %v1880
        %6853 = vmatpush1.bf16.msra.mxu0 %v1879
        %6854 = vmatprep.subr.bf16.mxu0 %v1876
        %6855 = vmatpush1.bf16.msra.mxu0 %v1875
        %6856 = vmatprep.subr.bf16.mxu0 %v1872
        %6857 = vmatpush1.bf16.msra.mxu0 %v1871
        %6858 = vmatprep.subr.bf16.mxu0 %v1932
        %6859 = vmatpush2.bf16.msra.mxu0 %v1931
        %6860 = vmatprep.subr.bf16.mxu0 %v1928
        %6861 = vmatpush2.bf16.msra.mxu0 %v1927
        %6862 = vmatprep.subr.bf16.mxu0 %v1924
        %6863 = vmatpush2.bf16.msra.mxu0 %v1923
        %6864 = vmatprep.subr.bf16.mxu0 %v1920
        %6865 = vmatpush2.bf16.msra.mxu0 %v1919
        %6866 = vmatprep.subr.bf16.mxu0 %v1916
        %6867 = vmatpush2.bf16.msra.mxu0 %v1915
        %6868 = vmatprep.subr.bf16.mxu0 %v1912
        %6869 = vmatpush2.bf16.msra.mxu0 %v1911
        %6870 = vmatprep.subr.bf16.mxu0 %v1908
        %6871 = vmatpush2.bf16.msra.mxu0 %v1907
        %6872 = vmatprep.subr.bf16.mxu0 %v1904
        %6873 = vmatpush2.bf16.msra.mxu0 %v1903
        %6874 = vmatprep.mubr.bf16.mxu0 %v4484
        %6875 = vmatmul.mubr.bf16.gmra.mxu0 %v4470
        %v6876 = vpop.f32.mrf.mxu0
        %v6877 = vadd.f32 %v6836, %v6876
        %v6878 = vpop.f32.mrf.mxu0
        %v6879 = vadd.f32 %v6838, %v6878
        %v6880 = vpop.f32.mrf.mxu0
        %v6881 = vpop.f32.mrf.mxu0
        %6882 = vdwg.mxu0
        %6883 = vmatprep.subr.bf16.mxu0 %v1964
        %6884 = vmatpush1.bf16.msra.mxu0 %v1963
        %6885 = vmatprep.subr.bf16.mxu0 %v1960
        %6886 = vmatpush1.bf16.msra.mxu0 %v1959
        %6887 = vmatprep.subr.bf16.mxu0 %v1956
        %6888 = vmatpush1.bf16.msra.mxu0 %v1955
        %6889 = vmatprep.subr.bf16.mxu0 %v1952
        %6890 = vmatpush1.bf16.msra.mxu0 %v1951
        %6891 = vmatprep.subr.bf16.mxu0 %v1948
        %6892 = vmatpush1.bf16.msra.mxu0 %v1947
        %6893 = vmatprep.subr.bf16.mxu0 %v1944
        %6894 = vmatpush1.bf16.msra.mxu0 %v1943
        %6895 = vmatprep.subr.bf16.mxu0 %v1940
        %6896 = vmatpush1.bf16.msra.mxu0 %v1939
        %6897 = vmatprep.subr.bf16.mxu0 %v1936
        %6898 = vmatpush1.bf16.msra.mxu0 %v1935
        %6899 = vmatprep.subr.bf16.mxu0 %v1996
        %6900 = vmatpush2.bf16.msra.mxu0 %v1995
        %6901 = vmatprep.subr.bf16.mxu0 %v1992
        %6902 = vmatpush2.bf16.msra.mxu0 %v1991
        %6903 = vmatprep.subr.bf16.mxu0 %v1988
        %6904 = vmatpush2.bf16.msra.mxu0 %v1987
        %6905 = vmatprep.subr.bf16.mxu0 %v1984
        %6906 = vmatpush2.bf16.msra.mxu0 %v1983
        %6907 = vmatprep.subr.bf16.mxu0 %v1980
        %6908 = vmatpush2.bf16.msra.mxu0 %v1979
        %6909 = vmatprep.subr.bf16.mxu0 %v1976
        %6910 = vmatpush2.bf16.msra.mxu0 %v1975
        %6911 = vmatprep.subr.bf16.mxu0 %v1972
        %6912 = vmatpush2.bf16.msra.mxu0 %v1971
        %6913 = vmatprep.subr.bf16.mxu0 %v1968
        %6914 = vmatpush2.bf16.msra.mxu0 %v1967
        %6915 = vmatprep.mubr.bf16.mxu0 %v4488
        %6916 = vmatmul.mubr.bf16.gmra.mxu0 %v4486
        %v6917 = vpop.f32.mrf.mxu0
        %v6918 = vadd.f32 %v6877, %v6917
        %v6919 = vpop.f32.mrf.mxu0
        %v6920 = vadd.f32 %v6879, %v6919
        %v6921 = vpop.f32.mrf.mxu0
        %v6922 = vpop.f32.mrf.mxu0
        %6923 = vdwg.mxu0
        %6924 = vmatprep.subr.bf16.mxu0 %v2028
        %6925 = vmatpush1.bf16.msra.mxu0 %v2027
        %6926 = vmatprep.subr.bf16.mxu0 %v2024
        %6927 = vmatpush1.bf16.msra.mxu0 %v2023
        %6928 = vmatprep.subr.bf16.mxu0 %v2020
        %6929 = vmatpush1.bf16.msra.mxu0 %v2019
        %6930 = vmatprep.subr.bf16.mxu0 %v2016
        %6931 = vmatpush1.bf16.msra.mxu0 %v2015
        %6932 = vmatprep.subr.bf16.mxu0 %v2012
        %6933 = vmatpush1.bf16.msra.mxu0 %v2011
        %6934 = vmatprep.subr.bf16.mxu0 %v2008
        %6935 = vmatpush1.bf16.msra.mxu0 %v2007
        %6936 = vmatprep.subr.bf16.mxu0 %v2004
        %6937 = vmatpush1.bf16.msra.mxu0 %v2003
        %6938 = vmatprep.subr.bf16.mxu0 %v2000
        %6939 = vmatpush1.bf16.msra.mxu0 %v1999
        %6940 = vmatprep.subr.bf16.mxu0 %v2060
        %6941 = vmatpush2.bf16.msra.mxu0 %v2059
        %6942 = vmatprep.subr.bf16.mxu0 %v2056
        %6943 = vmatpush2.bf16.msra.mxu0 %v2055
        %6944 = vmatprep.subr.bf16.mxu0 %v2052
        %6945 = vmatpush2.bf16.msra.mxu0 %v2051
        %6946 = vmatprep.subr.bf16.mxu0 %v2048
        %6947 = vmatpush2.bf16.msra.mxu0 %v2047
        %6948 = vmatprep.subr.bf16.mxu0 %v2044
        %6949 = vmatpush2.bf16.msra.mxu0 %v2043
        %6950 = vmatprep.subr.bf16.mxu0 %v2040
        %6951 = vmatpush2.bf16.msra.mxu0 %v2039
        %6952 = vmatprep.subr.bf16.mxu0 %v2036
        %6953 = vmatpush2.bf16.msra.mxu0 %v2035
        %6954 = vmatprep.subr.bf16.mxu0 %v2032
        %6955 = vmatpush2.bf16.msra.mxu0 %v2031
        %6956 = vmatprep.mubr.bf16.mxu0 %v4526
        %6957 = vmatmul.mubr.bf16.gmra.mxu0 %v4512
        %v6958 = vpop.f32.mrf.mxu0
        %v6959 = vadd.f32 %v6918, %v6958
        %v6960 = vpop.f32.mrf.mxu0
        %v6961 = vadd.f32 %v6920, %v6960
        %v6962 = vpop.f32.mrf.mxu0
        %v6963 = vpop.f32.mrf.mxu0
        %6964 = vdwg.mxu0
        %6965 = vmatprep.subr.bf16.mxu0 %v2092
        %6966 = vmatpush1.bf16.msra.mxu0 %v2091
        %6967 = vmatprep.subr.bf16.mxu0 %v2088
        %6968 = vmatpush1.bf16.msra.mxu0 %v2087
        %6969 = vmatprep.subr.bf16.mxu0 %v2084
        %6970 = vmatpush1.bf16.msra.mxu0 %v2083
        %6971 = vmatprep.subr.bf16.mxu0 %v2080
        %6972 = vmatpush1.bf16.msra.mxu0 %v2079
        %6973 = vmatprep.subr.bf16.mxu0 %v2076
        %6974 = vmatpush1.bf16.msra.mxu0 %v2075
        %6975 = vmatprep.subr.bf16.mxu0 %v2072
        %6976 = vmatpush1.bf16.msra.mxu0 %v2071
        %6977 = vmatprep.subr.bf16.mxu0 %v2068
        %6978 = vmatpush1.bf16.msra.mxu0 %v2067
        %6979 = vmatprep.subr.bf16.mxu0 %v2064
        %6980 = vmatpush1.bf16.msra.mxu0 %v2063
        %6981 = vmatprep.subr.bf16.mxu0 %v2124
        %6982 = vmatpush2.bf16.msra.mxu0 %v2123
        %6983 = vmatprep.subr.bf16.mxu0 %v2120
        %6984 = vmatpush2.bf16.msra.mxu0 %v2119
        %6985 = vmatprep.subr.bf16.mxu0 %v2116
        %6986 = vmatpush2.bf16.msra.mxu0 %v2115
        %6987 = vmatprep.subr.bf16.mxu0 %v2112
        %6988 = vmatpush2.bf16.msra.mxu0 %v2111
        %6989 = vmatprep.subr.bf16.mxu0 %v2108
        %6990 = vmatpush2.bf16.msra.mxu0 %v2107
        %6991 = vmatprep.subr.bf16.mxu0 %v2104
        %6992 = vmatpush2.bf16.msra.mxu0 %v2103
        %6993 = vmatprep.subr.bf16.mxu0 %v2100
        %6994 = vmatpush2.bf16.msra.mxu0 %v2099
        %6995 = vmatprep.subr.bf16.mxu0 %v2096
        %6996 = vmatpush2.bf16.msra.mxu0 %v2095
        %6997 = vmatprep.mubr.bf16.mxu0 %v4536
        %6998 = vmatmul.mubr.bf16.gmra.mxu0 %v4534
        %v6999 = vpop.f32.mrf.mxu0
        %v7000 = vadd.f32 %v6959, %v6999
        %v7001 = vpop.f32.mrf.mxu0
        %v7002 = vadd.f32 %v6961, %v7001
        %v7003 = vpop.f32.mrf.mxu0
        %v7004 = vpop.f32.mrf.mxu0
        %7005 = vdwg.mxu0
        %7006 = vmatprep.subr.bf16.mxu0 %v2156
        %7007 = vmatpush1.bf16.msra.mxu0 %v2155
        %7008 = vmatprep.subr.bf16.mxu0 %v2152
        %7009 = vmatpush1.bf16.msra.mxu0 %v2151
        %7010 = vmatprep.subr.bf16.mxu0 %v2148
        %7011 = vmatpush1.bf16.msra.mxu0 %v2147
        %7012 = vmatprep.subr.bf16.mxu0 %v2144
        %7013 = vmatpush1.bf16.msra.mxu0 %v2143
        %7014 = vmatprep.subr.bf16.mxu0 %v2140
        %7015 = vmatpush1.bf16.msra.mxu0 %v2139
        %7016 = vmatprep.subr.bf16.mxu0 %v2136
        %7017 = vmatpush1.bf16.msra.mxu0 %v2135
        %7018 = vmatprep.subr.bf16.mxu0 %v2132
        %7019 = vmatpush1.bf16.msra.mxu0 %v2131
        %7020 = vmatprep.subr.bf16.mxu0 %v2128
        %7021 = vmatpush1.bf16.msra.mxu0 %v2127
        %7022 = vmatprep.subr.bf16.mxu0 %v2188
        %7023 = vmatpush2.bf16.msra.mxu0 %v2187
        %7024 = vmatprep.subr.bf16.mxu0 %v2184
        %7025 = vmatpush2.bf16.msra.mxu0 %v2183
        %7026 = vmatprep.subr.bf16.mxu0 %v2180
        %7027 = vmatpush2.bf16.msra.mxu0 %v2179
        %7028 = vmatprep.subr.bf16.mxu0 %v2176
        %7029 = vmatpush2.bf16.msra.mxu0 %v2175
        %7030 = vmatprep.subr.bf16.mxu0 %v2172
        %7031 = vmatpush2.bf16.msra.mxu0 %v2171
        %7032 = vmatprep.subr.bf16.mxu0 %v2168
        %7033 = vmatpush2.bf16.msra.mxu0 %v2167
        %7034 = vmatprep.subr.bf16.mxu0 %v2164
        %7035 = vmatpush2.bf16.msra.mxu0 %v2163
        %7036 = vmatprep.subr.bf16.mxu0 %v2160
        %7037 = vmatpush2.bf16.msra.mxu0 %v2159
        %7038 = vmatprep.mubr.bf16.mxu0 %v4533
        %7039 = vmatmul.mubr.bf16.gmra.mxu0 %v4519
        %v7040 = vpop.f32.mrf.mxu0
        %v7041 = vadd.f32 %v7000, %v7040
        %v7042 = vpop.f32.mrf.mxu0
        %v7043 = vadd.f32 %v7002, %v7042
        %v7044 = vpop.f32.mrf.mxu0
        %v7045 = vpop.f32.mrf.mxu0
        %7046 = vdwg.mxu0
        %7047 = vmatprep.subr.bf16.mxu0 %v2220
        %7048 = vmatpush1.bf16.msra.mxu0 %v2219
        %7049 = vmatprep.subr.bf16.mxu0 %v2216
        %7050 = vmatpush1.bf16.msra.mxu0 %v2215
        %7051 = vmatprep.subr.bf16.mxu0 %v2212
        %7052 = vmatpush1.bf16.msra.mxu0 %v2211
        %7053 = vmatprep.subr.bf16.mxu0 %v2208
        %7054 = vmatpush1.bf16.msra.mxu0 %v2207
        %7055 = vmatprep.subr.bf16.mxu0 %v2204
        %7056 = vmatpush1.bf16.msra.mxu0 %v2203
        %7057 = vmatprep.subr.bf16.mxu0 %v2200
        %7058 = vmatpush1.bf16.msra.mxu0 %v2199
        %7059 = vmatprep.subr.bf16.mxu0 %v2196
        %7060 = vmatpush1.bf16.msra.mxu0 %v2195
        %7061 = vmatprep.subr.bf16.mxu0 %v2192
        %7062 = vmatpush1.bf16.msra.mxu0 %v2191
        %7063 = vmatprep.subr.bf16.mxu0 %v2252
        %7064 = vmatpush2.bf16.msra.mxu0 %v2251
        %7065 = vmatprep.subr.bf16.mxu0 %v2248
        %7066 = vmatpush2.bf16.msra.mxu0 %v2247
        %7067 = vmatprep.subr.bf16.mxu0 %v2244
        %7068 = vmatpush2.bf16.msra.mxu0 %v2243
        %7069 = vmatprep.subr.bf16.mxu0 %v2240
        %7070 = vmatpush2.bf16.msra.mxu0 %v2239
        %7071 = vmatprep.subr.bf16.mxu0 %v2236
        %7072 = vmatpush2.bf16.msra.mxu0 %v2235
        %7073 = vmatprep.subr.bf16.mxu0 %v2232
        %7074 = vmatpush2.bf16.msra.mxu0 %v2231
        %7075 = vmatprep.subr.bf16.mxu0 %v2228
        %7076 = vmatpush2.bf16.msra.mxu0 %v2227
        %7077 = vmatprep.subr.bf16.mxu0 %v2224
        %7078 = vmatpush2.bf16.msra.mxu0 %v2223
        %7079 = vmatprep.mubr.bf16.mxu0 %v4537
        %7080 = vmatmul.mubr.bf16.gmra.mxu0 %v4535
        %v7081 = vpop.f32.mrf.mxu0
        %v7082 = vadd.f32 %v7041, %v7081
        %v7083 = vpop.f32.mrf.mxu0
        %v7084 = vadd.f32 %v7043, %v7083
        %v7085 = vpop.f32.mrf.mxu0
        %v7086 = vpop.f32.mrf.mxu0
        %7087 = vdwg.mxu0
        %7088 = vmatprep.subr.bf16.mxu0 %v2284
        %7089 = vmatpush1.bf16.msra.mxu0 %v2283
        %7090 = vmatprep.subr.bf16.mxu0 %v2280
        %7091 = vmatpush1.bf16.msra.mxu0 %v2279
        %7092 = vmatprep.subr.bf16.mxu0 %v2276
        %7093 = vmatpush1.bf16.msra.mxu0 %v2275
        %7094 = vmatprep.subr.bf16.mxu0 %v2272
        %7095 = vmatpush1.bf16.msra.mxu0 %v2271
        %7096 = vmatprep.subr.bf16.mxu0 %v2268
        %7097 = vmatpush1.bf16.msra.mxu0 %v2267
        %7098 = vmatprep.subr.bf16.mxu0 %v2264
        %7099 = vmatpush1.bf16.msra.mxu0 %v2263
        %7100 = vmatprep.subr.bf16.mxu0 %v2260
        %7101 = vmatpush1.bf16.msra.mxu0 %v2259
        %7102 = vmatprep.subr.bf16.mxu0 %v2256
        %7103 = vmatpush1.bf16.msra.mxu0 %v2255
        %7104 = vmatprep.subr.bf16.mxu0 %v2316
        %7105 = vmatpush2.bf16.msra.mxu0 %v2315
        %7106 = vmatprep.subr.bf16.mxu0 %v2312
        %7107 = vmatpush2.bf16.msra.mxu0 %v2311
        %7108 = vmatprep.subr.bf16.mxu0 %v2308
        %7109 = vmatpush2.bf16.msra.mxu0 %v2307
        %7110 = vmatprep.subr.bf16.mxu0 %v2304
        %7111 = vmatpush2.bf16.msra.mxu0 %v2303
        %7112 = vmatprep.subr.bf16.mxu0 %v2300
        %7113 = vmatpush2.bf16.msra.mxu0 %v2299
        %7114 = vmatprep.subr.bf16.mxu0 %v2296
        %7115 = vmatpush2.bf16.msra.mxu0 %v2295
        %7116 = vmatprep.subr.bf16.mxu0 %v2292
        %7117 = vmatpush2.bf16.msra.mxu0 %v2291
        %7118 = vmatprep.subr.bf16.mxu0 %v2288
        %7119 = vmatpush2.bf16.msra.mxu0 %v2287
        %7120 = vmatprep.mubr.bf16.mxu0 %v4575
        %7121 = vmatmul.mubr.bf16.gmra.mxu0 %v4561
        %v7122 = vpop.f32.mrf.mxu0
        %v7123 = vadd.f32 %v7082, %v7122
        %v7124 = vpop.f32.mrf.mxu0
        %v7125 = vadd.f32 %v7084, %v7124
        %v7126 = vpop.f32.mrf.mxu0
        %v7127 = vpop.f32.mrf.mxu0
        %7128 = vdwg.mxu0
        %7129 = vmatprep.subr.bf16.mxu0 %v2348
        %7130 = vmatpush1.bf16.msra.mxu0 %v2347
        %7131 = vmatprep.subr.bf16.mxu0 %v2344
        %7132 = vmatpush1.bf16.msra.mxu0 %v2343
        %7133 = vmatprep.subr.bf16.mxu0 %v2340
        %7134 = vmatpush1.bf16.msra.mxu0 %v2339
        %7135 = vmatprep.subr.bf16.mxu0 %v2336
        %7136 = vmatpush1.bf16.msra.mxu0 %v2335
        %7137 = vmatprep.subr.bf16.mxu0 %v2332
        %7138 = vmatpush1.bf16.msra.mxu0 %v2331
        %7139 = vmatprep.subr.bf16.mxu0 %v2328
        %7140 = vmatpush1.bf16.msra.mxu0 %v2327
        %7141 = vmatprep.subr.bf16.mxu0 %v2324
        %7142 = vmatpush1.bf16.msra.mxu0 %v2323
        %7143 = vmatprep.subr.bf16.mxu0 %v2320
        %7144 = vmatpush1.bf16.msra.mxu0 %v2319
        %7145 = vmatprep.subr.bf16.mxu0 %v2380
        %7146 = vmatpush2.bf16.msra.mxu0 %v2379
        %7147 = vmatprep.subr.bf16.mxu0 %v2376
        %7148 = vmatpush2.bf16.msra.mxu0 %v2375
        %7149 = vmatprep.subr.bf16.mxu0 %v2372
        %7150 = vmatpush2.bf16.msra.mxu0 %v2371
        %7151 = vmatprep.subr.bf16.mxu0 %v2368
        %7152 = vmatpush2.bf16.msra.mxu0 %v2367
        %7153 = vmatprep.subr.bf16.mxu0 %v2364
        %7154 = vmatpush2.bf16.msra.mxu0 %v2363
        %7155 = vmatprep.subr.bf16.mxu0 %v2360
        %7156 = vmatpush2.bf16.msra.mxu0 %v2359
        %7157 = vmatprep.subr.bf16.mxu0 %v2356
        %7158 = vmatpush2.bf16.msra.mxu0 %v2355
        %7159 = vmatprep.subr.bf16.mxu0 %v2352
        %7160 = vmatpush2.bf16.msra.mxu0 %v2351
        %7161 = vmatprep.mubr.bf16.mxu0 %v4585
        %7162 = vmatmul.mubr.bf16.gmra.mxu0 %v4583
        %v7163 = vpop.f32.mrf.mxu0
        %v7164 = vadd.f32 %v7123, %v7163
        %v7165 = vpop.f32.mrf.mxu0
        %v7166 = vadd.f32 %v7125, %v7165
        %v7167 = vpop.f32.mrf.mxu0
        %v7168 = vpop.f32.mrf.mxu0
        %7169 = vdwg.mxu0
        %7170 = vmatprep.subr.bf16.mxu0 %v2412
        %7171 = vmatpush1.bf16.msra.mxu0 %v2411
        %7172 = vmatprep.subr.bf16.mxu0 %v2408
        %7173 = vmatpush1.bf16.msra.mxu0 %v2407
        %7174 = vmatprep.subr.bf16.mxu0 %v2404
        %7175 = vmatpush1.bf16.msra.mxu0 %v2403
        %7176 = vmatprep.subr.bf16.mxu0 %v2400
        %7177 = vmatpush1.bf16.msra.mxu0 %v2399
        %7178 = vmatprep.subr.bf16.mxu0 %v2396
        %7179 = vmatpush1.bf16.msra.mxu0 %v2395
        %7180 = vmatprep.subr.bf16.mxu0 %v2392
        %7181 = vmatpush1.bf16.msra.mxu0 %v2391
        %7182 = vmatprep.subr.bf16.mxu0 %v2388
        %7183 = vmatpush1.bf16.msra.mxu0 %v2387
        %7184 = vmatprep.subr.bf16.mxu0 %v2384
        %7185 = vmatpush1.bf16.msra.mxu0 %v2383
        %7186 = vmatprep.subr.bf16.mxu0 %v2444
        %7187 = vmatpush2.bf16.msra.mxu0 %v2443
        %7188 = vmatprep.subr.bf16.mxu0 %v2440
        %7189 = vmatpush2.bf16.msra.mxu0 %v2439
        %7190 = vmatprep.subr.bf16.mxu0 %v2436
        %7191 = vmatpush2.bf16.msra.mxu0 %v2435
        %7192 = vmatprep.subr.bf16.mxu0 %v2432
        %7193 = vmatpush2.bf16.msra.mxu0 %v2431
        %7194 = vmatprep.subr.bf16.mxu0 %v2428
        %7195 = vmatpush2.bf16.msra.mxu0 %v2427
        %7196 = vmatprep.subr.bf16.mxu0 %v2424
        %7197 = vmatpush2.bf16.msra.mxu0 %v2423
        %7198 = vmatprep.subr.bf16.mxu0 %v2420
        %7199 = vmatpush2.bf16.msra.mxu0 %v2419
        %7200 = vmatprep.subr.bf16.mxu0 %v2416
        %7201 = vmatpush2.bf16.msra.mxu0 %v2415
        %7202 = vmatprep.mubr.bf16.mxu0 %v4582
        %7203 = vmatmul.mubr.bf16.gmra.mxu0 %v4568
        %v7204 = vpop.f32.mrf.mxu0
        %v7205 = vadd.f32 %v7164, %v7204
        %v7206 = vpop.f32.mrf.mxu0
        %v7207 = vadd.f32 %v7166, %v7206
        %v7208 = vpop.f32.mrf.mxu0
        %v7209 = vpop.f32.mrf.mxu0
        %7210 = vdwg.mxu0
        %7211 = vmatprep.subr.bf16.mxu0 %v2476
        %7212 = vmatpush1.bf16.msra.mxu0 %v2475
        %7213 = vmatprep.subr.bf16.mxu0 %v2472
        %7214 = vmatpush1.bf16.msra.mxu0 %v2471
        %7215 = vmatprep.subr.bf16.mxu0 %v2468
        %7216 = vmatpush1.bf16.msra.mxu0 %v2467
        %7217 = vmatprep.subr.bf16.mxu0 %v2464
        %7218 = vmatpush1.bf16.msra.mxu0 %v2463
        %7219 = vmatprep.subr.bf16.mxu0 %v2460
        %7220 = vmatpush1.bf16.msra.mxu0 %v2459
        %7221 = vmatprep.subr.bf16.mxu0 %v2456
        %7222 = vmatpush1.bf16.msra.mxu0 %v2455
        %7223 = vmatprep.subr.bf16.mxu0 %v2452
        %7224 = vmatpush1.bf16.msra.mxu0 %v2451
        %7225 = vmatprep.subr.bf16.mxu0 %v2448
        %7226 = vmatpush1.bf16.msra.mxu0 %v2447
        %7227 = vmatprep.subr.bf16.mxu0 %v2508
        %7228 = vmatpush2.bf16.msra.mxu0 %v2507
        %7229 = vmatprep.subr.bf16.mxu0 %v2504
        %7230 = vmatpush2.bf16.msra.mxu0 %v2503
        %7231 = vmatprep.subr.bf16.mxu0 %v2500
        %7232 = vmatpush2.bf16.msra.mxu0 %v2499
        %7233 = vmatprep.subr.bf16.mxu0 %v2496
        %7234 = vmatpush2.bf16.msra.mxu0 %v2495
        %7235 = vmatprep.subr.bf16.mxu0 %v2492
        %7236 = vmatpush2.bf16.msra.mxu0 %v2491
        %7237 = vmatprep.subr.bf16.mxu0 %v2488
        %7238 = vmatpush2.bf16.msra.mxu0 %v2487
        %7239 = vmatprep.subr.bf16.mxu0 %v2484
        %7240 = vmatpush2.bf16.msra.mxu0 %v2483
        %7241 = vmatprep.subr.bf16.mxu0 %v2480
        %7242 = vmatpush2.bf16.msra.mxu0 %v2479
        %7243 = vmatprep.mubr.bf16.mxu0 %v4586
        %7244 = vmatmul.mubr.bf16.gmra.mxu0 %v4584
        %v7245 = vpop.f32.mrf.mxu0
        %v7246 = vadd.f32 %v7205, %v7245
        %v7247 = vpop.f32.mrf.mxu0
        %v7248 = vadd.f32 %v7207, %v7247
        %v7249 = vpop.f32.mrf.mxu0
        %v7250 = vpop.f32.mrf.mxu0
        %7251 = vdwg.mxu0
        %7252 = vmatprep.subr.bf16.mxu0 %v2540
        %7253 = vmatpush1.bf16.msra.mxu0 %v2539
        %7254 = vmatprep.subr.bf16.mxu0 %v2536
        %7255 = vmatpush1.bf16.msra.mxu0 %v2535
        %7256 = vmatprep.subr.bf16.mxu0 %v2532
        %7257 = vmatpush1.bf16.msra.mxu0 %v2531
        %7258 = vmatprep.subr.bf16.mxu0 %v2528
        %7259 = vmatpush1.bf16.msra.mxu0 %v2527
        %7260 = vmatprep.subr.bf16.mxu0 %v2524
        %7261 = vmatpush1.bf16.msra.mxu0 %v2523
        %7262 = vmatprep.subr.bf16.mxu0 %v2520
        %7263 = vmatpush1.bf16.msra.mxu0 %v2519
        %7264 = vmatprep.subr.bf16.mxu0 %v2516
        %7265 = vmatpush1.bf16.msra.mxu0 %v2515
        %7266 = vmatprep.subr.bf16.mxu0 %v2512
        %7267 = vmatpush1.bf16.msra.mxu0 %v2511
        %7268 = vmatprep.subr.bf16.mxu0 %v2572
        %7269 = vmatpush2.bf16.msra.mxu0 %v2571
        %7270 = vmatprep.subr.bf16.mxu0 %v2568
        %7271 = vmatpush2.bf16.msra.mxu0 %v2567
        %7272 = vmatprep.subr.bf16.mxu0 %v2564
        %7273 = vmatpush2.bf16.msra.mxu0 %v2563
        %7274 = vmatprep.subr.bf16.mxu0 %v2560
        %7275 = vmatpush2.bf16.msra.mxu0 %v2559
        %7276 = vmatprep.subr.bf16.mxu0 %v2556
        %7277 = vmatpush2.bf16.msra.mxu0 %v2555
        %7278 = vmatprep.subr.bf16.mxu0 %v2552
        %7279 = vmatpush2.bf16.msra.mxu0 %v2551
        %7280 = vmatprep.subr.bf16.mxu0 %v2548
        %7281 = vmatpush2.bf16.msra.mxu0 %v2547
        %7282 = vmatprep.subr.bf16.mxu0 %v2544
        %7283 = vmatpush2.bf16.msra.mxu0 %v2543
        %7284 = vmatprep.mubr.bf16.mxu0 %v4624
        %7285 = vmatmul.mubr.bf16.gmra.mxu0 %v4610
        %v7286 = vpop.f32.mrf.mxu0
        %v7287 = vadd.f32 %v7246, %v7286
        %v7288 = vpop.f32.mrf.mxu0
        %v7289 = vadd.f32 %v7248, %v7288
        %v7290 = vpop.f32.mrf.mxu0
        %v7291 = vpop.f32.mrf.mxu0
        %7292 = vdwg.mxu0
        %7293 = vmatprep.subr.bf16.mxu0 %v2604
        %7294 = vmatpush1.bf16.msra.mxu0 %v2603
        %7295 = vmatprep.subr.bf16.mxu0 %v2600
        %7296 = vmatpush1.bf16.msra.mxu0 %v2599
        %7297 = vmatprep.subr.bf16.mxu0 %v2596
        %7298 = vmatpush1.bf16.msra.mxu0 %v2595
        %7299 = vmatprep.subr.bf16.mxu0 %v2592
        %7300 = vmatpush1.bf16.msra.mxu0 %v2591
        %7301 = vmatprep.subr.bf16.mxu0 %v2588
        %7302 = vmatpush1.bf16.msra.mxu0 %v2587
        %7303 = vmatprep.subr.bf16.mxu0 %v2584
        %7304 = vmatpush1.bf16.msra.mxu0 %v2583
        %7305 = vmatprep.subr.bf16.mxu0 %v2580
        %7306 = vmatpush1.bf16.msra.mxu0 %v2579
        %7307 = vmatprep.subr.bf16.mxu0 %v2576
        %7308 = vmatpush1.bf16.msra.mxu0 %v2575
        %7309 = vmatprep.subr.bf16.mxu0 %v2636
        %7310 = vmatpush2.bf16.msra.mxu0 %v2635
        %7311 = vmatprep.subr.bf16.mxu0 %v2632
        %7312 = vmatpush2.bf16.msra.mxu0 %v2631
        %7313 = vmatprep.subr.bf16.mxu0 %v2628
        %7314 = vmatpush2.bf16.msra.mxu0 %v2627
        %7315 = vmatprep.subr.bf16.mxu0 %v2624
        %7316 = vmatpush2.bf16.msra.mxu0 %v2623
        %7317 = vmatprep.subr.bf16.mxu0 %v2620
        %7318 = vmatpush2.bf16.msra.mxu0 %v2619
        %7319 = vmatprep.subr.bf16.mxu0 %v2616
        %7320 = vmatpush2.bf16.msra.mxu0 %v2615
        %7321 = vmatprep.subr.bf16.mxu0 %v2612
        %7322 = vmatpush2.bf16.msra.mxu0 %v2611
        %7323 = vmatprep.subr.bf16.mxu0 %v2608
        %7324 = vmatpush2.bf16.msra.mxu0 %v2607
        %7325 = vmatprep.mubr.bf16.mxu0 %v4634
        %7326 = vmatmul.mubr.bf16.gmra.mxu0 %v4632
        %v7327 = vpop.f32.mrf.mxu0
        %v7328 = vadd.f32 %v7287, %v7327
        %v7329 = vpop.f32.mrf.mxu0
        %v7330 = vadd.f32 %v7289, %v7329
        %v7331 = vpop.f32.mrf.mxu0
        %v7332 = vpop.f32.mrf.mxu0
        %7333 = vdwg.mxu0
        %7334 = vmatprep.subr.bf16.mxu0 %v2668
        %7335 = vmatpush1.bf16.msra.mxu0 %v2667
        %7336 = vmatprep.subr.bf16.mxu0 %v2664
        %7337 = vmatpush1.bf16.msra.mxu0 %v2663
        %7338 = vmatprep.subr.bf16.mxu0 %v2660
        %7339 = vmatpush1.bf16.msra.mxu0 %v2659
        %7340 = vmatprep.subr.bf16.mxu0 %v2656
        %7341 = vmatpush1.bf16.msra.mxu0 %v2655
        %7342 = vmatprep.subr.bf16.mxu0 %v2652
        %7343 = vmatpush1.bf16.msra.mxu0 %v2651
        %7344 = vmatprep.subr.bf16.mxu0 %v2648
        %7345 = vmatpush1.bf16.msra.mxu0 %v2647
        %7346 = vmatprep.subr.bf16.mxu0 %v2644
        %7347 = vmatpush1.bf16.msra.mxu0 %v2643
        %7348 = vmatprep.subr.bf16.mxu0 %v2640
        %7349 = vmatpush1.bf16.msra.mxu0 %v2639
        %7350 = vmatprep.subr.bf16.mxu0 %v2700
        %7351 = vmatpush2.bf16.msra.mxu0 %v2699
        %7352 = vmatprep.subr.bf16.mxu0 %v2696
        %7353 = vmatpush2.bf16.msra.mxu0 %v2695
        %7354 = vmatprep.subr.bf16.mxu0 %v2692
        %7355 = vmatpush2.bf16.msra.mxu0 %v2691
        %7356 = vmatprep.subr.bf16.mxu0 %v2688
        %7357 = vmatpush2.bf16.msra.mxu0 %v2687
        %7358 = vmatprep.subr.bf16.mxu0 %v2684
        %7359 = vmatpush2.bf16.msra.mxu0 %v2683
        %7360 = vmatprep.subr.bf16.mxu0 %v2680
        %7361 = vmatpush2.bf16.msra.mxu0 %v2679
        %7362 = vmatprep.subr.bf16.mxu0 %v2676
        %7363 = vmatpush2.bf16.msra.mxu0 %v2675
        %7364 = vmatprep.subr.bf16.mxu0 %v2672
        %7365 = vmatpush2.bf16.msra.mxu0 %v2671
        %7366 = vmatprep.mubr.bf16.mxu0 %v4631
        %7367 = vmatmul.mubr.bf16.gmra.mxu0 %v4617
        %v7368 = vpop.f32.mrf.mxu0
        %v7369 = vadd.f32 %v7328, %v7368
        %v7370 = vpop.f32.mrf.mxu0
        %v7371 = vadd.f32 %v7330, %v7370
        %v7372 = vpop.f32.mrf.mxu0
        %v7373 = vpop.f32.mrf.mxu0
        %7374 = vdwg.mxu0
        %7375 = vmatprep.subr.bf16.mxu0 %v2732
        %7376 = vmatpush1.bf16.msra.mxu0 %v2731
        %7377 = vmatprep.subr.bf16.mxu0 %v2728
        %7378 = vmatpush1.bf16.msra.mxu0 %v2727
        %7379 = vmatprep.subr.bf16.mxu0 %v2724
        %7380 = vmatpush1.bf16.msra.mxu0 %v2723
        %7381 = vmatprep.subr.bf16.mxu0 %v2720
        %7382 = vmatpush1.bf16.msra.mxu0 %v2719
        %7383 = vmatprep.subr.bf16.mxu0 %v2716
        %7384 = vmatpush1.bf16.msra.mxu0 %v2715
        %7385 = vmatprep.subr.bf16.mxu0 %v2712
        %7386 = vmatpush1.bf16.msra.mxu0 %v2711
        %7387 = vmatprep.subr.bf16.mxu0 %v2708
        %7388 = vmatpush1.bf16.msra.mxu0 %v2707
        %7389 = vmatprep.subr.bf16.mxu0 %v2704
        %7390 = vmatpush1.bf16.msra.mxu0 %v2703
        %7391 = vmatprep.subr.bf16.mxu0 %v2764
        %7392 = vmatpush2.bf16.msra.mxu0 %v2763
        %7393 = vmatprep.subr.bf16.mxu0 %v2760
        %7394 = vmatpush2.bf16.msra.mxu0 %v2759
        %7395 = vmatprep.subr.bf16.mxu0 %v2756
        %7396 = vmatpush2.bf16.msra.mxu0 %v2755
        %7397 = vmatprep.subr.bf16.mxu0 %v2752
        %7398 = vmatpush2.bf16.msra.mxu0 %v2751
        %7399 = vmatprep.subr.bf16.mxu0 %v2748
        %7400 = vmatpush2.bf16.msra.mxu0 %v2747
        %7401 = vmatprep.subr.bf16.mxu0 %v2744
        %7402 = vmatpush2.bf16.msra.mxu0 %v2743
        %7403 = vmatprep.subr.bf16.mxu0 %v2740
        %7404 = vmatpush2.bf16.msra.mxu0 %v2739
        %7405 = vmatprep.subr.bf16.mxu0 %v2736
        %7406 = vmatpush2.bf16.msra.mxu0 %v2735
        %7407 = vmatprep.mubr.bf16.mxu0 %v4635
        %7408 = vmatmul.mubr.bf16.gmra.mxu0 %v4633
        %v7409 = vpop.f32.mrf.mxu0
        %v7410 = vadd.f32 %v7369, %v7409
        %v7411 = vpop.f32.mrf.mxu0
        %v7412 = vadd.f32 %v7371, %v7411
        %v7413 = vpop.f32.mrf.mxu0
        %v7414 = vpop.f32.mrf.mxu0
        %7415 = vdwg.mxu0
        %7416 = vmatprep.subr.bf16.mxu0 %v2796
        %7417 = vmatpush1.bf16.msra.mxu0 %v2795
        %7418 = vmatprep.subr.bf16.mxu0 %v2792
        %7419 = vmatpush1.bf16.msra.mxu0 %v2791
        %7420 = vmatprep.subr.bf16.mxu0 %v2788
        %7421 = vmatpush1.bf16.msra.mxu0 %v2787
        %7422 = vmatprep.subr.bf16.mxu0 %v2784
        %7423 = vmatpush1.bf16.msra.mxu0 %v2783
        %7424 = vmatprep.subr.bf16.mxu0 %v2780
        %7425 = vmatpush1.bf16.msra.mxu0 %v2779
        %7426 = vmatprep.subr.bf16.mxu0 %v2776
        %7427 = vmatpush1.bf16.msra.mxu0 %v2775
        %7428 = vmatprep.subr.bf16.mxu0 %v2772
        %7429 = vmatpush1.bf16.msra.mxu0 %v2771
        %7430 = vmatprep.subr.bf16.mxu0 %v2768
        %7431 = vmatpush1.bf16.msra.mxu0 %v2767
        %7432 = vmatprep.subr.bf16.mxu0 %v2828
        %7433 = vmatpush2.bf16.msra.mxu0 %v2827
        %7434 = vmatprep.subr.bf16.mxu0 %v2824
        %7435 = vmatpush2.bf16.msra.mxu0 %v2823
        %7436 = vmatprep.subr.bf16.mxu0 %v2820
        %7437 = vmatpush2.bf16.msra.mxu0 %v2819
        %7438 = vmatprep.subr.bf16.mxu0 %v2816
        %7439 = vmatpush2.bf16.msra.mxu0 %v2815
        %7440 = vmatprep.subr.bf16.mxu0 %v2812
        %7441 = vmatpush2.bf16.msra.mxu0 %v2811
        %7442 = vmatprep.subr.bf16.mxu0 %v2808
        %7443 = vmatpush2.bf16.msra.mxu0 %v2807
        %7444 = vmatprep.subr.bf16.mxu0 %v2804
        %7445 = vmatpush2.bf16.msra.mxu0 %v2803
        %7446 = vmatprep.subr.bf16.mxu0 %v2800
        %7447 = vmatpush2.bf16.msra.mxu0 %v2799
        %7448 = vmatprep.mubr.bf16.mxu0 %v4673
        %7449 = vmatmul.mubr.bf16.gmra.mxu0 %v4659
        %v7450 = vpop.f32.mrf.mxu0
        %v7451 = vadd.f32 %v7410, %v7450
        %v7452 = vpop.f32.mrf.mxu0
        %v7453 = vadd.f32 %v7412, %v7452
        %v7454 = vpop.f32.mrf.mxu0
        %v7455 = vpop.f32.mrf.mxu0
        %7456 = vdwg.mxu0
        %7457 = vmatprep.subr.bf16.mxu0 %v2860
        %7458 = vmatpush1.bf16.msra.mxu0 %v2859
        %7459 = vmatprep.subr.bf16.mxu0 %v2856
        %7460 = vmatpush1.bf16.msra.mxu0 %v2855
        %7461 = vmatprep.subr.bf16.mxu0 %v2852
        %7462 = vmatpush1.bf16.msra.mxu0 %v2851
        %7463 = vmatprep.subr.bf16.mxu0 %v2848
        %7464 = vmatpush1.bf16.msra.mxu0 %v2847
        %7465 = vmatprep.subr.bf16.mxu0 %v2844
        %7466 = vmatpush1.bf16.msra.mxu0 %v2843
        %7467 = vmatprep.subr.bf16.mxu0 %v2840
        %7468 = vmatpush1.bf16.msra.mxu0 %v2839
        %7469 = vmatprep.subr.bf16.mxu0 %v2836
        %7470 = vmatpush1.bf16.msra.mxu0 %v2835
        %7471 = vmatprep.subr.bf16.mxu0 %v2832
        %7472 = vmatpush1.bf16.msra.mxu0 %v2831
        %7473 = vmatprep.subr.bf16.mxu0 %v2892
        %7474 = vmatpush2.bf16.msra.mxu0 %v2891
        %7475 = vmatprep.subr.bf16.mxu0 %v2888
        %7476 = vmatpush2.bf16.msra.mxu0 %v2887
        %7477 = vmatprep.subr.bf16.mxu0 %v2884
        %7478 = vmatpush2.bf16.msra.mxu0 %v2883
        %7479 = vmatprep.subr.bf16.mxu0 %v2880
        %7480 = vmatpush2.bf16.msra.mxu0 %v2879
        %7481 = vmatprep.subr.bf16.mxu0 %v2876
        %7482 = vmatpush2.bf16.msra.mxu0 %v2875
        %7483 = vmatprep.subr.bf16.mxu0 %v2872
        %7484 = vmatpush2.bf16.msra.mxu0 %v2871
        %7485 = vmatprep.subr.bf16.mxu0 %v2868
        %7486 = vmatpush2.bf16.msra.mxu0 %v2867
        %7487 = vmatprep.subr.bf16.mxu0 %v2864
        %7488 = vmatpush2.bf16.msra.mxu0 %v2863
        %7489 = vmatprep.mubr.bf16.mxu0 %v4683
        %7490 = vmatmul.mubr.bf16.gmra.mxu0 %v4681
        %v7491 = vpop.f32.mrf.mxu0
        %v7492 = vadd.f32 %v7451, %v7491
        %v7493 = vpop.f32.mrf.mxu0
        %v7494 = vadd.f32 %v7453, %v7493
        %v7495 = vpop.f32.mrf.mxu0
        %v7496 = vpop.f32.mrf.mxu0
        %7497 = vdwg.mxu0
        %7498 = vmatprep.subr.bf16.mxu0 %v2924
        %7499 = vmatpush1.bf16.msra.mxu0 %v2923
        %7500 = vmatprep.subr.bf16.mxu0 %v2920
        %7501 = vmatpush1.bf16.msra.mxu0 %v2919
        %7502 = vmatprep.subr.bf16.mxu0 %v2916
        %7503 = vmatpush1.bf16.msra.mxu0 %v2915
        %7504 = vmatprep.subr.bf16.mxu0 %v2912
        %7505 = vmatpush1.bf16.msra.mxu0 %v2911
        %7506 = vmatprep.subr.bf16.mxu0 %v2908
        %7507 = vmatpush1.bf16.msra.mxu0 %v2907
        %7508 = vmatprep.subr.bf16.mxu0 %v2904
        %7509 = vmatpush1.bf16.msra.mxu0 %v2903
        %7510 = vmatprep.subr.bf16.mxu0 %v2900
        %7511 = vmatpush1.bf16.msra.mxu0 %v2899
        %7512 = vmatprep.subr.bf16.mxu0 %v2896
        %7513 = vmatpush1.bf16.msra.mxu0 %v2895
        %7514 = vmatprep.subr.bf16.mxu0 %v2956
        %7515 = vmatpush2.bf16.msra.mxu0 %v2955
        %7516 = vmatprep.subr.bf16.mxu0 %v2952
        %7517 = vmatpush2.bf16.msra.mxu0 %v2951
        %7518 = vmatprep.subr.bf16.mxu0 %v2948
        %7519 = vmatpush2.bf16.msra.mxu0 %v2947
        %7520 = vmatprep.subr.bf16.mxu0 %v2944
        %7521 = vmatpush2.bf16.msra.mxu0 %v2943
        %7522 = vmatprep.subr.bf16.mxu0 %v2940
        %7523 = vmatpush2.bf16.msra.mxu0 %v2939
        %7524 = vmatprep.subr.bf16.mxu0 %v2936
        %7525 = vmatpush2.bf16.msra.mxu0 %v2935
        %7526 = vmatprep.subr.bf16.mxu0 %v2932
        %7527 = vmatpush2.bf16.msra.mxu0 %v2931
        %7528 = vmatprep.subr.bf16.mxu0 %v2928
        %7529 = vmatpush2.bf16.msra.mxu0 %v2927
        %7530 = vmatprep.mubr.bf16.mxu0 %v4680
        %7531 = vmatmul.mubr.bf16.gmra.mxu0 %v4666
        %v7532 = vpop.f32.mrf.mxu0
        %v7533 = vadd.f32 %v7492, %v7532
        %v7534 = vpop.f32.mrf.mxu0
        %v7535 = vadd.f32 %v7494, %v7534
        %v7536 = vpop.f32.mrf.mxu0
        %v7537 = vpop.f32.mrf.mxu0
        %7538 = vdwg.mxu0
        %7539 = vmatprep.subr.bf16.mxu0 %v2988
        %7540 = vmatpush1.bf16.msra.mxu0 %v2987
        %7541 = vmatprep.subr.bf16.mxu0 %v2984
        %7542 = vmatpush1.bf16.msra.mxu0 %v2983
        %7543 = vmatprep.subr.bf16.mxu0 %v2980
        %7544 = vmatpush1.bf16.msra.mxu0 %v2979
        %7545 = vmatprep.subr.bf16.mxu0 %v2976
        %7546 = vmatpush1.bf16.msra.mxu0 %v2975
        %7547 = vmatprep.subr.bf16.mxu0 %v2972
        %7548 = vmatpush1.bf16.msra.mxu0 %v2971
        %7549 = vmatprep.subr.bf16.mxu0 %v2968
        %7550 = vmatpush1.bf16.msra.mxu0 %v2967
        %7551 = vmatprep.subr.bf16.mxu0 %v2964
        %7552 = vmatpush1.bf16.msra.mxu0 %v2963
        %7553 = vmatprep.subr.bf16.mxu0 %v2960
        %7554 = vmatpush1.bf16.msra.mxu0 %v2959
        %7555 = vmatprep.subr.bf16.mxu0 %v3020
        %7556 = vmatpush2.bf16.msra.mxu0 %v3019
        %7557 = vmatprep.subr.bf16.mxu0 %v3016
        %7558 = vmatpush2.bf16.msra.mxu0 %v3015
        %7559 = vmatprep.subr.bf16.mxu0 %v3012
        %7560 = vmatpush2.bf16.msra.mxu0 %v3011
        %7561 = vmatprep.subr.bf16.mxu0 %v3008
        %7562 = vmatpush2.bf16.msra.mxu0 %v3007
        %7563 = vmatprep.subr.bf16.mxu0 %v3004
        %7564 = vmatpush2.bf16.msra.mxu0 %v3003
        %7565 = vmatprep.subr.bf16.mxu0 %v3000
        %7566 = vmatpush2.bf16.msra.mxu0 %v2999
        %7567 = vmatprep.subr.bf16.mxu0 %v2996
        %7568 = vmatpush2.bf16.msra.mxu0 %v2995
        %7569 = vmatprep.subr.bf16.mxu0 %v2992
        %7570 = vmatpush2.bf16.msra.mxu0 %v2991
        %7571 = vmatprep.mubr.bf16.mxu0 %v4684
        %7572 = vmatmul.mubr.bf16.gmra.mxu0 %v4682
        %v7573 = vpop.f32.mrf.mxu0
        %v7574 = vadd.f32 %v7533, %v7573
        %v7575 = vpop.f32.mrf.mxu0
        %v7576 = vadd.f32 %v7535, %v7575
        %v7577 = vpop.f32.mrf.mxu0
        %v7578 = vpop.f32.mrf.mxu0
        %7579 = vdwg.mxu0
        %7580 = vmatprep.subr.bf16.mxu0 %v3052
        %7581 = vmatpush1.bf16.msra.mxu0 %v3051
        %7582 = vmatprep.subr.bf16.mxu0 %v3048
        %7583 = vmatpush1.bf16.msra.mxu0 %v3047
        %7584 = vmatprep.subr.bf16.mxu0 %v3044
        %7585 = vmatpush1.bf16.msra.mxu0 %v3043
        %7586 = vmatprep.subr.bf16.mxu0 %v3040
        %7587 = vmatpush1.bf16.msra.mxu0 %v3039
        %7588 = vmatprep.subr.bf16.mxu0 %v3036
        %7589 = vmatpush1.bf16.msra.mxu0 %v3035
        %7590 = vmatprep.subr.bf16.mxu0 %v3032
        %7591 = vmatpush1.bf16.msra.mxu0 %v3031
        %7592 = vmatprep.subr.bf16.mxu0 %v3028
        %7593 = vmatpush1.bf16.msra.mxu0 %v3027
        %7594 = vmatprep.subr.bf16.mxu0 %v3024
        %7595 = vmatpush1.bf16.msra.mxu0 %v3023
        %7596 = vmatprep.subr.bf16.mxu0 %v3084
        %7597 = vmatpush2.bf16.msra.mxu0 %v3083
        %7598 = vmatprep.subr.bf16.mxu0 %v3080
        %7599 = vmatpush2.bf16.msra.mxu0 %v3079
        %7600 = vmatprep.subr.bf16.mxu0 %v3076
        %7601 = vmatpush2.bf16.msra.mxu0 %v3075
        %7602 = vmatprep.subr.bf16.mxu0 %v3072
        %7603 = vmatpush2.bf16.msra.mxu0 %v3071
        %7604 = vmatprep.subr.bf16.mxu0 %v3068
        %7605 = vmatpush2.bf16.msra.mxu0 %v3067
        %7606 = vmatprep.subr.bf16.mxu0 %v3064
        %7607 = vmatpush2.bf16.msra.mxu0 %v3063
        %7608 = vmatprep.subr.bf16.mxu0 %v3060
        %7609 = vmatpush2.bf16.msra.mxu0 %v3059
        %7610 = vmatprep.subr.bf16.mxu0 %v3056
        %7611 = vmatpush2.bf16.msra.mxu0 %v3055
        %7612 = vmatprep.mubr.bf16.mxu0 %v4722
        %7613 = vmatmul.mubr.bf16.gmra.mxu0 %v4708
        %v7614 = vpop.f32.mrf.mxu0
        %v7615 = vadd.f32 %v7574, %v7614
        %v7616 = vpop.f32.mrf.mxu0
        %v7617 = vadd.f32 %v7576, %v7616
        %v7618 = vpop.f32.mrf.mxu0
        %v7619 = vpop.f32.mrf.mxu0
        %7620 = vdwg.mxu0
        %7621 = vmatprep.subr.bf16.mxu0 %v3116
        %7622 = vmatpush1.bf16.msra.mxu0 %v3115
        %7623 = vmatprep.subr.bf16.mxu0 %v3112
        %7624 = vmatpush1.bf16.msra.mxu0 %v3111
        %7625 = vmatprep.subr.bf16.mxu0 %v3108
        %7626 = vmatpush1.bf16.msra.mxu0 %v3107
        %7627 = vmatprep.subr.bf16.mxu0 %v3104
        %7628 = vmatpush1.bf16.msra.mxu0 %v3103
        %7629 = vmatprep.subr.bf16.mxu0 %v3100
        %7630 = vmatpush1.bf16.msra.mxu0 %v3099
        %7631 = vmatprep.subr.bf16.mxu0 %v3096
        %7632 = vmatpush1.bf16.msra.mxu0 %v3095
        %7633 = vmatprep.subr.bf16.mxu0 %v3092
        %7634 = vmatpush1.bf16.msra.mxu0 %v3091
        %7635 = vmatprep.subr.bf16.mxu0 %v3088
        %7636 = vmatpush1.bf16.msra.mxu0 %v3087
        %7637 = vmatprep.subr.bf16.mxu0 %v3148
        %7638 = vmatpush2.bf16.msra.mxu0 %v3147
        %7639 = vmatprep.subr.bf16.mxu0 %v3144
        %7640 = vmatpush2.bf16.msra.mxu0 %v3143
        %7641 = vmatprep.subr.bf16.mxu0 %v3140
        %7642 = vmatpush2.bf16.msra.mxu0 %v3139
        %7643 = vmatprep.subr.bf16.mxu0 %v3136
        %7644 = vmatpush2.bf16.msra.mxu0 %v3135
        %7645 = vmatprep.subr.bf16.mxu0 %v3132
        %7646 = vmatpush2.bf16.msra.mxu0 %v3131
        %7647 = vmatprep.subr.bf16.mxu0 %v3128
        %7648 = vmatpush2.bf16.msra.mxu0 %v3127
        %7649 = vmatprep.subr.bf16.mxu0 %v3124
        %7650 = vmatpush2.bf16.msra.mxu0 %v3123
        %7651 = vmatprep.subr.bf16.mxu0 %v3120
        %7652 = vmatpush2.bf16.msra.mxu0 %v3119
        %7653 = vmatprep.mubr.bf16.mxu0 %v4732
        %7654 = vmatmul.mubr.bf16.gmra.mxu0 %v4730
        %v7655 = vpop.f32.mrf.mxu0
        %v7656 = vadd.f32 %v7615, %v7655
        %v7657 = vpop.f32.mrf.mxu0
        %v7658 = vadd.f32 %v7617, %v7657
        %v7659 = vpop.f32.mrf.mxu0
        %v7660 = vpop.f32.mrf.mxu0
        %7661 = vdwg.mxu0
        %7662 = vmatprep.subr.bf16.mxu0 %v3180
        %7663 = vmatpush1.bf16.msra.mxu0 %v3179
        %7664 = vmatprep.subr.bf16.mxu0 %v3176
        %7665 = vmatpush1.bf16.msra.mxu0 %v3175
        %7666 = vmatprep.subr.bf16.mxu0 %v3172
        %7667 = vmatpush1.bf16.msra.mxu0 %v3171
        %7668 = vmatprep.subr.bf16.mxu0 %v3168
        %7669 = vmatpush1.bf16.msra.mxu0 %v3167
        %7670 = vmatprep.subr.bf16.mxu0 %v3164
        %7671 = vmatpush1.bf16.msra.mxu0 %v3163
        %7672 = vmatprep.subr.bf16.mxu0 %v3160
        %7673 = vmatpush1.bf16.msra.mxu0 %v3159
        %7674 = vmatprep.subr.bf16.mxu0 %v3156
        %7675 = vmatpush1.bf16.msra.mxu0 %v3155
        %7676 = vmatprep.subr.bf16.mxu0 %v3152
        %7677 = vmatpush1.bf16.msra.mxu0 %v3151
        %7678 = vmatprep.subr.bf16.mxu0 %v3212
        %7679 = vmatpush2.bf16.msra.mxu0 %v3211
        %7680 = vmatprep.subr.bf16.mxu0 %v3208
        %7681 = vmatpush2.bf16.msra.mxu0 %v3207
        %7682 = vmatprep.subr.bf16.mxu0 %v3204
        %7683 = vmatpush2.bf16.msra.mxu0 %v3203
        %7684 = vmatprep.subr.bf16.mxu0 %v3200
        %7685 = vmatpush2.bf16.msra.mxu0 %v3199
        %7686 = vmatprep.subr.bf16.mxu0 %v3196
        %7687 = vmatpush2.bf16.msra.mxu0 %v3195
        %7688 = vmatprep.subr.bf16.mxu0 %v3192
        %7689 = vmatpush2.bf16.msra.mxu0 %v3191
        %7690 = vmatprep.subr.bf16.mxu0 %v3188
        %7691 = vmatpush2.bf16.msra.mxu0 %v3187
        %7692 = vmatprep.subr.bf16.mxu0 %v3184
        %7693 = vmatpush2.bf16.msra.mxu0 %v3183
        %7694 = vmatprep.mubr.bf16.mxu0 %v4729
        %7695 = vmatmul.mubr.bf16.gmra.mxu0 %v4715
        %v7696 = vpop.f32.mrf.mxu0
        %v7697 = vadd.f32 %v7656, %v7696
        %v7698 = vpop.f32.mrf.mxu0
        %v7699 = vadd.f32 %v7658, %v7698
        %v7700 = vpop.f32.mrf.mxu0
        %v7701 = vpop.f32.mrf.mxu0
        %7702 = vdwg.mxu0
        %7703 = vmatprep.subr.bf16.mxu0 %v3244
        %7704 = vmatpush1.bf16.msra.mxu0 %v3243
        %7705 = vmatprep.subr.bf16.mxu0 %v3240
        %7706 = vmatpush1.bf16.msra.mxu0 %v3239
        %7707 = vmatprep.subr.bf16.mxu0 %v3236
        %7708 = vmatpush1.bf16.msra.mxu0 %v3235
        %7709 = vmatprep.subr.bf16.mxu0 %v3232
        %7710 = vmatpush1.bf16.msra.mxu0 %v3231
        %7711 = vmatprep.subr.bf16.mxu0 %v3228
        %7712 = vmatpush1.bf16.msra.mxu0 %v3227
        %7713 = vmatprep.subr.bf16.mxu0 %v3224
        %7714 = vmatpush1.bf16.msra.mxu0 %v3223
        %7715 = vmatprep.subr.bf16.mxu0 %v3220
        %7716 = vmatpush1.bf16.msra.mxu0 %v3219
        %7717 = vmatprep.subr.bf16.mxu0 %v3216
        %7718 = vmatpush1.bf16.msra.mxu0 %v3215
        %7719 = vmatprep.subr.bf16.mxu0 %v3276
        %7720 = vmatpush2.bf16.msra.mxu0 %v3275
        %7721 = vmatprep.subr.bf16.mxu0 %v3272
        %7722 = vmatpush2.bf16.msra.mxu0 %v3271
        %7723 = vmatprep.subr.bf16.mxu0 %v3268
        %7724 = vmatpush2.bf16.msra.mxu0 %v3267
        %7725 = vmatprep.subr.bf16.mxu0 %v3264
        %7726 = vmatpush2.bf16.msra.mxu0 %v3263
        %7727 = vmatprep.subr.bf16.mxu0 %v3260
        %7728 = vmatpush2.bf16.msra.mxu0 %v3259
        %7729 = vmatprep.subr.bf16.mxu0 %v3256
        %7730 = vmatpush2.bf16.msra.mxu0 %v3255
        %7731 = vmatprep.subr.bf16.mxu0 %v3252
        %7732 = vmatpush2.bf16.msra.mxu0 %v3251
        %7733 = vmatprep.subr.bf16.mxu0 %v3248
        %7734 = vmatpush2.bf16.msra.mxu0 %v3247
        %7735 = vmatprep.mubr.bf16.mxu0 %v4733
        %7736 = vmatmul.mubr.bf16.gmra.mxu0 %v4731
        %v7737 = vpop.f32.mrf.mxu0
        %v7738 = vadd.f32 %v7697, %v7737
        %v7739 = vpop.f32.mrf.mxu0
        %v7740 = vadd.f32 %v7699, %v7739
        %v7741 = vpop.f32.mrf.mxu0
        %v7742 = vpop.f32.mrf.mxu0
        %7743 = vdwg.mxu0
        %7744 = vmatprep.subr.bf16.mxu0 %v3308
        %7745 = vmatpush1.bf16.msra.mxu0 %v3307
        %7746 = vmatprep.subr.bf16.mxu0 %v3304
        %7747 = vmatpush1.bf16.msra.mxu0 %v3303
        %7748 = vmatprep.subr.bf16.mxu0 %v3300
        %7749 = vmatpush1.bf16.msra.mxu0 %v3299
        %7750 = vmatprep.subr.bf16.mxu0 %v3296
        %7751 = vmatpush1.bf16.msra.mxu0 %v3295
        %7752 = vmatprep.subr.bf16.mxu0 %v3292
        %7753 = vmatpush1.bf16.msra.mxu0 %v3291
        %7754 = vmatprep.subr.bf16.mxu0 %v3288
        %7755 = vmatpush1.bf16.msra.mxu0 %v3287
        %7756 = vmatprep.subr.bf16.mxu0 %v3284
        %7757 = vmatpush1.bf16.msra.mxu0 %v3283
        %7758 = vmatprep.subr.bf16.mxu0 %v3280
        %7759 = vmatpush1.bf16.msra.mxu0 %v3279
        %7760 = vmatprep.subr.bf16.mxu0 %v3340
        %7761 = vmatpush2.bf16.msra.mxu0 %v3339
        %7762 = vmatprep.subr.bf16.mxu0 %v3336
        %7763 = vmatpush2.bf16.msra.mxu0 %v3335
        %7764 = vmatprep.subr.bf16.mxu0 %v3332
        %7765 = vmatpush2.bf16.msra.mxu0 %v3331
        %7766 = vmatprep.subr.bf16.mxu0 %v3328
        %7767 = vmatpush2.bf16.msra.mxu0 %v3327
        %7768 = vmatprep.subr.bf16.mxu0 %v3324
        %7769 = vmatpush2.bf16.msra.mxu0 %v3323
        %7770 = vmatprep.subr.bf16.mxu0 %v3320
        %7771 = vmatpush2.bf16.msra.mxu0 %v3319
        %7772 = vmatprep.subr.bf16.mxu0 %v3316
        %7773 = vmatpush2.bf16.msra.mxu0 %v3315
        %7774 = vmatprep.subr.bf16.mxu0 %v3312
        %7775 = vmatpush2.bf16.msra.mxu0 %v3311
        %7776 = vmatprep.mubr.bf16.mxu0 %v4771
        %7777 = vmatmul.mubr.bf16.gmra.mxu0 %v4757
        %v7778 = vpop.f32.mrf.mxu0
        %v7779 = vadd.f32 %v7738, %v7778
        %v7780 = vpop.f32.mrf.mxu0
        %v7781 = vadd.f32 %v7740, %v7780
        %v7782 = vpop.f32.mrf.mxu0
        %v7783 = vpop.f32.mrf.mxu0
        %7784 = vdwg.mxu0
        %7785 = vmatprep.subr.bf16.mxu0 %v3372
        %7786 = vmatpush1.bf16.msra.mxu0 %v3371
        %7787 = vmatprep.subr.bf16.mxu0 %v3368
        %7788 = vmatpush1.bf16.msra.mxu0 %v3367
        %7789 = vmatprep.subr.bf16.mxu0 %v3364
        %7790 = vmatpush1.bf16.msra.mxu0 %v3363
        %7791 = vmatprep.subr.bf16.mxu0 %v3360
        %7792 = vmatpush1.bf16.msra.mxu0 %v3359
        %7793 = vmatprep.subr.bf16.mxu0 %v3356
        %7794 = vmatpush1.bf16.msra.mxu0 %v3355
        %7795 = vmatprep.subr.bf16.mxu0 %v3352
        %7796 = vmatpush1.bf16.msra.mxu0 %v3351
        %7797 = vmatprep.subr.bf16.mxu0 %v3348
        %7798 = vmatpush1.bf16.msra.mxu0 %v3347
        %7799 = vmatprep.subr.bf16.mxu0 %v3344
        %7800 = vmatpush1.bf16.msra.mxu0 %v3343
        %7801 = vmatprep.subr.bf16.mxu0 %v3404
        %7802 = vmatpush2.bf16.msra.mxu0 %v3403
        %7803 = vmatprep.subr.bf16.mxu0 %v3400
        %7804 = vmatpush2.bf16.msra.mxu0 %v3399
        %7805 = vmatprep.subr.bf16.mxu0 %v3396
        %7806 = vmatpush2.bf16.msra.mxu0 %v3395
        %7807 = vmatprep.subr.bf16.mxu0 %v3392
        %7808 = vmatpush2.bf16.msra.mxu0 %v3391
        %7809 = vmatprep.subr.bf16.mxu0 %v3388
        %7810 = vmatpush2.bf16.msra.mxu0 %v3387
        %7811 = vmatprep.subr.bf16.mxu0 %v3384
        %7812 = vmatpush2.bf16.msra.mxu0 %v3383
        %7813 = vmatprep.subr.bf16.mxu0 %v3380
        %7814 = vmatpush2.bf16.msra.mxu0 %v3379
        %7815 = vmatprep.subr.bf16.mxu0 %v3376
        %7816 = vmatpush2.bf16.msra.mxu0 %v3375
        %7817 = vmatprep.mubr.bf16.mxu0 %v4781
        %7818 = vmatmul.mubr.bf16.gmra.mxu0 %v4779
        %v7819 = vpop.f32.mrf.mxu0
        %v7820 = vadd.f32 %v7779, %v7819
        %v7821 = vpop.f32.mrf.mxu0
        %v7822 = vadd.f32 %v7781, %v7821
        %v7823 = vpop.f32.mrf.mxu0
        %v7824 = vpop.f32.mrf.mxu0
        %7825 = vdwg.mxu0
        %7826 = vmatprep.subr.bf16.mxu0 %v3436
        %7827 = vmatpush1.bf16.msra.mxu0 %v3435
        %7828 = vmatprep.subr.bf16.mxu0 %v3432
        %7829 = vmatpush1.bf16.msra.mxu0 %v3431
        %7830 = vmatprep.subr.bf16.mxu0 %v3428
        %7831 = vmatpush1.bf16.msra.mxu0 %v3427
        %7832 = vmatprep.subr.bf16.mxu0 %v3424
        %7833 = vmatpush1.bf16.msra.mxu0 %v3423
        %7834 = vmatprep.subr.bf16.mxu0 %v3420
        %7835 = vmatpush1.bf16.msra.mxu0 %v3419
        %7836 = vmatprep.subr.bf16.mxu0 %v3416
        %7837 = vmatpush1.bf16.msra.mxu0 %v3415
        %7838 = vmatprep.subr.bf16.mxu0 %v3412
        %7839 = vmatpush1.bf16.msra.mxu0 %v3411
        %7840 = vmatprep.subr.bf16.mxu0 %v3408
        %7841 = vmatpush1.bf16.msra.mxu0 %v3407
        %7842 = vmatprep.subr.bf16.mxu0 %v3468
        %7843 = vmatpush2.bf16.msra.mxu0 %v3467
        %7844 = vmatprep.subr.bf16.mxu0 %v3464
        %7845 = vmatpush2.bf16.msra.mxu0 %v3463
        %7846 = vmatprep.subr.bf16.mxu0 %v3460
        %7847 = vmatpush2.bf16.msra.mxu0 %v3459
        %7848 = vmatprep.subr.bf16.mxu0 %v3456
        %7849 = vmatpush2.bf16.msra.mxu0 %v3455
        %7850 = vmatprep.subr.bf16.mxu0 %v3452
        %7851 = vmatpush2.bf16.msra.mxu0 %v3451
        %7852 = vmatprep.subr.bf16.mxu0 %v3448
        %7853 = vmatpush2.bf16.msra.mxu0 %v3447
        %7854 = vmatprep.subr.bf16.mxu0 %v3444
        %7855 = vmatpush2.bf16.msra.mxu0 %v3443
        %7856 = vmatprep.subr.bf16.mxu0 %v3440
        %7857 = vmatpush2.bf16.msra.mxu0 %v3439
        %7858 = vmatprep.mubr.bf16.mxu0 %v4778
        %7859 = vmatmul.mubr.bf16.gmra.mxu0 %v4764
        %v7860 = vpop.f32.mrf.mxu0
        %v7861 = vadd.f32 %v7820, %v7860
        %v7862 = vpop.f32.mrf.mxu0
        %v7863 = vadd.f32 %v7822, %v7862
        %v7864 = vpop.f32.mrf.mxu0
        %v7865 = vpop.f32.mrf.mxu0
        %7866 = vdwg.mxu0
        %7867 = vmatprep.subr.bf16.mxu0 %v3500
        %7868 = vmatpush1.bf16.msra.mxu0 %v3499
        %7869 = vmatprep.subr.bf16.mxu0 %v3496
        %7870 = vmatpush1.bf16.msra.mxu0 %v3495
        %7871 = vmatprep.subr.bf16.mxu0 %v3492
        %7872 = vmatpush1.bf16.msra.mxu0 %v3491
        %7873 = vmatprep.subr.bf16.mxu0 %v3488
        %7874 = vmatpush1.bf16.msra.mxu0 %v3487
        %7875 = vmatprep.subr.bf16.mxu0 %v3484
        %7876 = vmatpush1.bf16.msra.mxu0 %v3483
        %7877 = vmatprep.subr.bf16.mxu0 %v3480
        %7878 = vmatpush1.bf16.msra.mxu0 %v3479
        %7879 = vmatprep.subr.bf16.mxu0 %v3476
        %7880 = vmatpush1.bf16.msra.mxu0 %v3475
        %7881 = vmatprep.subr.bf16.mxu0 %v3472
        %7882 = vmatpush1.bf16.msra.mxu0 %v3471
        %7883 = vmatprep.subr.bf16.mxu0 %v3532
        %7884 = vmatpush2.bf16.msra.mxu0 %v3531
        %7885 = vmatprep.subr.bf16.mxu0 %v3528
        %7886 = vmatpush2.bf16.msra.mxu0 %v3527
        %7887 = vmatprep.subr.bf16.mxu0 %v3524
        %7888 = vmatpush2.bf16.msra.mxu0 %v3523
        %7889 = vmatprep.subr.bf16.mxu0 %v3520
        %7890 = vmatpush2.bf16.msra.mxu0 %v3519
        %7891 = vmatprep.subr.bf16.mxu0 %v3516
        %7892 = vmatpush2.bf16.msra.mxu0 %v3515
        %7893 = vmatprep.subr.bf16.mxu0 %v3512
        %7894 = vmatpush2.bf16.msra.mxu0 %v3511
        %7895 = vmatprep.subr.bf16.mxu0 %v3508
        %7896 = vmatpush2.bf16.msra.mxu0 %v3507
        %7897 = vmatprep.subr.bf16.mxu0 %v3504
        %7898 = vmatpush2.bf16.msra.mxu0 %v3503
        %7899 = vmatprep.mubr.bf16.mxu0 %v4782
        %7900 = vmatmul.mubr.bf16.gmra.mxu0 %v4780
        %v7901 = vpop.f32.mrf.mxu0
        %v7902 = vadd.f32 %v7861, %v7901
        %v7903 = vpop.f32.mrf.mxu0
        %v7904 = vadd.f32 %v7863, %v7903
        %v7905 = vpop.f32.mrf.mxu0
        %v7906 = vpop.f32.mrf.mxu0
        %7907 = vdwg.mxu0
        %7908 = vmatprep.subr.bf16.mxu0 %v3564
        %7909 = vmatpush1.bf16.msra.mxu0 %v3563
        %7910 = vmatprep.subr.bf16.mxu0 %v3560
        %7911 = vmatpush1.bf16.msra.mxu0 %v3559
        %7912 = vmatprep.subr.bf16.mxu0 %v3556
        %7913 = vmatpush1.bf16.msra.mxu0 %v3555
        %7914 = vmatprep.subr.bf16.mxu0 %v3552
        %7915 = vmatpush1.bf16.msra.mxu0 %v3551
        %7916 = vmatprep.subr.bf16.mxu0 %v3548
        %7917 = vmatpush1.bf16.msra.mxu0 %v3547
        %7918 = vmatprep.subr.bf16.mxu0 %v3544
        %7919 = vmatpush1.bf16.msra.mxu0 %v3543
        %7920 = vmatprep.subr.bf16.mxu0 %v3540
        %7921 = vmatpush1.bf16.msra.mxu0 %v3539
        %7922 = vmatprep.subr.bf16.mxu0 %v3536
        %7923 = vmatpush1.bf16.msra.mxu0 %v3535
        %7924 = vmatprep.subr.bf16.mxu0 %v3596
        %7925 = vmatpush2.bf16.msra.mxu0 %v3595
        %7926 = vmatprep.subr.bf16.mxu0 %v3592
        %7927 = vmatpush2.bf16.msra.mxu0 %v3591
        %7928 = vmatprep.subr.bf16.mxu0 %v3588
        %7929 = vmatpush2.bf16.msra.mxu0 %v3587
        %7930 = vmatprep.subr.bf16.mxu0 %v3584
        %7931 = vmatpush2.bf16.msra.mxu0 %v3583
        %7932 = vmatprep.subr.bf16.mxu0 %v3580
        %7933 = vmatpush2.bf16.msra.mxu0 %v3579
        %7934 = vmatprep.subr.bf16.mxu0 %v3576
        %7935 = vmatpush2.bf16.msra.mxu0 %v3575
        %7936 = vmatprep.subr.bf16.mxu0 %v3572
        %7937 = vmatpush2.bf16.msra.mxu0 %v3571
        %7938 = vmatprep.subr.bf16.mxu0 %v3568
        %7939 = vmatpush2.bf16.msra.mxu0 %v3567
        %7940 = vmatprep.mubr.bf16.mxu0 %v4820
        %7941 = vmatmul.mubr.bf16.gmra.mxu0 %v4806
        %v7942 = vpop.f32.mrf.mxu0
        %v7943 = vadd.f32 %v7902, %v7942
        %v7944 = vpop.f32.mrf.mxu0
        %v7945 = vadd.f32 %v7904, %v7944
        %v7946 = vpop.f32.mrf.mxu0
        %v7947 = vpop.f32.mrf.mxu0
        %7948 = vdwg.mxu0
        %7949 = vmatprep.subr.bf16.mxu0 %v3628
        %7950 = vmatpush1.bf16.msra.mxu0 %v3627
        %7951 = vmatprep.subr.bf16.mxu0 %v3624
        %7952 = vmatpush1.bf16.msra.mxu0 %v3623
        %7953 = vmatprep.subr.bf16.mxu0 %v3620
        %7954 = vmatpush1.bf16.msra.mxu0 %v3619
        %7955 = vmatprep.subr.bf16.mxu0 %v3616
        %7956 = vmatpush1.bf16.msra.mxu0 %v3615
        %7957 = vmatprep.subr.bf16.mxu0 %v3612
        %7958 = vmatpush1.bf16.msra.mxu0 %v3611
        %7959 = vmatprep.subr.bf16.mxu0 %v3608
        %7960 = vmatpush1.bf16.msra.mxu0 %v3607
        %7961 = vmatprep.subr.bf16.mxu0 %v3604
        %7962 = vmatpush1.bf16.msra.mxu0 %v3603
        %7963 = vmatprep.subr.bf16.mxu0 %v3600
        %7964 = vmatpush1.bf16.msra.mxu0 %v3599
        %7965 = vmatprep.subr.bf16.mxu0 %v3660
        %7966 = vmatpush2.bf16.msra.mxu0 %v3659
        %7967 = vmatprep.subr.bf16.mxu0 %v3656
        %7968 = vmatpush2.bf16.msra.mxu0 %v3655
        %7969 = vmatprep.subr.bf16.mxu0 %v3652
        %7970 = vmatpush2.bf16.msra.mxu0 %v3651
        %7971 = vmatprep.subr.bf16.mxu0 %v3648
        %7972 = vmatpush2.bf16.msra.mxu0 %v3647
        %7973 = vmatprep.subr.bf16.mxu0 %v3644
        %7974 = vmatpush2.bf16.msra.mxu0 %v3643
        %7975 = vmatprep.subr.bf16.mxu0 %v3640
        %7976 = vmatpush2.bf16.msra.mxu0 %v3639
        %7977 = vmatprep.subr.bf16.mxu0 %v3636
        %7978 = vmatpush2.bf16.msra.mxu0 %v3635
        %7979 = vmatprep.subr.bf16.mxu0 %v3632
        %7980 = vmatpush2.bf16.msra.mxu0 %v3631
        %7981 = vmatprep.mubr.bf16.mxu0 %v4830
        %7982 = vmatmul.mubr.bf16.gmra.mxu0 %v4828
        %v7983 = vpop.f32.mrf.mxu0
        %v7984 = vadd.f32 %v7943, %v7983
        %v7985 = vpop.f32.mrf.mxu0
        %v7986 = vadd.f32 %v7945, %v7985
        %v7987 = vpop.f32.mrf.mxu0
        %v7988 = vpop.f32.mrf.mxu0
        %7989 = vdwg.mxu0
        %7990 = vmatprep.subr.bf16.mxu0 %v3692
        %7991 = vmatpush1.bf16.msra.mxu0 %v3691
        %7992 = vmatprep.subr.bf16.mxu0 %v3688
        %7993 = vmatpush1.bf16.msra.mxu0 %v3687
        %7994 = vmatprep.subr.bf16.mxu0 %v3684
        %7995 = vmatpush1.bf16.msra.mxu0 %v3683
        %7996 = vmatprep.subr.bf16.mxu0 %v3680
        %7997 = vmatpush1.bf16.msra.mxu0 %v3679
        %7998 = vmatprep.subr.bf16.mxu0 %v3676
        %7999 = vmatpush1.bf16.msra.mxu0 %v3675
        %8000 = vmatprep.subr.bf16.mxu0 %v3672
        %8001 = vmatpush1.bf16.msra.mxu0 %v3671
        %8002 = vmatprep.subr.bf16.mxu0 %v3668
        %8003 = vmatpush1.bf16.msra.mxu0 %v3667
        %8004 = vmatprep.subr.bf16.mxu0 %v3664
        %8005 = vmatpush1.bf16.msra.mxu0 %v3663
        %8006 = vmatprep.subr.bf16.mxu0 %v3724
        %8007 = vmatpush2.bf16.msra.mxu0 %v3723
        %8008 = vmatprep.subr.bf16.mxu0 %v3720
        %8009 = vmatpush2.bf16.msra.mxu0 %v3719
        %8010 = vmatprep.subr.bf16.mxu0 %v3716
        %8011 = vmatpush2.bf16.msra.mxu0 %v3715
        %8012 = vmatprep.subr.bf16.mxu0 %v3712
        %8013 = vmatpush2.bf16.msra.mxu0 %v3711
        %8014 = vmatprep.subr.bf16.mxu0 %v3708
        %8015 = vmatpush2.bf16.msra.mxu0 %v3707
        %8016 = vmatprep.subr.bf16.mxu0 %v3704
        %8017 = vmatpush2.bf16.msra.mxu0 %v3703
        %8018 = vmatprep.subr.bf16.mxu0 %v3700
        %8019 = vmatpush2.bf16.msra.mxu0 %v3699
        %8020 = vmatprep.subr.bf16.mxu0 %v3696
        %8021 = vmatpush2.bf16.msra.mxu0 %v3695
        %8022 = vmatprep.mubr.bf16.mxu0 %v4827
        %8023 = vmatmul.mubr.bf16.gmra.mxu0 %v4813
        %v8024 = vpop.f32.mrf.mxu0
        %v8025 = vadd.f32 %v7984, %v8024
        %v8026 = vpop.f32.mrf.mxu0
        %v8027 = vadd.f32 %v7986, %v8026
        %v8028 = vpop.f32.mrf.mxu0
        %v8029 = vpop.f32.mrf.mxu0
        %8030 = vdwg.mxu0
        %8031 = vmatprep.subr.bf16.mxu0 %v3756
        %8032 = vmatpush1.bf16.msra.mxu0 %v3755
        %8033 = vmatprep.subr.bf16.mxu0 %v3752
        %8034 = vmatpush1.bf16.msra.mxu0 %v3751
        %8035 = vmatprep.subr.bf16.mxu0 %v3748
        %8036 = vmatpush1.bf16.msra.mxu0 %v3747
        %8037 = vmatprep.subr.bf16.mxu0 %v3744
        %8038 = vmatpush1.bf16.msra.mxu0 %v3743
        %8039 = vmatprep.subr.bf16.mxu0 %v3740
        %8040 = vmatpush1.bf16.msra.mxu0 %v3739
        %8041 = vmatprep.subr.bf16.mxu0 %v3736
        %8042 = vmatpush1.bf16.msra.mxu0 %v3735
        %8043 = vmatprep.subr.bf16.mxu0 %v3732
        %8044 = vmatpush1.bf16.msra.mxu0 %v3731
        %8045 = vmatprep.subr.bf16.mxu0 %v3728
        %8046 = vmatpush1.bf16.msra.mxu0 %v3727
        %8047 = vmatprep.subr.bf16.mxu0 %v3788
        %8048 = vmatpush2.bf16.msra.mxu0 %v3787
        %8049 = vmatprep.subr.bf16.mxu0 %v3784
        %8050 = vmatpush2.bf16.msra.mxu0 %v3783
        %8051 = vmatprep.subr.bf16.mxu0 %v3780
        %8052 = vmatpush2.bf16.msra.mxu0 %v3779
        %8053 = vmatprep.subr.bf16.mxu0 %v3776
        %8054 = vmatpush2.bf16.msra.mxu0 %v3775
        %8055 = vmatprep.subr.bf16.mxu0 %v3772
        %8056 = vmatpush2.bf16.msra.mxu0 %v3771
        %8057 = vmatprep.subr.bf16.mxu0 %v3768
        %8058 = vmatpush2.bf16.msra.mxu0 %v3767
        %8059 = vmatprep.subr.bf16.mxu0 %v3764
        %8060 = vmatpush2.bf16.msra.mxu0 %v3763
        %8061 = vmatprep.subr.bf16.mxu0 %v3760
        %8062 = vmatpush2.bf16.msra.mxu0 %v3759
        %8063 = vmatprep.mubr.bf16.mxu0 %v4831
        %8064 = vmatmul.mubr.bf16.gmra.mxu0 %v4829
        %v8065 = vpop.f32.mrf.mxu0
        %v8066 = vadd.f32 %v8025, %v8065
        %v8067 = vpop.f32.mrf.mxu0
        %v8068 = vadd.f32 %v8027, %v8067
        %v8069 = vpop.f32.mrf.mxu0
        %v8070 = vpop.f32.mrf.mxu0
        %8071 = vdwg.mxu0
        %8072 = vmatprep.subr.bf16.mxu0 %v3820
        %8073 = vmatpush1.bf16.msra.mxu0 %v3819
        %8074 = vmatprep.subr.bf16.mxu0 %v3816
        %8075 = vmatpush1.bf16.msra.mxu0 %v3815
        %8076 = vmatprep.subr.bf16.mxu0 %v3812
        %8077 = vmatpush1.bf16.msra.mxu0 %v3811
        %8078 = vmatprep.subr.bf16.mxu0 %v3808
        %8079 = vmatpush1.bf16.msra.mxu0 %v3807
        %8080 = vmatprep.subr.bf16.mxu0 %v3804
        %8081 = vmatpush1.bf16.msra.mxu0 %v3803
        %8082 = vmatprep.subr.bf16.mxu0 %v3800
        %8083 = vmatpush1.bf16.msra.mxu0 %v3799
        %8084 = vmatprep.subr.bf16.mxu0 %v3796
        %8085 = vmatpush1.bf16.msra.mxu0 %v3795
        %8086 = vmatprep.subr.bf16.mxu0 %v3792
        %8087 = vmatpush1.bf16.msra.mxu0 %v3791
        %8088 = vmatprep.subr.bf16.mxu0 %v3852
        %8089 = vmatpush2.bf16.msra.mxu0 %v3851
        %8090 = vmatprep.subr.bf16.mxu0 %v3848
        %8091 = vmatpush2.bf16.msra.mxu0 %v3847
        %8092 = vmatprep.subr.bf16.mxu0 %v3844
        %8093 = vmatpush2.bf16.msra.mxu0 %v3843
        %8094 = vmatprep.subr.bf16.mxu0 %v3840
        %8095 = vmatpush2.bf16.msra.mxu0 %v3839
        %8096 = vmatprep.subr.bf16.mxu0 %v3836
        %8097 = vmatpush2.bf16.msra.mxu0 %v3835
        %8098 = vmatprep.subr.bf16.mxu0 %v3832
        %8099 = vmatpush2.bf16.msra.mxu0 %v3831
        %8100 = vmatprep.subr.bf16.mxu0 %v3828
        %8101 = vmatpush2.bf16.msra.mxu0 %v3827
        %8102 = vmatprep.subr.bf16.mxu0 %v3824
        %8103 = vmatpush2.bf16.msra.mxu0 %v3823
        %8104 = vmatprep.mubr.bf16.mxu0 %v4869
        %8105 = vmatmul.mubr.bf16.gmra.mxu0 %v4855
        %v8106 = vpop.f32.mrf.mxu0
        %v8107 = vadd.f32 %v8066, %v8106
        %v8108 = vpop.f32.mrf.mxu0
        %v8109 = vadd.f32 %v8068, %v8108
        %v8110 = vpop.f32.mrf.mxu0
        %v8111 = vpop.f32.mrf.mxu0
        %8112 = vdwg.mxu0
        %8113 = vmatprep.subr.bf16.mxu0 %v3884
        %8114 = vmatpush1.bf16.msra.mxu0 %v3883
        %8115 = vmatprep.subr.bf16.mxu0 %v3880
        %8116 = vmatpush1.bf16.msra.mxu0 %v3879
        %8117 = vmatprep.subr.bf16.mxu0 %v3876
        %8118 = vmatpush1.bf16.msra.mxu0 %v3875
        %8119 = vmatprep.subr.bf16.mxu0 %v3872
        %8120 = vmatpush1.bf16.msra.mxu0 %v3871
        %8121 = vmatprep.subr.bf16.mxu0 %v3868
        %8122 = vmatpush1.bf16.msra.mxu0 %v3867
        %8123 = vmatprep.subr.bf16.mxu0 %v3864
        %8124 = vmatpush1.bf16.msra.mxu0 %v3863
        %8125 = vmatprep.subr.bf16.mxu0 %v3860
        %8126 = vmatpush1.bf16.msra.mxu0 %v3859
        %8127 = vmatprep.subr.bf16.mxu0 %v3856
        %8128 = vmatpush1.bf16.msra.mxu0 %v3855
        %8129 = vmatprep.subr.bf16.mxu0 %v3916
        %8130 = vmatpush2.bf16.msra.mxu0 %v3915
        %8131 = vmatprep.subr.bf16.mxu0 %v3912
        %8132 = vmatpush2.bf16.msra.mxu0 %v3911
        %8133 = vmatprep.subr.bf16.mxu0 %v3908
        %8134 = vmatpush2.bf16.msra.mxu0 %v3907
        %8135 = vmatprep.subr.bf16.mxu0 %v3904
        %8136 = vmatpush2.bf16.msra.mxu0 %v3903
        %8137 = vmatprep.subr.bf16.mxu0 %v3900
        %8138 = vmatpush2.bf16.msra.mxu0 %v3899
        %8139 = vmatprep.subr.bf16.mxu0 %v3896
        %8140 = vmatpush2.bf16.msra.mxu0 %v3895
        %8141 = vmatprep.subr.bf16.mxu0 %v3892
        %8142 = vmatpush2.bf16.msra.mxu0 %v3891
        %8143 = vmatprep.subr.bf16.mxu0 %v3888
        %8144 = vmatpush2.bf16.msra.mxu0 %v3887
        %8145 = vmatprep.mubr.bf16.mxu0 %v4879
        %8146 = vmatmul.mubr.bf16.gmra.mxu0 %v4877
        %v8147 = vpop.f32.mrf.mxu0
        %v8148 = vadd.f32 %v8107, %v8147
        %v8149 = vpop.f32.mrf.mxu0
        %v8150 = vadd.f32 %v8109, %v8149
        %v8151 = vpop.f32.mrf.mxu0
        %v8152 = vpop.f32.mrf.mxu0
        %8153 = vdwg.mxu0
        %8154 = vmatprep.subr.bf16.mxu0 %v3948
        %8155 = vmatpush1.bf16.msra.mxu0 %v3947
        %8156 = vmatprep.subr.bf16.mxu0 %v3944
        %8157 = vmatpush1.bf16.msra.mxu0 %v3943
        %8158 = vmatprep.subr.bf16.mxu0 %v3940
        %8159 = vmatpush1.bf16.msra.mxu0 %v3939
        %8160 = vmatprep.subr.bf16.mxu0 %v3936
        %8161 = vmatpush1.bf16.msra.mxu0 %v3935
        %8162 = vmatprep.subr.bf16.mxu0 %v3932
        %8163 = vmatpush1.bf16.msra.mxu0 %v3931
        %8164 = vmatprep.subr.bf16.mxu0 %v3928
        %8165 = vmatpush1.bf16.msra.mxu0 %v3927
        %8166 = vmatprep.subr.bf16.mxu0 %v3924
        %8167 = vmatpush1.bf16.msra.mxu0 %v3923
        %8168 = vmatprep.subr.bf16.mxu0 %v3920
        %8169 = vmatpush1.bf16.msra.mxu0 %v3919
        %8170 = vmatprep.subr.bf16.mxu0 %v3980
        %8171 = vmatpush2.bf16.msra.mxu0 %v3979
        %8172 = vmatprep.subr.bf16.mxu0 %v3976
        %8173 = vmatpush2.bf16.msra.mxu0 %v3975
        %8174 = vmatprep.subr.bf16.mxu0 %v3972
        %8175 = vmatpush2.bf16.msra.mxu0 %v3971
        %8176 = vmatprep.subr.bf16.mxu0 %v3968
        %8177 = vmatpush2.bf16.msra.mxu0 %v3967
        %8178 = vmatprep.subr.bf16.mxu0 %v3964
        %8179 = vmatpush2.bf16.msra.mxu0 %v3963
        %8180 = vmatprep.subr.bf16.mxu0 %v3960
        %8181 = vmatpush2.bf16.msra.mxu0 %v3959
        %8182 = vmatprep.subr.bf16.mxu0 %v3956
        %8183 = vmatpush2.bf16.msra.mxu0 %v3955
        %8184 = vmatprep.subr.bf16.mxu0 %v3952
        %8185 = vmatpush2.bf16.msra.mxu0 %v3951
        %8186 = vmatprep.mubr.bf16.mxu0 %v4876
        %8187 = vmatmul.mubr.bf16.gmra.mxu0 %v4862
        %v8188 = vpop.f32.mrf.mxu0
        %v8189 = vadd.f32 %v8148, %v8188
        %v8190 = vpop.f32.mrf.mxu0
        %v8191 = vadd.f32 %v8150, %v8190
        %v8192 = vpop.f32.mrf.mxu0
        %v8193 = vpop.f32.mrf.mxu0
        %8194 = vdwg.mxu0
        %8195 = vmatprep.subr.bf16.mxu0 %v4012
        %8196 = vmatpush1.bf16.msra.mxu0 %v4011
        %8197 = vmatprep.subr.bf16.mxu0 %v4008
        %8198 = vmatpush1.bf16.msra.mxu0 %v4007
        %8199 = vmatprep.subr.bf16.mxu0 %v4004
        %8200 = vmatpush1.bf16.msra.mxu0 %v4003
        %8201 = vmatprep.subr.bf16.mxu0 %v4000
        %8202 = vmatpush1.bf16.msra.mxu0 %v3999
        %8203 = vmatprep.subr.bf16.mxu0 %v3996
        %8204 = vmatpush1.bf16.msra.mxu0 %v3995
        %8205 = vmatprep.subr.bf16.mxu0 %v3992
        %8206 = vmatpush1.bf16.msra.mxu0 %v3991
        %8207 = vmatprep.subr.bf16.mxu0 %v3988
        %8208 = vmatpush1.bf16.msra.mxu0 %v3987
        %8209 = vmatprep.subr.bf16.mxu0 %v3984
        %8210 = vmatpush1.bf16.msra.mxu0 %v3983
        %8211 = vmatprep.subr.bf16.mxu0 %v4044
        %8212 = vmatpush2.bf16.msra.mxu0 %v4043
        %8213 = vmatprep.subr.bf16.mxu0 %v4040
        %8214 = vmatpush2.bf16.msra.mxu0 %v4039
        %8215 = vmatprep.subr.bf16.mxu0 %v4036
        %8216 = vmatpush2.bf16.msra.mxu0 %v4035
        %8217 = vmatprep.subr.bf16.mxu0 %v4032
        %8218 = vmatpush2.bf16.msra.mxu0 %v4031
        %8219 = vmatprep.subr.bf16.mxu0 %v4028
        %8220 = vmatpush2.bf16.msra.mxu0 %v4027
        %8221 = vmatprep.subr.bf16.mxu0 %v4024
        %8222 = vmatpush2.bf16.msra.mxu0 %v4023
        %8223 = vmatprep.subr.bf16.mxu0 %v4020
        %8224 = vmatpush2.bf16.msra.mxu0 %v4019
        %8225 = vmatprep.subr.bf16.mxu0 %v4016
        %8226 = vmatpush2.bf16.msra.mxu0 %v4015
        %8227 = vmatprep.mubr.bf16.mxu0 %v4880
        %8228 = vmatmul.mubr.bf16.gmra.mxu0 %v4878
        %v8229 = vpop.f32.mrf.mxu0
        %v8230 = vadd.f32 %v8189, %v8229
        %v8231 = vpop.f32.mrf.mxu0
        %v8232 = vadd.f32 %v8191, %v8231
        %v8233 = vpop.f32.mrf.mxu0
        %v8234 = vpop.f32.mrf.mxu0
        %8235 = vdwg.mxu0
        %8236 = vmatprep.subr.bf16.mxu0 %v4076
        %8237 = vmatpush1.bf16.msra.mxu0 %v4075
        %8238 = vmatprep.subr.bf16.mxu0 %v4072
        %8239 = vmatpush1.bf16.msra.mxu0 %v4071
        %8240 = vmatprep.subr.bf16.mxu0 %v4068
        %8241 = vmatpush1.bf16.msra.mxu0 %v4067
        %8242 = vmatprep.subr.bf16.mxu0 %v4064
        %8243 = vmatpush1.bf16.msra.mxu0 %v4063
        %8244 = vmatprep.subr.bf16.mxu0 %v4060
        %8245 = vmatpush1.bf16.msra.mxu0 %v4059
        %8246 = vmatprep.subr.bf16.mxu0 %v4056
        %8247 = vmatpush1.bf16.msra.mxu0 %v4055
        %8248 = vmatprep.subr.bf16.mxu0 %v4052
        %8249 = vmatpush1.bf16.msra.mxu0 %v4051
        %8250 = vmatprep.subr.bf16.mxu0 %v4048
        %8251 = vmatpush1.bf16.msra.mxu0 %v4047
        %8252 = vmatprep.subr.bf16.mxu0 %v4108
        %8253 = vmatpush2.bf16.msra.mxu0 %v4107
        %8254 = vmatprep.subr.bf16.mxu0 %v4104
        %8255 = vmatpush2.bf16.msra.mxu0 %v4103
        %8256 = vmatprep.subr.bf16.mxu0 %v4100
        %8257 = vmatpush2.bf16.msra.mxu0 %v4099
        %8258 = vmatprep.subr.bf16.mxu0 %v4096
        %8259 = vmatpush2.bf16.msra.mxu0 %v4095
        %8260 = vmatprep.subr.bf16.mxu0 %v4092
        %8261 = vmatpush2.bf16.msra.mxu0 %v4091
        %8262 = vmatprep.subr.bf16.mxu0 %v4088
        %8263 = vmatpush2.bf16.msra.mxu0 %v4087
        %8264 = vmatprep.subr.bf16.mxu0 %v4084
        %8265 = vmatpush2.bf16.msra.mxu0 %v4083
        %8266 = vmatprep.subr.bf16.mxu0 %v4080
        %8267 = vmatpush2.bf16.msra.mxu0 %v4079
        %8268 = vmatprep.mubr.bf16.mxu0 %v4918
        %8269 = vmatmul.mubr.bf16.gmra.mxu0 %v4904
        %v8270 = vpop.f32.mrf.mxu0
        %v8271 = vadd.f32 %v8230, %v8270
        %v8272 = vpop.f32.mrf.mxu0
        %v8273 = vadd.f32 %v8232, %v8272
        %v8274 = vpop.f32.mrf.mxu0
        %v8275 = vpop.f32.mrf.mxu0
        %8276 = vdwg.mxu0
        %8277 = vmatprep.subr.bf16.mxu0 %v4140
        %8278 = vmatpush1.bf16.msra.mxu0 %v4139
        %8279 = vmatprep.subr.bf16.mxu0 %v4136
        %8280 = vmatpush1.bf16.msra.mxu0 %v4135
        %8281 = vmatprep.subr.bf16.mxu0 %v4132
        %8282 = vmatpush1.bf16.msra.mxu0 %v4131
        %8283 = vmatprep.subr.bf16.mxu0 %v4128
        %8284 = vmatpush1.bf16.msra.mxu0 %v4127
        %8285 = vmatprep.subr.bf16.mxu0 %v4124
        %8286 = vmatpush1.bf16.msra.mxu0 %v4123
        %8287 = vmatprep.subr.bf16.mxu0 %v4120
        %8288 = vmatpush1.bf16.msra.mxu0 %v4119
        %8289 = vmatprep.subr.bf16.mxu0 %v4116
        %8290 = vmatpush1.bf16.msra.mxu0 %v4115
        %8291 = vmatprep.subr.bf16.mxu0 %v4112
        %8292 = vmatpush1.bf16.msra.mxu0 %v4111
        %8293 = vmatprep.subr.bf16.mxu0 %v4172
        %8294 = vmatpush2.bf16.msra.mxu0 %v4171
        %8295 = vmatprep.subr.bf16.mxu0 %v4168
        %8296 = vmatpush2.bf16.msra.mxu0 %v4167
        %8297 = vmatprep.subr.bf16.mxu0 %v4164
        %8298 = vmatpush2.bf16.msra.mxu0 %v4163
        %8299 = vmatprep.subr.bf16.mxu0 %v4160
        %8300 = vmatpush2.bf16.msra.mxu0 %v4159
        %8301 = vmatprep.subr.bf16.mxu0 %v4156
        %8302 = vmatpush2.bf16.msra.mxu0 %v4155
        %8303 = vmatprep.subr.bf16.mxu0 %v4152
        %8304 = vmatpush2.bf16.msra.mxu0 %v4151
        %8305 = vmatprep.subr.bf16.mxu0 %v4148
        %8306 = vmatpush2.bf16.msra.mxu0 %v4147
        %8307 = vmatprep.subr.bf16.mxu0 %v4144
        %8308 = vmatpush2.bf16.msra.mxu0 %v4143
        %8309 = vmatprep.mubr.bf16.mxu0 %v4928
        %8310 = vmatmul.mubr.bf16.gmra.mxu0 %v4926
        %v8311 = vpop.f32.mrf.mxu0
        %v8312 = vadd.f32 %v8271, %v8311
        %v8313 = vpop.f32.mrf.mxu0
        %v8314 = vadd.f32 %v8273, %v8313
        %v8315 = vpop.f32.mrf.mxu0
        %v8316 = vpop.f32.mrf.mxu0
        %8317 = vdwg.mxu0
        %8318 = vmatprep.subr.bf16.mxu0 %v4204
        %8319 = vmatpush1.bf16.msra.mxu0 %v4203
        %8320 = vmatprep.subr.bf16.mxu0 %v4200
        %8321 = vmatpush1.bf16.msra.mxu0 %v4199
        %8322 = vmatprep.subr.bf16.mxu0 %v4196
        %8323 = vmatpush1.bf16.msra.mxu0 %v4195
        %8324 = vmatprep.subr.bf16.mxu0 %v4192
        %8325 = vmatpush1.bf16.msra.mxu0 %v4191
        %8326 = vmatprep.subr.bf16.mxu0 %v4188
        %8327 = vmatpush1.bf16.msra.mxu0 %v4187
        %8328 = vmatprep.subr.bf16.mxu0 %v4184
        %8329 = vmatpush1.bf16.msra.mxu0 %v4183
        %8330 = vmatprep.subr.bf16.mxu0 %v4180
        %8331 = vmatpush1.bf16.msra.mxu0 %v4179
        %8332 = vmatprep.subr.bf16.mxu0 %v4176
        %8333 = vmatpush1.bf16.msra.mxu0 %v4175
        %8334 = vmatprep.subr.bf16.mxu0 %v4236
        %8335 = vmatpush2.bf16.msra.mxu0 %v4235
        %8336 = vmatprep.subr.bf16.mxu0 %v4232
        %8337 = vmatpush2.bf16.msra.mxu0 %v4231
        %8338 = vmatprep.subr.bf16.mxu0 %v4228
        %8339 = vmatpush2.bf16.msra.mxu0 %v4227
        %8340 = vmatprep.subr.bf16.mxu0 %v4224
        %8341 = vmatpush2.bf16.msra.mxu0 %v4223
        %8342 = vmatprep.subr.bf16.mxu0 %v4220
        %8343 = vmatpush2.bf16.msra.mxu0 %v4219
        %8344 = vmatprep.subr.bf16.mxu0 %v4216
        %8345 = vmatpush2.bf16.msra.mxu0 %v4215
        %8346 = vmatprep.subr.bf16.mxu0 %v4212
        %8347 = vmatpush2.bf16.msra.mxu0 %v4211
        %8348 = vmatprep.subr.bf16.mxu0 %v4208
        %8349 = vmatpush2.bf16.msra.mxu0 %v4207
        %8350 = vmatprep.mubr.bf16.mxu0 %v4925
        %8351 = vmatmul.mubr.bf16.gmra.mxu0 %v4911
        %v8352 = vpop.f32.mrf.mxu0
        %v8353 = vadd.f32 %v8312, %v8352
        %v8354 = vpop.f32.mrf.mxu0
        %v8355 = vadd.f32 %v8314, %v8354
        %v8356 = vpop.f32.mrf.mxu0
        %v8357 = vpop.f32.mrf.mxu0
        %8358 = vdwg.mxu0
        %8359 = vmatprep.subr.bf16.mxu0 %v4268
        %8360 = vmatpush1.bf16.msra.mxu0 %v4267
        %8361 = vmatprep.subr.bf16.mxu0 %v4264
        %8362 = vmatpush1.bf16.msra.mxu0 %v4263
        %8363 = vmatprep.subr.bf16.mxu0 %v4260
        %8364 = vmatpush1.bf16.msra.mxu0 %v4259
        %8365 = vmatprep.subr.bf16.mxu0 %v4256
        %8366 = vmatpush1.bf16.msra.mxu0 %v4255
        %8367 = vmatprep.subr.bf16.mxu0 %v4252
        %8368 = vmatpush1.bf16.msra.mxu0 %v4251
        %8369 = vmatprep.subr.bf16.mxu0 %v4248
        %8370 = vmatpush1.bf16.msra.mxu0 %v4247
        %8371 = vmatprep.subr.bf16.mxu0 %v4244
        %8372 = vmatpush1.bf16.msra.mxu0 %v4243
        %8373 = vmatprep.subr.bf16.mxu0 %v4240
        %8374 = vmatpush1.bf16.msra.mxu0 %v4239
        %8375 = vmatprep.subr.bf16.mxu0 %v4300
        %8376 = vmatpush2.bf16.msra.mxu0 %v4299
        %8377 = vmatprep.subr.bf16.mxu0 %v4296
        %8378 = vmatpush2.bf16.msra.mxu0 %v4295
        %8379 = vmatprep.subr.bf16.mxu0 %v4292
        %8380 = vmatpush2.bf16.msra.mxu0 %v4291
        %8381 = vmatprep.subr.bf16.mxu0 %v4288
        %8382 = vmatpush2.bf16.msra.mxu0 %v4287
        %8383 = vmatprep.subr.bf16.mxu0 %v4284
        %8384 = vmatpush2.bf16.msra.mxu0 %v4283
        %8385 = vmatprep.subr.bf16.mxu0 %v4280
        %8386 = vmatpush2.bf16.msra.mxu0 %v4279
        %8387 = vmatprep.subr.bf16.mxu0 %v4276
        %8388 = vmatpush2.bf16.msra.mxu0 %v4275
        %8389 = vmatprep.subr.bf16.mxu0 %v4272
        %8390 = vmatpush2.bf16.msra.mxu0 %v4271
        %8391 = vmatprep.mubr.bf16.mxu0 %v4929
        %8392 = vmatmul.mubr.bf16.gmra.mxu0 %v4927
        %v8393 = vpop.f32.mrf.mxu0
        %v8394 = vadd.f32 %v8353, %v8393
        %v8395 = vpop.f32.mrf.mxu0
        %v8396 = vadd.f32 %v8355, %v8395
        %v8397 = vpop.f32.mrf.mxu0
        %v8398 = vpop.f32.mrf.mxu0
        %8399 = vdwg.mxu0
        %8400 = vmatprep.subr.bf16.mxu0 %v4332
        %8401 = vmatpush1.bf16.msra.mxu0 %v4331
        %8402 = vmatprep.subr.bf16.mxu0 %v4328
        %8403 = vmatpush1.bf16.msra.mxu0 %v4327
        %8404 = vmatprep.subr.bf16.mxu0 %v4324
        %8405 = vmatpush1.bf16.msra.mxu0 %v4323
        %8406 = vmatprep.subr.bf16.mxu0 %v4320
        %8407 = vmatpush1.bf16.msra.mxu0 %v4319
        %8408 = vmatprep.subr.bf16.mxu0 %v4316
        %8409 = vmatpush1.bf16.msra.mxu0 %v4315
        %8410 = vmatprep.subr.bf16.mxu0 %v4312
        %8411 = vmatpush1.bf16.msra.mxu0 %v4311
        %8412 = vmatprep.subr.bf16.mxu0 %v4308
        %8413 = vmatpush1.bf16.msra.mxu0 %v4307
        %8414 = vmatprep.subr.bf16.mxu0 %v4304
        %8415 = vmatpush1.bf16.msra.mxu0 %v4303
        %8416 = vmatprep.subr.bf16.mxu0 %v4364
        %8417 = vmatpush2.bf16.msra.mxu0 %v4363
        %8418 = vmatprep.subr.bf16.mxu0 %v4360
        %8419 = vmatpush2.bf16.msra.mxu0 %v4359
        %8420 = vmatprep.subr.bf16.mxu0 %v4356
        %8421 = vmatpush2.bf16.msra.mxu0 %v4355
        %8422 = vmatprep.subr.bf16.mxu0 %v4352
        %8423 = vmatpush2.bf16.msra.mxu0 %v4351
        %8424 = vmatprep.subr.bf16.mxu0 %v4348
        %8425 = vmatpush2.bf16.msra.mxu0 %v4347
        %8426 = vmatprep.subr.bf16.mxu0 %v4344
        %8427 = vmatpush2.bf16.msra.mxu0 %v4343
        %8428 = vmatprep.subr.bf16.mxu0 %v4340
        %8429 = vmatpush2.bf16.msra.mxu0 %v4339
        %8430 = vmatprep.subr.bf16.mxu0 %v4336
        %8431 = vmatpush2.bf16.msra.mxu0 %v4335
        %8432 = vmatprep.mubr.bf16.mxu0 %v4951
        %8433 = vmatmul.mubr.bf16.gmra.mxu0 %v4944
        %v8434 = vpop.f32.mrf.mxu0
        %v8435 = vadd.f32 %v8394, %v8434
        %v8436 = vpop.f32.mrf.mxu0
        %v8437 = vadd.f32 %v8396, %v8436
        %v8438 = vpop.f32.mrf.mxu0
        %v8439 = vpop.f32.mrf.mxu0
        %8440 = vdwg.mxu0
        %8441 = vmatprep.subr.bf16.mxu0 %v4396
        %8442 = vmatpush1.bf16.msra.mxu0 %v4395
        %8443 = vmatprep.subr.bf16.mxu0 %v4392
        %8444 = vmatpush1.bf16.msra.mxu0 %v4391
        %8445 = vmatprep.subr.bf16.mxu0 %v4388
        %8446 = vmatpush1.bf16.msra.mxu0 %v4387
        %8447 = vmatprep.subr.bf16.mxu0 %v4384
        %8448 = vmatpush1.bf16.msra.mxu0 %v4383
        %8449 = vmatprep.subr.bf16.mxu0 %v4380
        %8450 = vmatpush1.bf16.msra.mxu0 %v4379
        %8451 = vmatprep.subr.bf16.mxu0 %v4376
        %8452 = vmatpush1.bf16.msra.mxu0 %v4375
        %8453 = vmatprep.subr.bf16.mxu0 %v4372
        %8454 = vmatpush1.bf16.msra.mxu0 %v4371
        %8455 = vmatprep.subr.bf16.mxu0 %v4368
        %8456 = vmatpush1.bf16.msra.mxu0 %v4367
        %8457 = vmatprep.subr.bf16.mxu0 %v4428
        %8458 = vmatpush2.bf16.msra.mxu0 %v4427
        %8459 = vmatprep.subr.bf16.mxu0 %v4424
        %8460 = vmatpush2.bf16.msra.mxu0 %v4423
        %8461 = vmatprep.subr.bf16.mxu0 %v4420
        %8462 = vmatpush2.bf16.msra.mxu0 %v4419
        %8463 = vmatprep.subr.bf16.mxu0 %v4416
        %8464 = vmatpush2.bf16.msra.mxu0 %v4415
        %8465 = vmatprep.subr.bf16.mxu0 %v4412
        %8466 = vmatpush2.bf16.msra.mxu0 %v4411
        %8467 = vmatprep.subr.bf16.mxu0 %v4408
        %8468 = vmatpush2.bf16.msra.mxu0 %v4407
        %8469 = vmatprep.subr.bf16.mxu0 %v4404
        %8470 = vmatpush2.bf16.msra.mxu0 %v4403
        %8471 = vmatprep.subr.bf16.mxu0 %v4400
        %8472 = vmatpush2.bf16.msra.mxu0 %v4399
        %8473 = vmatprep.mubr.bf16.mxu0 %v4953
        %8474 = vmatmul.mubr.bf16.gmra.mxu0 %v4952
        %v8475 = vpop.f32.mrf.mxu0
        %v8476 = vadd.f32 %v8435, %v8475
        %v8477 = vpop.f32.mrf.mxu0
        %v8478 = vadd.f32 %v8437, %v8477
        %v8479 = vpop.f32.mrf.mxu0
        %v8480 = vpop.f32.mrf.mxu0
        %8481 = vdwg.mxu0
        %v8486 = vcombine.low %v6754, %v6756
        %v8487 = vcombine.low %v8476, %v8478
        %v8489 = vunpack.c.l.s4 1983009808
        %v8490 = vunpack.c.0.s8 %v8489
        %v8491 = vlaneseq
        %v8492 = vshrl.u32 %v8491, 7
        %v8493 = vsub.s32 %v8490, %v8492
        %v8494 = vrot.slane %v8486, %v8493
        %v8496 = vunpack.c.l.s4 1983009808
        %v8497 = vunpack.c.0.s8 %v8496
        %v8498 = vlaneseq
        %v8499 = vshrl.u32 %v8498, 7
        %v8500 = vsub.s32 %v8497, %v8499
        %v8501 = vrot.slane %v8487, %v8500
        %v8502 = vcombine.low %v8494, %v8501
        %v8504 = vadd.f32 %v385, %v8502
        %8505 = vst [vmem:[#allocation2] sm:$0xff] %v8504
        %p8506 = scmp.eq.s32.totalorder %s28, 13
        // Predicated region
        $region65: #{another_net_forward.1} parent=43 // pred_check
          %p8507 = pneg %p8506
        $region66: #{another_net_forward.1} parent=43 // pred_check_branch
          %8509 = sbr.rel (%p8507) target = $region68
        $region67: #{another_net_forward.1} parent=43 // pred_region
          %v8510 = vld [vmem:[#allocation2] sm:$0xff]
          %v8511 = vld [vmem:[#allocation6] sm:$0xf]
          %v8513 = vlaneseq
          %v8514 = vshrl.u32 %v8513, 7
          %v8515 = vsub.s32 0, %v8514
          %v8516 = vrot.slane %v8511, %v8515
          %v8517 = vlaneseq
          %v8518 = vshrl.u32 %v8517, 7
          %v8519 = vsub.s32 1, %v8518
          %v8520 = vrot.slane %v8511, %v8519
          %v8521 = vlaneseq
          %v8522 = vshrl.u32 %v8521, 7
          %v8523 = vsub.s32 2, %v8522
          %v8524 = vrot.slane %v8511, %v8523
          %v8525 = vlaneseq
          %v8526 = vshrl.u32 %v8525, 7
          %v8527 = vsub.s32 3, %v8526
          %v8528 = vrot.slane %v8511, %v8527
          %v8529 = vcombine.low %v8516, %v8520
          %v8530 = vcombine.low %v8524, %v8528
          %v8532 = vunpack.c.l.s4 1983009808
          %v8533 = vunpack.c.0.s8 %v8532
          %v8534 = vlaneseq
          %v8535 = vshrl.u32 %v8534, 7
          %v8536 = vsub.s32 %v8533, %v8535
          %v8537 = vrot.slane %v8529, %v8536
          %v8539 = vunpack.c.l.s4 1983009808
          %v8540 = vunpack.c.0.s8 %v8539
          %v8541 = vlaneseq
          %v8542 = vshrl.u32 %v8541, 7
          %v8543 = vsub.s32 %v8540, %v8542
          %v8544 = vrot.slane %v8530, %v8543
          %v8545 = vcombine.low %v8537, %v8544
          %v8547 = vmul.f32 %v8510, %v8545
          %v8548 = vld [vmem:[#allocation8] sm:$0xf]
          %v8550 = vlaneseq
          %v8551 = vshrl.u32 %v8550, 7
          %v8552 = vsub.s32 0, %v8551
          %v8553 = vrot.slane %v8548, %v8552
          %v8554 = vlaneseq
          %v8555 = vshrl.u32 %v8554, 7
          %v8556 = vsub.s32 1, %v8555
          %v8557 = vrot.slane %v8548, %v8556
          %v8558 = vlaneseq
          %v8559 = vshrl.u32 %v8558, 7
          %v8560 = vsub.s32 2, %v8559
          %v8561 = vrot.slane %v8548, %v8560
          %v8562 = vlaneseq
          %v8563 = vshrl.u32 %v8562, 7
          %v8564 = vsub.s32 3, %v8563
          %v8565 = vrot.slane %v8548, %v8564
          %v8566 = vcombine.low %v8553, %v8557
          %v8567 = vcombine.low %v8561, %v8565
          %v8569 = vunpack.c.l.s4 1983009808
          %v8570 = vunpack.c.0.s8 %v8569
          %v8571 = vlaneseq
          %v8572 = vshrl.u32 %v8571, 7
          %v8573 = vsub.s32 %v8570, %v8572
          %v8574 = vrot.slane %v8566, %v8573
          %v8576 = vunpack.c.l.s4 1983009808
          %v8577 = vunpack.c.0.s8 %v8576
          %v8578 = vlaneseq
          %v8579 = vshrl.u32 %v8578, 7
          %v8580 = vsub.s32 %v8577, %v8579
          %v8581 = vrot.slane %v8567, %v8580
          %v8582 = vcombine.low %v8574, %v8581
          %v8584 = vadd.f32 %v8547, %v8582
          %v8585 = vmax.f32 %v8584, 0.0
          %v8587 = vcombine.high %v8585, %v8585
          %v8589 = vunpack.c.l.s4 1983009808
          %v8590 = vunpack.c.0.s8 %v8589
          %v8591 = vlaneseq
          %v8592 = vshrl.u32 %v8591, 7
          %v8593 = vsub.s32 %v8590, %v8592
          %v8594 = vrot.slane %v8585, %v8593
          %v8596 = vunpack.c.l.s4 1983009808
          %v8597 = vunpack.c.0.s8 %v8596
          %v8598 = vlaneseq
          %v8599 = vshrl.u32 %v8598, 7
          %v8600 = vsub.s32 %v8597, %v8599
          %v8601 = vrot.slane %v8587, %v8600
          %v8602 = vcombine.high %v8594, %v8594
          %v8603 = vcombine.high %v8601, %v8601
          %v8608 = vpack.c.bf16 %v8594, %v8594
          %v8609 = vpack.c.bf16 %v8602, %v8602
          %v8610 = vpack.c.bf16 %v8601, %v8601
          %v8611 = vpack.c.bf16 %v8603, %v8603
          %v8612 = vld [vmem:[%s377] sm:$0xf]
          %v8613 = vld [vmem:[%s377 + $0x4] sm:$0xf]
          %v8614 = vld [vmem:[%s377 + $0x8] sm:$0xf]
          %v8615 = vld [vmem:[%s377 + $0xc] sm:$0xf]
          %v8616 = vld [vmem:[%s377 + $0x10] sm:$0xf]
          %v8617 = vld [vmem:[%s377 + $0x14] sm:$0xf]
          %v8618 = vld [vmem:[%s377 + $0x18] sm:$0xf]
          %v8619 = vld [vmem:[%s377 + $0x1c] sm:$0xf]
          %v8620 = vld [vmem:[%s377 + $0x20] sm:$0xf]
          %v8621 = vld [vmem:[%s377 + $0x24] sm:$0xf]
          %v8622 = vld [vmem:[%s377 + $0x28] sm:$0xf]
          %v8623 = vld [vmem:[%s377 + $0x2c] sm:$0xf]
          %v8624 = vld [vmem:[%s377 + $0x30] sm:$0xf]
          %v8625 = vld [vmem:[%s377 + $0x34] sm:$0xf]
          %v8626 = vld [vmem:[%s377 + $0x38] sm:$0xf]
          %v8627 = vld [vmem:[%s377 + $0x3c] sm:$0xf]
          %v8628 = vld [vmem:[%s377 + $0x40] sm:$0xf]
          %v8629 = vld [vmem:[%s377 + $0x44] sm:$0xf]
          %v8630 = vld [vmem:[%s377 + $0x48] sm:$0xf]
          %v8631 = vld [vmem:[%s377 + $0x4c] sm:$0xf]
          %v8632 = vld [vmem:[%s377 + $0x50] sm:$0xf]
          %v8633 = vld [vmem:[%s377 + $0x54] sm:$0xf]
          %v8634 = vld [vmem:[%s377 + $0x58] sm:$0xf]
          %v8635 = vld [vmem:[%s377 + $0x5c] sm:$0xf]
          %v8636 = vld [vmem:[%s377 + $0x60] sm:$0xf]
          %v8637 = vld [vmem:[%s377 + $0x64] sm:$0xf]
          %v8638 = vld [vmem:[%s377 + $0x68] sm:$0xf]
          %v8639 = vld [vmem:[%s377 + $0x6c] sm:$0xf]
          %v8640 = vld [vmem:[%s377 + $0x70] sm:$0xf]
          %v8641 = vld [vmem:[%s377 + $0x74] sm:$0xf]
          %v8642 = vld [vmem:[%s377 + $0x78] sm:$0xf]
          %v8643 = vld [vmem:[%s377 + $0x7c] sm:$0xf]
          %v8644 = vld [vmem:[%s377 + $0x80] sm:$0xf]
          %v8645 = vld [vmem:[%s377 + $0x84] sm:$0xf]
          %v8646 = vld [vmem:[%s377 + $0x88] sm:$0xf]
          %v8647 = vld [vmem:[%s377 + $0x8c] sm:$0xf]
          %v8648 = vld [vmem:[%s377 + $0x90] sm:$0xf]
          %v8649 = vld [vmem:[%s377 + $0x94] sm:$0xf]
          %v8650 = vld [vmem:[%s377 + $0x98] sm:$0xf]
          %v8651 = vld [vmem:[%s377 + $0x9c] sm:$0xf]
          %v8652 = vld [vmem:[%s377 + $0xa0] sm:$0xf]
          %v8653 = vld [vmem:[%s377 + $0xa4] sm:$0xf]
          %v8654 = vld [vmem:[%s377 + $0xa8] sm:$0xf]
          %v8655 = vld [vmem:[%s377 + $0xac] sm:$0xf]
          %v8656 = vld [vmem:[%s377 + $0xb0] sm:$0xf]
          %v8657 = vld [vmem:[%s377 + $0xb4] sm:$0xf]
          %v8658 = vld [vmem:[%s377 + $0xb8] sm:$0xf]
          %v8659 = vld [vmem:[%s377 + $0xbc] sm:$0xf]
          %v8660 = vld [vmem:[%s377 + $0xc0] sm:$0xf]
          %v8661 = vld [vmem:[%s377 + $0xc4] sm:$0xf]
          %v8662 = vld [vmem:[%s377 + $0xc8] sm:$0xf]
          %v8663 = vld [vmem:[%s377 + $0xcc] sm:$0xf]
          %v8664 = vld [vmem:[%s377 + $0xd0] sm:$0xf]
          %v8665 = vld [vmem:[%s377 + $0xd4] sm:$0xf]
          %v8666 = vld [vmem:[%s377 + $0xd8] sm:$0xf]
          %v8667 = vld [vmem:[%s377 + $0xdc] sm:$0xf]
          %v8668 = vld [vmem:[%s377 + $0xe0] sm:$0xf]
          %v8669 = vld [vmem:[%s377 + $0xe4] sm:$0xf]
          %v8670 = vld [vmem:[%s377 + $0xe8] sm:$0xf]
          %v8671 = vld [vmem:[%s377 + $0xec] sm:$0xf]
          %v8672 = vld [vmem:[%s377 + $0xf0] sm:$0xf]
          %v8673 = vld [vmem:[%s377 + $0xf4] sm:$0xf]
          %v8674 = vld [vmem:[%s377 + $0xf8] sm:$0xf]
          %v8675 = vld [vmem:[%s377 + $0xfc] sm:$0xf]
          %v8676 = vld [vmem:[#allocation9] sm:$0x1]
          %p8677 = scmp.eq.s32.totalorder %s27, 0
          %s8678 = scalar_select %p8677, 1, 0
          %s8679 = scvt.s32.f32 %s8678
          %v8680 = vstv %s8679
          %v8681 = vmul.f32 %v8676, %v8680
          %v8683 = vlaneseq
          %v8684 = vshrl.u32 %v8683, 7
          %v8685 = vsub.s32 0, %v8684
          %v8686 = vrot.slane %v8681, %v8685
          %v8752 = vunpack.c.l.b16 %v8612
          %v8753 = vunpack.c.l.b16 %v8613
          %v8754 = vunpack.c.l.b16 %v8614
          %v8755 = vunpack.c.l.b16 %v8615
          %v8756 = vunpack.c.l.b16 %v8616
          %v8757 = vunpack.c.l.b16 %v8617
          %v8758 = vunpack.c.l.b16 %v8618
          %v8759 = vunpack.c.l.b16 %v8619
          %v8760 = vunpack.c.l.b16 %v8620
          %v8761 = vunpack.c.l.b16 %v8621
          %v8762 = vunpack.c.l.b16 %v8622
          %v8763 = vunpack.c.l.b16 %v8623
          %v8764 = vunpack.c.l.b16 %v8624
          %v8765 = vunpack.c.l.b16 %v8625
          %v8766 = vunpack.c.l.b16 %v8626
          %v8767 = vunpack.c.l.b16 %v8627
          %v8768 = vunpack.c.l.b16 %v8628
          %v8769 = vunpack.c.l.b16 %v8629
          %v8770 = vunpack.c.l.b16 %v8630
          %v8771 = vunpack.c.l.b16 %v8631
          %v8772 = vunpack.c.l.b16 %v8632
          %v8773 = vunpack.c.l.b16 %v8633
          %v8774 = vunpack.c.l.b16 %v8634
          %v8775 = vunpack.c.l.b16 %v8635
          %v8776 = vunpack.c.l.b16 %v8636
          %v8777 = vunpack.c.l.b16 %v8637
          %v8778 = vunpack.c.l.b16 %v8638
          %v8779 = vunpack.c.l.b16 %v8639
          %v8780 = vunpack.c.l.b16 %v8640
          %v8781 = vunpack.c.l.b16 %v8641
          %v8782 = vunpack.c.l.b16 %v8642
          %v8783 = vunpack.c.l.b16 %v8643
          %v8784 = vunpack.c.l.b16 %v8644
          %v8785 = vunpack.c.l.b16 %v8645
          %v8786 = vunpack.c.l.b16 %v8646
          %v8787 = vunpack.c.l.b16 %v8647
          %v8788 = vunpack.c.l.b16 %v8648
          %v8789 = vunpack.c.l.b16 %v8649
          %v8790 = vunpack.c.l.b16 %v8650
          %v8791 = vunpack.c.l.b16 %v8651
          %v8792 = vunpack.c.l.b16 %v8652
          %v8793 = vunpack.c.l.b16 %v8653
          %v8794 = vunpack.c.l.b16 %v8654
          %v8795 = vunpack.c.l.b16 %v8655
          %v8796 = vunpack.c.l.b16 %v8656
          %v8797 = vunpack.c.l.b16 %v8657
          %v8798 = vunpack.c.l.b16 %v8658
          %v8799 = vunpack.c.l.b16 %v8659
          %v8800 = vunpack.c.l.b16 %v8660
          %v8801 = vunpack.c.l.b16 %v8661
          %v8802 = vunpack.c.l.b16 %v8662
          %v8803 = vunpack.c.l.b16 %v8663
          %v8804 = vunpack.c.l.b16 %v8664
          %v8805 = vunpack.c.l.b16 %v8665
          %v8806 = vunpack.c.l.b16 %v8666
          %v8807 = vunpack.c.l.b16 %v8667
          %v8808 = vunpack.c.l.b16 %v8668
          %v8809 = vunpack.c.l.b16 %v8669
          %v8810 = vunpack.c.l.b16 %v8670
          %v8811 = vunpack.c.l.b16 %v8671
          %v8812 = vunpack.c.l.b16 %v8672
          %v8813 = vunpack.c.l.b16 %v8673
          %v8814 = vunpack.c.l.b16 %v8674
          %v8815 = vunpack.c.l.b16 %v8675
          %v8816 = vpack.c.b16 %v8753, %v8752
          %v8817 = vpack.c.b16 %v8755, %v8754
          %v8818 = vpack.c.b16 %v8757, %v8756
          %v8819 = vpack.c.b16 %v8759, %v8758
          %v8820 = vpack.c.b16 %v8761, %v8760
          %v8821 = vpack.c.b16 %v8763, %v8762
          %v8822 = vpack.c.b16 %v8765, %v8764
          %v8823 = vpack.c.b16 %v8767, %v8766
          %v8824 = vpack.c.b16 %v8769, %v8768
          %v8825 = vpack.c.b16 %v8771, %v8770
          %v8826 = vpack.c.b16 %v8773, %v8772
          %v8827 = vpack.c.b16 %v8775, %v8774
          %v8828 = vpack.c.b16 %v8777, %v8776
          %v8829 = vpack.c.b16 %v8779, %v8778
          %v8830 = vpack.c.b16 %v8781, %v8780
          %v8831 = vpack.c.b16 %v8783, %v8782
          %v8832 = vpack.c.b16 %v8785, %v8784
          %v8833 = vpack.c.b16 %v8787, %v8786
          %v8834 = vpack.c.b16 %v8789, %v8788
          %v8835 = vpack.c.b16 %v8791, %v8790
          %v8836 = vpack.c.b16 %v8793, %v8792
          %v8837 = vpack.c.b16 %v8795, %v8794
          %v8838 = vpack.c.b16 %v8797, %v8796
          %v8839 = vpack.c.b16 %v8799, %v8798
          %v8840 = vpack.c.b16 %v8801, %v8800
          %v8841 = vpack.c.b16 %v8803, %v8802
          %v8842 = vpack.c.b16 %v8805, %v8804
          %v8843 = vpack.c.b16 %v8807, %v8806
          %v8844 = vpack.c.b16 %v8809, %v8808
          %v8845 = vpack.c.b16 %v8811, %v8810
          %v8846 = vpack.c.b16 %v8813, %v8812
          %v8847 = vpack.c.b16 %v8815, %v8814
          %8880 = vmatprep.subr.bf16.mxu0 0
          %8881 = vmatpush1.bf16.msra.mxu0 %v8823
          %8882 = vmatprep.subr.bf16.mxu0 0
          %8883 = vmatpush1.bf16.msra.mxu0 %v8822
          %8884 = vmatprep.subr.bf16.mxu0 0
          %8885 = vmatpush1.bf16.msra.mxu0 %v8821
          %8886 = vmatprep.subr.bf16.mxu0 0
          %8887 = vmatpush1.bf16.msra.mxu0 %v8820
          %8888 = vmatprep.subr.bf16.mxu0 0
          %8889 = vmatpush1.bf16.msra.mxu0 %v8819
          %8890 = vmatprep.subr.bf16.mxu0 0
          %8891 = vmatpush1.bf16.msra.mxu0 %v8818
          %8892 = vmatprep.subr.bf16.mxu0 0
          %8893 = vmatpush1.bf16.msra.mxu0 %v8817
          %8894 = vmatprep.subr.bf16.mxu0 0
          %8895 = vmatpush1.bf16.msra.mxu0 %v8816
          %8896 = vmatprep.subr.bf16.mxu0 0
          %8897 = vmatpush2.bf16.msra.mxu0 %v8831
          %8898 = vmatprep.subr.bf16.mxu0 0
          %8899 = vmatpush2.bf16.msra.mxu0 %v8830
          %8900 = vmatprep.subr.bf16.mxu0 0
          %8901 = vmatpush2.bf16.msra.mxu0 %v8829
          %8902 = vmatprep.subr.bf16.mxu0 0
          %8903 = vmatpush2.bf16.msra.mxu0 %v8828
          %8904 = vmatprep.subr.bf16.mxu0 0
          %8905 = vmatpush2.bf16.msra.mxu0 %v8827
          %8906 = vmatprep.subr.bf16.mxu0 0
          %8907 = vmatpush2.bf16.msra.mxu0 %v8826
          %8908 = vmatprep.subr.bf16.mxu0 0
          %8909 = vmatpush2.bf16.msra.mxu0 %v8825
          %8910 = vmatprep.subr.bf16.mxu0 0
          %8911 = vmatpush2.bf16.msra.mxu0 %v8824
          %8912 = vmatprep.mubr.bf16.mxu0 %v8609
          %8913 = vmatmul.mubr.bf16.gmra.mxu0 %v8608
          %v8914 = vpop.f32.mrf.mxu0
          %v8915 = vadd.f32 %v8686, %v8914
          %v8916 = vpop.f32.mrf.mxu0
          %v8917 = vpop.f32.mrf.mxu0
          %v8918 = vpop.f32.mrf.mxu0
          %8919 = vdwg.mxu0
          %8920 = vmatprep.subr.bf16.mxu0 0
          %8921 = vmatpush1.bf16.msra.mxu0 %v8839
          %8922 = vmatprep.subr.bf16.mxu0 0
          %8923 = vmatpush1.bf16.msra.mxu0 %v8838
          %8924 = vmatprep.subr.bf16.mxu0 0
          %8925 = vmatpush1.bf16.msra.mxu0 %v8837
          %8926 = vmatprep.subr.bf16.mxu0 0
          %8927 = vmatpush1.bf16.msra.mxu0 %v8836
          %8928 = vmatprep.subr.bf16.mxu0 0
          %8929 = vmatpush1.bf16.msra.mxu0 %v8835
          %8930 = vmatprep.subr.bf16.mxu0 0
          %8931 = vmatpush1.bf16.msra.mxu0 %v8834
          %8932 = vmatprep.subr.bf16.mxu0 0
          %8933 = vmatpush1.bf16.msra.mxu0 %v8833
          %8934 = vmatprep.subr.bf16.mxu0 0
          %8935 = vmatpush1.bf16.msra.mxu0 %v8832
          %8936 = vmatprep.subr.bf16.mxu0 0
          %8937 = vmatpush2.bf16.msra.mxu0 %v8847
          %8938 = vmatprep.subr.bf16.mxu0 0
          %8939 = vmatpush2.bf16.msra.mxu0 %v8846
          %8940 = vmatprep.subr.bf16.mxu0 0
          %8941 = vmatpush2.bf16.msra.mxu0 %v8845
          %8942 = vmatprep.subr.bf16.mxu0 0
          %8943 = vmatpush2.bf16.msra.mxu0 %v8844
          %8944 = vmatprep.subr.bf16.mxu0 0
          %8945 = vmatpush2.bf16.msra.mxu0 %v8843
          %8946 = vmatprep.subr.bf16.mxu0 0
          %8947 = vmatpush2.bf16.msra.mxu0 %v8842
          %8948 = vmatprep.subr.bf16.mxu0 0
          %8949 = vmatpush2.bf16.msra.mxu0 %v8841
          %8950 = vmatprep.subr.bf16.mxu0 0
          %8951 = vmatpush2.bf16.msra.mxu0 %v8840
          %8952 = vmatprep.mubr.bf16.mxu0 %v8611
          %8953 = vmatmul.mubr.bf16.gmra.mxu0 %v8610
          %v8954 = vpop.f32.mrf.mxu0
          %v8955 = vadd.f32 %v8915, %v8954
          %v8956 = vpop.f32.mrf.mxu0
          %v8957 = vpop.f32.mrf.mxu0
          %v8958 = vpop.f32.mrf.mxu0
          %8959 = vdwg.mxu0
          %vm8960 = vcmask 74752
          %8961 = vst.msk [vmem:[#allocation11] sm:$0x3] %vm8960, %v8955
        $region68: #{another_net_forward.1} parent=43 // pred_fallthru
          _
        // Predicated region
        $region69: #{another_net_forward.1} parent=43 // pred_check
          %p8962 = pneg %p206
        $region70: #{another_net_forward.1} parent=43 // pred_check_branch
          %8964 = sbr.rel (%p8962) target = $region72
        $region71: #{another_net_forward.1} parent=43 // pred_region
          %s8966 = ssub.s32 32, 32
          %8967 = vsyncadd [#allocation5], %s8966
          %s8968 = smul.addr %s27, 32
          %s8969 = scalar_lea.hbm %s6, %s8968
          %s8971 = sshll.u32 [#allocation11], 4
          %s8972 = int_to_ptr.vmem [resolvable:$true] %s8971
          %8974 = dma.vmem_to_hbm [thread:$0]  %s8972, 32, %s8969, [#allocation5]
        $region72: #{another_net_forward.1} parent=43 // pred_fallthru
          _
        // Predicated region
        $region73: #{another_net_forward.1} parent=43 // pred_check
          %p8975 = pneg %p206
        $region74: #{another_net_forward.1} parent=43 // pred_check_branch
          %8977 = sbr.rel (%p8975) target = $region76
        $region75: #{another_net_forward.1} parent=43 // pred_region
          %8978 = dma.done [#allocation5], 32
        $region76: #{another_net_forward.1} parent=43 // pred_fallthru
          _
      $region44: #{another_net_forward.1} parent=5 // pred_fallthru
        _
      %p8979 = scmp.le.s32.totalorder 2, %s18
      // Predicated region
      $region77: #{another_net_forward.1} parent=5 // pred_check
        %p8980 = pneg %p8979
      $region78: #{another_net_forward.1} parent=5 // pred_check_branch
        %8982 = sbr.rel (%p8980) target = $region80
      $region79: #{another_net_forward.1} parent=5 // pred_region
        %s8983 = ssub.s32 %s18, 2
      $region80: #{another_net_forward.1} parent=5 // pred_fallthru
        _
    $region6: #{another_net_forward.1} parent=1 // loop_footer
      %s22 = sadd.s32 1, %s18
    $region7: #{another_net_forward.1} parent=1 // loop_footer_branch
      %17 = sbr.rel target = $region3
    $region8: #{another_net_forward.1} parent=1 // loop_exit
      _
    %8984 = vsyncpa [#allocation4], 1
    %s8985 = scalar_lea.sflag [#allocation4], 1
    %8986 = vsyncpa %s8985, 1
    %8987 = vsyncpa [#allocation7], 1
    %8988 = vsyncpa [#allocation10], 1
    %8989 = vsyncpa [#allocation5], 1
    %s8990 = scalar_lea.sflag [#allocation5], 1
    %8991 = vsyncpa %s8990, 1

</llo_original>
